<compile_context>
chip_gen: v7x
topology: tpu7x:2x2x1
jax: 0.10.0
libtpu: 0.0.40
codegen_flags: <defaults>
</compile_context>

<pallas_src>
import jax
import jax.numpy as jnp
from jax.experimental import pallas as pl
from jax.experimental.pallas import tpu as pltpu


# ----------------------------- Pallas kernels ------------------------------ #

def conv_relu_pool_kernel(x_ref, w_ref, b_ref, o_ref):
    """Fused conv(3x3, pad=1) + bias + ReLU + 2x2 max-pool via phase matmuls.

    x: (4*M, K) phase-separated im2col patches, K = 9*Cin.
       Rows [ph*M:(ph+1)*M] correspond to one of the 4 positions inside each
       2x2 pooling window, in (n, i, j) row order.
    w: (K, Cout)   b: (1, Cout)   o: (M, Cout) pooled output.
    """
    m, _ = o_ref.shape
    out = None
    for ph in range(4):  # static unroll; tile-aligned ref slices (M % 8 == 0)
        y = jnp.dot(x_ref[ph * m:(ph + 1) * m, :], w_ref[...],
                    preferred_element_type=jnp.float32)
        y = jnp.maximum(y + b_ref[...], 0.0)
        out = y if out is None else jnp.maximum(out, y)
    o_ref[...] = out


def mlp_pair_l2_kernel(x_ref, w1_ref, b1_ref, w2_ref, b2_ref, o_ref):
    """Fused FC head: relu(x@w1+b1)@w2+b2 on the 2B-row batch, then the
    pairwise L2 distance between the two B-row halves.

    x: (2B, fc_in)  w1: (fc_in, 512)  w2: (512, 256)  o: (B, 1)
    """
    h = jnp.dot(x_ref[...], w1_ref[...], preferred_element_type=jnp.float32)
    h = jnp.maximum(h + b1_ref[...], 0.0)
    e = jnp.dot(h, w2_ref[...], preferred_element_type=jnp.float32) + b2_ref[...]
    b = o_ref.shape[0]
    d = e[0:b, :] - e[b:2 * b, :]
    o_ref[...] = jnp.sqrt(jnp.sum(d * d, axis=1, keepdims=True))


# ------------------------------ thin wrappers ------------------------------ #

def conv_relu_pool(cols, w, b):
    m4, _ = cols.shape
    m = m4 // 4
    cout = w.shape[1]
    return pl.pallas_call(
        conv_relu_pool_kernel,
        out_shape=jax.ShapeDtypeStruct((m, cout), jnp.float32),
    )(cols, w, b)


def mlp_pair_l2(feats, w1, b1, w2, b2):
    bsz = feats.shape[0] // 2
    out = pl.pallas_call(
        mlp_pair_l2_kernel,
        out_shape=jax.ShapeDtypeStruct((bsz, 1), jnp.float32),
        compiler_params=pltpu.CompilerParams(vmem_limit_bytes=32 * 1024 * 1024),
    )(feats, w1, b1, w2, b2)
    return out.reshape(bsz)


# -------------------------- XLA-side layout glue ---------------------------- #

def im2col_pool_phases(x_nhwc):
    """Phase-separated 3x3 im2col (pad=1) feeding the fused conv+pool matmul.

    Returns (4 * N*(H//2)*(W//2), 9*Cin). Pure data-movement (pad, strided
    slices, concat) left to XLA; the matmul consuming it is lane-dense.
    """
    n, h, w, cin = x_nhwc.shape
    hp, wp = h // 2, w // 2
    xp = jnp.pad(x_nhwc, ((0, 0), (1, 1), (1, 1), (0, 0)))
    phases = []
    for p in range(2):
        for q in range(2):
            taps = [xp[:, p + dy:p + dy + h:2, q + dx:q + dx + w:2, :]
                    for dy in range(3) for dx in range(3)]
            patch = jnp.concatenate(taps, axis=-1)          # (N, HP, WP, 9*Cin)
            phases.append(patch.reshape(n * hp * wp, 9 * cin))
    return jnp.concatenate(phases, axis=0)                  # (4*M, 9*Cin)


# ------------------------------ model (glue) ------------------------------- #

def init_params(key, h, w):
    """Deterministic synthetic parameters; shapes mirror the PyTorch module."""
    ks = jax.random.split(key, 8)
    h4, w4 = h // 4, w // 4
    fc_in = 256 * h4 * w4
    # torch layouts: conv weight (Cout, Cin, kh, kw); linear weight (out, in)
    c1_w = jax.random.normal(ks[0], (128, 3, 3, 3), jnp.float32) * 0.05
    c1_b = jax.random.normal(ks[1], (128,), jnp.float32) * 0.05
    c2_w = jax.random.normal(ks[2], (256, 128, 3, 3), jnp.float32) * 0.02
    c2_b = jax.random.normal(ks[3], (256,), jnp.float32) * 0.02
    f1_w = jax.random.normal(ks[4], (512, fc_in), jnp.float32) * 0.01
    f1_b = jax.random.normal(ks[5], (512,), jnp.float32) * 0.01
    f2_w = jax.random.normal(ks[6], (256, 512), jnp.float32) * 0.02
    f2_b = jax.random.normal(ks[7], (256,), jnp.float32) * 0.02
    # fc1 rows are permuted once at init from torch's NCHW flatten order to the
    # NHWC flatten order the conv kernels produce (removes a runtime transpose).
    f1_w_nhwc = jnp.transpose(
        f1_w.reshape(512, 256, h4, w4), (0, 2, 3, 1)).reshape(512, fc_in)
    return {
        # kernel layouts: conv weights as (9*Cin, Cout), linears as (in, out)
        "c1_w": jnp.transpose(c1_w, (2, 3, 1, 0)).reshape(9 * 3, 128),
        "c1_b": c1_b.reshape(1, 128),
        "c2_w": jnp.transpose(c2_w, (2, 3, 1, 0)).reshape(9 * 128, 256),
        "c2_b": c2_b.reshape(1, 256),
        "f1_w": f1_w_nhwc.T,
        "f1_b": f1_b.reshape(1, 512),
        "f2_w": f2_w.T,
        "f2_b": f2_b.reshape(1, 256),
    }


def forward_batched(x_nchw, p):
    """CNN + FC head on the branch-batched (2B, C, H, W) input -> (B,) dists."""
    x = jnp.transpose(x_nchw, (0, 2, 3, 1))                 # NCHW -> NHWC
    n, h, w, _ = x.shape
    # stage 1: conv(3->128) + ReLU + 2x2 maxpool  (one fused kernel)
    y1 = conv_relu_pool(im2col_pool_phases(x), p["c1_w"], p["c1_b"])
    x = y1.reshape(n, h // 2, w // 2, 128)
    # stage 2: conv(128->256) + ReLU + 2x2 maxpool  (one fused kernel)
    y2 = conv_relu_pool(im2col_pool_phases(x), p["c2_w"], p["c2_b"])
    feats = y2.reshape(n, -1)                               # NHWC flatten (f1_w pre-permuted)
    # head: fc1 + ReLU + fc2 + pairwise L2  (one fused kernel)
    return mlp_pair_l2(feats, p["f1_w"], p["f1_b"], p["f2_w"], p["f2_b"])


@jax.jit
def siamese_forward(input1, input2, params):
    x = jnp.concatenate([input1, input2], axis=0)           # batch both branches
    return forward_batched(x, params)                       # (B,), like torch.norm(dim=1)


# ---------------------------------- main ----------------------------------- #

if __name__ == "__main__":
    B, C, H, W = 2, 3, 16, 16
    key = jax.random.PRNGKey(0)
    k1, k2, kp = jax.random.split(key, 3)
    x1 = jax.random.normal(k1, (B, C, H, W), jnp.float32)
    x2 = jax.random.normal(k2, (B, C, H, W), jnp.float32)
    params = init_params(kp, H, W)

    dist = siamese_forward(x1, x2, params)
    dist = jax.block_until_ready(dist)
    assert dist.shape == (B,) and dist.dtype == jnp.float32
    assert bool(jnp.all(jnp.isfinite(dist)))
    print("KERNEL_OK")
</pallas_src>

<mosaic_0001>
module attributes {stable_mosaic.version = 11 : i64} {
  func.func @conv_relu_pool_kernel(%arg0: memref<1024x27xf32, #tpu.memory_space<vmem>>, %arg1: memref<27x128xf32, #tpu.memory_space<vmem>>, %arg2: memref<1x128xf32, #tpu.memory_space<vmem>>, %arg3: memref<256x128xf32, #tpu.memory_space<vmem>>) attributes {dimension_semantics = [], scalar_prefetch = 0 : i64, scratch_operands = 0 : i64, tpu.core_type = #tpu.core_type<tc>} {
    %c0 = arith.constant 0 : index
    %c0_0 = arith.constant 0 : index
    %0 = vector.load %arg0[%c0, %c0_0] : memref<1024x27xf32, #tpu.memory_space<vmem>>, vector<256x27xf32>
    %c0_1 = arith.constant 0 : index
    %c0_2 = arith.constant 0 : index
    %1 = vector.load %arg1[%c0_1, %c0_2] : memref<27x128xf32, #tpu.memory_space<vmem>>, vector<27x128xf32>
    %cst = arith.constant dense<0.000000e+00> : vector<256x128xf32>
    %2 = tpu.matmul %0, %1, %cst {dimension_numbers = #tpu.dot_dimension_numbers<[1], [0], [0], [1], [0, 0, 1, 1], [], []>} : vector<256x27xf32>, vector<27x128xf32>, vector<256x128xf32> -> vector<256x128xf32>
    %c0_3 = arith.constant 0 : index
    %c0_4 = arith.constant 0 : index
    %3 = vector.load %arg2[%c0_3, %c0_4] : memref<1x128xf32, #tpu.memory_space<vmem>>, vector<1x128xf32>
    %4 = vector.broadcast %3 : vector<1x128xf32> to vector<256x128xf32>
    %5 = arith.addf %2, %4 : vector<256x128xf32>
    %cst_5 = arith.constant 0.000000e+00 : f32
    %6 = vector.broadcast %cst_5 : f32 to vector<256x128xf32>
    %7 = arith.maximumf %5, %6 : vector<256x128xf32>
    %c256 = arith.constant 256 : index
    %c0_6 = arith.constant 0 : index
    %8 = vector.load %arg0[%c256, %c0_6] : memref<1024x27xf32, #tpu.memory_space<vmem>>, vector<256x27xf32>
    %c0_7 = arith.constant 0 : index
    %c0_8 = arith.constant 0 : index
    %9 = vector.load %arg1[%c0_7, %c0_8] : memref<27x128xf32, #tpu.memory_space<vmem>>, vector<27x128xf32>
    %cst_9 = arith.constant dense<0.000000e+00> : vector<256x128xf32>
    %10 = tpu.matmul %8, %9, %cst_9 {dimension_numbers = #tpu.dot_dimension_numbers<[1], [0], [0], [1], [0, 0, 1, 1], [], []>} : vector<256x27xf32>, vector<27x128xf32>, vector<256x128xf32> -> vector<256x128xf32>
    %c0_10 = arith.constant 0 : index
    %c0_11 = arith.constant 0 : index
    %11 = vector.load %arg2[%c0_10, %c0_11] : memref<1x128xf32, #tpu.memory_space<vmem>>, vector<1x128xf32>
    %12 = vector.broadcast %11 : vector<1x128xf32> to vector<256x128xf32>
    %13 = arith.addf %10, %12 : vector<256x128xf32>
    %cst_12 = arith.constant 0.000000e+00 : f32
    %14 = vector.broadcast %cst_12 : f32 to vector<256x128xf32>
    %15 = arith.maximumf %13, %14 : vector<256x128xf32>
    %16 = arith.maximumf %7, %15 : vector<256x128xf32>
    %c512 = arith.constant 512 : index
    %c0_13 = arith.constant 0 : index
    %17 = vector.load %arg0[%c512, %c0_13] : memref<1024x27xf32, #tpu.memory_space<vmem>>, vector<256x27xf32>
    %c0_14 = arith.constant 0 : index
    %c0_15 = arith.constant 0 : index
    %18 = vector.load %arg1[%c0_14, %c0_15] : memref<27x128xf32, #tpu.memory_space<vmem>>, vector<27x128xf32>
    %cst_16 = arith.constant dense<0.000000e+00> : vector<256x128xf32>
    %19 = tpu.matmul %17, %18, %cst_16 {dimension_numbers = #tpu.dot_dimension_numbers<[1], [0], [0], [1], [0, 0, 1, 1], [], []>} : vector<256x27xf32>, vector<27x128xf32>, vector<256x128xf32> -> vector<256x128xf32>
    %c0_17 = arith.constant 0 : index
    %c0_18 = arith.constant 0 : index
    %20 = vector.load %arg2[%c0_17, %c0_18] : memref<1x128xf32, #tpu.memory_space<vmem>>, vector<1x128xf32>
    %21 = vector.broadcast %20 : vector<1x128xf32> to vector<256x128xf32>
    %22 = arith.addf %19, %21 : vector<256x128xf32>
    %cst_19 = arith.constant 0.000000e+00 : f32
    %23 = vector.broadcast %cst_19 : f32 to vector<256x128xf32>
    %24 = arith.maximumf %22, %23 : vector<256x128xf32>
    %25 = arith.maximumf %16, %24 : vector<256x128xf32>
    %c768 = arith.constant 768 : index
    %c0_20 = arith.constant 0 : index
    %26 = vector.load %arg0[%c768, %c0_20] : memref<1024x27xf32, #tpu.memory_space<vmem>>, vector<256x27xf32>
    %c0_21 = arith.constant 0 : index
    %c0_22 = arith.constant 0 : index
    %27 = vector.load %arg1[%c0_21, %c0_22] : memref<27x128xf32, #tpu.memory_space<vmem>>, vector<27x128xf32>
    %cst_23 = arith.constant dense<0.000000e+00> : vector<256x128xf32>
    %28 = tpu.matmul %26, %27, %cst_23 {dimension_numbers = #tpu.dot_dimension_numbers<[1], [0], [0], [1], [0, 0, 1, 1], [], []>} : vector<256x27xf32>, vector<27x128xf32>, vector<256x128xf32> -> vector<256x128xf32>
    %c0_24 = arith.constant 0 : index
    %c0_25 = arith.constant 0 : index
    %29 = vector.load %arg2[%c0_24, %c0_25] : memref<1x128xf32, #tpu.memory_space<vmem>>, vector<1x128xf32>
    %30 = vector.broadcast %29 : vector<1x128xf32> to vector<256x128xf32>
    %31 = arith.addf %28, %30 : vector<256x128xf32>
    %cst_26 = arith.constant 0.000000e+00 : f32
    %32 = vector.broadcast %cst_26 : f32 to vector<256x128xf32>
    %33 = arith.maximumf %31, %32 : vector<256x128xf32>
    %34 = arith.maximumf %25, %33 : vector<256x128xf32>
    %c0_27 = arith.constant 0 : index
    %c0_28 = arith.constant 0 : index
    %35 = vector.load %arg3[%c0_27, %c0_28] : memref<256x128xf32, #tpu.memory_space<vmem>>, vector<256x128xf32>
    tpu.vector_store %arg3[%c0_27, %c0_28], %34 {strides = array<i32>} : memref<256x128xf32, #tpu.memory_space<vmem>>, vector<256x128xf32>,
    return
  }
}

module attributes {stable_mosaic.version = 11 : i64} {
  func.func @conv_relu_pool_kernel(%arg0: memref<256x1152xf32, #tpu.memory_space<vmem>>, %arg1: memref<1152x256xf32, #tpu.memory_space<vmem>>, %arg2: memref<1x256xf32, #tpu.memory_space<vmem>>, %arg3: memref<64x256xf32, #tpu.memory_space<vmem>>) attributes {dimension_semantics = [], scalar_prefetch = 0 : i64, scratch_operands = 0 : i64, tpu.core_type = #tpu.core_type<tc>} {
    %c0 = arith.constant 0 : index
    %c0_0 = arith.constant 0 : index
    %0 = vector.load %arg0[%c0, %c0_0] : memref<256x1152xf32, #tpu.memory_space<vmem>>, vector<64x1152xf32>
    %c0_1 = arith.constant 0 : index
    %c0_2 = arith.constant 0 : index
    %1 = vector.load %arg1[%c0_1, %c0_2] : memref<1152x256xf32, #tpu.memory_space<vmem>>, vector<1152x256xf32>
    %cst = arith.constant dense<0.000000e+00> : vector<64x256xf32>
    %2 = tpu.matmul %0, %1, %cst {dimension_numbers = #tpu.dot_dimension_numbers<[1], [0], [0], [1], [0, 0, 1, 1], [], []>} : vector<64x1152xf32>, vector<1152x256xf32>, vector<64x256xf32> -> vector<64x256xf32>
    %c0_3 = arith.constant 0 : index
    %c0_4 = arith.constant 0 : index
    %3 = vector.load %arg2[%c0_3, %c0_4] : memref<1x256xf32, #tpu.memory_space<vmem>>, vector<1x256xf32>
    %4 = vector.broadcast %3 : vector<1x256xf32> to vector<64x256xf32>
    %5 = arith.addf %2, %4 : vector<64x256xf32>
    %cst_5 = arith.constant 0.000000e+00 : f32
    %6 = vector.broadcast %cst_5 : f32 to vector<64x256xf32>
    %7 = arith.maximumf %5, %6 : vector<64x256xf32>
    %c64 = arith.constant 64 : index
    %c0_6 = arith.constant 0 : index
    %8 = vector.load %arg0[%c64, %c0_6] : memref<256x1152xf32, #tpu.memory_space<vmem>>, vector<64x1152xf32>
    %c0_7 = arith.constant 0 : index
    %c0_8 = arith.constant 0 : index
    %9 = vector.load %arg1[%c0_7, %c0_8] : memref<1152x256xf32, #tpu.memory_space<vmem>>, vector<1152x256xf32>
    %cst_9 = arith.constant dense<0.000000e+00> : vector<64x256xf32>
    %10 = tpu.matmul %8, %9, %cst_9 {dimension_numbers = #tpu.dot_dimension_numbers<[1], [0], [0], [1], [0, 0, 1, 1], [], []>} : vector<64x1152xf32>, vector<1152x256xf32>, vector<64x256xf32> -> vector<64x256xf32>
    %c0_10 = arith.constant 0 : index
    %c0_11 = arith.constant 0 : index
    %11 = vector.load %arg2[%c0_10, %c0_11] : memref<1x256xf32, #tpu.memory_space<vmem>>, vector<1x256xf32>
    %12 = vector.broadcast %11 : vector<1x256xf32> to vector<64x256xf32>
    %13 = arith.addf %10, %12 : vector<64x256xf32>
    %cst_12 = arith.constant 0.000000e+00 : f32
    %14 = vector.broadcast %cst_12 : f32 to vector<64x256xf32>
    %15 = arith.maximumf %13, %14 : vector<64x256xf32>
    %16 = arith.maximumf %7, %15 : vector<64x256xf32>
    %c128 = arith.constant 128 : index
    %c0_13 = arith.constant 0 : index
    %17 = vector.load %arg0[%c128, %c0_13] : memref<256x1152xf32, #tpu.memory_space<vmem>>, vector<64x1152xf32>
    %c0_14 = arith.constant 0 : index
    %c0_15 = arith.constant 0 : index
    %18 = vector.load %arg1[%c0_14, %c0_15] : memref<1152x256xf32, #tpu.memory_space<vmem>>, vector<1152x256xf32>
    %cst_16 = arith.constant dense<0.000000e+00> : vector<64x256xf32>
    %19 = tpu.matmul %17, %18, %cst_16 {dimension_numbers = #tpu.dot_dimension_numbers<[1], [0], [0], [1], [0, 0, 1, 1], [], []>} : vector<64x1152xf32>, vector<1152x256xf32>, vector<64x256xf32> -> vector<64x256xf32>
    %c0_17 = arith.constant 0 : index
    %c0_18 = arith.constant 0 : index
    %20 = vector.load %arg2[%c0_17, %c0_18] : memref<1x256xf32, #tpu.memory_space<vmem>>, vector<1x256xf32>
    %21 = vector.broadcast %20 : vector<1x256xf32> to vector<64x256xf32>
    %22 = arith.addf %19, %21 : vector<64x256xf32>
    %cst_19 = arith.constant 0.000000e+00 : f32
    %23 = vector.broadcast %cst_19 : f32 to vector<64x256xf32>
    %24 = arith.maximumf %22, %23 : vector<64x256xf32>
    %25 = arith.maximumf %16, %24 : vector<64x256xf32>
    %c192 = arith.constant 192 : index
    %c0_20 = arith.constant 0 : index
    %26 = vector.load %arg0[%c192, %c0_20] : memref<256x1152xf32, #tpu.memory_space<vmem>>, vector<64x1152xf32>
    %c0_21 = arith.constant 0 : index
    %c0_22 = arith.constant 0 : index
    %27 = vector.load %arg1[%c0_21, %c0_22] : memref<1152x256xf32, #tpu.memory_space<vmem>>, vector<1152x256xf32>
    %cst_23 = arith.constant dense<0.000000e+00> : vector<64x256xf32>
    %28 = tpu.matmul %26, %27, %cst_23 {dimension_numbers = #tpu.dot_dimension_numbers<[1], [0], [0], [1], [0, 0, 1, 1], [], []>} : vector<64x1152xf32>, vector<1152x256xf32>, vector<64x256xf32> -> vector<64x256xf32>
    %c0_24 = arith.constant 0 : index
    %c0_25 = arith.constant 0 : index
    %29 = vector.load %arg2[%c0_24, %c0_25] : memref<1x256xf32, #tpu.memory_space<vmem>>, vector<1x256xf32>
    %30 = vector.broadcast %29 : vector<1x256xf32> to vector<64x256xf32>
    %31 = arith.addf %28, %30 : vector<64x256xf32>
    %cst_26 = arith.constant 0.000000e+00 : f32
    %32 = vector.broadcast %cst_26 : f32 to vector<64x256xf32>
    %33 = arith.maximumf %31, %32 : vector<64x256xf32>
    %34 = arith.maximumf %25, %33 : vector<64x256xf32>
    %c0_27 = arith.constant 0 : index
    %c0_28 = arith.constant 0 : index
    %35 = vector.load %arg3[%c0_27, %c0_28] : memref<64x256xf32, #tpu.memory_space<vmem>>, vector<64x256xf32>
    tpu.vector_store %arg3[%c0_27, %c0_28], %34 {strides = array<i32>} : memref<64x256xf32, #tpu.memory_space<vmem>>, vector<64x256xf32>,
    return
  }
}

module attributes {stable_mosaic.version = 11 : i64} {
  func.func @mlp_pair_l2_kernel(%arg0: memref<4x4096xf32, #tpu.memory_space<vmem>>, %arg1: memref<4096x512xf32, #tpu.memory_space<vmem>>, %arg2: memref<1x512xf32, #tpu.memory_space<vmem>>, %arg3: memref<512x256xf32, #tpu.memory_space<vmem>>, %arg4: memref<1x256xf32, #tpu.memory_space<vmem>>, %arg5: memref<2x1xf32, #tpu.memory_space<vmem>>) attributes {dimension_semantics = [], scalar_prefetch = 0 : i64, scratch_operands = 0 : i64, tpu.core_type = #tpu.core_type<tc>} {
    %c0 = arith.constant 0 : index
    %c0_0 = arith.constant 0 : index
    %0 = vector.load %arg0[%c0, %c0_0] : memref<4x4096xf32, #tpu.memory_space<vmem>>, vector<4x4096xf32>
    %c0_1 = arith.constant 0 : index
    %c0_2 = arith.constant 0 : index
    %1 = vector.load %arg1[%c0_1, %c0_2] : memref<4096x512xf32, #tpu.memory_space<vmem>>, vector<4096x512xf32>
    %cst = arith.constant dense<0.000000e+00> : vector<4x512xf32>
    %2 = tpu.matmul %0, %1, %cst {dimension_numbers = #tpu.dot_dimension_numbers<[1], [0], [0], [1], [0, 0, 1, 1], [], []>} : vector<4x4096xf32>, vector<4096x512xf32>, vector<4x512xf32> -> vector<4x512xf32>
    %c0_3 = arith.constant 0 : index
    %c0_4 = arith.constant 0 : index
    %3 = vector.load %arg2[%c0_3, %c0_4] : memref<1x512xf32, #tpu.memory_space<vmem>>, vector<1x512xf32>
    %4 = vector.broadcast %3 : vector<1x512xf32> to vector<4x512xf32>
    %5 = arith.addf %2, %4 : vector<4x512xf32>
    %cst_5 = arith.constant 0.000000e+00 : f32
    %6 = vector.broadcast %cst_5 : f32 to vector<4x512xf32>
    %7 = arith.maximumf %5, %6 : vector<4x512xf32>
    %c0_6 = arith.constant 0 : index
    %c0_7 = arith.constant 0 : index
    %8 = vector.load %arg3[%c0_6, %c0_7] : memref<512x256xf32, #tpu.memory_space<vmem>>, vector<512x256xf32>
    %cst_8 = arith.constant dense<0.000000e+00> : vector<4x256xf32>
    %9 = tpu.matmul %7, %8, %cst_8 {dimension_numbers = #tpu.dot_dimension_numbers<[1], [0], [0], [1], [0, 0, 1, 1], [], []>} : vector<4x512xf32>, vector<512x256xf32>, vector<4x256xf32> -> vector<4x256xf32>
    %c0_9 = arith.constant 0 : index
    %c0_10 = arith.constant 0 : index
    %10 = vector.load %arg4[%c0_9, %c0_10] : memref<1x256xf32, #tpu.memory_space<vmem>>, vector<1x256xf32>
    %11 = vector.broadcast %10 : vector<1x256xf32> to vector<4x256xf32>
    %12 = arith.addf %9, %11 : vector<4x256xf32>
    %13 = vector.extract_strided_slice %12 {offsets = [0, 0], sizes = [2, 256], strides = [1, 1]} : vector<4x256xf32> to vector<2x256xf32>
    %14 = vector.extract_strided_slice %12 {offsets = [2, 0], sizes = [2, 256], strides = [1, 1]} : vector<4x256xf32> to vector<2x256xf32>
    %15 = arith.subf %13, %14 : vector<2x256xf32>
    %16 = arith.mulf %15, %15 : vector<2x256xf32>
    %cst_11 = arith.constant dense<0.000000e+00> : vector<2xf32>
    %17 = vector.multi_reduction <add>, %16, %cst_11 [1] : vector<2x256xf32> to vector<2xf32>
    %18 = vector.shape_cast %17 : vector<2xf32> to vector<2x1xf32>
    %19 = math.sqrt %18 : vector<2x1xf32>
    %c0_12 = arith.constant 0 : index
    %c0_13 = arith.constant 0 : index
    %20 = vector.load %arg5[%c0_12, %c0_13] : memref<2x1xf32, #tpu.memory_space<vmem>>, vector<2x1xf32>
    tpu.vector_store %arg5[%c0_12, %c0_13], %19 {strides = array<i32>} : memref<2x1xf32, #tpu.memory_space<vmem>>, vector<2x1xf32>,
    return
  }
}

</mosaic_0001>

<llo_original>
// kernel: siamese_forward.3
$region0: #{siamese_forward.3}
  #allocation0 [shape = 'u32[]', space=smem, size = 0x4, offset = 0x4, fixed_abs, tag = 'smem constant byte address 0x4 - core index']
  #allocation1 [shape = 'u32[144,128]{1,0:T(1,128)}', space=vmem, size = 0x12000, scoped, tag = 'internal scratch']
  %s0 = inlined_call_operand.vmem [shape: f32[1024,27], index: 0, kind: input, shape index: {}]
  %s1 = inlined_call_operand.vmem [shape: f32[27,128], index: 1, kind: input, shape index: {}]
  %s2 = inlined_call_operand.vmem [shape: f32[1,128], index: 2, kind: input, shape index: {}]
  %s3 = inlined_call_operand.vmem [shape: f32[256,128], index: 3, kind: output, shape index: {}]
  %s4 = sld [smem:[#allocation0]]
  $region22: #{siamese_forward.3} parent=0
    _
  %s6 = ssub.s32 1, %s4
  %s7 = scalar_select 0, %s6, %s4
  // Predicated region
  $region2: #{siamese_forward.3} parent=0 // pred_check
    _
  $region3: #{siamese_forward.3} parent=0 // pred_check_branch
    %9 = sbr.rel (0) target = $region5
  $region4: #{siamese_forward.3} parent=0 // pred_region
    _
  $region5: #{siamese_forward.3} parent=0 // pred_fallthru
    _
  // Predicated region
  $region6: #{siamese_forward.3} parent=0 // pred_check
    _
  $region7: #{siamese_forward.3} parent=0 // pred_check_branch
    %11 = sbr.rel (0) target = $region9
  $region8: #{siamese_forward.3} parent=0 // pred_region
    _
  $region9: #{siamese_forward.3} parent=0 // pred_fallthru
    _
  // Predicated region
  $region10: #{siamese_forward.3} parent=0 // pred_check
    _
  $region11: #{siamese_forward.3} parent=0 // pred_check_branch
    %13 = sbr.rel (0) target = $region13
  $region12: #{siamese_forward.3} parent=0 // pred_region
    _
  $region13: #{siamese_forward.3} parent=0 // pred_fallthru
    _
  %v14 = vld [vmem:[%s0] sm:$0xff]
  %v15 = vld [vmem:[%s0 + $0x8] sm:$0xff]
  %v16 = vld [vmem:[%s0 + $0x10] sm:$0xff]
  %v17 = vld [vmem:[%s0 + $0x18] sm:$0xff]
  %v18 = vld [vmem:[%s0 + $0x20] sm:$0xff]
  %v19 = vld [vmem:[%s0 + $0x28] sm:$0xff]
  %v20 = vld [vmem:[%s0 + $0x30] sm:$0xff]
  %v21 = vld [vmem:[%s0 + $0x38] sm:$0xff]
  %v22 = vld [vmem:[%s0 + $0x40] sm:$0xff]
  %v23 = vld [vmem:[%s0 + $0x48] sm:$0xff]
  %v24 = vld [vmem:[%s0 + $0x50] sm:$0xff]
  %v25 = vld [vmem:[%s0 + $0x58] sm:$0xff]
  %v26 = vld [vmem:[%s0 + $0x60] sm:$0xff]
  %v27 = vld [vmem:[%s0 + $0x68] sm:$0xff]
  %v28 = vld [vmem:[%s0 + $0x70] sm:$0xff]
  %v29 = vld [vmem:[%s0 + $0x78] sm:$0xff]
  %v30 = vld [vmem:[%s0 + $0x80] sm:$0xff]
  %v31 = vld [vmem:[%s0 + $0x88] sm:$0xff]
  %v32 = vld [vmem:[%s0 + $0x90] sm:$0xff]
  %v33 = vld [vmem:[%s0 + $0x98] sm:$0xff]
  %v34 = vld [vmem:[%s0 + $0xa0] sm:$0xff]
  %v35 = vld [vmem:[%s0 + $0xa8] sm:$0xff]
  %v36 = vld [vmem:[%s0 + $0xb0] sm:$0xff]
  %v37 = vld [vmem:[%s0 + $0xb8] sm:$0xff]
  %v38 = vld [vmem:[%s0 + $0xc0] sm:$0xff]
  %v39 = vld [vmem:[%s0 + $0xc8] sm:$0xff]
  %v40 = vld [vmem:[%s0 + $0xd0] sm:$0xff]
  %v41 = vld [vmem:[%s0 + $0xd8] sm:$0xff]
  %v42 = vld [vmem:[%s0 + $0xe0] sm:$0xff]
  %v43 = vld [vmem:[%s0 + $0xe8] sm:$0xff]
  %v44 = vld [vmem:[%s0 + $0xf0] sm:$0xff]
  %v45 = vld [vmem:[%s0 + $0xf8] sm:$0xff]
  %v46 = vld [vmem:[%s1] sm:$0xff]
  %v47 = vld [vmem:[%s1 + $0x8] sm:$0xff]
  %v48 = vld [vmem:[%s1 + $0x10] sm:$0xff]
  %v49 = vld [vmem:[%s1 + $0x18] sm:$0x7]
  %v50 = vld [vmem:[%s2] sm:$0x1]
  %v52 = vlaneseq
  %v53 = vshrl.u32 %v52, 7
  %v54 = vsub.s32 0, %v53
  %v55 = vrot.slane %v50, %v54
  %vm57 = vcmask 220160
  %v59 = vsel %vm57, %v14, 0
  %v62 = vsel %vm57, %v15, 0
  %v65 = vsel %vm57, %v16, 0
  %v68 = vsel %vm57, %v17, 0
  %v71 = vsel %vm57, %v18, 0
  %v74 = vsel %vm57, %v19, 0
  %v77 = vsel %vm57, %v20, 0
  %v80 = vsel %vm57, %v21, 0
  %v83 = vsel %vm57, %v22, 0
  %v86 = vsel %vm57, %v23, 0
  %v89 = vsel %vm57, %v24, 0
  %v92 = vsel %vm57, %v25, 0
  %v95 = vsel %vm57, %v26, 0
  %v98 = vsel %vm57, %v27, 0
  %v101 = vsel %vm57, %v28, 0
  %v104 = vsel %vm57, %v29, 0
  %v107 = vsel %vm57, %v30, 0
  %v110 = vsel %vm57, %v31, 0
  %v113 = vsel %vm57, %v32, 0
  %v116 = vsel %vm57, %v33, 0
  %v119 = vsel %vm57, %v34, 0
  %v122 = vsel %vm57, %v35, 0
  %v125 = vsel %vm57, %v36, 0
  %v128 = vsel %vm57, %v37, 0
  %v131 = vsel %vm57, %v38, 0
  %v134 = vsel %vm57, %v39, 0
  %v137 = vsel %vm57, %v40, 0
  %v140 = vsel %vm57, %v41, 0
  %v143 = vsel %vm57, %v42, 0
  %v146 = vsel %vm57, %v43, 0
  %v149 = vsel %vm57, %v44, 0
  %v152 = vsel %vm57, %v45, 0
  %vm154 = vcmask 1042432
  %v156 = vsel %vm154, %v49, 0
  %158 = vmatprep.subr.mxu0 0.0
  %159 = vmatpush1.msra.mxu0 %v46
  %160 = vmatprep.subr.mxu0 0.0
  %161 = vmatpush1.msra.mxu0 %v47
  %162 = vmatprep.subr.mxu0 0.0
  %163 = vmatpush1.msra.mxu0 %v48
  %164 = vmatprep.subr.mxu0 0.0
  %165 = vmatpush1.msra.mxu0 %v156
  %166 = vmatprep.subr.mxu0 0.0
  %167 = vmatpush1.msra.mxu0 0.0
  %168 = vmatprep.subr.mxu0 0.0
  %169 = vmatpush1.msra.mxu0 0.0
  %170 = vmatprep.subr.mxu0 0.0
  %171 = vmatpush1.msra.mxu0 0.0
  %172 = vmatprep.subr.mxu0 0.0
  %173 = vmatpush1.msra.mxu0 0.0
  %174 = vmatprep.subr.mxu0 0.0
  %175 = vmatpush1.msra.mxu0 0.0
  %176 = vmatprep.subr.mxu0 0.0
  %177 = vmatpush1.msra.mxu0 0.0
  %178 = vmatprep.subr.mxu0 0.0
  %179 = vmatpush1.msra.mxu0 0.0
  %180 = vmatprep.subr.mxu0 0.0
  %181 = vmatpush1.msra.mxu0 0.0
  %182 = vmatprep.subr.mxu0 0.0
  %183 = vmatpush1.msra.mxu0 0.0
  %184 = vmatprep.subr.mxu0 0.0
  %185 = vmatpush1.msra.mxu0 0.0
  %186 = vmatprep.subr.mxu0 0.0
  %187 = vmatpush1.msra.mxu0 0.0
  %188 = vmatprep.subr.mxu0 0.0
  %189 = vmatpush1.msra.mxu0 0.0
  %190 = vmatprep.subr.mxu0 0.0
  %191 = vmatpush1.msra.mxu0 0.0
  %192 = vmatprep.subr.mxu0 0.0
  %193 = vmatpush1.msra.mxu0 0.0
  %194 = vmatprep.subr.mxu0 0.0
  %195 = vmatpush1.msra.mxu0 0.0
  %196 = vmatprep.subr.mxu0 0.0
  %197 = vmatpush1.msra.mxu0 0.0
  %198 = vmatprep.subr.mxu0 0.0
  %199 = vmatpush1.msra.mxu0 0.0
  %200 = vmatprep.subr.mxu0 0.0
  %201 = vmatpush1.msra.mxu0 0.0
  %202 = vmatprep.subr.mxu0 0.0
  %203 = vmatpush1.msra.mxu0 0.0
  %204 = vmatprep.subr.mxu0 0.0
  %205 = vmatpush1.msra.mxu0 0.0
  %206 = vmatprep.subr.mxu0 0.0
  %207 = vmatpush1.msra.mxu0 0.0
  %208 = vmatprep.subr.mxu0 0.0
  %209 = vmatpush1.msra.mxu0 0.0
  %210 = vmatprep.subr.mxu0 0.0
  %211 = vmatpush1.msra.mxu0 0.0
  %212 = vmatprep.subr.mxu0 0.0
  %213 = vmatpush1.msra.mxu0 0.0
  %214 = vmatprep.subr.mxu0 0.0
  %215 = vmatpush1.msra.mxu0 0.0
  %216 = vmatprep.subr.mxu0 0.0
  %217 = vmatpush1.msra.mxu0 0.0
  %218 = vmatprep.subr.mxu0 0.0
  %219 = vmatpush1.msra.mxu0 0.0
  %220 = vmatprep.subr.mxu0 0.0
  %221 = vmatpush1.msra.mxu0 0.0
  %222 = vmatprep.mubr.f32.mxu0 0.0
  %223 = vmatmul.mubr.f32.gmra.mrb[0].mxu0 %v59
  %v224 = vpop.f32.mrb[0].mxu0
  %v225 = vadd.f32 %v55, %v224
  %v226 = vpop.f32.mrb[0].mxu0
  %227 = vmatprep.mubr.f32.mxu0 0.0
  %228 = vmatmul.mubr.f32.gmra.mrb[0].mxu0 %v62
  %v229 = vpop.f32.mrb[0].mxu0
  %v230 = vadd.f32 %v55, %v229
  %v231 = vpop.f32.mrb[0].mxu0
  %232 = vmatprep.mubr.f32.mxu0 0.0
  %233 = vmatmul.mubr.f32.gmra.mrb[0].mxu0 %v65
  %v234 = vpop.f32.mrb[0].mxu0
  %v235 = vadd.f32 %v55, %v234
  %v236 = vpop.f32.mrb[0].mxu0
  %237 = vmatprep.mubr.f32.mxu0 0.0
  %238 = vmatmul.mubr.f32.gmra.mrb[0].mxu0 %v68
  %v239 = vpop.f32.mrb[0].mxu0
  %v240 = vadd.f32 %v55, %v239
  %v241 = vpop.f32.mrb[0].mxu0
  %242 = vmatprep.mubr.f32.mxu0 0.0
  %243 = vmatmul.mubr.f32.gmra.mrb[0].mxu0 %v71
  %v244 = vpop.f32.mrb[0].mxu0
  %v245 = vadd.f32 %v55, %v244
  %v246 = vpop.f32.mrb[0].mxu0
  %247 = vmatprep.mubr.f32.mxu0 0.0
  %248 = vmatmul.mubr.f32.gmra.mrb[0].mxu0 %v74
  %v249 = vpop.f32.mrb[0].mxu0
  %v250 = vadd.f32 %v55, %v249
  %v251 = vpop.f32.mrb[0].mxu0
  %252 = vmatprep.mubr.f32.mxu0 0.0
  %253 = vmatmul.mubr.f32.gmra.mrb[0].mxu0 %v77
  %v254 = vpop.f32.mrb[0].mxu0
  %v255 = vadd.f32 %v55, %v254
  %v256 = vpop.f32.mrb[0].mxu0
  %257 = vmatprep.mubr.f32.mxu0 0.0
  %258 = vmatmul.mubr.f32.gmra.mrb[0].mxu0 %v80
  %v259 = vpop.f32.mrb[0].mxu0
  %v260 = vadd.f32 %v55, %v259
  %v261 = vpop.f32.mrb[0].mxu0
  %262 = vmatprep.mubr.f32.mxu0 0.0
  %263 = vmatmul.mubr.f32.gmra.mrb[0].mxu0 %v83
  %v264 = vpop.f32.mrb[0].mxu0
  %v265 = vadd.f32 %v55, %v264
  %v266 = vpop.f32.mrb[0].mxu0
  %267 = vmatprep.mubr.f32.mxu0 0.0
  %268 = vmatmul.mubr.f32.gmra.mrb[0].mxu0 %v86
  %v269 = vpop.f32.mrb[0].mxu0
  %v270 = vadd.f32 %v55, %v269
  %v271 = vpop.f32.mrb[0].mxu0
  %272 = vmatprep.mubr.f32.mxu0 0.0
  %273 = vmatmul.mubr.f32.gmra.mrb[0].mxu0 %v89
  %v274 = vpop.f32.mrb[0].mxu0
  %v275 = vadd.f32 %v55, %v274
  %v276 = vpop.f32.mrb[0].mxu0
  %277 = vmatprep.mubr.f32.mxu0 0.0
  %278 = vmatmul.mubr.f32.gmra.mrb[0].mxu0 %v92
  %v279 = vpop.f32.mrb[0].mxu0
  %v280 = vadd.f32 %v55, %v279
  %v281 = vpop.f32.mrb[0].mxu0
  %282 = vmatprep.mubr.f32.mxu0 0.0
  %283 = vmatmul.mubr.f32.gmra.mrb[0].mxu0 %v95
  %v284 = vpop.f32.mrb[0].mxu0
  %v285 = vadd.f32 %v55, %v284
  %v286 = vpop.f32.mrb[0].mxu0
  %287 = vmatprep.mubr.f32.mxu0 0.0
  %288 = vmatmul.mubr.f32.gmra.mrb[0].mxu0 %v98
  %v289 = vpop.f32.mrb[0].mxu0
  %v290 = vadd.f32 %v55, %v289
  %v291 = vpop.f32.mrb[0].mxu0
  %292 = vmatprep.mubr.f32.mxu0 0.0
  %293 = vmatmul.mubr.f32.gmra.mrb[0].mxu0 %v101
  %v294 = vpop.f32.mrb[0].mxu0
  %v295 = vadd.f32 %v55, %v294
  %v296 = vpop.f32.mrb[0].mxu0
  %297 = vmatprep.mubr.f32.mxu0 0.0
  %298 = vmatmul.mubr.f32.gmra.mrb[0].mxu0 %v104
  %v299 = vpop.f32.mrb[0].mxu0
  %v300 = vadd.f32 %v55, %v299
  %v301 = vpop.f32.mrb[0].mxu0
  %302 = vmatprep.mubr.f32.mxu0 0.0
  %303 = vmatmul.mubr.f32.gmra.mrb[0].mxu0 %v107
  %v304 = vpop.f32.mrb[0].mxu0
  %v305 = vadd.f32 %v55, %v304
  %v306 = vpop.f32.mrb[0].mxu0
  %307 = vmatprep.mubr.f32.mxu0 0.0
  %308 = vmatmul.mubr.f32.gmra.mrb[0].mxu0 %v110
  %v309 = vpop.f32.mrb[0].mxu0
  %v310 = vadd.f32 %v55, %v309
  %v311 = vpop.f32.mrb[0].mxu0
  %312 = vmatprep.mubr.f32.mxu0 0.0
  %313 = vmatmul.mubr.f32.gmra.mrb[0].mxu0 %v113
  %v314 = vpop.f32.mrb[0].mxu0
  %v315 = vadd.f32 %v55, %v314
  %v316 = vpop.f32.mrb[0].mxu0
  %317 = vmatprep.mubr.f32.mxu0 0.0
  %318 = vmatmul.mubr.f32.gmra.mrb[0].mxu0 %v116
  %v319 = vpop.f32.mrb[0].mxu0
  %v320 = vadd.f32 %v55, %v319
  %v321 = vpop.f32.mrb[0].mxu0
  %322 = vmatprep.mubr.f32.mxu0 0.0
  %323 = vmatmul.mubr.f32.gmra.mrb[0].mxu0 %v119
  %v324 = vpop.f32.mrb[0].mxu0
  %v325 = vadd.f32 %v55, %v324
  %v326 = vpop.f32.mrb[0].mxu0
  %327 = vmatprep.mubr.f32.mxu0 0.0
  %328 = vmatmul.mubr.f32.gmra.mrb[0].mxu0 %v122
  %v329 = vpop.f32.mrb[0].mxu0
  %v330 = vadd.f32 %v55, %v329
  %v331 = vpop.f32.mrb[0].mxu0
  %332 = vmatprep.mubr.f32.mxu0 0.0
  %333 = vmatmul.mubr.f32.gmra.mrb[0].mxu0 %v125
  %v334 = vpop.f32.mrb[0].mxu0
  %v335 = vadd.f32 %v55, %v334
  %v336 = vpop.f32.mrb[0].mxu0
  %337 = vmatprep.mubr.f32.mxu0 0.0
  %338 = vmatmul.mubr.f32.gmra.mrb[0].mxu0 %v128
  %v339 = vpop.f32.mrb[0].mxu0
  %v340 = vadd.f32 %v55, %v339
  %v341 = vpop.f32.mrb[0].mxu0
  %342 = vmatprep.mubr.f32.mxu0 0.0
  %343 = vmatmul.mubr.f32.gmra.mrb[0].mxu0 %v131
  %v344 = vpop.f32.mrb[0].mxu0
  %v345 = vadd.f32 %v55, %v344
  %v346 = vpop.f32.mrb[0].mxu0
  %347 = vmatprep.mubr.f32.mxu0 0.0
  %348 = vmatmul.mubr.f32.gmra.mrb[0].mxu0 %v134
  %v349 = vpop.f32.mrb[0].mxu0
  %v350 = vadd.f32 %v55, %v349
  %v351 = vpop.f32.mrb[0].mxu0
  %352 = vmatprep.mubr.f32.mxu0 0.0
  %353 = vmatmul.mubr.f32.gmra.mrb[0].mxu0 %v137
  %v354 = vpop.f32.mrb[0].mxu0
  %v355 = vadd.f32 %v55, %v354
  %v356 = vpop.f32.mrb[0].mxu0
  %357 = vmatprep.mubr.f32.mxu0 0.0
  %358 = vmatmul.mubr.f32.gmra.mrb[0].mxu0 %v140
  %v359 = vpop.f32.mrb[0].mxu0
  %v360 = vadd.f32 %v55, %v359
  %v361 = vpop.f32.mrb[0].mxu0
  %362 = vmatprep.mubr.f32.mxu0 0.0
  %363 = vmatmul.mubr.f32.gmra.mrb[0].mxu0 %v143
  %v364 = vpop.f32.mrb[0].mxu0
  %v365 = vadd.f32 %v55, %v364
  %v366 = vpop.f32.mrb[0].mxu0
  %367 = vmatprep.mubr.f32.mxu0 0.0
  %368 = vmatmul.mubr.f32.gmra.mrb[0].mxu0 %v146
  %v369 = vpop.f32.mrb[0].mxu0
  %v370 = vadd.f32 %v55, %v369
  %v371 = vpop.f32.mrb[0].mxu0
  %372 = vmatprep.mubr.f32.mxu0 0.0
  %373 = vmatmul.mubr.f32.gmra.mrb[0].mxu0 %v149
  %v374 = vpop.f32.mrb[0].mxu0
  %v375 = vadd.f32 %v55, %v374
  %v376 = vpop.f32.mrb[0].mxu0
  %377 = vmatprep.mubr.f32.mxu0 0.0
  %378 = vmatmul.mubr.f32.gmra.mrb[0].mxu0 %v152
  %v379 = vpop.f32.mrb[0].mxu0
  %v380 = vadd.f32 %v55, %v379
  %v381 = vpop.f32.mrb[0].mxu0
  %382 = vdwg.mxu0
  %v383 = vmax.f32 %v225, 0.0
  %v384 = vmax.f32 %v230, 0.0
  %v385 = vmax.f32 %v235, 0.0
  %v386 = vmax.f32 %v240, 0.0
  %v387 = vmax.f32 %v245, 0.0
  %v388 = vmax.f32 %v250, 0.0
  %v389 = vmax.f32 %v255, 0.0
  %v390 = vmax.f32 %v260, 0.0
  %v391 = vmax.f32 %v265, 0.0
  %v392 = vmax.f32 %v270, 0.0
  %v393 = vmax.f32 %v275, 0.0
  %v394 = vmax.f32 %v280, 0.0
  %v395 = vmax.f32 %v285, 0.0
  %v396 = vmax.f32 %v290, 0.0
  %v397 = vmax.f32 %v295, 0.0
  %v398 = vmax.f32 %v300, 0.0
  %v399 = vmax.f32 %v305, 0.0
  %v400 = vmax.f32 %v310, 0.0
  %v401 = vmax.f32 %v315, 0.0
  %v402 = vmax.f32 %v320, 0.0
  %v403 = vmax.f32 %v325, 0.0
  %v404 = vmax.f32 %v330, 0.0
  %v405 = vmax.f32 %v335, 0.0
  %v406 = vmax.f32 %v340, 0.0
  %v407 = vmax.f32 %v345, 0.0
  %v408 = vmax.f32 %v350, 0.0
  %v409 = vmax.f32 %v355, 0.0
  %v410 = vmax.f32 %v360, 0.0
  %v411 = vmax.f32 %v365, 0.0
  %v412 = vmax.f32 %v370, 0.0
  %v413 = vmax.f32 %v375, 0.0
  %v414 = vmax.f32 %v380, 0.0
  %v415 = vld [vmem:[%s0 + $0x100] sm:$0xff]
  %v416 = vld [vmem:[%s0 + $0x108] sm:$0xff]
  %v417 = vld [vmem:[%s0 + $0x110] sm:$0xff]
  %v418 = vld [vmem:[%s0 + $0x118] sm:$0xff]
  %v419 = vld [vmem:[%s0 + $0x120] sm:$0xff]
  %v420 = vld [vmem:[%s0 + $0x128] sm:$0xff]
  %v421 = vld [vmem:[%s0 + $0x130] sm:$0xff]
  %v422 = vld [vmem:[%s0 + $0x138] sm:$0xff]
  %v423 = vld [vmem:[%s0 + $0x140] sm:$0xff]
  %v424 = vld [vmem:[%s0 + $0x148] sm:$0xff]
  %v425 = vld [vmem:[%s0 + $0x150] sm:$0xff]
  %v426 = vld [vmem:[%s0 + $0x158] sm:$0xff]
  %v427 = vld [vmem:[%s0 + $0x160] sm:$0xff]
  %v428 = vld [vmem:[%s0 + $0x168] sm:$0xff]
  %v429 = vld [vmem:[%s0 + $0x170] sm:$0xff]
  %v430 = vld [vmem:[%s0 + $0x178] sm:$0xff]
  %v431 = vld [vmem:[%s0 + $0x180] sm:$0xff]
  %v432 = vld [vmem:[%s0 + $0x188] sm:$0xff]
  %v433 = vld [vmem:[%s0 + $0x190] sm:$0xff]
  %v434 = vld [vmem:[%s0 + $0x198] sm:$0xff]
  %v435 = vld [vmem:[%s0 + $0x1a0] sm:$0xff]
  %v436 = vld [vmem:[%s0 + $0x1a8] sm:$0xff]
  %v437 = vld [vmem:[%s0 + $0x1b0] sm:$0xff]
  %v438 = vld [vmem:[%s0 + $0x1b8] sm:$0xff]
  %v439 = vld [vmem:[%s0 + $0x1c0] sm:$0xff]
  %v440 = vld [vmem:[%s0 + $0x1c8] sm:$0xff]
  %v441 = vld [vmem:[%s0 + $0x1d0] sm:$0xff]
  %v442 = vld [vmem:[%s0 + $0x1d8] sm:$0xff]
  %v443 = vld [vmem:[%s0 + $0x1e0] sm:$0xff]
  %v444 = vld [vmem:[%s0 + $0x1e8] sm:$0xff]
  %v445 = vld [vmem:[%s0 + $0x1f0] sm:$0xff]
  %v446 = vld [vmem:[%s0 + $0x1f8] sm:$0xff]
  %v448 = vsel %vm57, %v415, 0
  %v451 = vsel %vm57, %v416, 0
  %v454 = vsel %vm57, %v417, 0
  %v457 = vsel %vm57, %v418, 0
  %v460 = vsel %vm57, %v419, 0
  %v463 = vsel %vm57, %v420, 0
  %v466 = vsel %vm57, %v421, 0
  %v469 = vsel %vm57, %v422, 0
  %v472 = vsel %vm57, %v423, 0
  %v475 = vsel %vm57, %v424, 0
  %v478 = vsel %vm57, %v425, 0
  %v481 = vsel %vm57, %v426, 0
  %v484 = vsel %vm57, %v427, 0
  %v487 = vsel %vm57, %v428, 0
  %v490 = vsel %vm57, %v429, 0
  %v493 = vsel %vm57, %v430, 0
  %v496 = vsel %vm57, %v431, 0
  %v499 = vsel %vm57, %v432, 0
  %v502 = vsel %vm57, %v433, 0
  %v505 = vsel %vm57, %v434, 0
  %v508 = vsel %vm57, %v435, 0
  %v511 = vsel %vm57, %v436, 0
  %v514 = vsel %vm57, %v437, 0
  %v517 = vsel %vm57, %v438, 0
  %v520 = vsel %vm57, %v439, 0
  %v523 = vsel %vm57, %v440, 0
  %v526 = vsel %vm57, %v441, 0
  %v529 = vsel %vm57, %v442, 0
  %v532 = vsel %vm57, %v443, 0
  %v535 = vsel %vm57, %v444, 0
  %v538 = vsel %vm57, %v445, 0
  %v541 = vsel %vm57, %v446, 0
  %543 = vmatprep.subr.mxu0 0.0
  %544 = vmatpush1.msra.mxu0 %v46
  %545 = vmatprep.subr.mxu0 0.0
  %546 = vmatpush1.msra.mxu0 %v47
  %547 = vmatprep.subr.mxu0 0.0
  %548 = vmatpush1.msra.mxu0 %v48
  %549 = vmatprep.subr.mxu0 0.0
  %550 = vmatpush1.msra.mxu0 %v156
  %551 = vmatprep.subr.mxu0 0.0
  %552 = vmatpush1.msra.mxu0 0.0
  %553 = vmatprep.subr.mxu0 0.0
  %554 = vmatpush1.msra.mxu0 0.0
  %555 = vmatprep.subr.mxu0 0.0
  %556 = vmatpush1.msra.mxu0 0.0
  %557 = vmatprep.subr.mxu0 0.0
  %558 = vmatpush1.msra.mxu0 0.0
  %559 = vmatprep.subr.mxu0 0.0
  %560 = vmatpush1.msra.mxu0 0.0
  %561 = vmatprep.subr.mxu0 0.0
  %562 = vmatpush1.msra.mxu0 0.0
  %563 = vmatprep.subr.mxu0 0.0
  %564 = vmatpush1.msra.mxu0 0.0
  %565 = vmatprep.subr.mxu0 0.0
  %566 = vmatpush1.msra.mxu0 0.0
  %567 = vmatprep.subr.mxu0 0.0
  %568 = vmatpush1.msra.mxu0 0.0
  %569 = vmatprep.subr.mxu0 0.0
  %570 = vmatpush1.msra.mxu0 0.0
  %571 = vmatprep.subr.mxu0 0.0
  %572 = vmatpush1.msra.mxu0 0.0
  %573 = vmatprep.subr.mxu0 0.0
  %574 = vmatpush1.msra.mxu0 0.0
  %575 = vmatprep.subr.mxu0 0.0
  %576 = vmatpush1.msra.mxu0 0.0
  %577 = vmatprep.subr.mxu0 0.0
  %578 = vmatpush1.msra.mxu0 0.0
  %579 = vmatprep.subr.mxu0 0.0
  %580 = vmatpush1.msra.mxu0 0.0
  %581 = vmatprep.subr.mxu0 0.0
  %582 = vmatpush1.msra.mxu0 0.0
  %583 = vmatprep.subr.mxu0 0.0
  %584 = vmatpush1.msra.mxu0 0.0
  %585 = vmatprep.subr.mxu0 0.0
  %586 = vmatpush1.msra.mxu0 0.0
  %587 = vmatprep.subr.mxu0 0.0
  %588 = vmatpush1.msra.mxu0 0.0
  %589 = vmatprep.subr.mxu0 0.0
  %590 = vmatpush1.msra.mxu0 0.0
  %591 = vmatprep.subr.mxu0 0.0
  %592 = vmatpush1.msra.mxu0 0.0
  %593 = vmatprep.subr.mxu0 0.0
  %594 = vmatpush1.msra.mxu0 0.0
  %595 = vmatprep.subr.mxu0 0.0
  %596 = vmatpush1.msra.mxu0 0.0
  %597 = vmatprep.subr.mxu0 0.0
  %598 = vmatpush1.msra.mxu0 0.0
  %599 = vmatprep.subr.mxu0 0.0
  %600 = vmatpush1.msra.mxu0 0.0
  %601 = vmatprep.subr.mxu0 0.0
  %602 = vmatpush1.msra.mxu0 0.0
  %603 = vmatprep.subr.mxu0 0.0
  %604 = vmatpush1.msra.mxu0 0.0
  %605 = vmatprep.subr.mxu0 0.0
  %606 = vmatpush1.msra.mxu0 0.0
  %607 = vmatprep.mubr.f32.mxu0 0.0
  %608 = vmatmul.mubr.f32.gmra.mrb[0].mxu0 %v448
  %v609 = vpop.f32.mrb[0].mxu0
  %v610 = vadd.f32 %v55, %v609
  %v611 = vpop.f32.mrb[0].mxu0
  %612 = vmatprep.mubr.f32.mxu0 0.0
  %613 = vmatmul.mubr.f32.gmra.mrb[0].mxu0 %v451
  %v614 = vpop.f32.mrb[0].mxu0
  %v615 = vadd.f32 %v55, %v614
  %v616 = vpop.f32.mrb[0].mxu0
  %617 = vmatprep.mubr.f32.mxu0 0.0
  %618 = vmatmul.mubr.f32.gmra.mrb[0].mxu0 %v454
  %v619 = vpop.f32.mrb[0].mxu0
  %v620 = vadd.f32 %v55, %v619
  %v621 = vpop.f32.mrb[0].mxu0
  %622 = vmatprep.mubr.f32.mxu0 0.0
  %623 = vmatmul.mubr.f32.gmra.mrb[0].mxu0 %v457
  %v624 = vpop.f32.mrb[0].mxu0
  %v625 = vadd.f32 %v55, %v624
  %v626 = vpop.f32.mrb[0].mxu0
  %627 = vmatprep.mubr.f32.mxu0 0.0
  %628 = vmatmul.mubr.f32.gmra.mrb[0].mxu0 %v460
  %v629 = vpop.f32.mrb[0].mxu0
  %v630 = vadd.f32 %v55, %v629
  %v631 = vpop.f32.mrb[0].mxu0
  %632 = vmatprep.mubr.f32.mxu0 0.0
  %633 = vmatmul.mubr.f32.gmra.mrb[0].mxu0 %v463
  %v634 = vpop.f32.mrb[0].mxu0
  %v635 = vadd.f32 %v55, %v634
  %v636 = vpop.f32.mrb[0].mxu0
  %637 = vmatprep.mubr.f32.mxu0 0.0
  %638 = vmatmul.mubr.f32.gmra.mrb[0].mxu0 %v466
  %v639 = vpop.f32.mrb[0].mxu0
  %v640 = vadd.f32 %v55, %v639
  %v641 = vpop.f32.mrb[0].mxu0
  %642 = vmatprep.mubr.f32.mxu0 0.0
  %643 = vmatmul.mubr.f32.gmra.mrb[0].mxu0 %v469
  %v644 = vpop.f32.mrb[0].mxu0
  %v645 = vadd.f32 %v55, %v644
  %v646 = vpop.f32.mrb[0].mxu0
  %647 = vmatprep.mubr.f32.mxu0 0.0
  %648 = vmatmul.mubr.f32.gmra.mrb[0].mxu0 %v472
  %v649 = vpop.f32.mrb[0].mxu0
  %v650 = vadd.f32 %v55, %v649
  %v651 = vpop.f32.mrb[0].mxu0
  %652 = vmatprep.mubr.f32.mxu0 0.0
  %653 = vmatmul.mubr.f32.gmra.mrb[0].mxu0 %v475
  %v654 = vpop.f32.mrb[0].mxu0
  %v655 = vadd.f32 %v55, %v654
  %v656 = vpop.f32.mrb[0].mxu0
  %657 = vmatprep.mubr.f32.mxu0 0.0
  %658 = vmatmul.mubr.f32.gmra.mrb[0].mxu0 %v478
  %v659 = vpop.f32.mrb[0].mxu0
  %v660 = vadd.f32 %v55, %v659
  %v661 = vpop.f32.mrb[0].mxu0
  %662 = vmatprep.mubr.f32.mxu0 0.0
  %663 = vmatmul.mubr.f32.gmra.mrb[0].mxu0 %v481
  %v664 = vpop.f32.mrb[0].mxu0
  %v665 = vadd.f32 %v55, %v664
  %v666 = vpop.f32.mrb[0].mxu0
  %667 = vmatprep.mubr.f32.mxu0 0.0
  %668 = vmatmul.mubr.f32.gmra.mrb[0].mxu0 %v484
  %v669 = vpop.f32.mrb[0].mxu0
  %v670 = vadd.f32 %v55, %v669
  %v671 = vpop.f32.mrb[0].mxu0
  %672 = vmatprep.mubr.f32.mxu0 0.0
  %673 = vmatmul.mubr.f32.gmra.mrb[0].mxu0 %v487
  %v674 = vpop.f32.mrb[0].mxu0
  %v675 = vadd.f32 %v55, %v674
  %v676 = vpop.f32.mrb[0].mxu0
  %677 = vmatprep.mubr.f32.mxu0 0.0
  %678 = vmatmul.mubr.f32.gmra.mrb[0].mxu0 %v490
  %v679 = vpop.f32.mrb[0].mxu0
  %v680 = vadd.f32 %v55, %v679
  %v681 = vpop.f32.mrb[0].mxu0
  %682 = vmatprep.mubr.f32.mxu0 0.0
  %683 = vmatmul.mubr.f32.gmra.mrb[0].mxu0 %v493
  %v684 = vpop.f32.mrb[0].mxu0
  %v685 = vadd.f32 %v55, %v684
  %v686 = vpop.f32.mrb[0].mxu0
  %687 = vmatprep.mubr.f32.mxu0 0.0
  %688 = vmatmul.mubr.f32.gmra.mrb[0].mxu0 %v496
  %v689 = vpop.f32.mrb[0].mxu0
  %v690 = vadd.f32 %v55, %v689
  %v691 = vpop.f32.mrb[0].mxu0
  %692 = vmatprep.mubr.f32.mxu0 0.0
  %693 = vmatmul.mubr.f32.gmra.mrb[0].mxu0 %v499
  %v694 = vpop.f32.mrb[0].mxu0
  %v695 = vadd.f32 %v55, %v694
  %v696 = vpop.f32.mrb[0].mxu0
  %697 = vmatprep.mubr.f32.mxu0 0.0
  %698 = vmatmul.mubr.f32.gmra.mrb[0].mxu0 %v502
  %v699 = vpop.f32.mrb[0].mxu0
  %v700 = vadd.f32 %v55, %v699
  %v701 = vpop.f32.mrb[0].mxu0
  %702 = vmatprep.mubr.f32.mxu0 0.0
  %703 = vmatmul.mubr.f32.gmra.mrb[0].mxu0 %v505
  %v704 = vpop.f32.mrb[0].mxu0
  %v705 = vadd.f32 %v55, %v704
  %v706 = vpop.f32.mrb[0].mxu0
  %707 = vmatprep.mubr.f32.mxu0 0.0
  %708 = vmatmul.mubr.f32.gmra.mrb[0].mxu0 %v508
  %v709 = vpop.f32.mrb[0].mxu0
  %v710 = vadd.f32 %v55, %v709
  %v711 = vpop.f32.mrb[0].mxu0
  %712 = vmatprep.mubr.f32.mxu0 0.0
  %713 = vmatmul.mubr.f32.gmra.mrb[0].mxu0 %v511
  %v714 = vpop.f32.mrb[0].mxu0
  %v715 = vadd.f32 %v55, %v714
  %v716 = vpop.f32.mrb[0].mxu0
  %717 = vmatprep.mubr.f32.mxu0 0.0
  %718 = vmatmul.mubr.f32.gmra.mrb[0].mxu0 %v514
  %v719 = vpop.f32.mrb[0].mxu0
  %v720 = vadd.f32 %v55, %v719
  %v721 = vpop.f32.mrb[0].mxu0
  %722 = vmatprep.mubr.f32.mxu0 0.0
  %723 = vmatmul.mubr.f32.gmra.mrb[0].mxu0 %v517
  %v724 = vpop.f32.mrb[0].mxu0
  %v725 = vadd.f32 %v55, %v724
  %v726 = vpop.f32.mrb[0].mxu0
  %727 = vmatprep.mubr.f32.mxu0 0.0
  %728 = vmatmul.mubr.f32.gmra.mrb[0].mxu0 %v520
  %v729 = vpop.f32.mrb[0].mxu0
  %v730 = vadd.f32 %v55, %v729
  %v731 = vpop.f32.mrb[0].mxu0
  %732 = vmatprep.mubr.f32.mxu0 0.0
  %733 = vmatmul.mubr.f32.gmra.mrb[0].mxu0 %v523
  %v734 = vpop.f32.mrb[0].mxu0
  %v735 = vadd.f32 %v55, %v734
  %v736 = vpop.f32.mrb[0].mxu0
  %737 = vmatprep.mubr.f32.mxu0 0.0
  %738 = vmatmul.mubr.f32.gmra.mrb[0].mxu0 %v526
  %v739 = vpop.f32.mrb[0].mxu0
  %v740 = vadd.f32 %v55, %v739
  %v741 = vpop.f32.mrb[0].mxu0
  %742 = vmatprep.mubr.f32.mxu0 0.0
  %743 = vmatmul.mubr.f32.gmra.mrb[0].mxu0 %v529
  %v744 = vpop.f32.mrb[0].mxu0
  %v745 = vadd.f32 %v55, %v744
  %v746 = vpop.f32.mrb[0].mxu0
  %747 = vmatprep.mubr.f32.mxu0 0.0
  %748 = vmatmul.mubr.f32.gmra.mrb[0].mxu0 %v532
  %v749 = vpop.f32.mrb[0].mxu0
  %v750 = vadd.f32 %v55, %v749
  %v751 = vpop.f32.mrb[0].mxu0
  %752 = vmatprep.mubr.f32.mxu0 0.0
  %753 = vmatmul.mubr.f32.gmra.mrb[0].mxu0 %v535
  %v754 = vpop.f32.mrb[0].mxu0
  %v755 = vadd.f32 %v55, %v754
  %v756 = vpop.f32.mrb[0].mxu0
  %757 = vmatprep.mubr.f32.mxu0 0.0
  %758 = vmatmul.mubr.f32.gmra.mrb[0].mxu0 %v538
  %v759 = vpop.f32.mrb[0].mxu0
  %v760 = vadd.f32 %v55, %v759
  %v761 = vpop.f32.mrb[0].mxu0
  %762 = vmatprep.mubr.f32.mxu0 0.0
  %763 = vmatmul.mubr.f32.gmra.mrb[0].mxu0 %v541
  %v764 = vpop.f32.mrb[0].mxu0
  %v765 = vadd.f32 %v55, %v764
  %v766 = vpop.f32.mrb[0].mxu0
  %767 = vdwg.mxu0
  %v768 = vmax.f32 %v610, 0.0
  %v769 = vmax.f32 %v615, 0.0
  %v770 = vmax.f32 %v620, 0.0
  %v771 = vmax.f32 %v625, 0.0
  %v772 = vmax.f32 %v630, 0.0
  %v773 = vmax.f32 %v635, 0.0
  %v774 = vmax.f32 %v640, 0.0
  %v775 = vmax.f32 %v645, 0.0
  %v776 = vmax.f32 %v650, 0.0
  %v777 = vmax.f32 %v655, 0.0
  %v778 = vmax.f32 %v660, 0.0
  %v779 = vmax.f32 %v665, 0.0
  %v780 = vmax.f32 %v670, 0.0
  %v781 = vmax.f32 %v675, 0.0
  %v782 = vmax.f32 %v680, 0.0
  %v783 = vmax.f32 %v685, 0.0
  %v784 = vmax.f32 %v690, 0.0
  %v785 = vmax.f32 %v695, 0.0
  %v786 = vmax.f32 %v700, 0.0
  %v787 = vmax.f32 %v705, 0.0
  %v788 = vmax.f32 %v710, 0.0
  %v789 = vmax.f32 %v715, 0.0
  %v790 = vmax.f32 %v720, 0.0
  %v791 = vmax.f32 %v725, 0.0
  %v792 = vmax.f32 %v730, 0.0
  %v793 = vmax.f32 %v735, 0.0
  %v794 = vmax.f32 %v740, 0.0
  %v795 = vmax.f32 %v745, 0.0
  %v796 = vmax.f32 %v750, 0.0
  %v797 = vmax.f32 %v755, 0.0
  %v798 = vmax.f32 %v760, 0.0
  %v799 = vmax.f32 %v765, 0.0
  %v800 = vmax.f32 %v383, %v768
  %v801 = vmax.f32 %v384, %v769
  %v802 = vmax.f32 %v385, %v770
  %v803 = vmax.f32 %v386, %v771
  %v804 = vmax.f32 %v387, %v772
  %v805 = vmax.f32 %v388, %v773
  %v806 = vmax.f32 %v389, %v774
  %v807 = vmax.f32 %v390, %v775
  %v808 = vmax.f32 %v391, %v776
  %v809 = vmax.f32 %v392, %v777
  %v810 = vmax.f32 %v393, %v778
  %v811 = vmax.f32 %v394, %v779
  %v812 = vmax.f32 %v395, %v780
  %v813 = vmax.f32 %v396, %v781
  %v814 = vmax.f32 %v397, %v782
  %v815 = vmax.f32 %v398, %v783
  %v816 = vmax.f32 %v399, %v784
  %v817 = vmax.f32 %v400, %v785
  %v818 = vmax.f32 %v401, %v786
  %v819 = vmax.f32 %v402, %v787
  %v820 = vmax.f32 %v403, %v788
  %v821 = vmax.f32 %v404, %v789
  %v822 = vmax.f32 %v405, %v790
  %v823 = vmax.f32 %v406, %v791
  %v824 = vmax.f32 %v407, %v792
  %v825 = vmax.f32 %v408, %v793
  %v826 = vmax.f32 %v409, %v794
  %v827 = vmax.f32 %v410, %v795
  %v828 = vmax.f32 %v411, %v796
  %v829 = vmax.f32 %v412, %v797
  %v830 = vmax.f32 %v413, %v798
  %v831 = vmax.f32 %v414, %v799
  %v832 = vld [vmem:[%s0 + $0x200] sm:$0xff]
  %v833 = vld [vmem:[%s0 + $0x208] sm:$0xff]
  %v834 = vld [vmem:[%s0 + $0x210] sm:$0xff]
  %v835 = vld [vmem:[%s0 + $0x218] sm:$0xff]
  %v836 = vld [vmem:[%s0 + $0x220] sm:$0xff]
  %v837 = vld [vmem:[%s0 + $0x228] sm:$0xff]
  %v838 = vld [vmem:[%s0 + $0x230] sm:$0xff]
  %v839 = vld [vmem:[%s0 + $0x238] sm:$0xff]
  %v840 = vld [vmem:[%s0 + $0x240] sm:$0xff]
  %v841 = vld [vmem:[%s0 + $0x248] sm:$0xff]
  %v842 = vld [vmem:[%s0 + $0x250] sm:$0xff]
  %v843 = vld [vmem:[%s0 + $0x258] sm:$0xff]
  %v844 = vld [vmem:[%s0 + $0x260] sm:$0xff]
  %v845 = vld [vmem:[%s0 + $0x268] sm:$0xff]
  %v846 = vld [vmem:[%s0 + $0x270] sm:$0xff]
  %v847 = vld [vmem:[%s0 + $0x278] sm:$0xff]
  %v848 = vld [vmem:[%s0 + $0x280] sm:$0xff]
  %v849 = vld [vmem:[%s0 + $0x288] sm:$0xff]
  %v850 = vld [vmem:[%s0 + $0x290] sm:$0xff]
  %v851 = vld [vmem:[%s0 + $0x298] sm:$0xff]
  %v852 = vld [vmem:[%s0 + $0x2a0] sm:$0xff]
  %v853 = vld [vmem:[%s0 + $0x2a8] sm:$0xff]
  %v854 = vld [vmem:[%s0 + $0x2b0] sm:$0xff]
  %v855 = vld [vmem:[%s0 + $0x2b8] sm:$0xff]
  %v856 = vld [vmem:[%s0 + $0x2c0] sm:$0xff]
  %v857 = vld [vmem:[%s0 + $0x2c8] sm:$0xff]
  %v858 = vld [vmem:[%s0 + $0x2d0] sm:$0xff]
  %v859 = vld [vmem:[%s0 + $0x2d8] sm:$0xff]
  %v860 = vld [vmem:[%s0 + $0x2e0] sm:$0xff]
  %v861 = vld [vmem:[%s0 + $0x2e8] sm:$0xff]
  %v862 = vld [vmem:[%s0 + $0x2f0] sm:$0xff]
  %v863 = vld [vmem:[%s0 + $0x2f8] sm:$0xff]
  %v865 = vsel %vm57, %v832, 0
  %v868 = vsel %vm57, %v833, 0
  %v871 = vsel %vm57, %v834, 0
  %v874 = vsel %vm57, %v835, 0
  %v877 = vsel %vm57, %v836, 0
  %v880 = vsel %vm57, %v837, 0
  %v883 = vsel %vm57, %v838, 0
  %v886 = vsel %vm57, %v839, 0
  %v889 = vsel %vm57, %v840, 0
  %v892 = vsel %vm57, %v841, 0
  %v895 = vsel %vm57, %v842, 0
  %v898 = vsel %vm57, %v843, 0
  %v901 = vsel %vm57, %v844, 0
  %v904 = vsel %vm57, %v845, 0
  %v907 = vsel %vm57, %v846, 0
  %v910 = vsel %vm57, %v847, 0
  %v913 = vsel %vm57, %v848, 0
  %v916 = vsel %vm57, %v849, 0
  %v919 = vsel %vm57, %v850, 0
  %v922 = vsel %vm57, %v851, 0
  %v925 = vsel %vm57, %v852, 0
  %v928 = vsel %vm57, %v853, 0
  %v931 = vsel %vm57, %v854, 0
  %v934 = vsel %vm57, %v855, 0
  %v937 = vsel %vm57, %v856, 0
  %v940 = vsel %vm57, %v857, 0
  %v943 = vsel %vm57, %v858, 0
  %v946 = vsel %vm57, %v859, 0
  %v949 = vsel %vm57, %v860, 0
  %v952 = vsel %vm57, %v861, 0
  %v955 = vsel %vm57, %v862, 0
  %v958 = vsel %vm57, %v863, 0
  %960 = vmatprep.subr.mxu0 0.0
  %961 = vmatpush1.msra.mxu0 %v46
  %962 = vmatprep.subr.mxu0 0.0
  %963 = vmatpush1.msra.mxu0 %v47
  %964 = vmatprep.subr.mxu0 0.0
  %965 = vmatpush1.msra.mxu0 %v48
  %966 = vmatprep.subr.mxu0 0.0
  %967 = vmatpush1.msra.mxu0 %v156
  %968 = vmatprep.subr.mxu0 0.0
  %969 = vmatpush1.msra.mxu0 0.0
  %970 = vmatprep.subr.mxu0 0.0
  %971 = vmatpush1.msra.mxu0 0.0
  %972 = vmatprep.subr.mxu0 0.0
  %973 = vmatpush1.msra.mxu0 0.0
  %974 = vmatprep.subr.mxu0 0.0
  %975 = vmatpush1.msra.mxu0 0.0
  %976 = vmatprep.subr.mxu0 0.0
  %977 = vmatpush1.msra.mxu0 0.0
  %978 = vmatprep.subr.mxu0 0.0
  %979 = vmatpush1.msra.mxu0 0.0
  %980 = vmatprep.subr.mxu0 0.0
  %981 = vmatpush1.msra.mxu0 0.0
  %982 = vmatprep.subr.mxu0 0.0
  %983 = vmatpush1.msra.mxu0 0.0
  %984 = vmatprep.subr.mxu0 0.0
  %985 = vmatpush1.msra.mxu0 0.0
  %986 = vmatprep.subr.mxu0 0.0
  %987 = vmatpush1.msra.mxu0 0.0
  %988 = vmatprep.subr.mxu0 0.0
  %989 = vmatpush1.msra.mxu0 0.0
  %990 = vmatprep.subr.mxu0 0.0
  %991 = vmatpush1.msra.mxu0 0.0
  %992 = vmatprep.subr.mxu0 0.0
  %993 = vmatpush1.msra.mxu0 0.0
  %994 = vmatprep.subr.mxu0 0.0
  %995 = vmatpush1.msra.mxu0 0.0
  %996 = vmatprep.subr.mxu0 0.0
  %997 = vmatpush1.msra.mxu0 0.0
  %998 = vmatprep.subr.mxu0 0.0
  %999 = vmatpush1.msra.mxu0 0.0
  %1000 = vmatprep.subr.mxu0 0.0
  %1001 = vmatpush1.msra.mxu0 0.0
  %1002 = vmatprep.subr.mxu0 0.0
  %1003 = vmatpush1.msra.mxu0 0.0
  %1004 = vmatprep.subr.mxu0 0.0
  %1005 = vmatpush1.msra.mxu0 0.0
  %1006 = vmatprep.subr.mxu0 0.0
  %1007 = vmatpush1.msra.mxu0 0.0
  %1008 = vmatprep.subr.mxu0 0.0
  %1009 = vmatpush1.msra.mxu0 0.0
  %1010 = vmatprep.subr.mxu0 0.0
  %1011 = vmatpush1.msra.mxu0 0.0
  %1012 = vmatprep.subr.mxu0 0.0
  %1013 = vmatpush1.msra.mxu0 0.0
  %1014 = vmatprep.subr.mxu0 0.0
  %1015 = vmatpush1.msra.mxu0 0.0
  %1016 = vmatprep.subr.mxu0 0.0
  %1017 = vmatpush1.msra.mxu0 0.0
  %1018 = vmatprep.subr.mxu0 0.0
  %1019 = vmatpush1.msra.mxu0 0.0
  %1020 = vmatprep.subr.mxu0 0.0
  %1021 = vmatpush1.msra.mxu0 0.0
  %1022 = vmatprep.subr.mxu0 0.0
  %1023 = vmatpush1.msra.mxu0 0.0
  %1024 = vmatprep.mubr.f32.mxu0 0.0
  %1025 = vmatmul.mubr.f32.gmra.mrb[0].mxu0 %v865
  %v1026 = vpop.f32.mrb[0].mxu0
  %v1027 = vadd.f32 %v55, %v1026
  %v1028 = vpop.f32.mrb[0].mxu0
  %1029 = vmatprep.mubr.f32.mxu0 0.0
  %1030 = vmatmul.mubr.f32.gmra.mrb[0].mxu0 %v868
  %v1031 = vpop.f32.mrb[0].mxu0
  %v1032 = vadd.f32 %v55, %v1031
  %v1033 = vpop.f32.mrb[0].mxu0
  %1034 = vmatprep.mubr.f32.mxu0 0.0
  %1035 = vmatmul.mubr.f32.gmra.mrb[0].mxu0 %v871
  %v1036 = vpop.f32.mrb[0].mxu0
  %v1037 = vadd.f32 %v55, %v1036
  %v1038 = vpop.f32.mrb[0].mxu0
  %1039 = vmatprep.mubr.f32.mxu0 0.0
  %1040 = vmatmul.mubr.f32.gmra.mrb[0].mxu0 %v874
  %v1041 = vpop.f32.mrb[0].mxu0
  %v1042 = vadd.f32 %v55, %v1041
  %v1043 = vpop.f32.mrb[0].mxu0
  %1044 = vmatprep.mubr.f32.mxu0 0.0
  %1045 = vmatmul.mubr.f32.gmra.mrb[0].mxu0 %v877
  %v1046 = vpop.f32.mrb[0].mxu0
  %v1047 = vadd.f32 %v55, %v1046
  %v1048 = vpop.f32.mrb[0].mxu0
  %1049 = vmatprep.mubr.f32.mxu0 0.0
  %1050 = vmatmul.mubr.f32.gmra.mrb[0].mxu0 %v880
  %v1051 = vpop.f32.mrb[0].mxu0
  %v1052 = vadd.f32 %v55, %v1051
  %v1053 = vpop.f32.mrb[0].mxu0
  %1054 = vmatprep.mubr.f32.mxu0 0.0
  %1055 = vmatmul.mubr.f32.gmra.mrb[0].mxu0 %v883
  %v1056 = vpop.f32.mrb[0].mxu0
  %v1057 = vadd.f32 %v55, %v1056
  %v1058 = vpop.f32.mrb[0].mxu0
  %1059 = vmatprep.mubr.f32.mxu0 0.0
  %1060 = vmatmul.mubr.f32.gmra.mrb[0].mxu0 %v886
  %v1061 = vpop.f32.mrb[0].mxu0
  %v1062 = vadd.f32 %v55, %v1061
  %v1063 = vpop.f32.mrb[0].mxu0
  %1064 = vmatprep.mubr.f32.mxu0 0.0
  %1065 = vmatmul.mubr.f32.gmra.mrb[0].mxu0 %v889
  %v1066 = vpop.f32.mrb[0].mxu0
  %v1067 = vadd.f32 %v55, %v1066
  %v1068 = vpop.f32.mrb[0].mxu0
  %1069 = vmatprep.mubr.f32.mxu0 0.0
  %1070 = vmatmul.mubr.f32.gmra.mrb[0].mxu0 %v892
  %v1071 = vpop.f32.mrb[0].mxu0
  %v1072 = vadd.f32 %v55, %v1071
  %v1073 = vpop.f32.mrb[0].mxu0
  %1074 = vmatprep.mubr.f32.mxu0 0.0
  %1075 = vmatmul.mubr.f32.gmra.mrb[0].mxu0 %v895
  %v1076 = vpop.f32.mrb[0].mxu0
  %v1077 = vadd.f32 %v55, %v1076
  %v1078 = vpop.f32.mrb[0].mxu0
  %1079 = vmatprep.mubr.f32.mxu0 0.0
  %1080 = vmatmul.mubr.f32.gmra.mrb[0].mxu0 %v898
  %v1081 = vpop.f32.mrb[0].mxu0
  %v1082 = vadd.f32 %v55, %v1081
  %v1083 = vpop.f32.mrb[0].mxu0
  %1084 = vmatprep.mubr.f32.mxu0 0.0
  %1085 = vmatmul.mubr.f32.gmra.mrb[0].mxu0 %v901
  %v1086 = vpop.f32.mrb[0].mxu0
  %v1087 = vadd.f32 %v55, %v1086
  %v1088 = vpop.f32.mrb[0].mxu0
  %1089 = vmatprep.mubr.f32.mxu0 0.0
  %1090 = vmatmul.mubr.f32.gmra.mrb[0].mxu0 %v904
  %v1091 = vpop.f32.mrb[0].mxu0
  %v1092 = vadd.f32 %v55, %v1091
  %v1093 = vpop.f32.mrb[0].mxu0
  %1094 = vmatprep.mubr.f32.mxu0 0.0
  %1095 = vmatmul.mubr.f32.gmra.mrb[0].mxu0 %v907
  %v1096 = vpop.f32.mrb[0].mxu0
  %v1097 = vadd.f32 %v55, %v1096
  %v1098 = vpop.f32.mrb[0].mxu0
  %1099 = vmatprep.mubr.f32.mxu0 0.0
  %1100 = vmatmul.mubr.f32.gmra.mrb[0].mxu0 %v910
  %v1101 = vpop.f32.mrb[0].mxu0
  %v1102 = vadd.f32 %v55, %v1101
  %v1103 = vpop.f32.mrb[0].mxu0
  %1104 = vmatprep.mubr.f32.mxu0 0.0
  %1105 = vmatmul.mubr.f32.gmra.mrb[0].mxu0 %v913
  %v1106 = vpop.f32.mrb[0].mxu0
  %v1107 = vadd.f32 %v55, %v1106
  %v1108 = vpop.f32.mrb[0].mxu0
  %1109 = vmatprep.mubr.f32.mxu0 0.0
  %1110 = vmatmul.mubr.f32.gmra.mrb[0].mxu0 %v916
  %v1111 = vpop.f32.mrb[0].mxu0
  %v1112 = vadd.f32 %v55, %v1111
  %v1113 = vpop.f32.mrb[0].mxu0
  %1114 = vmatprep.mubr.f32.mxu0 0.0
  %1115 = vmatmul.mubr.f32.gmra.mrb[0].mxu0 %v919
  %v1116 = vpop.f32.mrb[0].mxu0
  %v1117 = vadd.f32 %v55, %v1116
  %v1118 = vpop.f32.mrb[0].mxu0
  %1119 = vmatprep.mubr.f32.mxu0 0.0
  %1120 = vmatmul.mubr.f32.gmra.mrb[0].mxu0 %v922
  %v1121 = vpop.f32.mrb[0].mxu0
  %v1122 = vadd.f32 %v55, %v1121
  %v1123 = vpop.f32.mrb[0].mxu0
  %1124 = vmatprep.mubr.f32.mxu0 0.0
  %1125 = vmatmul.mubr.f32.gmra.mrb[0].mxu0 %v925
  %v1126 = vpop.f32.mrb[0].mxu0
  %v1127 = vadd.f32 %v55, %v1126
  %v1128 = vpop.f32.mrb[0].mxu0
  %1129 = vmatprep.mubr.f32.mxu0 0.0
  %1130 = vmatmul.mubr.f32.gmra.mrb[0].mxu0 %v928
  %v1131 = vpop.f32.mrb[0].mxu0
  %v1132 = vadd.f32 %v55, %v1131
  %v1133 = vpop.f32.mrb[0].mxu0
  %1134 = vmatprep.mubr.f32.mxu0 0.0
  %1135 = vmatmul.mubr.f32.gmra.mrb[0].mxu0 %v931
  %v1136 = vpop.f32.mrb[0].mxu0
  %v1137 = vadd.f32 %v55, %v1136
  %v1138 = vpop.f32.mrb[0].mxu0
  %1139 = vmatprep.mubr.f32.mxu0 0.0
  %1140 = vmatmul.mubr.f32.gmra.mrb[0].mxu0 %v934
  %v1141 = vpop.f32.mrb[0].mxu0
  %v1142 = vadd.f32 %v55, %v1141
  %v1143 = vpop.f32.mrb[0].mxu0
  %1144 = vmatprep.mubr.f32.mxu0 0.0
  %1145 = vmatmul.mubr.f32.gmra.mrb[0].mxu0 %v937
  %v1146 = vpop.f32.mrb[0].mxu0
  %v1147 = vadd.f32 %v55, %v1146
  %v1148 = vpop.f32.mrb[0].mxu0
  %1149 = vmatprep.mubr.f32.mxu0 0.0
  %1150 = vmatmul.mubr.f32.gmra.mrb[0].mxu0 %v940
  %v1151 = vpop.f32.mrb[0].mxu0
  %v1152 = vadd.f32 %v55, %v1151
  %v1153 = vpop.f32.mrb[0].mxu0
  %1154 = vmatprep.mubr.f32.mxu0 0.0
  %1155 = vmatmul.mubr.f32.gmra.mrb[0].mxu0 %v943
  %v1156 = vpop.f32.mrb[0].mxu0
  %v1157 = vadd.f32 %v55, %v1156
  %v1158 = vpop.f32.mrb[0].mxu0
  %1159 = vmatprep.mubr.f32.mxu0 0.0
  %1160 = vmatmul.mubr.f32.gmra.mrb[0].mxu0 %v946
  %v1161 = vpop.f32.mrb[0].mxu0
  %v1162 = vadd.f32 %v55, %v1161
  %v1163 = vpop.f32.mrb[0].mxu0
  %1164 = vmatprep.mubr.f32.mxu0 0.0
  %1165 = vmatmul.mubr.f32.gmra.mrb[0].mxu0 %v949
  %v1166 = vpop.f32.mrb[0].mxu0
  %v1167 = vadd.f32 %v55, %v1166
  %v1168 = vpop.f32.mrb[0].mxu0
  %1169 = vmatprep.mubr.f32.mxu0 0.0
  %1170 = vmatmul.mubr.f32.gmra.mrb[0].mxu0 %v952
  %v1171 = vpop.f32.mrb[0].mxu0
  %v1172 = vadd.f32 %v55, %v1171
  %v1173 = vpop.f32.mrb[0].mxu0
  %1174 = vmatprep.mubr.f32.mxu0 0.0
  %1175 = vmatmul.mubr.f32.gmra.mrb[0].mxu0 %v955
  %v1176 = vpop.f32.mrb[0].mxu0
  %v1177 = vadd.f32 %v55, %v1176
  %v1178 = vpop.f32.mrb[0].mxu0
  %1179 = vmatprep.mubr.f32.mxu0 0.0
  %1180 = vmatmul.mubr.f32.gmra.mrb[0].mxu0 %v958
  %v1181 = vpop.f32.mrb[0].mxu0
  %v1182 = vadd.f32 %v55, %v1181
  %v1183 = vpop.f32.mrb[0].mxu0
  %1184 = vdwg.mxu0
  %v1185 = vmax.f32 %v1027, 0.0
  %v1186 = vmax.f32 %v1032, 0.0
  %v1187 = vmax.f32 %v1037, 0.0
  %v1188 = vmax.f32 %v1042, 0.0
  %v1189 = vmax.f32 %v1047, 0.0
  %v1190 = vmax.f32 %v1052, 0.0
  %v1191 = vmax.f32 %v1057, 0.0
  %v1192 = vmax.f32 %v1062, 0.0
  %v1193 = vmax.f32 %v1067, 0.0
  %v1194 = vmax.f32 %v1072, 0.0
  %v1195 = vmax.f32 %v1077, 0.0
  %v1196 = vmax.f32 %v1082, 0.0
  %v1197 = vmax.f32 %v1087, 0.0
  %v1198 = vmax.f32 %v1092, 0.0
  %v1199 = vmax.f32 %v1097, 0.0
  %v1200 = vmax.f32 %v1102, 0.0
  %v1201 = vmax.f32 %v1107, 0.0
  %v1202 = vmax.f32 %v1112, 0.0
  %v1203 = vmax.f32 %v1117, 0.0
  %v1204 = vmax.f32 %v1122, 0.0
  %v1205 = vmax.f32 %v1127, 0.0
  %v1206 = vmax.f32 %v1132, 0.0
  %v1207 = vmax.f32 %v1137, 0.0
  %v1208 = vmax.f32 %v1142, 0.0
  %v1209 = vmax.f32 %v1147, 0.0
  %v1210 = vmax.f32 %v1152, 0.0
  %v1211 = vmax.f32 %v1157, 0.0
  %v1212 = vmax.f32 %v1162, 0.0
  %v1213 = vmax.f32 %v1167, 0.0
  %v1214 = vmax.f32 %v1172, 0.0
  %v1215 = vmax.f32 %v1177, 0.0
  %v1216 = vmax.f32 %v1182, 0.0
  %v1217 = vmax.f32 %v800, %v1185
  %v1218 = vmax.f32 %v801, %v1186
  %v1219 = vmax.f32 %v802, %v1187
  %v1220 = vmax.f32 %v803, %v1188
  %v1221 = vmax.f32 %v804, %v1189
  %v1222 = vmax.f32 %v805, %v1190
  %v1223 = vmax.f32 %v806, %v1191
  %v1224 = vmax.f32 %v807, %v1192
  %v1225 = vmax.f32 %v808, %v1193
  %v1226 = vmax.f32 %v809, %v1194
  %v1227 = vmax.f32 %v810, %v1195
  %v1228 = vmax.f32 %v811, %v1196
  %v1229 = vmax.f32 %v812, %v1197
  %v1230 = vmax.f32 %v813, %v1198
  %v1231 = vmax.f32 %v814, %v1199
  %v1232 = vmax.f32 %v815, %v1200
  %v1233 = vmax.f32 %v816, %v1201
  %v1234 = vmax.f32 %v817, %v1202
  %v1235 = vmax.f32 %v818, %v1203
  %v1236 = vmax.f32 %v819, %v1204
  %v1237 = vmax.f32 %v820, %v1205
  %v1238 = vmax.f32 %v821, %v1206
  %v1239 = vmax.f32 %v822, %v1207
  %v1240 = vmax.f32 %v823, %v1208
  %v1241 = vmax.f32 %v824, %v1209
  %v1242 = vmax.f32 %v825, %v1210
  %v1243 = vmax.f32 %v826, %v1211
  %v1244 = vmax.f32 %v827, %v1212
  %v1245 = vmax.f32 %v828, %v1213
  %v1246 = vmax.f32 %v829, %v1214
  %v1247 = vmax.f32 %v830, %v1215
  %v1248 = vmax.f32 %v831, %v1216
  %v1249 = vld [vmem:[%s0 + $0x300] sm:$0xff]
  %v1250 = vld [vmem:[%s0 + $0x308] sm:$0xff]
  %v1251 = vld [vmem:[%s0 + $0x310] sm:$0xff]
  %v1252 = vld [vmem:[%s0 + $0x318] sm:$0xff]
  %v1253 = vld [vmem:[%s0 + $0x320] sm:$0xff]
  %v1254 = vld [vmem:[%s0 + $0x328] sm:$0xff]
  %v1255 = vld [vmem:[%s0 + $0x330] sm:$0xff]
  %v1256 = vld [vmem:[%s0 + $0x338] sm:$0xff]
  %v1257 = vld [vmem:[%s0 + $0x340] sm:$0xff]
  %v1258 = vld [vmem:[%s0 + $0x348] sm:$0xff]
  %v1259 = vld [vmem:[%s0 + $0x350] sm:$0xff]
  %v1260 = vld [vmem:[%s0 + $0x358] sm:$0xff]
  %v1261 = vld [vmem:[%s0 + $0x360] sm:$0xff]
  %v1262 = vld [vmem:[%s0 + $0x368] sm:$0xff]
  %v1263 = vld [vmem:[%s0 + $0x370] sm:$0xff]
  %v1264 = vld [vmem:[%s0 + $0x378] sm:$0xff]
  %v1265 = vld [vmem:[%s0 + $0x380] sm:$0xff]
  %v1266 = vld [vmem:[%s0 + $0x388] sm:$0xff]
  %v1267 = vld [vmem:[%s0 + $0x390] sm:$0xff]
  %v1268 = vld [vmem:[%s0 + $0x398] sm:$0xff]
  %v1269 = vld [vmem:[%s0 + $0x3a0] sm:$0xff]
  %v1270 = vld [vmem:[%s0 + $0x3a8] sm:$0xff]
  %v1271 = vld [vmem:[%s0 + $0x3b0] sm:$0xff]
  %v1272 = vld [vmem:[%s0 + $0x3b8] sm:$0xff]
  %v1273 = vld [vmem:[%s0 + $0x3c0] sm:$0xff]
  %v1274 = vld [vmem:[%s0 + $0x3c8] sm:$0xff]
  %v1275 = vld [vmem:[%s0 + $0x3d0] sm:$0xff]
  %v1276 = vld [vmem:[%s0 + $0x3d8] sm:$0xff]
  %v1277 = vld [vmem:[%s0 + $0x3e0] sm:$0xff]
  %v1278 = vld [vmem:[%s0 + $0x3e8] sm:$0xff]
  %v1279 = vld [vmem:[%s0 + $0x3f0] sm:$0xff]
  %v1280 = vld [vmem:[%s0 + $0x3f8] sm:$0xff]
  %v1282 = vsel %vm57, %v1249, 0
  %v1285 = vsel %vm57, %v1250, 0
  %v1288 = vsel %vm57, %v1251, 0
  %v1291 = vsel %vm57, %v1252, 0
  %v1294 = vsel %vm57, %v1253, 0
  %v1297 = vsel %vm57, %v1254, 0
  %v1300 = vsel %vm57, %v1255, 0
  %v1303 = vsel %vm57, %v1256, 0
  %v1306 = vsel %vm57, %v1257, 0
  %v1309 = vsel %vm57, %v1258, 0
  %v1312 = vsel %vm57, %v1259, 0
  %v1315 = vsel %vm57, %v1260, 0
  %v1318 = vsel %vm57, %v1261, 0
  %v1321 = vsel %vm57, %v1262, 0
  %v1324 = vsel %vm57, %v1263, 0
  %v1327 = vsel %vm57, %v1264, 0
  %v1330 = vsel %vm57, %v1265, 0
  %v1333 = vsel %vm57, %v1266, 0
  %v1336 = vsel %vm57, %v1267, 0
  %v1339 = vsel %vm57, %v1268, 0
  %v1342 = vsel %vm57, %v1269, 0
  %v1345 = vsel %vm57, %v1270, 0
  %v1348 = vsel %vm57, %v1271, 0
  %v1351 = vsel %vm57, %v1272, 0
  %v1354 = vsel %vm57, %v1273, 0
  %v1357 = vsel %vm57, %v1274, 0
  %v1360 = vsel %vm57, %v1275, 0
  %v1363 = vsel %vm57, %v1276, 0
  %v1366 = vsel %vm57, %v1277, 0
  %v1369 = vsel %vm57, %v1278, 0
  %v1372 = vsel %vm57, %v1279, 0
  %v1375 = vsel %vm57, %v1280, 0
  %1377 = vmatprep.subr.mxu0 0.0
  %1378 = vmatpush1.msra.mxu0 %v46
  %1379 = vmatprep.subr.mxu0 0.0
  %1380 = vmatpush1.msra.mxu0 %v47
  %1381 = vmatprep.subr.mxu0 0.0
  %1382 = vmatpush1.msra.mxu0 %v48
  %1383 = vmatprep.subr.mxu0 0.0
  %1384 = vmatpush1.msra.mxu0 %v156
  %1385 = vmatprep.subr.mxu0 0.0
  %1386 = vmatpush1.msra.mxu0 0.0
  %1387 = vmatprep.subr.mxu0 0.0
  %1388 = vmatpush1.msra.mxu0 0.0
  %1389 = vmatprep.subr.mxu0 0.0
  %1390 = vmatpush1.msra.mxu0 0.0
  %1391 = vmatprep.subr.mxu0 0.0
  %1392 = vmatpush1.msra.mxu0 0.0
  %1393 = vmatprep.subr.mxu0 0.0
  %1394 = vmatpush1.msra.mxu0 0.0
  %1395 = vmatprep.subr.mxu0 0.0
  %1396 = vmatpush1.msra.mxu0 0.0
  %1397 = vmatprep.subr.mxu0 0.0
  %1398 = vmatpush1.msra.mxu0 0.0
  %1399 = vmatprep.subr.mxu0 0.0
  %1400 = vmatpush1.msra.mxu0 0.0
  %1401 = vmatprep.subr.mxu0 0.0
  %1402 = vmatpush1.msra.mxu0 0.0
  %1403 = vmatprep.subr.mxu0 0.0
  %1404 = vmatpush1.msra.mxu0 0.0
  %1405 = vmatprep.subr.mxu0 0.0
  %1406 = vmatpush1.msra.mxu0 0.0
  %1407 = vmatprep.subr.mxu0 0.0
  %1408 = vmatpush1.msra.mxu0 0.0
  %1409 = vmatprep.subr.mxu0 0.0
  %1410 = vmatpush1.msra.mxu0 0.0
  %1411 = vmatprep.subr.mxu0 0.0
  %1412 = vmatpush1.msra.mxu0 0.0
  %1413 = vmatprep.subr.mxu0 0.0
  %1414 = vmatpush1.msra.mxu0 0.0
  %1415 = vmatprep.subr.mxu0 0.0
  %1416 = vmatpush1.msra.mxu0 0.0
  %1417 = vmatprep.subr.mxu0 0.0
  %1418 = vmatpush1.msra.mxu0 0.0
  %1419 = vmatprep.subr.mxu0 0.0
  %1420 = vmatpush1.msra.mxu0 0.0
  %1421 = vmatprep.subr.mxu0 0.0
  %1422 = vmatpush1.msra.mxu0 0.0
  %1423 = vmatprep.subr.mxu0 0.0
  %1424 = vmatpush1.msra.mxu0 0.0
  %1425 = vmatprep.subr.mxu0 0.0
  %1426 = vmatpush1.msra.mxu0 0.0
  %1427 = vmatprep.subr.mxu0 0.0
  %1428 = vmatpush1.msra.mxu0 0.0
  %1429 = vmatprep.subr.mxu0 0.0
  %1430 = vmatpush1.msra.mxu0 0.0
  %1431 = vmatprep.subr.mxu0 0.0
  %1432 = vmatpush1.msra.mxu0 0.0
  %1433 = vmatprep.subr.mxu0 0.0
  %1434 = vmatpush1.msra.mxu0 0.0
  %1435 = vmatprep.subr.mxu0 0.0
  %1436 = vmatpush1.msra.mxu0 0.0
  %1437 = vmatprep.subr.mxu0 0.0
  %1438 = vmatpush1.msra.mxu0 0.0
  %1439 = vmatprep.subr.mxu0 0.0
  %1440 = vmatpush1.msra.mxu0 0.0
  %1441 = vmatprep.mubr.f32.mxu0 0.0
  %1442 = vmatmul.mubr.f32.gmra.mrb[0].mxu0 %v1282
  %v1443 = vpop.f32.mrb[0].mxu0
  %v1444 = vadd.f32 %v55, %v1443
  %v1445 = vpop.f32.mrb[0].mxu0
  %1446 = vmatprep.mubr.f32.mxu0 0.0
  %1447 = vmatmul.mubr.f32.gmra.mrb[0].mxu0 %v1285
  %v1448 = vpop.f32.mrb[0].mxu0
  %v1449 = vadd.f32 %v55, %v1448
  %v1450 = vpop.f32.mrb[0].mxu0
  %1451 = vmatprep.mubr.f32.mxu0 0.0
  %1452 = vmatmul.mubr.f32.gmra.mrb[0].mxu0 %v1288
  %v1453 = vpop.f32.mrb[0].mxu0
  %v1454 = vadd.f32 %v55, %v1453
  %v1455 = vpop.f32.mrb[0].mxu0
  %1456 = vmatprep.mubr.f32.mxu0 0.0
  %1457 = vmatmul.mubr.f32.gmra.mrb[0].mxu0 %v1291
  %v1458 = vpop.f32.mrb[0].mxu0
  %v1459 = vadd.f32 %v55, %v1458
  %v1460 = vpop.f32.mrb[0].mxu0
  %1461 = vmatprep.mubr.f32.mxu0 0.0
  %1462 = vmatmul.mubr.f32.gmra.mrb[0].mxu0 %v1294
  %v1463 = vpop.f32.mrb[0].mxu0
  %v1464 = vadd.f32 %v55, %v1463
  %v1465 = vpop.f32.mrb[0].mxu0
  %1466 = vmatprep.mubr.f32.mxu0 0.0
  %1467 = vmatmul.mubr.f32.gmra.mrb[0].mxu0 %v1297
  %v1468 = vpop.f32.mrb[0].mxu0
  %v1469 = vadd.f32 %v55, %v1468
  %v1470 = vpop.f32.mrb[0].mxu0
  %1471 = vmatprep.mubr.f32.mxu0 0.0
  %1472 = vmatmul.mubr.f32.gmra.mrb[0].mxu0 %v1300
  %v1473 = vpop.f32.mrb[0].mxu0
  %v1474 = vadd.f32 %v55, %v1473
  %v1475 = vpop.f32.mrb[0].mxu0
  %1476 = vmatprep.mubr.f32.mxu0 0.0
  %1477 = vmatmul.mubr.f32.gmra.mrb[0].mxu0 %v1303
  %v1478 = vpop.f32.mrb[0].mxu0
  %v1479 = vadd.f32 %v55, %v1478
  %v1480 = vpop.f32.mrb[0].mxu0
  %1481 = vmatprep.mubr.f32.mxu0 0.0
  %1482 = vmatmul.mubr.f32.gmra.mrb[0].mxu0 %v1306
  %v1483 = vpop.f32.mrb[0].mxu0
  %v1484 = vadd.f32 %v55, %v1483
  %v1485 = vpop.f32.mrb[0].mxu0
  %1486 = vmatprep.mubr.f32.mxu0 0.0
  %1487 = vmatmul.mubr.f32.gmra.mrb[0].mxu0 %v1309
  %v1488 = vpop.f32.mrb[0].mxu0
  %v1489 = vadd.f32 %v55, %v1488
  %v1490 = vpop.f32.mrb[0].mxu0
  %1491 = vmatprep.mubr.f32.mxu0 0.0
  %1492 = vmatmul.mubr.f32.gmra.mrb[0].mxu0 %v1312
  %v1493 = vpop.f32.mrb[0].mxu0
  %v1494 = vadd.f32 %v55, %v1493
  %v1495 = vpop.f32.mrb[0].mxu0
  %1496 = vmatprep.mubr.f32.mxu0 0.0
  %1497 = vmatmul.mubr.f32.gmra.mrb[0].mxu0 %v1315
  %v1498 = vpop.f32.mrb[0].mxu0
  %v1499 = vadd.f32 %v55, %v1498
  %v1500 = vpop.f32.mrb[0].mxu0
  %1501 = vmatprep.mubr.f32.mxu0 0.0
  %1502 = vmatmul.mubr.f32.gmra.mrb[0].mxu0 %v1318
  %v1503 = vpop.f32.mrb[0].mxu0
  %v1504 = vadd.f32 %v55, %v1503
  %v1505 = vpop.f32.mrb[0].mxu0
  %1506 = vmatprep.mubr.f32.mxu0 0.0
  %1507 = vmatmul.mubr.f32.gmra.mrb[0].mxu0 %v1321
  %v1508 = vpop.f32.mrb[0].mxu0
  %v1509 = vadd.f32 %v55, %v1508
  %v1510 = vpop.f32.mrb[0].mxu0
  %1511 = vmatprep.mubr.f32.mxu0 0.0
  %1512 = vmatmul.mubr.f32.gmra.mrb[0].mxu0 %v1324
  %v1513 = vpop.f32.mrb[0].mxu0
  %v1514 = vadd.f32 %v55, %v1513
  %v1515 = vpop.f32.mrb[0].mxu0
  %1516 = vmatprep.mubr.f32.mxu0 0.0
  %1517 = vmatmul.mubr.f32.gmra.mrb[0].mxu0 %v1327
  %v1518 = vpop.f32.mrb[0].mxu0
  %v1519 = vadd.f32 %v55, %v1518
  %v1520 = vpop.f32.mrb[0].mxu0
  %1521 = vmatprep.mubr.f32.mxu0 0.0
  %1522 = vmatmul.mubr.f32.gmra.mrb[0].mxu0 %v1330
  %v1523 = vpop.f32.mrb[0].mxu0
  %v1524 = vadd.f32 %v55, %v1523
  %v1525 = vpop.f32.mrb[0].mxu0
  %1526 = vmatprep.mubr.f32.mxu0 0.0
  %1527 = vmatmul.mubr.f32.gmra.mrb[0].mxu0 %v1333
  %v1528 = vpop.f32.mrb[0].mxu0
  %v1529 = vadd.f32 %v55, %v1528
  %v1530 = vpop.f32.mrb[0].mxu0
  %1531 = vmatprep.mubr.f32.mxu0 0.0
  %1532 = vmatmul.mubr.f32.gmra.mrb[0].mxu0 %v1336
  %v1533 = vpop.f32.mrb[0].mxu0
  %v1534 = vadd.f32 %v55, %v1533
  %v1535 = vpop.f32.mrb[0].mxu0
  %1536 = vmatprep.mubr.f32.mxu0 0.0
  %1537 = vmatmul.mubr.f32.gmra.mrb[0].mxu0 %v1339
  %v1538 = vpop.f32.mrb[0].mxu0
  %v1539 = vadd.f32 %v55, %v1538
  %v1540 = vpop.f32.mrb[0].mxu0
  %1541 = vmatprep.mubr.f32.mxu0 0.0
  %1542 = vmatmul.mubr.f32.gmra.mrb[0].mxu0 %v1342
  %v1543 = vpop.f32.mrb[0].mxu0
  %v1544 = vadd.f32 %v55, %v1543
  %v1545 = vpop.f32.mrb[0].mxu0
  %1546 = vmatprep.mubr.f32.mxu0 0.0
  %1547 = vmatmul.mubr.f32.gmra.mrb[0].mxu0 %v1345
  %v1548 = vpop.f32.mrb[0].mxu0
  %v1549 = vadd.f32 %v55, %v1548
  %v1550 = vpop.f32.mrb[0].mxu0
  %1551 = vmatprep.mubr.f32.mxu0 0.0
  %1552 = vmatmul.mubr.f32.gmra.mrb[0].mxu0 %v1348
  %v1553 = vpop.f32.mrb[0].mxu0
  %v1554 = vadd.f32 %v55, %v1553
  %v1555 = vpop.f32.mrb[0].mxu0
  %1556 = vmatprep.mubr.f32.mxu0 0.0
  %1557 = vmatmul.mubr.f32.gmra.mrb[0].mxu0 %v1351
  %v1558 = vpop.f32.mrb[0].mxu0
  %v1559 = vadd.f32 %v55, %v1558
  %v1560 = vpop.f32.mrb[0].mxu0
  %1561 = vmatprep.mubr.f32.mxu0 0.0
  %1562 = vmatmul.mubr.f32.gmra.mrb[0].mxu0 %v1354
  %v1563 = vpop.f32.mrb[0].mxu0
  %v1564 = vadd.f32 %v55, %v1563
  %v1565 = vpop.f32.mrb[0].mxu0
  %1566 = vmatprep.mubr.f32.mxu0 0.0
  %1567 = vmatmul.mubr.f32.gmra.mrb[0].mxu0 %v1357
  %v1568 = vpop.f32.mrb[0].mxu0
  %v1569 = vadd.f32 %v55, %v1568
  %v1570 = vpop.f32.mrb[0].mxu0
  %1571 = vmatprep.mubr.f32.mxu0 0.0
  %1572 = vmatmul.mubr.f32.gmra.mrb[0].mxu0 %v1360
  %v1573 = vpop.f32.mrb[0].mxu0
  %v1574 = vadd.f32 %v55, %v1573
  %v1575 = vpop.f32.mrb[0].mxu0
  %1576 = vmatprep.mubr.f32.mxu0 0.0
  %1577 = vmatmul.mubr.f32.gmra.mrb[0].mxu0 %v1363
  %v1578 = vpop.f32.mrb[0].mxu0
  %v1579 = vadd.f32 %v55, %v1578
  %v1580 = vpop.f32.mrb[0].mxu0
  %1581 = vmatprep.mubr.f32.mxu0 0.0
  %1582 = vmatmul.mubr.f32.gmra.mrb[0].mxu0 %v1366
  %v1583 = vpop.f32.mrb[0].mxu0
  %v1584 = vadd.f32 %v55, %v1583
  %v1585 = vpop.f32.mrb[0].mxu0
  %1586 = vmatprep.mubr.f32.mxu0 0.0
  %1587 = vmatmul.mubr.f32.gmra.mrb[0].mxu0 %v1369
  %v1588 = vpop.f32.mrb[0].mxu0
  %v1589 = vadd.f32 %v55, %v1588
  %v1590 = vpop.f32.mrb[0].mxu0
  %1591 = vmatprep.mubr.f32.mxu0 0.0
  %1592 = vmatmul.mubr.f32.gmra.mrb[0].mxu0 %v1372
  %v1593 = vpop.f32.mrb[0].mxu0
  %v1594 = vadd.f32 %v55, %v1593
  %v1595 = vpop.f32.mrb[0].mxu0
  %1596 = vmatprep.mubr.f32.mxu0 0.0
  %1597 = vmatmul.mubr.f32.gmra.mrb[0].mxu0 %v1375
  %v1598 = vpop.f32.mrb[0].mxu0
  %v1599 = vadd.f32 %v55, %v1598
  %v1600 = vpop.f32.mrb[0].mxu0
  %1601 = vdwg.mxu0
  %v1602 = vmax.f32 %v1444, 0.0
  %v1603 = vmax.f32 %v1449, 0.0
  %v1604 = vmax.f32 %v1454, 0.0
  %v1605 = vmax.f32 %v1459, 0.0
  %v1606 = vmax.f32 %v1464, 0.0
  %v1607 = vmax.f32 %v1469, 0.0
  %v1608 = vmax.f32 %v1474, 0.0
  %v1609 = vmax.f32 %v1479, 0.0
  %v1610 = vmax.f32 %v1484, 0.0
  %v1611 = vmax.f32 %v1489, 0.0
  %v1612 = vmax.f32 %v1494, 0.0
  %v1613 = vmax.f32 %v1499, 0.0
  %v1614 = vmax.f32 %v1504, 0.0
  %v1615 = vmax.f32 %v1509, 0.0
  %v1616 = vmax.f32 %v1514, 0.0
  %v1617 = vmax.f32 %v1519, 0.0
  %v1618 = vmax.f32 %v1524, 0.0
  %v1619 = vmax.f32 %v1529, 0.0
  %v1620 = vmax.f32 %v1534, 0.0
  %v1621 = vmax.f32 %v1539, 0.0
  %v1622 = vmax.f32 %v1544, 0.0
  %v1623 = vmax.f32 %v1549, 0.0
  %v1624 = vmax.f32 %v1554, 0.0
  %v1625 = vmax.f32 %v1559, 0.0
  %v1626 = vmax.f32 %v1564, 0.0
  %v1627 = vmax.f32 %v1569, 0.0
  %v1628 = vmax.f32 %v1574, 0.0
  %v1629 = vmax.f32 %v1579, 0.0
  %v1630 = vmax.f32 %v1584, 0.0
  %v1631 = vmax.f32 %v1589, 0.0
  %v1632 = vmax.f32 %v1594, 0.0
  %v1633 = vmax.f32 %v1599, 0.0
  %v1634 = vmax.f32 %v1217, %v1602
  %v1635 = vmax.f32 %v1218, %v1603
  %v1636 = vmax.f32 %v1219, %v1604
  %v1637 = vmax.f32 %v1220, %v1605
  %v1638 = vmax.f32 %v1221, %v1606
  %v1639 = vmax.f32 %v1222, %v1607
  %v1640 = vmax.f32 %v1223, %v1608
  %v1641 = vmax.f32 %v1224, %v1609
  %v1642 = vmax.f32 %v1225, %v1610
  %v1643 = vmax.f32 %v1226, %v1611
  %v1644 = vmax.f32 %v1227, %v1612
  %v1645 = vmax.f32 %v1228, %v1613
  %v1646 = vmax.f32 %v1229, %v1614
  %v1647 = vmax.f32 %v1230, %v1615
  %v1648 = vmax.f32 %v1231, %v1616
  %v1649 = vmax.f32 %v1232, %v1617
  %v1650 = vmax.f32 %v1233, %v1618
  %v1651 = vmax.f32 %v1234, %v1619
  %v1652 = vmax.f32 %v1235, %v1620
  %v1653 = vmax.f32 %v1236, %v1621
  %v1654 = vmax.f32 %v1237, %v1622
  %v1655 = vmax.f32 %v1238, %v1623
  %v1656 = vmax.f32 %v1239, %v1624
  %v1657 = vmax.f32 %v1240, %v1625
  %v1658 = vmax.f32 %v1241, %v1626
  %v1659 = vmax.f32 %v1242, %v1627
  %v1660 = vmax.f32 %v1243, %v1628
  %v1661 = vmax.f32 %v1244, %v1629
  %v1662 = vmax.f32 %v1245, %v1630
  %v1663 = vmax.f32 %v1246, %v1631
  %v1664 = vmax.f32 %v1247, %v1632
  %v1665 = vmax.f32 %v1248, %v1633
  %1666 = vst [vmem:[%s3] sm:$0xff] %v1634
  %1667 = vst [vmem:[%s3 + $0x8] sm:$0xff] %v1635
  %1668 = vst [vmem:[%s3 + $0x10] sm:$0xff] %v1636
  %1669 = vst [vmem:[%s3 + $0x18] sm:$0xff] %v1637
  %1670 = vst [vmem:[%s3 + $0x20] sm:$0xff] %v1638
  %1671 = vst [vmem:[%s3 + $0x28] sm:$0xff] %v1639
  %1672 = vst [vmem:[%s3 + $0x30] sm:$0xff] %v1640
  %1673 = vst [vmem:[%s3 + $0x38] sm:$0xff] %v1641
  %1674 = vst [vmem:[%s3 + $0x40] sm:$0xff] %v1642
  %1675 = vst [vmem:[%s3 + $0x48] sm:$0xff] %v1643
  %1676 = vst [vmem:[%s3 + $0x50] sm:$0xff] %v1644
  %1677 = vst [vmem:[%s3 + $0x58] sm:$0xff] %v1645
  %1678 = vst [vmem:[%s3 + $0x60] sm:$0xff] %v1646
  %1679 = vst [vmem:[%s3 + $0x68] sm:$0xff] %v1647
  %1680 = vst [vmem:[%s3 + $0x70] sm:$0xff] %v1648
  %1681 = vst [vmem:[%s3 + $0x78] sm:$0xff] %v1649
  %1682 = vst [vmem:[%s3 + $0x80] sm:$0xff] %v1650
  %1683 = vst [vmem:[%s3 + $0x88] sm:$0xff] %v1651
  %1684 = vst [vmem:[%s3 + $0x90] sm:$0xff] %v1652
  %1685 = vst [vmem:[%s3 + $0x98] sm:$0xff] %v1653
  %1686 = vst [vmem:[%s3 + $0xa0] sm:$0xff] %v1654
  %1687 = vst [vmem:[%s3 + $0xa8] sm:$0xff] %v1655
  %1688 = vst [vmem:[%s3 + $0xb0] sm:$0xff] %v1656
  %1689 = vst [vmem:[%s3 + $0xb8] sm:$0xff] %v1657
  %1690 = vst [vmem:[%s3 + $0xc0] sm:$0xff] %v1658
  %1691 = vst [vmem:[%s3 + $0xc8] sm:$0xff] %v1659
  %1692 = vst [vmem:[%s3 + $0xd0] sm:$0xff] %v1660
  %1693 = vst [vmem:[%s3 + $0xd8] sm:$0xff] %v1661
  %1694 = vst [vmem:[%s3 + $0xe0] sm:$0xff] %v1662
  %1695 = vst [vmem:[%s3 + $0xe8] sm:$0xff] %v1663
  %1696 = vst [vmem:[%s3 + $0xf0] sm:$0xff] %v1664
  %1697 = vst [vmem:[%s3 + $0xf8] sm:$0xff] %v1665
  // Predicated region
  $region14: #{siamese_forward.3} parent=0 // pred_check
    _
  $region15: #{siamese_forward.3} parent=0 // pred_check_branch
    %1699 = sbr.rel (0) target = $region17
  $region16: #{siamese_forward.3} parent=0 // pred_region
    _
  $region17: #{siamese_forward.3} parent=0 // pred_fallthru
    _
  // Predicated region
  $region18: #{siamese_forward.3} parent=0 // pred_check
    _
  $region19: #{siamese_forward.3} parent=0 // pred_check_branch
    %1701 = sbr.rel (0) target = $region21
  $region20: #{siamese_forward.3} parent=0 // pred_region
    _
  $region21: #{siamese_forward.3} parent=0 // pred_fallthru
    _

// kernel: siamese_forward.4
$region0: #{siamese_forward.4}
  #allocation0 [shape = 'u32[]', space=smem, size = 0x4, offset = 0x4, fixed_abs, tag = 'smem constant byte address 0x4 - core index']
  #allocation1 [shape = 'u32[144,128]{1,0:T(1,128)}', space=vmem, size = 0x12000, scoped, tag = 'internal scratch']
  %s0 = inlined_call_operand.vmem [shape: f32[256,1152], index: 0, kind: input, shape index: {}]
  %s1 = inlined_call_operand.vmem [shape: f32[1152,256], index: 1, kind: input, shape index: {}]
  %s2 = inlined_call_operand.vmem [shape: f32[1,256], index: 2, kind: input, shape index: {}]
  %s3 = inlined_call_operand.vmem [shape: f32[64,256], index: 3, kind: output, shape index: {}]
  %s4 = sld [smem:[#allocation0]]
  $region22: #{siamese_forward.4} parent=0
    _
  %s6 = ssub.s32 1, %s4
  %s7 = scalar_select 0, %s6, %s4
  // Predicated region
  $region2: #{siamese_forward.4} parent=0 // pred_check
    _
  $region3: #{siamese_forward.4} parent=0 // pred_check_branch
    %9 = sbr.rel (0) target = $region5
  $region4: #{siamese_forward.4} parent=0 // pred_region
    _
  $region5: #{siamese_forward.4} parent=0 // pred_fallthru
    _
  // Predicated region
  $region6: #{siamese_forward.4} parent=0 // pred_check
    _
  $region7: #{siamese_forward.4} parent=0 // pred_check_branch
    %11 = sbr.rel (0) target = $region9
  $region8: #{siamese_forward.4} parent=0 // pred_region
    _
  $region9: #{siamese_forward.4} parent=0 // pred_fallthru
    _
  // Predicated region
  $region10: #{siamese_forward.4} parent=0 // pred_check
    _
  $region11: #{siamese_forward.4} parent=0 // pred_check_branch
    %13 = sbr.rel (0) target = $region13
  $region12: #{siamese_forward.4} parent=0 // pred_region
    _
  $region13: #{siamese_forward.4} parent=0 // pred_fallthru
    _
  %v14 = vld [vmem:[%s0] sm:$0xff]
  %v15 = vld [vmem:[%s0 + $0x8] sm:$0xff]
  %v16 = vld [vmem:[%s0 + $0x10] sm:$0xff]
  %v17 = vld [vmem:[%s0 + $0x18] sm:$0xff]
  %v18 = vld [vmem:[%s0 + $0x20] sm:$0xff]
  %v19 = vld [vmem:[%s0 + $0x28] sm:$0xff]
  %v20 = vld [vmem:[%s0 + $0x30] sm:$0xff]
  %v21 = vld [vmem:[%s0 + $0x38] sm:$0xff]
  %v22 = vld [vmem:[%s0 + $0x40] sm:$0xff]
  %v23 = vld [vmem:[%s0 + $0x48] sm:$0xff]
  %v24 = vld [vmem:[%s0 + $0x50] sm:$0xff]
  %v25 = vld [vmem:[%s0 + $0x58] sm:$0xff]
  %v26 = vld [vmem:[%s0 + $0x60] sm:$0xff]
  %v27 = vld [vmem:[%s0 + $0x68] sm:$0xff]
  %v28 = vld [vmem:[%s0 + $0x70] sm:$0xff]
  %v29 = vld [vmem:[%s0 + $0x78] sm:$0xff]
  %v30 = vld [vmem:[%s0 + $0x80] sm:$0xff]
  %v31 = vld [vmem:[%s0 + $0x88] sm:$0xff]
  %v32 = vld [vmem:[%s0 + $0x90] sm:$0xff]
  %v33 = vld [vmem:[%s0 + $0x98] sm:$0xff]
  %v34 = vld [vmem:[%s0 + $0xa0] sm:$0xff]
  %v35 = vld [vmem:[%s0 + $0xa8] sm:$0xff]
  %v36 = vld [vmem:[%s0 + $0xb0] sm:$0xff]
  %v37 = vld [vmem:[%s0 + $0xb8] sm:$0xff]
  %v38 = vld [vmem:[%s0 + $0xc0] sm:$0xff]
  %v39 = vld [vmem:[%s0 + $0xc8] sm:$0xff]
  %v40 = vld [vmem:[%s0 + $0xd0] sm:$0xff]
  %v41 = vld [vmem:[%s0 + $0xd8] sm:$0xff]
  %v42 = vld [vmem:[%s0 + $0xe0] sm:$0xff]
  %v43 = vld [vmem:[%s0 + $0xe8] sm:$0xff]
  %v44 = vld [vmem:[%s0 + $0xf0] sm:$0xff]
  %v45 = vld [vmem:[%s0 + $0xf8] sm:$0xff]
  %v46 = vld [vmem:[%s0 + $0x100] sm:$0xff]
  %v47 = vld [vmem:[%s0 + $0x108] sm:$0xff]
  %v48 = vld [vmem:[%s0 + $0x110] sm:$0xff]
  %v49 = vld [vmem:[%s0 + $0x118] sm:$0xff]
  %v50 = vld [vmem:[%s0 + $0x120] sm:$0xff]
  %v51 = vld [vmem:[%s0 + $0x128] sm:$0xff]
  %v52 = vld [vmem:[%s0 + $0x130] sm:$0xff]
  %v53 = vld [vmem:[%s0 + $0x138] sm:$0xff]
  %v54 = vld [vmem:[%s0 + $0x140] sm:$0xff]
  %v55 = vld [vmem:[%s0 + $0x148] sm:$0xff]
  %v56 = vld [vmem:[%s0 + $0x150] sm:$0xff]
  %v57 = vld [vmem:[%s0 + $0x158] sm:$0xff]
  %v58 = vld [vmem:[%s0 + $0x160] sm:$0xff]
  %v59 = vld [vmem:[%s0 + $0x168] sm:$0xff]
  %v60 = vld [vmem:[%s0 + $0x170] sm:$0xff]
  %v61 = vld [vmem:[%s0 + $0x178] sm:$0xff]
  %v62 = vld [vmem:[%s0 + $0x180] sm:$0xff]
  %v63 = vld [vmem:[%s0 + $0x188] sm:$0xff]
  %v64 = vld [vmem:[%s0 + $0x190] sm:$0xff]
  %v65 = vld [vmem:[%s0 + $0x198] sm:$0xff]
  %v66 = vld [vmem:[%s0 + $0x1a0] sm:$0xff]
  %v67 = vld [vmem:[%s0 + $0x1a8] sm:$0xff]
  %v68 = vld [vmem:[%s0 + $0x1b0] sm:$0xff]
  %v69 = vld [vmem:[%s0 + $0x1b8] sm:$0xff]
  %v70 = vld [vmem:[%s0 + $0x1c0] sm:$0xff]
  %v71 = vld [vmem:[%s0 + $0x1c8] sm:$0xff]
  %v72 = vld [vmem:[%s0 + $0x1d0] sm:$0xff]
  %v73 = vld [vmem:[%s0 + $0x1d8] sm:$0xff]
  %v74 = vld [vmem:[%s0 + $0x1e0] sm:$0xff]
  %v75 = vld [vmem:[%s0 + $0x1e8] sm:$0xff]
  %v76 = vld [vmem:[%s0 + $0x1f0] sm:$0xff]
  %v77 = vld [vmem:[%s0 + $0x1f8] sm:$0xff]
  %v78 = vld [vmem:[%s0 + $0x200] sm:$0xff]
  %v79 = vld [vmem:[%s0 + $0x208] sm:$0xff]
  %v80 = vld [vmem:[%s0 + $0x210] sm:$0xff]
  %v81 = vld [vmem:[%s0 + $0x218] sm:$0xff]
  %v82 = vld [vmem:[%s0 + $0x220] sm:$0xff]
  %v83 = vld [vmem:[%s0 + $0x228] sm:$0xff]
  %v84 = vld [vmem:[%s0 + $0x230] sm:$0xff]
  %v85 = vld [vmem:[%s0 + $0x238] sm:$0xff]
  %v86 = vld [vmem:[%s1] sm:$0xff]
  %v87 = vld [vmem:[%s1 + $0x8] sm:$0xff]
  %v88 = vld [vmem:[%s1 + $0x10] sm:$0xff]
  %v89 = vld [vmem:[%s1 + $0x18] sm:$0xff]
  %v90 = vld [vmem:[%s1 + $0x20] sm:$0xff]
  %v91 = vld [vmem:[%s1 + $0x28] sm:$0xff]
  %v92 = vld [vmem:[%s1 + $0x30] sm:$0xff]
  %v93 = vld [vmem:[%s1 + $0x38] sm:$0xff]
  %v94 = vld [vmem:[%s1 + $0x40] sm:$0xff]
  %v95 = vld [vmem:[%s1 + $0x48] sm:$0xff]
  %v96 = vld [vmem:[%s1 + $0x50] sm:$0xff]
  %v97 = vld [vmem:[%s1 + $0x58] sm:$0xff]
  %v98 = vld [vmem:[%s1 + $0x60] sm:$0xff]
  %v99 = vld [vmem:[%s1 + $0x68] sm:$0xff]
  %v100 = vld [vmem:[%s1 + $0x70] sm:$0xff]
  %v101 = vld [vmem:[%s1 + $0x78] sm:$0xff]
  %v102 = vld [vmem:[%s1 + $0x80] sm:$0xff]
  %v103 = vld [vmem:[%s1 + $0x88] sm:$0xff]
  %v104 = vld [vmem:[%s1 + $0x90] sm:$0xff]
  %v105 = vld [vmem:[%s1 + $0x98] sm:$0xff]
  %v106 = vld [vmem:[%s1 + $0xa0] sm:$0xff]
  %v107 = vld [vmem:[%s1 + $0xa8] sm:$0xff]
  %v108 = vld [vmem:[%s1 + $0xb0] sm:$0xff]
  %v109 = vld [vmem:[%s1 + $0xb8] sm:$0xff]
  %v110 = vld [vmem:[%s1 + $0xc0] sm:$0xff]
  %v111 = vld [vmem:[%s1 + $0xc8] sm:$0xff]
  %v112 = vld [vmem:[%s1 + $0xd0] sm:$0xff]
  %v113 = vld [vmem:[%s1 + $0xd8] sm:$0xff]
  %v114 = vld [vmem:[%s1 + $0xe0] sm:$0xff]
  %v115 = vld [vmem:[%s1 + $0xe8] sm:$0xff]
  %v116 = vld [vmem:[%s1 + $0xf0] sm:$0xff]
  %v117 = vld [vmem:[%s1 + $0xf8] sm:$0xff]
  %v118 = vld [vmem:[%s1 + $0x100] sm:$0xff]
  %v119 = vld [vmem:[%s1 + $0x108] sm:$0xff]
  %v120 = vld [vmem:[%s1 + $0x110] sm:$0xff]
  %v121 = vld [vmem:[%s1 + $0x118] sm:$0xff]
  %v122 = vld [vmem:[%s1 + $0x120] sm:$0xff]
  %v123 = vld [vmem:[%s1 + $0x128] sm:$0xff]
  %v124 = vld [vmem:[%s1 + $0x130] sm:$0xff]
  %v125 = vld [vmem:[%s1 + $0x138] sm:$0xff]
  %v126 = vld [vmem:[%s1 + $0x140] sm:$0xff]
  %v127 = vld [vmem:[%s1 + $0x148] sm:$0xff]
  %v128 = vld [vmem:[%s1 + $0x150] sm:$0xff]
  %v129 = vld [vmem:[%s1 + $0x158] sm:$0xff]
  %v130 = vld [vmem:[%s1 + $0x160] sm:$0xff]
  %v131 = vld [vmem:[%s1 + $0x168] sm:$0xff]
  %v132 = vld [vmem:[%s1 + $0x170] sm:$0xff]
  %v133 = vld [vmem:[%s1 + $0x178] sm:$0xff]
  %v134 = vld [vmem:[%s1 + $0x180] sm:$0xff]
  %v135 = vld [vmem:[%s1 + $0x188] sm:$0xff]
  %v136 = vld [vmem:[%s1 + $0x190] sm:$0xff]
  %v137 = vld [vmem:[%s1 + $0x198] sm:$0xff]
  %v138 = vld [vmem:[%s1 + $0x1a0] sm:$0xff]
  %v139 = vld [vmem:[%s1 + $0x1a8] sm:$0xff]
  %v140 = vld [vmem:[%s1 + $0x1b0] sm:$0xff]
  %v141 = vld [vmem:[%s1 + $0x1b8] sm:$0xff]
  %v142 = vld [vmem:[%s1 + $0x1c0] sm:$0xff]
  %v143 = vld [vmem:[%s1 + $0x1c8] sm:$0xff]
  %v144 = vld [vmem:[%s1 + $0x1d0] sm:$0xff]
  %v145 = vld [vmem:[%s1 + $0x1d8] sm:$0xff]
  %v146 = vld [vmem:[%s1 + $0x1e0] sm:$0xff]
  %v147 = vld [vmem:[%s1 + $0x1e8] sm:$0xff]
  %v148 = vld [vmem:[%s1 + $0x1f0] sm:$0xff]
  %v149 = vld [vmem:[%s1 + $0x1f8] sm:$0xff]
  %v150 = vld [vmem:[%s1 + $0x200] sm:$0xff]
  %v151 = vld [vmem:[%s1 + $0x208] sm:$0xff]
  %v152 = vld [vmem:[%s1 + $0x210] sm:$0xff]
  %v153 = vld [vmem:[%s1 + $0x218] sm:$0xff]
  %v154 = vld [vmem:[%s1 + $0x220] sm:$0xff]
  %v155 = vld [vmem:[%s1 + $0x228] sm:$0xff]
  %v156 = vld [vmem:[%s1 + $0x230] sm:$0xff]
  %v157 = vld [vmem:[%s1 + $0x238] sm:$0xff]
  %v158 = vld [vmem:[%s1 + $0x240] sm:$0xff]
  %v159 = vld [vmem:[%s1 + $0x248] sm:$0xff]
  %v160 = vld [vmem:[%s1 + $0x250] sm:$0xff]
  %v161 = vld [vmem:[%s1 + $0x258] sm:$0xff]
  %v162 = vld [vmem:[%s1 + $0x260] sm:$0xff]
  %v163 = vld [vmem:[%s1 + $0x268] sm:$0xff]
  %v164 = vld [vmem:[%s1 + $0x270] sm:$0xff]
  %v165 = vld [vmem:[%s1 + $0x278] sm:$0xff]
  %v166 = vld [vmem:[%s1 + $0x280] sm:$0xff]
  %v167 = vld [vmem:[%s1 + $0x288] sm:$0xff]
  %v168 = vld [vmem:[%s1 + $0x290] sm:$0xff]
  %v169 = vld [vmem:[%s1 + $0x298] sm:$0xff]
  %v170 = vld [vmem:[%s1 + $0x2a0] sm:$0xff]
  %v171 = vld [vmem:[%s1 + $0x2a8] sm:$0xff]
  %v172 = vld [vmem:[%s1 + $0x2b0] sm:$0xff]
  %v173 = vld [vmem:[%s1 + $0x2b8] sm:$0xff]
  %v174 = vld [vmem:[%s1 + $0x2c0] sm:$0xff]
  %v175 = vld [vmem:[%s1 + $0x2c8] sm:$0xff]
  %v176 = vld [vmem:[%s1 + $0x2d0] sm:$0xff]
  %v177 = vld [vmem:[%s1 + $0x2d8] sm:$0xff]
  %v178 = vld [vmem:[%s1 + $0x2e0] sm:$0xff]
  %v179 = vld [vmem:[%s1 + $0x2e8] sm:$0xff]
  %v180 = vld [vmem:[%s1 + $0x2f0] sm:$0xff]
  %v181 = vld [vmem:[%s1 + $0x2f8] sm:$0xff]
  %v182 = vld [vmem:[%s1 + $0x300] sm:$0xff]
  %v183 = vld [vmem:[%s1 + $0x308] sm:$0xff]
  %v184 = vld [vmem:[%s1 + $0x310] sm:$0xff]
  %v185 = vld [vmem:[%s1 + $0x318] sm:$0xff]
  %v186 = vld [vmem:[%s1 + $0x320] sm:$0xff]
  %v187 = vld [vmem:[%s1 + $0x328] sm:$0xff]
  %v188 = vld [vmem:[%s1 + $0x330] sm:$0xff]
  %v189 = vld [vmem:[%s1 + $0x338] sm:$0xff]
  %v190 = vld [vmem:[%s1 + $0x340] sm:$0xff]
  %v191 = vld [vmem:[%s1 + $0x348] sm:$0xff]
  %v192 = vld [vmem:[%s1 + $0x350] sm:$0xff]
  %v193 = vld [vmem:[%s1 + $0x358] sm:$0xff]
  %v194 = vld [vmem:[%s1 + $0x360] sm:$0xff]
  %v195 = vld [vmem:[%s1 + $0x368] sm:$0xff]
  %v196 = vld [vmem:[%s1 + $0x370] sm:$0xff]
  %v197 = vld [vmem:[%s1 + $0x378] sm:$0xff]
  %v198 = vld [vmem:[%s1 + $0x380] sm:$0xff]
  %v199 = vld [vmem:[%s1 + $0x388] sm:$0xff]
  %v200 = vld [vmem:[%s1 + $0x390] sm:$0xff]
  %v201 = vld [vmem:[%s1 + $0x398] sm:$0xff]
  %v202 = vld [vmem:[%s1 + $0x3a0] sm:$0xff]
  %v203 = vld [vmem:[%s1 + $0x3a8] sm:$0xff]
  %v204 = vld [vmem:[%s1 + $0x3b0] sm:$0xff]
  %v205 = vld [vmem:[%s1 + $0x3b8] sm:$0xff]
  %v206 = vld [vmem:[%s1 + $0x3c0] sm:$0xff]
  %v207 = vld [vmem:[%s1 + $0x3c8] sm:$0xff]
  %v208 = vld [vmem:[%s1 + $0x3d0] sm:$0xff]
  %v209 = vld [vmem:[%s1 + $0x3d8] sm:$0xff]
  %v210 = vld [vmem:[%s1 + $0x3e0] sm:$0xff]
  %v211 = vld [vmem:[%s1 + $0x3e8] sm:$0xff]
  %v212 = vld [vmem:[%s1 + $0x3f0] sm:$0xff]
  %v213 = vld [vmem:[%s1 + $0x3f8] sm:$0xff]
  %v214 = vld [vmem:[%s1 + $0x400] sm:$0xff]
  %v215 = vld [vmem:[%s1 + $0x408] sm:$0xff]
  %v216 = vld [vmem:[%s1 + $0x410] sm:$0xff]
  %v217 = vld [vmem:[%s1 + $0x418] sm:$0xff]
  %v218 = vld [vmem:[%s1 + $0x420] sm:$0xff]
  %v219 = vld [vmem:[%s1 + $0x428] sm:$0xff]
  %v220 = vld [vmem:[%s1 + $0x430] sm:$0xff]
  %v221 = vld [vmem:[%s1 + $0x438] sm:$0xff]
  %v222 = vld [vmem:[%s1 + $0x440] sm:$0xff]
  %v223 = vld [vmem:[%s1 + $0x448] sm:$0xff]
  %v224 = vld [vmem:[%s1 + $0x450] sm:$0xff]
  %v225 = vld [vmem:[%s1 + $0x458] sm:$0xff]
  %v226 = vld [vmem:[%s1 + $0x460] sm:$0xff]
  %v227 = vld [vmem:[%s1 + $0x468] sm:$0xff]
  %v228 = vld [vmem:[%s1 + $0x470] sm:$0xff]
  %v229 = vld [vmem:[%s1 + $0x478] sm:$0xff]
  %v230 = vld [vmem:[%s1 + $0x480] sm:$0xff]
  %v231 = vld [vmem:[%s1 + $0x488] sm:$0xff]
  %v232 = vld [vmem:[%s1 + $0x490] sm:$0xff]
  %v233 = vld [vmem:[%s1 + $0x498] sm:$0xff]
  %v234 = vld [vmem:[%s1 + $0x4a0] sm:$0xff]
  %v235 = vld [vmem:[%s1 + $0x4a8] sm:$0xff]
  %v236 = vld [vmem:[%s1 + $0x4b0] sm:$0xff]
  %v237 = vld [vmem:[%s1 + $0x4b8] sm:$0xff]
  %v238 = vld [vmem:[%s1 + $0x4c0] sm:$0xff]
  %v239 = vld [vmem:[%s1 + $0x4c8] sm:$0xff]
  %v240 = vld [vmem:[%s1 + $0x4d0] sm:$0xff]
  %v241 = vld [vmem:[%s1 + $0x4d8] sm:$0xff]
  %v242 = vld [vmem:[%s1 + $0x4e0] sm:$0xff]
  %v243 = vld [vmem:[%s1 + $0x4e8] sm:$0xff]
  %v244 = vld [vmem:[%s1 + $0x4f0] sm:$0xff]
  %v245 = vld [vmem:[%s1 + $0x4f8] sm:$0xff]
  %v246 = vld [vmem:[%s1 + $0x500] sm:$0xff]
  %v247 = vld [vmem:[%s1 + $0x508] sm:$0xff]
  %v248 = vld [vmem:[%s1 + $0x510] sm:$0xff]
  %v249 = vld [vmem:[%s1 + $0x518] sm:$0xff]
  %v250 = vld [vmem:[%s1 + $0x520] sm:$0xff]
  %v251 = vld [vmem:[%s1 + $0x528] sm:$0xff]
  %v252 = vld [vmem:[%s1 + $0x530] sm:$0xff]
  %v253 = vld [vmem:[%s1 + $0x538] sm:$0xff]
  %v254 = vld [vmem:[%s1 + $0x540] sm:$0xff]
  %v255 = vld [vmem:[%s1 + $0x548] sm:$0xff]
  %v256 = vld [vmem:[%s1 + $0x550] sm:$0xff]
  %v257 = vld [vmem:[%s1 + $0x558] sm:$0xff]
  %v258 = vld [vmem:[%s1 + $0x560] sm:$0xff]
  %v259 = vld [vmem:[%s1 + $0x568] sm:$0xff]
  %v260 = vld [vmem:[%s1 + $0x570] sm:$0xff]
  %v261 = vld [vmem:[%s1 + $0x578] sm:$0xff]
  %v262 = vld [vmem:[%s1 + $0x580] sm:$0xff]
  %v263 = vld [vmem:[%s1 + $0x588] sm:$0xff]
  %v264 = vld [vmem:[%s1 + $0x590] sm:$0xff]
  %v265 = vld [vmem:[%s1 + $0x598] sm:$0xff]
  %v266 = vld [vmem:[%s1 + $0x5a0] sm:$0xff]
  %v267 = vld [vmem:[%s1 + $0x5a8] sm:$0xff]
  %v268 = vld [vmem:[%s1 + $0x5b0] sm:$0xff]
  %v269 = vld [vmem:[%s1 + $0x5b8] sm:$0xff]
  %v270 = vld [vmem:[%s1 + $0x5c0] sm:$0xff]
  %v271 = vld [vmem:[%s1 + $0x5c8] sm:$0xff]
  %v272 = vld [vmem:[%s1 + $0x5d0] sm:$0xff]
  %v273 = vld [vmem:[%s1 + $0x5d8] sm:$0xff]
  %v274 = vld [vmem:[%s1 + $0x5e0] sm:$0xff]
  %v275 = vld [vmem:[%s1 + $0x5e8] sm:$0xff]
  %v276 = vld [vmem:[%s1 + $0x5f0] sm:$0xff]
  %v277 = vld [vmem:[%s1 + $0x5f8] sm:$0xff]
  %v278 = vld [vmem:[%s1 + $0x600] sm:$0xff]
  %v279 = vld [vmem:[%s1 + $0x608] sm:$0xff]
  %v280 = vld [vmem:[%s1 + $0x610] sm:$0xff]
  %v281 = vld [vmem:[%s1 + $0x618] sm:$0xff]
  %v282 = vld [vmem:[%s1 + $0x620] sm:$0xff]
  %v283 = vld [vmem:[%s1 + $0x628] sm:$0xff]
  %v284 = vld [vmem:[%s1 + $0x630] sm:$0xff]
  %v285 = vld [vmem:[%s1 + $0x638] sm:$0xff]
  %v286 = vld [vmem:[%s1 + $0x640] sm:$0xff]
  %v287 = vld [vmem:[%s1 + $0x648] sm:$0xff]
  %v288 = vld [vmem:[%s1 + $0x650] sm:$0xff]
  %v289 = vld [vmem:[%s1 + $0x658] sm:$0xff]
  %v290 = vld [vmem:[%s1 + $0x660] sm:$0xff]
  %v291 = vld [vmem:[%s1 + $0x668] sm:$0xff]
  %v292 = vld [vmem:[%s1 + $0x670] sm:$0xff]
  %v293 = vld [vmem:[%s1 + $0x678] sm:$0xff]
  %v294 = vld [vmem:[%s1 + $0x680] sm:$0xff]
  %v295 = vld [vmem:[%s1 + $0x688] sm:$0xff]
  %v296 = vld [vmem:[%s1 + $0x690] sm:$0xff]
  %v297 = vld [vmem:[%s1 + $0x698] sm:$0xff]
  %v298 = vld [vmem:[%s1 + $0x6a0] sm:$0xff]
  %v299 = vld [vmem:[%s1 + $0x6a8] sm:$0xff]
  %v300 = vld [vmem:[%s1 + $0x6b0] sm:$0xff]
  %v301 = vld [vmem:[%s1 + $0x6b8] sm:$0xff]
  %v302 = vld [vmem:[%s1 + $0x6c0] sm:$0xff]
  %v303 = vld [vmem:[%s1 + $0x6c8] sm:$0xff]
  %v304 = vld [vmem:[%s1 + $0x6d0] sm:$0xff]
  %v305 = vld [vmem:[%s1 + $0x6d8] sm:$0xff]
  %v306 = vld [vmem:[%s1 + $0x6e0] sm:$0xff]
  %v307 = vld [vmem:[%s1 + $0x6e8] sm:$0xff]
  %v308 = vld [vmem:[%s1 + $0x6f0] sm:$0xff]
  %v309 = vld [vmem:[%s1 + $0x6f8] sm:$0xff]
  %v310 = vld [vmem:[%s1 + $0x700] sm:$0xff]
  %v311 = vld [vmem:[%s1 + $0x708] sm:$0xff]
  %v312 = vld [vmem:[%s1 + $0x710] sm:$0xff]
  %v313 = vld [vmem:[%s1 + $0x718] sm:$0xff]
  %v314 = vld [vmem:[%s1 + $0x720] sm:$0xff]
  %v315 = vld [vmem:[%s1 + $0x728] sm:$0xff]
  %v316 = vld [vmem:[%s1 + $0x730] sm:$0xff]
  %v317 = vld [vmem:[%s1 + $0x738] sm:$0xff]
  %v318 = vld [vmem:[%s1 + $0x740] sm:$0xff]
  %v319 = vld [vmem:[%s1 + $0x748] sm:$0xff]
  %v320 = vld [vmem:[%s1 + $0x750] sm:$0xff]
  %v321 = vld [vmem:[%s1 + $0x758] sm:$0xff]
  %v322 = vld [vmem:[%s1 + $0x760] sm:$0xff]
  %v323 = vld [vmem:[%s1 + $0x768] sm:$0xff]
  %v324 = vld [vmem:[%s1 + $0x770] sm:$0xff]
  %v325 = vld [vmem:[%s1 + $0x778] sm:$0xff]
  %v326 = vld [vmem:[%s1 + $0x780] sm:$0xff]
  %v327 = vld [vmem:[%s1 + $0x788] sm:$0xff]
  %v328 = vld [vmem:[%s1 + $0x790] sm:$0xff]
  %v329 = vld [vmem:[%s1 + $0x798] sm:$0xff]
  %v330 = vld [vmem:[%s1 + $0x7a0] sm:$0xff]
  %v331 = vld [vmem:[%s1 + $0x7a8] sm:$0xff]
  %v332 = vld [vmem:[%s1 + $0x7b0] sm:$0xff]
  %v333 = vld [vmem:[%s1 + $0x7b8] sm:$0xff]
  %v334 = vld [vmem:[%s1 + $0x7c0] sm:$0xff]
  %v335 = vld [vmem:[%s1 + $0x7c8] sm:$0xff]
  %v336 = vld [vmem:[%s1 + $0x7d0] sm:$0xff]
  %v337 = vld [vmem:[%s1 + $0x7d8] sm:$0xff]
  %v338 = vld [vmem:[%s1 + $0x7e0] sm:$0xff]
  %v339 = vld [vmem:[%s1 + $0x7e8] sm:$0xff]
  %v340 = vld [vmem:[%s1 + $0x7f0] sm:$0xff]
  %v341 = vld [vmem:[%s1 + $0x7f8] sm:$0xff]
  %v342 = vld [vmem:[%s1 + $0x800] sm:$0xff]
  %v343 = vld [vmem:[%s1 + $0x808] sm:$0xff]
  %v344 = vld [vmem:[%s1 + $0x810] sm:$0xff]
  %v345 = vld [vmem:[%s1 + $0x818] sm:$0xff]
  %v346 = vld [vmem:[%s1 + $0x820] sm:$0xff]
  %v347 = vld [vmem:[%s1 + $0x828] sm:$0xff]
  %v348 = vld [vmem:[%s1 + $0x830] sm:$0xff]
  %v349 = vld [vmem:[%s1 + $0x838] sm:$0xff]
  %v350 = vld [vmem:[%s1 + $0x840] sm:$0xff]
  %v351 = vld [vmem:[%s1 + $0x848] sm:$0xff]
  %v352 = vld [vmem:[%s1 + $0x850] sm:$0xff]
  %v353 = vld [vmem:[%s1 + $0x858] sm:$0xff]
  %v354 = vld [vmem:[%s1 + $0x860] sm:$0xff]
  %v355 = vld [vmem:[%s1 + $0x868] sm:$0xff]
  %v356 = vld [vmem:[%s1 + $0x870] sm:$0xff]
  %v357 = vld [vmem:[%s1 + $0x878] sm:$0xff]
  %v358 = vld [vmem:[%s1 + $0x880] sm:$0xff]
  %v359 = vld [vmem:[%s1 + $0x888] sm:$0xff]
  %v360 = vld [vmem:[%s1 + $0x890] sm:$0xff]
  %v361 = vld [vmem:[%s1 + $0x898] sm:$0xff]
  %v362 = vld [vmem:[%s1 + $0x8a0] sm:$0xff]
  %v363 = vld [vmem:[%s1 + $0x8a8] sm:$0xff]
  %v364 = vld [vmem:[%s1 + $0x8b0] sm:$0xff]
  %v365 = vld [vmem:[%s1 + $0x8b8] sm:$0xff]
  %v366 = vld [vmem:[%s1 + $0x8c0] sm:$0xff]
  %v367 = vld [vmem:[%s1 + $0x8c8] sm:$0xff]
  %v368 = vld [vmem:[%s1 + $0x8d0] sm:$0xff]
  %v369 = vld [vmem:[%s1 + $0x8d8] sm:$0xff]
  %v370 = vld [vmem:[%s1 + $0x8e0] sm:$0xff]
  %v371 = vld [vmem:[%s1 + $0x8e8] sm:$0xff]
  %v372 = vld [vmem:[%s1 + $0x8f0] sm:$0xff]
  %v373 = vld [vmem:[%s1 + $0x8f8] sm:$0xff]
  %v374 = vld [vmem:[%s2] sm:$0x3]
  %v376 = vlaneseq
  %v377 = vshrl.u32 %v376, 7
  %v378 = vsub.s32 0, %v377
  %v379 = vrot.slane %v374, %v378
  %v380 = vlaneseq
  %v381 = vshrl.u32 %v380, 7
  %v382 = vsub.s32 1, %v381
  %v383 = vrot.slane %v374, %v382
  %386 = vmatprep.subr.mxu0 %v87
  %387 = vmatpush1.msra.mxu0 %v86
  %388 = vmatprep.subr.mxu0 %v89
  %389 = vmatpush1.msra.mxu0 %v88
  %390 = vmatprep.subr.mxu0 %v91
  %391 = vmatpush1.msra.mxu0 %v90
  %392 = vmatprep.subr.mxu0 %v93
  %393 = vmatpush1.msra.mxu0 %v92
  %394 = vmatprep.subr.mxu0 %v95
  %395 = vmatpush1.msra.mxu0 %v94
  %396 = vmatprep.subr.mxu0 %v97
  %397 = vmatpush1.msra.mxu0 %v96
  %398 = vmatprep.subr.mxu0 %v99
  %399 = vmatpush1.msra.mxu0 %v98
  %400 = vmatprep.subr.mxu0 %v101
  %401 = vmatpush1.msra.mxu0 %v100
  %402 = vmatprep.subr.mxu0 %v103
  %403 = vmatpush1.msra.mxu0 %v102
  %404 = vmatprep.subr.mxu0 %v105
  %405 = vmatpush1.msra.mxu0 %v104
  %406 = vmatprep.subr.mxu0 %v107
  %407 = vmatpush1.msra.mxu0 %v106
  %408 = vmatprep.subr.mxu0 %v109
  %409 = vmatpush1.msra.mxu0 %v108
  %410 = vmatprep.subr.mxu0 %v111
  %411 = vmatpush1.msra.mxu0 %v110
  %412 = vmatprep.subr.mxu0 %v113
  %413 = vmatpush1.msra.mxu0 %v112
  %414 = vmatprep.subr.mxu0 %v115
  %415 = vmatpush1.msra.mxu0 %v114
  %416 = vmatprep.subr.mxu0 %v117
  %417 = vmatpush1.msra.mxu0 %v116
  %418 = vmatprep.subr.mxu0 %v119
  %419 = vmatpush1.msra.mxu0 %v118
  %420 = vmatprep.subr.mxu0 %v121
  %421 = vmatpush1.msra.mxu0 %v120
  %422 = vmatprep.subr.mxu0 %v123
  %423 = vmatpush1.msra.mxu0 %v122
  %424 = vmatprep.subr.mxu0 %v125
  %425 = vmatpush1.msra.mxu0 %v124
  %426 = vmatprep.subr.mxu0 %v127
  %427 = vmatpush1.msra.mxu0 %v126
  %428 = vmatprep.subr.mxu0 %v129
  %429 = vmatpush1.msra.mxu0 %v128
  %430 = vmatprep.subr.mxu0 %v131
  %431 = vmatpush1.msra.mxu0 %v130
  %432 = vmatprep.subr.mxu0 %v133
  %433 = vmatpush1.msra.mxu0 %v132
  %434 = vmatprep.subr.mxu0 %v135
  %435 = vmatpush1.msra.mxu0 %v134
  %436 = vmatprep.subr.mxu0 %v137
  %437 = vmatpush1.msra.mxu0 %v136
  %438 = vmatprep.subr.mxu0 %v139
  %439 = vmatpush1.msra.mxu0 %v138
  %440 = vmatprep.subr.mxu0 %v141
  %441 = vmatpush1.msra.mxu0 %v140
  %442 = vmatprep.subr.mxu0 %v143
  %443 = vmatpush1.msra.mxu0 %v142
  %444 = vmatprep.subr.mxu0 %v145
  %445 = vmatpush1.msra.mxu0 %v144
  %446 = vmatprep.subr.mxu0 %v147
  %447 = vmatpush1.msra.mxu0 %v146
  %448 = vmatprep.subr.mxu0 %v149
  %449 = vmatpush1.msra.mxu0 %v148
  %450 = vmatprep.mubr.f32.mxu0 %v15
  %451 = vmatmul.mubr.f32.gmra.mrb[0].mxu0 %v14
  %v452 = vpop.f32.mrb[0].mxu0
  %v453 = vadd.f32 %v379, %v452
  %v454 = vpop.f32.mrb[0].mxu0
  %v455 = vadd.f32 %v383, %v454
  %456 = vmatprep.mubr.f32.mxu0 %v24
  %457 = vmatmul.mubr.f32.gmra.mrb[0].mxu0 %v23
  %v458 = vpop.f32.mrb[0].mxu0
  %v459 = vadd.f32 %v379, %v458
  %v460 = vpop.f32.mrb[0].mxu0
  %v461 = vadd.f32 %v383, %v460
  %462 = vmatprep.mubr.f32.mxu0 %v33
  %463 = vmatmul.mubr.f32.gmra.mrb[0].mxu0 %v32
  %v464 = vpop.f32.mrb[0].mxu0
  %v465 = vadd.f32 %v379, %v464
  %v466 = vpop.f32.mrb[0].mxu0
  %v467 = vadd.f32 %v383, %v466
  %468 = vmatprep.mubr.f32.mxu0 %v42
  %469 = vmatmul.mubr.f32.gmra.mrb[0].mxu0 %v41
  %v470 = vpop.f32.mrb[0].mxu0
  %v471 = vadd.f32 %v379, %v470
  %v472 = vpop.f32.mrb[0].mxu0
  %v473 = vadd.f32 %v383, %v472
  %474 = vmatprep.mubr.f32.mxu0 %v51
  %475 = vmatmul.mubr.f32.gmra.mrb[0].mxu0 %v50
  %v476 = vpop.f32.mrb[0].mxu0
  %v477 = vadd.f32 %v379, %v476
  %v478 = vpop.f32.mrb[0].mxu0
  %v479 = vadd.f32 %v383, %v478
  %480 = vmatprep.mubr.f32.mxu0 %v60
  %481 = vmatmul.mubr.f32.gmra.mrb[0].mxu0 %v59
  %v482 = vpop.f32.mrb[0].mxu0
  %v483 = vadd.f32 %v379, %v482
  %v484 = vpop.f32.mrb[0].mxu0
  %v485 = vadd.f32 %v383, %v484
  %486 = vmatprep.mubr.f32.mxu0 %v69
  %487 = vmatmul.mubr.f32.gmra.mrb[0].mxu0 %v68
  %v488 = vpop.f32.mrb[0].mxu0
  %v489 = vadd.f32 %v379, %v488
  %v490 = vpop.f32.mrb[0].mxu0
  %v491 = vadd.f32 %v383, %v490
  %492 = vmatprep.mubr.f32.mxu0 %v78
  %493 = vmatmul.mubr.f32.gmra.mrb[0].mxu0 %v77
  %v494 = vpop.f32.mrb[0].mxu0
  %v495 = vadd.f32 %v379, %v494
  %v496 = vpop.f32.mrb[0].mxu0
  %v497 = vadd.f32 %v383, %v496
  %498 = vdwg.mxu0
  %499 = vmatprep.subr.mxu0 %v151
  %500 = vmatpush1.msra.mxu0 %v150
  %501 = vmatprep.subr.mxu0 %v153
  %502 = vmatpush1.msra.mxu0 %v152
  %503 = vmatprep.subr.mxu0 %v155
  %504 = vmatpush1.msra.mxu0 %v154
  %505 = vmatprep.subr.mxu0 %v157
  %506 = vmatpush1.msra.mxu0 %v156
  %507 = vmatprep.subr.mxu0 %v159
  %508 = vmatpush1.msra.mxu0 %v158
  %509 = vmatprep.subr.mxu0 %v161
  %510 = vmatpush1.msra.mxu0 %v160
  %511 = vmatprep.subr.mxu0 %v163
  %512 = vmatpush1.msra.mxu0 %v162
  %513 = vmatprep.subr.mxu0 %v165
  %514 = vmatpush1.msra.mxu0 %v164
  %515 = vmatprep.subr.mxu0 %v167
  %516 = vmatpush1.msra.mxu0 %v166
  %517 = vmatprep.subr.mxu0 %v169
  %518 = vmatpush1.msra.mxu0 %v168
  %519 = vmatprep.subr.mxu0 %v171
  %520 = vmatpush1.msra.mxu0 %v170
  %521 = vmatprep.subr.mxu0 %v173
  %522 = vmatpush1.msra.mxu0 %v172
  %523 = vmatprep.subr.mxu0 %v175
  %524 = vmatpush1.msra.mxu0 %v174
  %525 = vmatprep.subr.mxu0 %v177
  %526 = vmatpush1.msra.mxu0 %v176
  %527 = vmatprep.subr.mxu0 %v179
  %528 = vmatpush1.msra.mxu0 %v178
  %529 = vmatprep.subr.mxu0 %v181
  %530 = vmatpush1.msra.mxu0 %v180
  %531 = vmatprep.subr.mxu0 %v183
  %532 = vmatpush1.msra.mxu0 %v182
  %533 = vmatprep.subr.mxu0 %v185
  %534 = vmatpush1.msra.mxu0 %v184
  %535 = vmatprep.subr.mxu0 %v187
  %536 = vmatpush1.msra.mxu0 %v186
  %537 = vmatprep.subr.mxu0 %v189
  %538 = vmatpush1.msra.mxu0 %v188
  %539 = vmatprep.subr.mxu0 %v191
  %540 = vmatpush1.msra.mxu0 %v190
  %541 = vmatprep.subr.mxu0 %v193
  %542 = vmatpush1.msra.mxu0 %v192
  %543 = vmatprep.subr.mxu0 %v195
  %544 = vmatpush1.msra.mxu0 %v194
  %545 = vmatprep.subr.mxu0 %v197
  %546 = vmatpush1.msra.mxu0 %v196
  %547 = vmatprep.subr.mxu0 %v199
  %548 = vmatpush1.msra.mxu0 %v198
  %549 = vmatprep.subr.mxu0 %v201
  %550 = vmatpush1.msra.mxu0 %v200
  %551 = vmatprep.subr.mxu0 %v203
  %552 = vmatpush1.msra.mxu0 %v202
  %553 = vmatprep.subr.mxu0 %v205
  %554 = vmatpush1.msra.mxu0 %v204
  %555 = vmatprep.subr.mxu0 %v207
  %556 = vmatpush1.msra.mxu0 %v206
  %557 = vmatprep.subr.mxu0 %v209
  %558 = vmatpush1.msra.mxu0 %v208
  %559 = vmatprep.subr.mxu0 %v211
  %560 = vmatpush1.msra.mxu0 %v210
  %561 = vmatprep.subr.mxu0 %v213
  %562 = vmatpush1.msra.mxu0 %v212
  %563 = vmatprep.mubr.f32.mxu0 %v17
  %564 = vmatmul.mubr.f32.gmra.mrb[0].mxu0 %v16
  %v565 = vpop.f32.mrb[0].mxu0
  %v566 = vadd.f32 %v453, %v565
  %v567 = vpop.f32.mrb[0].mxu0
  %v568 = vadd.f32 %v455, %v567
  %569 = vmatprep.mubr.f32.mxu0 %v26
  %570 = vmatmul.mubr.f32.gmra.mrb[0].mxu0 %v25
  %v571 = vpop.f32.mrb[0].mxu0
  %v572 = vadd.f32 %v459, %v571
  %v573 = vpop.f32.mrb[0].mxu0
  %v574 = vadd.f32 %v461, %v573
  %575 = vmatprep.mubr.f32.mxu0 %v35
  %576 = vmatmul.mubr.f32.gmra.mrb[0].mxu0 %v34
  %v577 = vpop.f32.mrb[0].mxu0
  %v578 = vadd.f32 %v465, %v577
  %v579 = vpop.f32.mrb[0].mxu0
  %v580 = vadd.f32 %v467, %v579
  %581 = vmatprep.mubr.f32.mxu0 %v44
  %582 = vmatmul.mubr.f32.gmra.mrb[0].mxu0 %v43
  %v583 = vpop.f32.mrb[0].mxu0
  %v584 = vadd.f32 %v471, %v583
  %v585 = vpop.f32.mrb[0].mxu0
  %v586 = vadd.f32 %v473, %v585
  %587 = vmatprep.mubr.f32.mxu0 %v53
  %588 = vmatmul.mubr.f32.gmra.mrb[0].mxu0 %v52
  %v589 = vpop.f32.mrb[0].mxu0
  %v590 = vadd.f32 %v477, %v589
  %v591 = vpop.f32.mrb[0].mxu0
  %v592 = vadd.f32 %v479, %v591
  %593 = vmatprep.mubr.f32.mxu0 %v62
  %594 = vmatmul.mubr.f32.gmra.mrb[0].mxu0 %v61
  %v595 = vpop.f32.mrb[0].mxu0
  %v596 = vadd.f32 %v483, %v595
  %v597 = vpop.f32.mrb[0].mxu0
  %v598 = vadd.f32 %v485, %v597
  %599 = vmatprep.mubr.f32.mxu0 %v71
  %600 = vmatmul.mubr.f32.gmra.mrb[0].mxu0 %v70
  %v601 = vpop.f32.mrb[0].mxu0
  %v602 = vadd.f32 %v489, %v601
  %v603 = vpop.f32.mrb[0].mxu0
  %v604 = vadd.f32 %v491, %v603
  %605 = vmatprep.mubr.f32.mxu0 %v80
  %606 = vmatmul.mubr.f32.gmra.mrb[0].mxu0 %v79
  %v607 = vpop.f32.mrb[0].mxu0
  %v608 = vadd.f32 %v495, %v607
  %v609 = vpop.f32.mrb[0].mxu0
  %v610 = vadd.f32 %v497, %v609
  %611 = vdwg.mxu0
  %612 = vmatprep.subr.mxu0 %v215
  %613 = vmatpush1.msra.mxu0 %v214
  %614 = vmatprep.subr.mxu0 %v217
  %615 = vmatpush1.msra.mxu0 %v216
  %616 = vmatprep.subr.mxu0 %v219
  %617 = vmatpush1.msra.mxu0 %v218
  %618 = vmatprep.subr.mxu0 %v221
  %619 = vmatpush1.msra.mxu0 %v220
  %620 = vmatprep.subr.mxu0 %v223
  %621 = vmatpush1.msra.mxu0 %v222
  %622 = vmatprep.subr.mxu0 %v225
  %623 = vmatpush1.msra.mxu0 %v224
  %624 = vmatprep.subr.mxu0 %v227
  %625 = vmatpush1.msra.mxu0 %v226
  %626 = vmatprep.subr.mxu0 %v229
  %627 = vmatpush1.msra.mxu0 %v228
  %628 = vmatprep.subr.mxu0 %v231
  %629 = vmatpush1.msra.mxu0 %v230
  %630 = vmatprep.subr.mxu0 %v233
  %631 = vmatpush1.msra.mxu0 %v232
  %632 = vmatprep.subr.mxu0 %v235
  %633 = vmatpush1.msra.mxu0 %v234
  %634 = vmatprep.subr.mxu0 %v237
  %635 = vmatpush1.msra.mxu0 %v236
  %636 = vmatprep.subr.mxu0 %v239
  %637 = vmatpush1.msra.mxu0 %v238
  %638 = vmatprep.subr.mxu0 %v241
  %639 = vmatpush1.msra.mxu0 %v240
  %640 = vmatprep.subr.mxu0 %v243
  %641 = vmatpush1.msra.mxu0 %v242
  %642 = vmatprep.subr.mxu0 %v245
  %643 = vmatpush1.msra.mxu0 %v244
  %644 = vmatprep.subr.mxu0 %v247
  %645 = vmatpush1.msra.mxu0 %v246
  %646 = vmatprep.subr.mxu0 %v249
  %647 = vmatpush1.msra.mxu0 %v248
  %648 = vmatprep.subr.mxu0 %v251
  %649 = vmatpush1.msra.mxu0 %v250
  %650 = vmatprep.subr.mxu0 %v253
  %651 = vmatpush1.msra.mxu0 %v252
  %652 = vmatprep.subr.mxu0 %v255
  %653 = vmatpush1.msra.mxu0 %v254
  %654 = vmatprep.subr.mxu0 %v257
  %655 = vmatpush1.msra.mxu0 %v256
  %656 = vmatprep.subr.mxu0 %v259
  %657 = vmatpush1.msra.mxu0 %v258
  %658 = vmatprep.subr.mxu0 %v261
  %659 = vmatpush1.msra.mxu0 %v260
  %660 = vmatprep.subr.mxu0 %v263
  %661 = vmatpush1.msra.mxu0 %v262
  %662 = vmatprep.subr.mxu0 %v265
  %663 = vmatpush1.msra.mxu0 %v264
  %664 = vmatprep.subr.mxu0 %v267
  %665 = vmatpush1.msra.mxu0 %v266
  %666 = vmatprep.subr.mxu0 %v269
  %667 = vmatpush1.msra.mxu0 %v268
  %668 = vmatprep.subr.mxu0 %v271
  %669 = vmatpush1.msra.mxu0 %v270
  %670 = vmatprep.subr.mxu0 %v273
  %671 = vmatpush1.msra.mxu0 %v272
  %672 = vmatprep.subr.mxu0 %v275
  %673 = vmatpush1.msra.mxu0 %v274
  %674 = vmatprep.subr.mxu0 %v277
  %675 = vmatpush1.msra.mxu0 %v276
  %676 = vmatprep.mubr.f32.mxu0 %v19
  %677 = vmatmul.mubr.f32.gmra.mrb[0].mxu0 %v18
  %v678 = vpop.f32.mrb[0].mxu0
  %v679 = vadd.f32 %v566, %v678
  %v680 = vpop.f32.mrb[0].mxu0
  %v681 = vadd.f32 %v568, %v680
  %682 = vmatprep.mubr.f32.mxu0 %v28
  %683 = vmatmul.mubr.f32.gmra.mrb[0].mxu0 %v27
  %v684 = vpop.f32.mrb[0].mxu0
  %v685 = vadd.f32 %v572, %v684
  %v686 = vpop.f32.mrb[0].mxu0
  %v687 = vadd.f32 %v574, %v686
  %688 = vmatprep.mubr.f32.mxu0 %v37
  %689 = vmatmul.mubr.f32.gmra.mrb[0].mxu0 %v36
  %v690 = vpop.f32.mrb[0].mxu0
  %v691 = vadd.f32 %v578, %v690
  %v692 = vpop.f32.mrb[0].mxu0
  %v693 = vadd.f32 %v580, %v692
  %694 = vmatprep.mubr.f32.mxu0 %v46
  %695 = vmatmul.mubr.f32.gmra.mrb[0].mxu0 %v45
  %v696 = vpop.f32.mrb[0].mxu0
  %v697 = vadd.f32 %v584, %v696
  %v698 = vpop.f32.mrb[0].mxu0
  %v699 = vadd.f32 %v586, %v698
  %700 = vmatprep.mubr.f32.mxu0 %v55
  %701 = vmatmul.mubr.f32.gmra.mrb[0].mxu0 %v54
  %v702 = vpop.f32.mrb[0].mxu0
  %v703 = vadd.f32 %v590, %v702
  %v704 = vpop.f32.mrb[0].mxu0
  %v705 = vadd.f32 %v592, %v704
  %706 = vmatprep.mubr.f32.mxu0 %v64
  %707 = vmatmul.mubr.f32.gmra.mrb[0].mxu0 %v63
  %v708 = vpop.f32.mrb[0].mxu0
  %v709 = vadd.f32 %v596, %v708
  %v710 = vpop.f32.mrb[0].mxu0
  %v711 = vadd.f32 %v598, %v710
  %712 = vmatprep.mubr.f32.mxu0 %v73
  %713 = vmatmul.mubr.f32.gmra.mrb[0].mxu0 %v72
  %v714 = vpop.f32.mrb[0].mxu0
  %v715 = vadd.f32 %v602, %v714
  %v716 = vpop.f32.mrb[0].mxu0
  %v717 = vadd.f32 %v604, %v716
  %718 = vmatprep.mubr.f32.mxu0 %v82
  %719 = vmatmul.mubr.f32.gmra.mrb[0].mxu0 %v81
  %v720 = vpop.f32.mrb[0].mxu0
  %v721 = vadd.f32 %v608, %v720
  %v722 = vpop.f32.mrb[0].mxu0
  %v723 = vadd.f32 %v610, %v722
  %724 = vdwg.mxu0
  %725 = vmatprep.subr.mxu0 %v279
  %726 = vmatpush1.msra.mxu0 %v278
  %727 = vmatprep.subr.mxu0 %v281
  %728 = vmatpush1.msra.mxu0 %v280
  %729 = vmatprep.subr.mxu0 %v283
  %730 = vmatpush1.msra.mxu0 %v282
  %731 = vmatprep.subr.mxu0 %v285
  %732 = vmatpush1.msra.mxu0 %v284
  %733 = vmatprep.subr.mxu0 %v287
  %734 = vmatpush1.msra.mxu0 %v286
  %735 = vmatprep.subr.mxu0 %v289
  %736 = vmatpush1.msra.mxu0 %v288
  %737 = vmatprep.subr.mxu0 %v291
  %738 = vmatpush1.msra.mxu0 %v290
  %739 = vmatprep.subr.mxu0 %v293
  %740 = vmatpush1.msra.mxu0 %v292
  %741 = vmatprep.subr.mxu0 %v295
  %742 = vmatpush1.msra.mxu0 %v294
  %743 = vmatprep.subr.mxu0 %v297
  %744 = vmatpush1.msra.mxu0 %v296
  %745 = vmatprep.subr.mxu0 %v299
  %746 = vmatpush1.msra.mxu0 %v298
  %747 = vmatprep.subr.mxu0 %v301
  %748 = vmatpush1.msra.mxu0 %v300
  %749 = vmatprep.subr.mxu0 %v303
  %750 = vmatpush1.msra.mxu0 %v302
  %751 = vmatprep.subr.mxu0 %v305
  %752 = vmatpush1.msra.mxu0 %v304
  %753 = vmatprep.subr.mxu0 %v307
  %754 = vmatpush1.msra.mxu0 %v306
  %755 = vmatprep.subr.mxu0 %v309
  %756 = vmatpush1.msra.mxu0 %v308
  %757 = vmatprep.subr.mxu0 %v311
  %758 = vmatpush1.msra.mxu0 %v310
  %759 = vmatprep.subr.mxu0 %v313
  %760 = vmatpush1.msra.mxu0 %v312
  %761 = vmatprep.subr.mxu0 %v315
  %762 = vmatpush1.msra.mxu0 %v314
  %763 = vmatprep.subr.mxu0 %v317
  %764 = vmatpush1.msra.mxu0 %v316
  %765 = vmatprep.subr.mxu0 %v319
  %766 = vmatpush1.msra.mxu0 %v318
  %767 = vmatprep.subr.mxu0 %v321
  %768 = vmatpush1.msra.mxu0 %v320
  %769 = vmatprep.subr.mxu0 %v323
  %770 = vmatpush1.msra.mxu0 %v322
  %771 = vmatprep.subr.mxu0 %v325
  %772 = vmatpush1.msra.mxu0 %v324
  %773 = vmatprep.subr.mxu0 %v327
  %774 = vmatpush1.msra.mxu0 %v326
  %775 = vmatprep.subr.mxu0 %v329
  %776 = vmatpush1.msra.mxu0 %v328
  %777 = vmatprep.subr.mxu0 %v331
  %778 = vmatpush1.msra.mxu0 %v330
  %779 = vmatprep.subr.mxu0 %v333
  %780 = vmatpush1.msra.mxu0 %v332
  %781 = vmatprep.subr.mxu0 %v335
  %782 = vmatpush1.msra.mxu0 %v334
  %783 = vmatprep.subr.mxu0 %v337
  %784 = vmatpush1.msra.mxu0 %v336
  %785 = vmatprep.subr.mxu0 %v339
  %786 = vmatpush1.msra.mxu0 %v338
  %787 = vmatprep.subr.mxu0 %v341
  %788 = vmatpush1.msra.mxu0 %v340
  %789 = vmatprep.mubr.f32.mxu0 %v21
  %790 = vmatmul.mubr.f32.gmra.mrb[0].mxu0 %v20
  %v791 = vpop.f32.mrb[0].mxu0
  %v792 = vadd.f32 %v679, %v791
  %v793 = vpop.f32.mrb[0].mxu0
  %v794 = vadd.f32 %v681, %v793
  %795 = vmatprep.mubr.f32.mxu0 %v30
  %796 = vmatmul.mubr.f32.gmra.mrb[0].mxu0 %v29
  %v797 = vpop.f32.mrb[0].mxu0
  %v798 = vadd.f32 %v685, %v797
  %v799 = vpop.f32.mrb[0].mxu0
  %v800 = vadd.f32 %v687, %v799
  %801 = vmatprep.mubr.f32.mxu0 %v39
  %802 = vmatmul.mubr.f32.gmra.mrb[0].mxu0 %v38
  %v803 = vpop.f32.mrb[0].mxu0
  %v804 = vadd.f32 %v691, %v803
  %v805 = vpop.f32.mrb[0].mxu0
  %v806 = vadd.f32 %v693, %v805
  %807 = vmatprep.mubr.f32.mxu0 %v48
  %808 = vmatmul.mubr.f32.gmra.mrb[0].mxu0 %v47
  %v809 = vpop.f32.mrb[0].mxu0
  %v810 = vadd.f32 %v697, %v809
  %v811 = vpop.f32.mrb[0].mxu0
  %v812 = vadd.f32 %v699, %v811
  %813 = vmatprep.mubr.f32.mxu0 %v57
  %814 = vmatmul.mubr.f32.gmra.mrb[0].mxu0 %v56
  %v815 = vpop.f32.mrb[0].mxu0
  %v816 = vadd.f32 %v703, %v815
  %v817 = vpop.f32.mrb[0].mxu0
  %v818 = vadd.f32 %v705, %v817
  %819 = vmatprep.mubr.f32.mxu0 %v66
  %820 = vmatmul.mubr.f32.gmra.mrb[0].mxu0 %v65
  %v821 = vpop.f32.mrb[0].mxu0
  %v822 = vadd.f32 %v709, %v821
  %v823 = vpop.f32.mrb[0].mxu0
  %v824 = vadd.f32 %v711, %v823
  %825 = vmatprep.mubr.f32.mxu0 %v75
  %826 = vmatmul.mubr.f32.gmra.mrb[0].mxu0 %v74
  %v827 = vpop.f32.mrb[0].mxu0
  %v828 = vadd.f32 %v715, %v827
  %v829 = vpop.f32.mrb[0].mxu0
  %v830 = vadd.f32 %v717, %v829
  %831 = vmatprep.mubr.f32.mxu0 %v84
  %832 = vmatmul.mubr.f32.gmra.mrb[0].mxu0 %v83
  %v833 = vpop.f32.mrb[0].mxu0
  %v834 = vadd.f32 %v721, %v833
  %v835 = vpop.f32.mrb[0].mxu0
  %v836 = vadd.f32 %v723, %v835
  %837 = vdwg.mxu0
  %838 = vmatprep.subr.mxu0 %v343
  %839 = vmatpush1.msra.mxu0 %v342
  %840 = vmatprep.subr.mxu0 %v345
  %841 = vmatpush1.msra.mxu0 %v344
  %842 = vmatprep.subr.mxu0 %v347
  %843 = vmatpush1.msra.mxu0 %v346
  %844 = vmatprep.subr.mxu0 %v349
  %845 = vmatpush1.msra.mxu0 %v348
  %846 = vmatprep.subr.mxu0 %v351
  %847 = vmatpush1.msra.mxu0 %v350
  %848 = vmatprep.subr.mxu0 %v353
  %849 = vmatpush1.msra.mxu0 %v352
  %850 = vmatprep.subr.mxu0 %v355
  %851 = vmatpush1.msra.mxu0 %v354
  %852 = vmatprep.subr.mxu0 %v357
  %853 = vmatpush1.msra.mxu0 %v356
  %854 = vmatprep.subr.mxu0 %v359
  %855 = vmatpush1.msra.mxu0 %v358
  %856 = vmatprep.subr.mxu0 %v361
  %857 = vmatpush1.msra.mxu0 %v360
  %858 = vmatprep.subr.mxu0 %v363
  %859 = vmatpush1.msra.mxu0 %v362
  %860 = vmatprep.subr.mxu0 %v365
  %861 = vmatpush1.msra.mxu0 %v364
  %862 = vmatprep.subr.mxu0 %v367
  %863 = vmatpush1.msra.mxu0 %v366
  %864 = vmatprep.subr.mxu0 %v369
  %865 = vmatpush1.msra.mxu0 %v368
  %866 = vmatprep.subr.mxu0 %v371
  %867 = vmatpush1.msra.mxu0 %v370
  %868 = vmatprep.subr.mxu0 %v373
  %869 = vmatpush1.msra.mxu0 %v372
  %870 = vmatprep.subr.mxu0 0.0
  %871 = vmatpush1.msra.mxu0 0.0
  %872 = vmatprep.subr.mxu0 0.0
  %873 = vmatpush1.msra.mxu0 0.0
  %874 = vmatprep.subr.mxu0 0.0
  %875 = vmatpush1.msra.mxu0 0.0
  %876 = vmatprep.subr.mxu0 0.0
  %877 = vmatpush1.msra.mxu0 0.0
  %878 = vmatprep.subr.mxu0 0.0
  %879 = vmatpush1.msra.mxu0 0.0
  %880 = vmatprep.subr.mxu0 0.0
  %881 = vmatpush1.msra.mxu0 0.0
  %882 = vmatprep.subr.mxu0 0.0
  %883 = vmatpush1.msra.mxu0 0.0
  %884 = vmatprep.subr.mxu0 0.0
  %885 = vmatpush1.msra.mxu0 0.0
  %886 = vmatprep.subr.mxu0 0.0
  %887 = vmatpush1.msra.mxu0 0.0
  %888 = vmatprep.subr.mxu0 0.0
  %889 = vmatpush1.msra.mxu0 0.0
  %890 = vmatprep.subr.mxu0 0.0
  %891 = vmatpush1.msra.mxu0 0.0
  %892 = vmatprep.subr.mxu0 0.0
  %893 = vmatpush1.msra.mxu0 0.0
  %894 = vmatprep.subr.mxu0 0.0
  %895 = vmatpush1.msra.mxu0 0.0
  %896 = vmatprep.subr.mxu0 0.0
  %897 = vmatpush1.msra.mxu0 0.0
  %898 = vmatprep.subr.mxu0 0.0
  %899 = vmatpush1.msra.mxu0 0.0
  %900 = vmatprep.subr.mxu0 0.0
  %901 = vmatpush1.msra.mxu0 0.0
  %902 = vmatprep.mubr.f32.mxu0 0.0
  %903 = vmatmul.mubr.f32.gmra.mrb[0].mxu0 %v22
  %v904 = vpop.f32.mrb[0].mxu0
  %v905 = vadd.f32 %v792, %v904
  %v906 = vpop.f32.mrb[0].mxu0
  %v907 = vadd.f32 %v794, %v906
  %908 = vmatprep.mubr.f32.mxu0 0.0
  %909 = vmatmul.mubr.f32.gmra.mrb[0].mxu0 %v31
  %v910 = vpop.f32.mrb[0].mxu0
  %v911 = vadd.f32 %v798, %v910
  %v912 = vpop.f32.mrb[0].mxu0
  %v913 = vadd.f32 %v800, %v912
  %914 = vmatprep.mubr.f32.mxu0 0.0
  %915 = vmatmul.mubr.f32.gmra.mrb[0].mxu0 %v40
  %v916 = vpop.f32.mrb[0].mxu0
  %v917 = vadd.f32 %v804, %v916
  %v918 = vpop.f32.mrb[0].mxu0
  %v919 = vadd.f32 %v806, %v918
  %920 = vmatprep.mubr.f32.mxu0 0.0
  %921 = vmatmul.mubr.f32.gmra.mrb[0].mxu0 %v49
  %v922 = vpop.f32.mrb[0].mxu0
  %v923 = vadd.f32 %v810, %v922
  %v924 = vpop.f32.mrb[0].mxu0
  %v925 = vadd.f32 %v812, %v924
  %926 = vmatprep.mubr.f32.mxu0 0.0
  %927 = vmatmul.mubr.f32.gmra.mrb[0].mxu0 %v58
  %v928 = vpop.f32.mrb[0].mxu0
  %v929 = vadd.f32 %v816, %v928
  %v930 = vpop.f32.mrb[0].mxu0
  %v931 = vadd.f32 %v818, %v930
  %932 = vmatprep.mubr.f32.mxu0 0.0
  %933 = vmatmul.mubr.f32.gmra.mrb[0].mxu0 %v67
  %v934 = vpop.f32.mrb[0].mxu0
  %v935 = vadd.f32 %v822, %v934
  %v936 = vpop.f32.mrb[0].mxu0
  %v937 = vadd.f32 %v824, %v936
  %938 = vmatprep.mubr.f32.mxu0 0.0
  %939 = vmatmul.mubr.f32.gmra.mrb[0].mxu0 %v76
  %v940 = vpop.f32.mrb[0].mxu0
  %v941 = vadd.f32 %v828, %v940
  %v942 = vpop.f32.mrb[0].mxu0
  %v943 = vadd.f32 %v830, %v942
  %944 = vmatprep.mubr.f32.mxu0 0.0
  %945 = vmatmul.mubr.f32.gmra.mrb[0].mxu0 %v85
  %v946 = vpop.f32.mrb[0].mxu0
  %v947 = vadd.f32 %v834, %v946
  %v948 = vpop.f32.mrb[0].mxu0
  %v949 = vadd.f32 %v836, %v948
  %950 = vdwg.mxu0
  %v951 = vmax.f32 %v905, 0.0
  %v952 = vmax.f32 %v907, 0.0
  %v953 = vmax.f32 %v911, 0.0
  %v954 = vmax.f32 %v913, 0.0
  %v955 = vmax.f32 %v917, 0.0
  %v956 = vmax.f32 %v919, 0.0
  %v957 = vmax.f32 %v923, 0.0
  %v958 = vmax.f32 %v925, 0.0
  %v959 = vmax.f32 %v929, 0.0
  %v960 = vmax.f32 %v931, 0.0
  %v961 = vmax.f32 %v935, 0.0
  %v962 = vmax.f32 %v937, 0.0
  %v963 = vmax.f32 %v941, 0.0
  %v964 = vmax.f32 %v943, 0.0
  %v965 = vmax.f32 %v947, 0.0
  %v966 = vmax.f32 %v949, 0.0
  %v967 = vld [vmem:[%s0 + $0x240] sm:$0xff]
  %v968 = vld [vmem:[%s0 + $0x248] sm:$0xff]
  %v969 = vld [vmem:[%s0 + $0x250] sm:$0xff]
  %v970 = vld [vmem:[%s0 + $0x258] sm:$0xff]
  %v971 = vld [vmem:[%s0 + $0x260] sm:$0xff]
  %v972 = vld [vmem:[%s0 + $0x268] sm:$0xff]
  %v973 = vld [vmem:[%s0 + $0x270] sm:$0xff]
  %v974 = vld [vmem:[%s0 + $0x278] sm:$0xff]
  %v975 = vld [vmem:[%s0 + $0x280] sm:$0xff]
  %v976 = vld [vmem:[%s0 + $0x288] sm:$0xff]
  %v977 = vld [vmem:[%s0 + $0x290] sm:$0xff]
  %v978 = vld [vmem:[%s0 + $0x298] sm:$0xff]
  %v979 = vld [vmem:[%s0 + $0x2a0] sm:$0xff]
  %v980 = vld [vmem:[%s0 + $0x2a8] sm:$0xff]
  %v981 = vld [vmem:[%s0 + $0x2b0] sm:$0xff]
  %v982 = vld [vmem:[%s0 + $0x2b8] sm:$0xff]
  %v983 = vld [vmem:[%s0 + $0x2c0] sm:$0xff]
  %v984 = vld [vmem:[%s0 + $0x2c8] sm:$0xff]
  %v985 = vld [vmem:[%s0 + $0x2d0] sm:$0xff]
  %v986 = vld [vmem:[%s0 + $0x2d8] sm:$0xff]
  %v987 = vld [vmem:[%s0 + $0x2e0] sm:$0xff]
  %v988 = vld [vmem:[%s0 + $0x2e8] sm:$0xff]
  %v989 = vld [vmem:[%s0 + $0x2f0] sm:$0xff]
  %v990 = vld [vmem:[%s0 + $0x2f8] sm:$0xff]
  %v991 = vld [vmem:[%s0 + $0x300] sm:$0xff]
  %v992 = vld [vmem:[%s0 + $0x308] sm:$0xff]
  %v993 = vld [vmem:[%s0 + $0x310] sm:$0xff]
  %v994 = vld [vmem:[%s0 + $0x318] sm:$0xff]
  %v995 = vld [vmem:[%s0 + $0x320] sm:$0xff]
  %v996 = vld [vmem:[%s0 + $0x328] sm:$0xff]
  %v997 = vld [vmem:[%s0 + $0x330] sm:$0xff]
  %v998 = vld [vmem:[%s0 + $0x338] sm:$0xff]
  %v999 = vld [vmem:[%s0 + $0x340] sm:$0xff]
  %v1000 = vld [vmem:[%s0 + $0x348] sm:$0xff]
  %v1001 = vld [vmem:[%s0 + $0x350] sm:$0xff]
  %v1002 = vld [vmem:[%s0 + $0x358] sm:$0xff]
  %v1003 = vld [vmem:[%s0 + $0x360] sm:$0xff]
  %v1004 = vld [vmem:[%s0 + $0x368] sm:$0xff]
  %v1005 = vld [vmem:[%s0 + $0x370] sm:$0xff]
  %v1006 = vld [vmem:[%s0 + $0x378] sm:$0xff]
  %v1007 = vld [vmem:[%s0 + $0x380] sm:$0xff]
  %v1008 = vld [vmem:[%s0 + $0x388] sm:$0xff]
  %v1009 = vld [vmem:[%s0 + $0x390] sm:$0xff]
  %v1010 = vld [vmem:[%s0 + $0x398] sm:$0xff]
  %v1011 = vld [vmem:[%s0 + $0x3a0] sm:$0xff]
  %v1012 = vld [vmem:[%s0 + $0x3a8] sm:$0xff]
  %v1013 = vld [vmem:[%s0 + $0x3b0] sm:$0xff]
  %v1014 = vld [vmem:[%s0 + $0x3b8] sm:$0xff]
  %v1015 = vld [vmem:[%s0 + $0x3c0] sm:$0xff]
  %v1016 = vld [vmem:[%s0 + $0x3c8] sm:$0xff]
  %v1017 = vld [vmem:[%s0 + $0x3d0] sm:$0xff]
  %v1018 = vld [vmem:[%s0 + $0x3d8] sm:$0xff]
  %v1019 = vld [vmem:[%s0 + $0x3e0] sm:$0xff]
  %v1020 = vld [vmem:[%s0 + $0x3e8] sm:$0xff]
  %v1021 = vld [vmem:[%s0 + $0x3f0] sm:$0xff]
  %v1022 = vld [vmem:[%s0 + $0x3f8] sm:$0xff]
  %v1023 = vld [vmem:[%s0 + $0x400] sm:$0xff]
  %v1024 = vld [vmem:[%s0 + $0x408] sm:$0xff]
  %v1025 = vld [vmem:[%s0 + $0x410] sm:$0xff]
  %v1026 = vld [vmem:[%s0 + $0x418] sm:$0xff]
  %v1027 = vld [vmem:[%s0 + $0x420] sm:$0xff]
  %v1028 = vld [vmem:[%s0 + $0x428] sm:$0xff]
  %v1029 = vld [vmem:[%s0 + $0x430] sm:$0xff]
  %v1030 = vld [vmem:[%s0 + $0x438] sm:$0xff]
  %v1031 = vld [vmem:[%s0 + $0x440] sm:$0xff]
  %v1032 = vld [vmem:[%s0 + $0x448] sm:$0xff]
  %v1033 = vld [vmem:[%s0 + $0x450] sm:$0xff]
  %v1034 = vld [vmem:[%s0 + $0x458] sm:$0xff]
  %v1035 = vld [vmem:[%s0 + $0x460] sm:$0xff]
  %v1036 = vld [vmem:[%s0 + $0x468] sm:$0xff]
  %v1037 = vld [vmem:[%s0 + $0x470] sm:$0xff]
  %v1038 = vld [vmem:[%s0 + $0x478] sm:$0xff]
  %1039 = vmatprep.subr.mxu0 %v87
  %1040 = vmatpush1.msra.mxu0 %v86
  %1041 = vmatprep.subr.mxu0 %v89
  %1042 = vmatpush1.msra.mxu0 %v88
  %1043 = vmatprep.subr.mxu0 %v91
  %1044 = vmatpush1.msra.mxu0 %v90
  %1045 = vmatprep.subr.mxu0 %v93
  %1046 = vmatpush1.msra.mxu0 %v92
  %1047 = vmatprep.subr.mxu0 %v95
  %1048 = vmatpush1.msra.mxu0 %v94
  %1049 = vmatprep.subr.mxu0 %v97
  %1050 = vmatpush1.msra.mxu0 %v96
  %1051 = vmatprep.subr.mxu0 %v99
  %1052 = vmatpush1.msra.mxu0 %v98
  %1053 = vmatprep.subr.mxu0 %v101
  %1054 = vmatpush1.msra.mxu0 %v100
  %1055 = vmatprep.subr.mxu0 %v103
  %1056 = vmatpush1.msra.mxu0 %v102
  %1057 = vmatprep.subr.mxu0 %v105
  %1058 = vmatpush1.msra.mxu0 %v104
  %1059 = vmatprep.subr.mxu0 %v107
  %1060 = vmatpush1.msra.mxu0 %v106
  %1061 = vmatprep.subr.mxu0 %v109
  %1062 = vmatpush1.msra.mxu0 %v108
  %1063 = vmatprep.subr.mxu0 %v111
  %1064 = vmatpush1.msra.mxu0 %v110
  %1065 = vmatprep.subr.mxu0 %v113
  %1066 = vmatpush1.msra.mxu0 %v112
  %1067 = vmatprep.subr.mxu0 %v115
  %1068 = vmatpush1.msra.mxu0 %v114
  %1069 = vmatprep.subr.mxu0 %v117
  %1070 = vmatpush1.msra.mxu0 %v116
  %1071 = vmatprep.subr.mxu0 %v119
  %1072 = vmatpush1.msra.mxu0 %v118
  %1073 = vmatprep.subr.mxu0 %v121
  %1074 = vmatpush1.msra.mxu0 %v120
  %1075 = vmatprep.subr.mxu0 %v123
  %1076 = vmatpush1.msra.mxu0 %v122
  %1077 = vmatprep.subr.mxu0 %v125
  %1078 = vmatpush1.msra.mxu0 %v124
  %1079 = vmatprep.subr.mxu0 %v127
  %1080 = vmatpush1.msra.mxu0 %v126
  %1081 = vmatprep.subr.mxu0 %v129
  %1082 = vmatpush1.msra.mxu0 %v128
  %1083 = vmatprep.subr.mxu0 %v131
  %1084 = vmatpush1.msra.mxu0 %v130
  %1085 = vmatprep.subr.mxu0 %v133
  %1086 = vmatpush1.msra.mxu0 %v132
  %1087 = vmatprep.subr.mxu0 %v135
  %1088 = vmatpush1.msra.mxu0 %v134
  %1089 = vmatprep.subr.mxu0 %v137
  %1090 = vmatpush1.msra.mxu0 %v136
  %1091 = vmatprep.subr.mxu0 %v139
  %1092 = vmatpush1.msra.mxu0 %v138
  %1093 = vmatprep.subr.mxu0 %v141
  %1094 = vmatpush1.msra.mxu0 %v140
  %1095 = vmatprep.subr.mxu0 %v143
  %1096 = vmatpush1.msra.mxu0 %v142
  %1097 = vmatprep.subr.mxu0 %v145
  %1098 = vmatpush1.msra.mxu0 %v144
  %1099 = vmatprep.subr.mxu0 %v147
  %1100 = vmatpush1.msra.mxu0 %v146
  %1101 = vmatprep.subr.mxu0 %v149
  %1102 = vmatpush1.msra.mxu0 %v148
  %1103 = vmatprep.mubr.f32.mxu0 %v968
  %1104 = vmatmul.mubr.f32.gmra.mrb[0].mxu0 %v967
  %v1105 = vpop.f32.mrb[0].mxu0
  %v1106 = vadd.f32 %v379, %v1105
  %v1107 = vpop.f32.mrb[0].mxu0
  %v1108 = vadd.f32 %v383, %v1107
  %1109 = vmatprep.mubr.f32.mxu0 %v977
  %1110 = vmatmul.mubr.f32.gmra.mrb[0].mxu0 %v976
  %v1111 = vpop.f32.mrb[0].mxu0
  %v1112 = vadd.f32 %v379, %v1111
  %v1113 = vpop.f32.mrb[0].mxu0
  %v1114 = vadd.f32 %v383, %v1113
  %1115 = vmatprep.mubr.f32.mxu0 %v986
  %1116 = vmatmul.mubr.f32.gmra.mrb[0].mxu0 %v985
  %v1117 = vpop.f32.mrb[0].mxu0
  %v1118 = vadd.f32 %v379, %v1117
  %v1119 = vpop.f32.mrb[0].mxu0
  %v1120 = vadd.f32 %v383, %v1119
  %1121 = vmatprep.mubr.f32.mxu0 %v995
  %1122 = vmatmul.mubr.f32.gmra.mrb[0].mxu0 %v994
  %v1123 = vpop.f32.mrb[0].mxu0
  %v1124 = vadd.f32 %v379, %v1123
  %v1125 = vpop.f32.mrb[0].mxu0
  %v1126 = vadd.f32 %v383, %v1125
  %1127 = vmatprep.mubr.f32.mxu0 %v1004
  %1128 = vmatmul.mubr.f32.gmra.mrb[0].mxu0 %v1003
  %v1129 = vpop.f32.mrb[0].mxu0
  %v1130 = vadd.f32 %v379, %v1129
  %v1131 = vpop.f32.mrb[0].mxu0
  %v1132 = vadd.f32 %v383, %v1131
  %1133 = vmatprep.mubr.f32.mxu0 %v1013
  %1134 = vmatmul.mubr.f32.gmra.mrb[0].mxu0 %v1012
  %v1135 = vpop.f32.mrb[0].mxu0
  %v1136 = vadd.f32 %v379, %v1135
  %v1137 = vpop.f32.mrb[0].mxu0
  %v1138 = vadd.f32 %v383, %v1137
  %1139 = vmatprep.mubr.f32.mxu0 %v1022
  %1140 = vmatmul.mubr.f32.gmra.mrb[0].mxu0 %v1021
  %v1141 = vpop.f32.mrb[0].mxu0
  %v1142 = vadd.f32 %v379, %v1141
  %v1143 = vpop.f32.mrb[0].mxu0
  %v1144 = vadd.f32 %v383, %v1143
  %1145 = vmatprep.mubr.f32.mxu0 %v1031
  %1146 = vmatmul.mubr.f32.gmra.mrb[0].mxu0 %v1030
  %v1147 = vpop.f32.mrb[0].mxu0
  %v1148 = vadd.f32 %v379, %v1147
  %v1149 = vpop.f32.mrb[0].mxu0
  %v1150 = vadd.f32 %v383, %v1149
  %1151 = vdwg.mxu0
  %1152 = vmatprep.subr.mxu0 %v151
  %1153 = vmatpush1.msra.mxu0 %v150
  %1154 = vmatprep.subr.mxu0 %v153
  %1155 = vmatpush1.msra.mxu0 %v152
  %1156 = vmatprep.subr.mxu0 %v155
  %1157 = vmatpush1.msra.mxu0 %v154
  %1158 = vmatprep.subr.mxu0 %v157
  %1159 = vmatpush1.msra.mxu0 %v156
  %1160 = vmatprep.subr.mxu0 %v159
  %1161 = vmatpush1.msra.mxu0 %v158
  %1162 = vmatprep.subr.mxu0 %v161
  %1163 = vmatpush1.msra.mxu0 %v160
  %1164 = vmatprep.subr.mxu0 %v163
  %1165 = vmatpush1.msra.mxu0 %v162
  %1166 = vmatprep.subr.mxu0 %v165
  %1167 = vmatpush1.msra.mxu0 %v164
  %1168 = vmatprep.subr.mxu0 %v167
  %1169 = vmatpush1.msra.mxu0 %v166
  %1170 = vmatprep.subr.mxu0 %v169
  %1171 = vmatpush1.msra.mxu0 %v168
  %1172 = vmatprep.subr.mxu0 %v171
  %1173 = vmatpush1.msra.mxu0 %v170
  %1174 = vmatprep.subr.mxu0 %v173
  %1175 = vmatpush1.msra.mxu0 %v172
  %1176 = vmatprep.subr.mxu0 %v175
  %1177 = vmatpush1.msra.mxu0 %v174
  %1178 = vmatprep.subr.mxu0 %v177
  %1179 = vmatpush1.msra.mxu0 %v176
  %1180 = vmatprep.subr.mxu0 %v179
  %1181 = vmatpush1.msra.mxu0 %v178
  %1182 = vmatprep.subr.mxu0 %v181
  %1183 = vmatpush1.msra.mxu0 %v180
  %1184 = vmatprep.subr.mxu0 %v183
  %1185 = vmatpush1.msra.mxu0 %v182
  %1186 = vmatprep.subr.mxu0 %v185
  %1187 = vmatpush1.msra.mxu0 %v184
  %1188 = vmatprep.subr.mxu0 %v187
  %1189 = vmatpush1.msra.mxu0 %v186
  %1190 = vmatprep.subr.mxu0 %v189
  %1191 = vmatpush1.msra.mxu0 %v188
  %1192 = vmatprep.subr.mxu0 %v191
  %1193 = vmatpush1.msra.mxu0 %v190
  %1194 = vmatprep.subr.mxu0 %v193
  %1195 = vmatpush1.msra.mxu0 %v192
  %1196 = vmatprep.subr.mxu0 %v195
  %1197 = vmatpush1.msra.mxu0 %v194
  %1198 = vmatprep.subr.mxu0 %v197
  %1199 = vmatpush1.msra.mxu0 %v196
  %1200 = vmatprep.subr.mxu0 %v199
  %1201 = vmatpush1.msra.mxu0 %v198
  %1202 = vmatprep.subr.mxu0 %v201
  %1203 = vmatpush1.msra.mxu0 %v200
  %1204 = vmatprep.subr.mxu0 %v203
  %1205 = vmatpush1.msra.mxu0 %v202
  %1206 = vmatprep.subr.mxu0 %v205
  %1207 = vmatpush1.msra.mxu0 %v204
  %1208 = vmatprep.subr.mxu0 %v207
  %1209 = vmatpush1.msra.mxu0 %v206
  %1210 = vmatprep.subr.mxu0 %v209
  %1211 = vmatpush1.msra.mxu0 %v208
  %1212 = vmatprep.subr.mxu0 %v211
  %1213 = vmatpush1.msra.mxu0 %v210
  %1214 = vmatprep.subr.mxu0 %v213
  %1215 = vmatpush1.msra.mxu0 %v212
  %1216 = vmatprep.mubr.f32.mxu0 %v970
  %1217 = vmatmul.mubr.f32.gmra.mrb[0].mxu0 %v969
  %v1218 = vpop.f32.mrb[0].mxu0
  %v1219 = vadd.f32 %v1106, %v1218
  %v1220 = vpop.f32.mrb[0].mxu0
  %v1221 = vadd.f32 %v1108, %v1220
  %1222 = vmatprep.mubr.f32.mxu0 %v979
  %1223 = vmatmul.mubr.f32.gmra.mrb[0].mxu0 %v978
  %v1224 = vpop.f32.mrb[0].mxu0
  %v1225 = vadd.f32 %v1112, %v1224
  %v1226 = vpop.f32.mrb[0].mxu0
  %v1227 = vadd.f32 %v1114, %v1226
  %1228 = vmatprep.mubr.f32.mxu0 %v988
  %1229 = vmatmul.mubr.f32.gmra.mrb[0].mxu0 %v987
  %v1230 = vpop.f32.mrb[0].mxu0
  %v1231 = vadd.f32 %v1118, %v1230
  %v1232 = vpop.f32.mrb[0].mxu0
  %v1233 = vadd.f32 %v1120, %v1232
  %1234 = vmatprep.mubr.f32.mxu0 %v997
  %1235 = vmatmul.mubr.f32.gmra.mrb[0].mxu0 %v996
  %v1236 = vpop.f32.mrb[0].mxu0
  %v1237 = vadd.f32 %v1124, %v1236
  %v1238 = vpop.f32.mrb[0].mxu0
  %v1239 = vadd.f32 %v1126, %v1238
  %1240 = vmatprep.mubr.f32.mxu0 %v1006
  %1241 = vmatmul.mubr.f32.gmra.mrb[0].mxu0 %v1005
  %v1242 = vpop.f32.mrb[0].mxu0
  %v1243 = vadd.f32 %v1130, %v1242
  %v1244 = vpop.f32.mrb[0].mxu0
  %v1245 = vadd.f32 %v1132, %v1244
  %1246 = vmatprep.mubr.f32.mxu0 %v1015
  %1247 = vmatmul.mubr.f32.gmra.mrb[0].mxu0 %v1014
  %v1248 = vpop.f32.mrb[0].mxu0
  %v1249 = vadd.f32 %v1136, %v1248
  %v1250 = vpop.f32.mrb[0].mxu0
  %v1251 = vadd.f32 %v1138, %v1250
  %1252 = vmatprep.mubr.f32.mxu0 %v1024
  %1253 = vmatmul.mubr.f32.gmra.mrb[0].mxu0 %v1023
  %v1254 = vpop.f32.mrb[0].mxu0
  %v1255 = vadd.f32 %v1142, %v1254
  %v1256 = vpop.f32.mrb[0].mxu0
  %v1257 = vadd.f32 %v1144, %v1256
  %1258 = vmatprep.mubr.f32.mxu0 %v1033
  %1259 = vmatmul.mubr.f32.gmra.mrb[0].mxu0 %v1032
  %v1260 = vpop.f32.mrb[0].mxu0
  %v1261 = vadd.f32 %v1148, %v1260
  %v1262 = vpop.f32.mrb[0].mxu0
  %v1263 = vadd.f32 %v1150, %v1262
  %1264 = vdwg.mxu0
  %1265 = vmatprep.subr.mxu0 %v215
  %1266 = vmatpush1.msra.mxu0 %v214
  %1267 = vmatprep.subr.mxu0 %v217
  %1268 = vmatpush1.msra.mxu0 %v216
  %1269 = vmatprep.subr.mxu0 %v219
  %1270 = vmatpush1.msra.mxu0 %v218
  %1271 = vmatprep.subr.mxu0 %v221
  %1272 = vmatpush1.msra.mxu0 %v220
  %1273 = vmatprep.subr.mxu0 %v223
  %1274 = vmatpush1.msra.mxu0 %v222
  %1275 = vmatprep.subr.mxu0 %v225
  %1276 = vmatpush1.msra.mxu0 %v224
  %1277 = vmatprep.subr.mxu0 %v227
  %1278 = vmatpush1.msra.mxu0 %v226
  %1279 = vmatprep.subr.mxu0 %v229
  %1280 = vmatpush1.msra.mxu0 %v228
  %1281 = vmatprep.subr.mxu0 %v231
  %1282 = vmatpush1.msra.mxu0 %v230
  %1283 = vmatprep.subr.mxu0 %v233
  %1284 = vmatpush1.msra.mxu0 %v232
  %1285 = vmatprep.subr.mxu0 %v235
  %1286 = vmatpush1.msra.mxu0 %v234
  %1287 = vmatprep.subr.mxu0 %v237
  %1288 = vmatpush1.msra.mxu0 %v236
  %1289 = vmatprep.subr.mxu0 %v239
  %1290 = vmatpush1.msra.mxu0 %v238
  %1291 = vmatprep.subr.mxu0 %v241
  %1292 = vmatpush1.msra.mxu0 %v240
  %1293 = vmatprep.subr.mxu0 %v243
  %1294 = vmatpush1.msra.mxu0 %v242
  %1295 = vmatprep.subr.mxu0 %v245
  %1296 = vmatpush1.msra.mxu0 %v244
  %1297 = vmatprep.subr.mxu0 %v247
  %1298 = vmatpush1.msra.mxu0 %v246
  %1299 = vmatprep.subr.mxu0 %v249
  %1300 = vmatpush1.msra.mxu0 %v248
  %1301 = vmatprep.subr.mxu0 %v251
  %1302 = vmatpush1.msra.mxu0 %v250
  %1303 = vmatprep.subr.mxu0 %v253
  %1304 = vmatpush1.msra.mxu0 %v252
  %1305 = vmatprep.subr.mxu0 %v255
  %1306 = vmatpush1.msra.mxu0 %v254
  %1307 = vmatprep.subr.mxu0 %v257
  %1308 = vmatpush1.msra.mxu0 %v256
  %1309 = vmatprep.subr.mxu0 %v259
  %1310 = vmatpush1.msra.mxu0 %v258
  %1311 = vmatprep.subr.mxu0 %v261
  %1312 = vmatpush1.msra.mxu0 %v260
  %1313 = vmatprep.subr.mxu0 %v263
  %1314 = vmatpush1.msra.mxu0 %v262
  %1315 = vmatprep.subr.mxu0 %v265
  %1316 = vmatpush1.msra.mxu0 %v264
  %1317 = vmatprep.subr.mxu0 %v267
  %1318 = vmatpush1.msra.mxu0 %v266
  %1319 = vmatprep.subr.mxu0 %v269
  %1320 = vmatpush1.msra.mxu0 %v268
  %1321 = vmatprep.subr.mxu0 %v271
  %1322 = vmatpush1.msra.mxu0 %v270
  %1323 = vmatprep.subr.mxu0 %v273
  %1324 = vmatpush1.msra.mxu0 %v272
  %1325 = vmatprep.subr.mxu0 %v275
  %1326 = vmatpush1.msra.mxu0 %v274
  %1327 = vmatprep.subr.mxu0 %v277
  %1328 = vmatpush1.msra.mxu0 %v276
  %1329 = vmatprep.mubr.f32.mxu0 %v972
  %1330 = vmatmul.mubr.f32.gmra.mrb[0].mxu0 %v971
  %v1331 = vpop.f32.mrb[0].mxu0
  %v1332 = vadd.f32 %v1219, %v1331
  %v1333 = vpop.f32.mrb[0].mxu0
  %v1334 = vadd.f32 %v1221, %v1333
  %1335 = vmatprep.mubr.f32.mxu0 %v981
  %1336 = vmatmul.mubr.f32.gmra.mrb[0].mxu0 %v980
  %v1337 = vpop.f32.mrb[0].mxu0
  %v1338 = vadd.f32 %v1225, %v1337
  %v1339 = vpop.f32.mrb[0].mxu0
  %v1340 = vadd.f32 %v1227, %v1339
  %1341 = vmatprep.mubr.f32.mxu0 %v990
  %1342 = vmatmul.mubr.f32.gmra.mrb[0].mxu0 %v989
  %v1343 = vpop.f32.mrb[0].mxu0
  %v1344 = vadd.f32 %v1231, %v1343
  %v1345 = vpop.f32.mrb[0].mxu0
  %v1346 = vadd.f32 %v1233, %v1345
  %1347 = vmatprep.mubr.f32.mxu0 %v999
  %1348 = vmatmul.mubr.f32.gmra.mrb[0].mxu0 %v998
  %v1349 = vpop.f32.mrb[0].mxu0
  %v1350 = vadd.f32 %v1237, %v1349
  %v1351 = vpop.f32.mrb[0].mxu0
  %v1352 = vadd.f32 %v1239, %v1351
  %1353 = vmatprep.mubr.f32.mxu0 %v1008
  %1354 = vmatmul.mubr.f32.gmra.mrb[0].mxu0 %v1007
  %v1355 = vpop.f32.mrb[0].mxu0
  %v1356 = vadd.f32 %v1243, %v1355
  %v1357 = vpop.f32.mrb[0].mxu0
  %v1358 = vadd.f32 %v1245, %v1357
  %1359 = vmatprep.mubr.f32.mxu0 %v1017
  %1360 = vmatmul.mubr.f32.gmra.mrb[0].mxu0 %v1016
  %v1361 = vpop.f32.mrb[0].mxu0
  %v1362 = vadd.f32 %v1249, %v1361
  %v1363 = vpop.f32.mrb[0].mxu0
  %v1364 = vadd.f32 %v1251, %v1363
  %1365 = vmatprep.mubr.f32.mxu0 %v1026
  %1366 = vmatmul.mubr.f32.gmra.mrb[0].mxu0 %v1025
  %v1367 = vpop.f32.mrb[0].mxu0
  %v1368 = vadd.f32 %v1255, %v1367
  %v1369 = vpop.f32.mrb[0].mxu0
  %v1370 = vadd.f32 %v1257, %v1369
  %1371 = vmatprep.mubr.f32.mxu0 %v1035
  %1372 = vmatmul.mubr.f32.gmra.mrb[0].mxu0 %v1034
  %v1373 = vpop.f32.mrb[0].mxu0
  %v1374 = vadd.f32 %v1261, %v1373
  %v1375 = vpop.f32.mrb[0].mxu0
  %v1376 = vadd.f32 %v1263, %v1375
  %1377 = vdwg.mxu0
  %1378 = vmatprep.subr.mxu0 %v279
  %1379 = vmatpush1.msra.mxu0 %v278
  %1380 = vmatprep.subr.mxu0 %v281
  %1381 = vmatpush1.msra.mxu0 %v280
  %1382 = vmatprep.subr.mxu0 %v283
  %1383 = vmatpush1.msra.mxu0 %v282
  %1384 = vmatprep.subr.mxu0 %v285
  %1385 = vmatpush1.msra.mxu0 %v284
  %1386 = vmatprep.subr.mxu0 %v287
  %1387 = vmatpush1.msra.mxu0 %v286
  %1388 = vmatprep.subr.mxu0 %v289
  %1389 = vmatpush1.msra.mxu0 %v288
  %1390 = vmatprep.subr.mxu0 %v291
  %1391 = vmatpush1.msra.mxu0 %v290
  %1392 = vmatprep.subr.mxu0 %v293
  %1393 = vmatpush1.msra.mxu0 %v292
  %1394 = vmatprep.subr.mxu0 %v295
  %1395 = vmatpush1.msra.mxu0 %v294
  %1396 = vmatprep.subr.mxu0 %v297
  %1397 = vmatpush1.msra.mxu0 %v296
  %1398 = vmatprep.subr.mxu0 %v299
  %1399 = vmatpush1.msra.mxu0 %v298
  %1400 = vmatprep.subr.mxu0 %v301
  %1401 = vmatpush1.msra.mxu0 %v300
  %1402 = vmatprep.subr.mxu0 %v303
  %1403 = vmatpush1.msra.mxu0 %v302
  %1404 = vmatprep.subr.mxu0 %v305
  %1405 = vmatpush1.msra.mxu0 %v304
  %1406 = vmatprep.subr.mxu0 %v307
  %1407 = vmatpush1.msra.mxu0 %v306
  %1408 = vmatprep.subr.mxu0 %v309
  %1409 = vmatpush1.msra.mxu0 %v308
  %1410 = vmatprep.subr.mxu0 %v311
  %1411 = vmatpush1.msra.mxu0 %v310
  %1412 = vmatprep.subr.mxu0 %v313
  %1413 = vmatpush1.msra.mxu0 %v312
  %1414 = vmatprep.subr.mxu0 %v315
  %1415 = vmatpush1.msra.mxu0 %v314
  %1416 = vmatprep.subr.mxu0 %v317
  %1417 = vmatpush1.msra.mxu0 %v316
  %1418 = vmatprep.subr.mxu0 %v319
  %1419 = vmatpush1.msra.mxu0 %v318
  %1420 = vmatprep.subr.mxu0 %v321
  %1421 = vmatpush1.msra.mxu0 %v320
  %1422 = vmatprep.subr.mxu0 %v323
  %1423 = vmatpush1.msra.mxu0 %v322
  %1424 = vmatprep.subr.mxu0 %v325
  %1425 = vmatpush1.msra.mxu0 %v324
  %1426 = vmatprep.subr.mxu0 %v327
  %1427 = vmatpush1.msra.mxu0 %v326
  %1428 = vmatprep.subr.mxu0 %v329
  %1429 = vmatpush1.msra.mxu0 %v328
  %1430 = vmatprep.subr.mxu0 %v331
  %1431 = vmatpush1.msra.mxu0 %v330
  %1432 = vmatprep.subr.mxu0 %v333
  %1433 = vmatpush1.msra.mxu0 %v332
  %1434 = vmatprep.subr.mxu0 %v335
  %1435 = vmatpush1.msra.mxu0 %v334
  %1436 = vmatprep.subr.mxu0 %v337
  %1437 = vmatpush1.msra.mxu0 %v336
  %1438 = vmatprep.subr.mxu0 %v339
  %1439 = vmatpush1.msra.mxu0 %v338
  %1440 = vmatprep.subr.mxu0 %v341
  %1441 = vmatpush1.msra.mxu0 %v340
  %1442 = vmatprep.mubr.f32.mxu0 %v974
  %1443 = vmatmul.mubr.f32.gmra.mrb[0].mxu0 %v973
  %v1444 = vpop.f32.mrb[0].mxu0
  %v1445 = vadd.f32 %v1332, %v1444
  %v1446 = vpop.f32.mrb[0].mxu0
  %v1447 = vadd.f32 %v1334, %v1446
  %1448 = vmatprep.mubr.f32.mxu0 %v983
  %1449 = vmatmul.mubr.f32.gmra.mrb[0].mxu0 %v982
  %v1450 = vpop.f32.mrb[0].mxu0
  %v1451 = vadd.f32 %v1338, %v1450
  %v1452 = vpop.f32.mrb[0].mxu0
  %v1453 = vadd.f32 %v1340, %v1452
  %1454 = vmatprep.mubr.f32.mxu0 %v992
  %1455 = vmatmul.mubr.f32.gmra.mrb[0].mxu0 %v991
  %v1456 = vpop.f32.mrb[0].mxu0
  %v1457 = vadd.f32 %v1344, %v1456
  %v1458 = vpop.f32.mrb[0].mxu0
  %v1459 = vadd.f32 %v1346, %v1458
  %1460 = vmatprep.mubr.f32.mxu0 %v1001
  %1461 = vmatmul.mubr.f32.gmra.mrb[0].mxu0 %v1000
  %v1462 = vpop.f32.mrb[0].mxu0
  %v1463 = vadd.f32 %v1350, %v1462
  %v1464 = vpop.f32.mrb[0].mxu0
  %v1465 = vadd.f32 %v1352, %v1464
  %1466 = vmatprep.mubr.f32.mxu0 %v1010
  %1467 = vmatmul.mubr.f32.gmra.mrb[0].mxu0 %v1009
  %v1468 = vpop.f32.mrb[0].mxu0
  %v1469 = vadd.f32 %v1356, %v1468
  %v1470 = vpop.f32.mrb[0].mxu0
  %v1471 = vadd.f32 %v1358, %v1470
  %1472 = vmatprep.mubr.f32.mxu0 %v1019
  %1473 = vmatmul.mubr.f32.gmra.mrb[0].mxu0 %v1018
  %v1474 = vpop.f32.mrb[0].mxu0
  %v1475 = vadd.f32 %v1362, %v1474
  %v1476 = vpop.f32.mrb[0].mxu0
  %v1477 = vadd.f32 %v1364, %v1476
  %1478 = vmatprep.mubr.f32.mxu0 %v1028
  %1479 = vmatmul.mubr.f32.gmra.mrb[0].mxu0 %v1027
  %v1480 = vpop.f32.mrb[0].mxu0
  %v1481 = vadd.f32 %v1368, %v1480
  %v1482 = vpop.f32.mrb[0].mxu0
  %v1483 = vadd.f32 %v1370, %v1482
  %1484 = vmatprep.mubr.f32.mxu0 %v1037
  %1485 = vmatmul.mubr.f32.gmra.mrb[0].mxu0 %v1036
  %v1486 = vpop.f32.mrb[0].mxu0
  %v1487 = vadd.f32 %v1374, %v1486
  %v1488 = vpop.f32.mrb[0].mxu0
  %v1489 = vadd.f32 %v1376, %v1488
  %1490 = vdwg.mxu0
  %1491 = vmatprep.subr.mxu0 %v343
  %1492 = vmatpush1.msra.mxu0 %v342
  %1493 = vmatprep.subr.mxu0 %v345
  %1494 = vmatpush1.msra.mxu0 %v344
  %1495 = vmatprep.subr.mxu0 %v347
  %1496 = vmatpush1.msra.mxu0 %v346
  %1497 = vmatprep.subr.mxu0 %v349
  %1498 = vmatpush1.msra.mxu0 %v348
  %1499 = vmatprep.subr.mxu0 %v351
  %1500 = vmatpush1.msra.mxu0 %v350
  %1501 = vmatprep.subr.mxu0 %v353
  %1502 = vmatpush1.msra.mxu0 %v352
  %1503 = vmatprep.subr.mxu0 %v355
  %1504 = vmatpush1.msra.mxu0 %v354
  %1505 = vmatprep.subr.mxu0 %v357
  %1506 = vmatpush1.msra.mxu0 %v356
  %1507 = vmatprep.subr.mxu0 %v359
  %1508 = vmatpush1.msra.mxu0 %v358
  %1509 = vmatprep.subr.mxu0 %v361
  %1510 = vmatpush1.msra.mxu0 %v360
  %1511 = vmatprep.subr.mxu0 %v363
  %1512 = vmatpush1.msra.mxu0 %v362
  %1513 = vmatprep.subr.mxu0 %v365
  %1514 = vmatpush1.msra.mxu0 %v364
  %1515 = vmatprep.subr.mxu0 %v367
  %1516 = vmatpush1.msra.mxu0 %v366
  %1517 = vmatprep.subr.mxu0 %v369
  %1518 = vmatpush1.msra.mxu0 %v368
  %1519 = vmatprep.subr.mxu0 %v371
  %1520 = vmatpush1.msra.mxu0 %v370
  %1521 = vmatprep.subr.mxu0 %v373
  %1522 = vmatpush1.msra.mxu0 %v372
  %1523 = vmatprep.subr.mxu0 0.0
  %1524 = vmatpush1.msra.mxu0 0.0
  %1525 = vmatprep.subr.mxu0 0.0
  %1526 = vmatpush1.msra.mxu0 0.0
  %1527 = vmatprep.subr.mxu0 0.0
  %1528 = vmatpush1.msra.mxu0 0.0
  %1529 = vmatprep.subr.mxu0 0.0
  %1530 = vmatpush1.msra.mxu0 0.0
  %1531 = vmatprep.subr.mxu0 0.0
  %1532 = vmatpush1.msra.mxu0 0.0
  %1533 = vmatprep.subr.mxu0 0.0
  %1534 = vmatpush1.msra.mxu0 0.0
  %1535 = vmatprep.subr.mxu0 0.0
  %1536 = vmatpush1.msra.mxu0 0.0
  %1537 = vmatprep.subr.mxu0 0.0
  %1538 = vmatpush1.msra.mxu0 0.0
  %1539 = vmatprep.subr.mxu0 0.0
  %1540 = vmatpush1.msra.mxu0 0.0
  %1541 = vmatprep.subr.mxu0 0.0
  %1542 = vmatpush1.msra.mxu0 0.0
  %1543 = vmatprep.subr.mxu0 0.0
  %1544 = vmatpush1.msra.mxu0 0.0
  %1545 = vmatprep.subr.mxu0 0.0
  %1546 = vmatpush1.msra.mxu0 0.0
  %1547 = vmatprep.subr.mxu0 0.0
  %1548 = vmatpush1.msra.mxu0 0.0
  %1549 = vmatprep.subr.mxu0 0.0
  %1550 = vmatpush1.msra.mxu0 0.0
  %1551 = vmatprep.subr.mxu0 0.0
  %1552 = vmatpush1.msra.mxu0 0.0
  %1553 = vmatprep.subr.mxu0 0.0
  %1554 = vmatpush1.msra.mxu0 0.0
  %1555 = vmatprep.mubr.f32.mxu0 0.0
  %1556 = vmatmul.mubr.f32.gmra.mrb[0].mxu0 %v975
  %v1557 = vpop.f32.mrb[0].mxu0
  %v1558 = vadd.f32 %v1445, %v1557
  %v1559 = vpop.f32.mrb[0].mxu0
  %v1560 = vadd.f32 %v1447, %v1559
  %1561 = vmatprep.mubr.f32.mxu0 0.0
  %1562 = vmatmul.mubr.f32.gmra.mrb[0].mxu0 %v984
  %v1563 = vpop.f32.mrb[0].mxu0
  %v1564 = vadd.f32 %v1451, %v1563
  %v1565 = vpop.f32.mrb[0].mxu0
  %v1566 = vadd.f32 %v1453, %v1565
  %1567 = vmatprep.mubr.f32.mxu0 0.0
  %1568 = vmatmul.mubr.f32.gmra.mrb[0].mxu0 %v993
  %v1569 = vpop.f32.mrb[0].mxu0
  %v1570 = vadd.f32 %v1457, %v1569
  %v1571 = vpop.f32.mrb[0].mxu0
  %v1572 = vadd.f32 %v1459, %v1571
  %1573 = vmatprep.mubr.f32.mxu0 0.0
  %1574 = vmatmul.mubr.f32.gmra.mrb[0].mxu0 %v1002
  %v1575 = vpop.f32.mrb[0].mxu0
  %v1576 = vadd.f32 %v1463, %v1575
  %v1577 = vpop.f32.mrb[0].mxu0
  %v1578 = vadd.f32 %v1465, %v1577
  %1579 = vmatprep.mubr.f32.mxu0 0.0
  %1580 = vmatmul.mubr.f32.gmra.mrb[0].mxu0 %v1011
  %v1581 = vpop.f32.mrb[0].mxu0
  %v1582 = vadd.f32 %v1469, %v1581
  %v1583 = vpop.f32.mrb[0].mxu0
  %v1584 = vadd.f32 %v1471, %v1583
  %1585 = vmatprep.mubr.f32.mxu0 0.0
  %1586 = vmatmul.mubr.f32.gmra.mrb[0].mxu0 %v1020
  %v1587 = vpop.f32.mrb[0].mxu0
  %v1588 = vadd.f32 %v1475, %v1587
  %v1589 = vpop.f32.mrb[0].mxu0
  %v1590 = vadd.f32 %v1477, %v1589
  %1591 = vmatprep.mubr.f32.mxu0 0.0
  %1592 = vmatmul.mubr.f32.gmra.mrb[0].mxu0 %v1029
  %v1593 = vpop.f32.mrb[0].mxu0
  %v1594 = vadd.f32 %v1481, %v1593
  %v1595 = vpop.f32.mrb[0].mxu0
  %v1596 = vadd.f32 %v1483, %v1595
  %1597 = vmatprep.mubr.f32.mxu0 0.0
  %1598 = vmatmul.mubr.f32.gmra.mrb[0].mxu0 %v1038
  %v1599 = vpop.f32.mrb[0].mxu0
  %v1600 = vadd.f32 %v1487, %v1599
  %v1601 = vpop.f32.mrb[0].mxu0
  %v1602 = vadd.f32 %v1489, %v1601
  %1603 = vdwg.mxu0
  %v1604 = vmax.f32 %v1558, 0.0
  %v1605 = vmax.f32 %v1560, 0.0
  %v1606 = vmax.f32 %v1564, 0.0
  %v1607 = vmax.f32 %v1566, 0.0
  %v1608 = vmax.f32 %v1570, 0.0
  %v1609 = vmax.f32 %v1572, 0.0
  %v1610 = vmax.f32 %v1576, 0.0
  %v1611 = vmax.f32 %v1578, 0.0
  %v1612 = vmax.f32 %v1582, 0.0
  %v1613 = vmax.f32 %v1584, 0.0
  %v1614 = vmax.f32 %v1588, 0.0
  %v1615 = vmax.f32 %v1590, 0.0
  %v1616 = vmax.f32 %v1594, 0.0
  %v1617 = vmax.f32 %v1596, 0.0
  %v1618 = vmax.f32 %v1600, 0.0
  %v1619 = vmax.f32 %v1602, 0.0
  %v1620 = vmax.f32 %v951, %v1604
  %v1621 = vmax.f32 %v952, %v1605
  %v1622 = vmax.f32 %v953, %v1606
  %v1623 = vmax.f32 %v954, %v1607
  %v1624 = vmax.f32 %v955, %v1608
  %v1625 = vmax.f32 %v956, %v1609
  %v1626 = vmax.f32 %v957, %v1610
  %v1627 = vmax.f32 %v958, %v1611
  %v1628 = vmax.f32 %v959, %v1612
  %v1629 = vmax.f32 %v960, %v1613
  %v1630 = vmax.f32 %v961, %v1614
  %v1631 = vmax.f32 %v962, %v1615
  %v1632 = vmax.f32 %v963, %v1616
  %v1633 = vmax.f32 %v964, %v1617
  %v1634 = vmax.f32 %v965, %v1618
  %v1635 = vmax.f32 %v966, %v1619
  %v1636 = vld [vmem:[%s0 + $0x480] sm:$0xff]
  %v1637 = vld [vmem:[%s0 + $0x488] sm:$0xff]
  %v1638 = vld [vmem:[%s0 + $0x490] sm:$0xff]
  %v1639 = vld [vmem:[%s0 + $0x498] sm:$0xff]
  %v1640 = vld [vmem:[%s0 + $0x4a0] sm:$0xff]
  %v1641 = vld [vmem:[%s0 + $0x4a8] sm:$0xff]
  %v1642 = vld [vmem:[%s0 + $0x4b0] sm:$0xff]
  %v1643 = vld [vmem:[%s0 + $0x4b8] sm:$0xff]
  %v1644 = vld [vmem:[%s0 + $0x4c0] sm:$0xff]
  %v1645 = vld [vmem:[%s0 + $0x4c8] sm:$0xff]
  %v1646 = vld [vmem:[%s0 + $0x4d0] sm:$0xff]
  %v1647 = vld [vmem:[%s0 + $0x4d8] sm:$0xff]
  %v1648 = vld [vmem:[%s0 + $0x4e0] sm:$0xff]
  %v1649 = vld [vmem:[%s0 + $0x4e8] sm:$0xff]
  %v1650 = vld [vmem:[%s0 + $0x4f0] sm:$0xff]
  %v1651 = vld [vmem:[%s0 + $0x4f8] sm:$0xff]
  %v1652 = vld [vmem:[%s0 + $0x500] sm:$0xff]
  %v1653 = vld [vmem:[%s0 + $0x508] sm:$0xff]
  %v1654 = vld [vmem:[%s0 + $0x510] sm:$0xff]
  %v1655 = vld [vmem:[%s0 + $0x518] sm:$0xff]
  %v1656 = vld [vmem:[%s0 + $0x520] sm:$0xff]
  %v1657 = vld [vmem:[%s0 + $0x528] sm:$0xff]
  %v1658 = vld [vmem:[%s0 + $0x530] sm:$0xff]
  %v1659 = vld [vmem:[%s0 + $0x538] sm:$0xff]
  %v1660 = vld [vmem:[%s0 + $0x540] sm:$0xff]
  %v1661 = vld [vmem:[%s0 + $0x548] sm:$0xff]
  %v1662 = vld [vmem:[%s0 + $0x550] sm:$0xff]
  %v1663 = vld [vmem:[%s0 + $0x558] sm:$0xff]
  %v1664 = vld [vmem:[%s0 + $0x560] sm:$0xff]
  %v1665 = vld [vmem:[%s0 + $0x568] sm:$0xff]
  %v1666 = vld [vmem:[%s0 + $0x570] sm:$0xff]
  %v1667 = vld [vmem:[%s0 + $0x578] sm:$0xff]
  %v1668 = vld [vmem:[%s0 + $0x580] sm:$0xff]
  %v1669 = vld [vmem:[%s0 + $0x588] sm:$0xff]
  %v1670 = vld [vmem:[%s0 + $0x590] sm:$0xff]
  %v1671 = vld [vmem:[%s0 + $0x598] sm:$0xff]
  %v1672 = vld [vmem:[%s0 + $0x5a0] sm:$0xff]
  %v1673 = vld [vmem:[%s0 + $0x5a8] sm:$0xff]
  %v1674 = vld [vmem:[%s0 + $0x5b0] sm:$0xff]
  %v1675 = vld [vmem:[%s0 + $0x5b8] sm:$0xff]
  %v1676 = vld [vmem:[%s0 + $0x5c0] sm:$0xff]
  %v1677 = vld [vmem:[%s0 + $0x5c8] sm:$0xff]
  %v1678 = vld [vmem:[%s0 + $0x5d0] sm:$0xff]
  %v1679 = vld [vmem:[%s0 + $0x5d8] sm:$0xff]
  %v1680 = vld [vmem:[%s0 + $0x5e0] sm:$0xff]
  %v1681 = vld [vmem:[%s0 + $0x5e8] sm:$0xff]
  %v1682 = vld [vmem:[%s0 + $0x5f0] sm:$0xff]
  %v1683 = vld [vmem:[%s0 + $0x5f8] sm:$0xff]
  %v1684 = vld [vmem:[%s0 + $0x600] sm:$0xff]
  %v1685 = vld [vmem:[%s0 + $0x608] sm:$0xff]
  %v1686 = vld [vmem:[%s0 + $0x610] sm:$0xff]
  %v1687 = vld [vmem:[%s0 + $0x618] sm:$0xff]
  %v1688 = vld [vmem:[%s0 + $0x620] sm:$0xff]
  %v1689 = vld [vmem:[%s0 + $0x628] sm:$0xff]
  %v1690 = vld [vmem:[%s0 + $0x630] sm:$0xff]
  %v1691 = vld [vmem:[%s0 + $0x638] sm:$0xff]
  %v1692 = vld [vmem:[%s0 + $0x640] sm:$0xff]
  %v1693 = vld [vmem:[%s0 + $0x648] sm:$0xff]
  %v1694 = vld [vmem:[%s0 + $0x650] sm:$0xff]
  %v1695 = vld [vmem:[%s0 + $0x658] sm:$0xff]
  %v1696 = vld [vmem:[%s0 + $0x660] sm:$0xff]
  %v1697 = vld [vmem:[%s0 + $0x668] sm:$0xff]
  %v1698 = vld [vmem:[%s0 + $0x670] sm:$0xff]
  %v1699 = vld [vmem:[%s0 + $0x678] sm:$0xff]
  %v1700 = vld [vmem:[%s0 + $0x680] sm:$0xff]
  %v1701 = vld [vmem:[%s0 + $0x688] sm:$0xff]
  %v1702 = vld [vmem:[%s0 + $0x690] sm:$0xff]
  %v1703 = vld [vmem:[%s0 + $0x698] sm:$0xff]
  %v1704 = vld [vmem:[%s0 + $0x6a0] sm:$0xff]
  %v1705 = vld [vmem:[%s0 + $0x6a8] sm:$0xff]
  %v1706 = vld [vmem:[%s0 + $0x6b0] sm:$0xff]
  %v1707 = vld [vmem:[%s0 + $0x6b8] sm:$0xff]
  %1708 = vmatprep.subr.mxu0 %v87
  %1709 = vmatpush1.msra.mxu0 %v86
  %1710 = vmatprep.subr.mxu0 %v89
  %1711 = vmatpush1.msra.mxu0 %v88
  %1712 = vmatprep.subr.mxu0 %v91
  %1713 = vmatpush1.msra.mxu0 %v90
  %1714 = vmatprep.subr.mxu0 %v93
  %1715 = vmatpush1.msra.mxu0 %v92
  %1716 = vmatprep.subr.mxu0 %v95
  %1717 = vmatpush1.msra.mxu0 %v94
  %1718 = vmatprep.subr.mxu0 %v97
  %1719 = vmatpush1.msra.mxu0 %v96
  %1720 = vmatprep.subr.mxu0 %v99
  %1721 = vmatpush1.msra.mxu0 %v98
  %1722 = vmatprep.subr.mxu0 %v101
  %1723 = vmatpush1.msra.mxu0 %v100
  %1724 = vmatprep.subr.mxu0 %v103
  %1725 = vmatpush1.msra.mxu0 %v102
  %1726 = vmatprep.subr.mxu0 %v105
  %1727 = vmatpush1.msra.mxu0 %v104
  %1728 = vmatprep.subr.mxu0 %v107
  %1729 = vmatpush1.msra.mxu0 %v106
  %1730 = vmatprep.subr.mxu0 %v109
  %1731 = vmatpush1.msra.mxu0 %v108
  %1732 = vmatprep.subr.mxu0 %v111
  %1733 = vmatpush1.msra.mxu0 %v110
  %1734 = vmatprep.subr.mxu0 %v113
  %1735 = vmatpush1.msra.mxu0 %v112
  %1736 = vmatprep.subr.mxu0 %v115
  %1737 = vmatpush1.msra.mxu0 %v114
  %1738 = vmatprep.subr.mxu0 %v117
  %1739 = vmatpush1.msra.mxu0 %v116
  %1740 = vmatprep.subr.mxu0 %v119
  %1741 = vmatpush1.msra.mxu0 %v118
  %1742 = vmatprep.subr.mxu0 %v121
  %1743 = vmatpush1.msra.mxu0 %v120
  %1744 = vmatprep.subr.mxu0 %v123
  %1745 = vmatpush1.msra.mxu0 %v122
  %1746 = vmatprep.subr.mxu0 %v125
  %1747 = vmatpush1.msra.mxu0 %v124
  %1748 = vmatprep.subr.mxu0 %v127
  %1749 = vmatpush1.msra.mxu0 %v126
  %1750 = vmatprep.subr.mxu0 %v129
  %1751 = vmatpush1.msra.mxu0 %v128
  %1752 = vmatprep.subr.mxu0 %v131
  %1753 = vmatpush1.msra.mxu0 %v130
  %1754 = vmatprep.subr.mxu0 %v133
  %1755 = vmatpush1.msra.mxu0 %v132
  %1756 = vmatprep.subr.mxu0 %v135
  %1757 = vmatpush1.msra.mxu0 %v134
  %1758 = vmatprep.subr.mxu0 %v137
  %1759 = vmatpush1.msra.mxu0 %v136
  %1760 = vmatprep.subr.mxu0 %v139
  %1761 = vmatpush1.msra.mxu0 %v138
  %1762 = vmatprep.subr.mxu0 %v141
  %1763 = vmatpush1.msra.mxu0 %v140
  %1764 = vmatprep.subr.mxu0 %v143
  %1765 = vmatpush1.msra.mxu0 %v142
  %1766 = vmatprep.subr.mxu0 %v145
  %1767 = vmatpush1.msra.mxu0 %v144
  %1768 = vmatprep.subr.mxu0 %v147
  %1769 = vmatpush1.msra.mxu0 %v146
  %1770 = vmatprep.subr.mxu0 %v149
  %1771 = vmatpush1.msra.mxu0 %v148
  %1772 = vmatprep.mubr.f32.mxu0 %v1637
  %1773 = vmatmul.mubr.f32.gmra.mrb[0].mxu0 %v1636
  %v1774 = vpop.f32.mrb[0].mxu0
  %v1775 = vadd.f32 %v379, %v1774
  %v1776 = vpop.f32.mrb[0].mxu0
  %v1777 = vadd.f32 %v383, %v1776
  %1778 = vmatprep.mubr.f32.mxu0 %v1646
  %1779 = vmatmul.mubr.f32.gmra.mrb[0].mxu0 %v1645
  %v1780 = vpop.f32.mrb[0].mxu0
  %v1781 = vadd.f32 %v379, %v1780
  %v1782 = vpop.f32.mrb[0].mxu0
  %v1783 = vadd.f32 %v383, %v1782
  %1784 = vmatprep.mubr.f32.mxu0 %v1655
  %1785 = vmatmul.mubr.f32.gmra.mrb[0].mxu0 %v1654
  %v1786 = vpop.f32.mrb[0].mxu0
  %v1787 = vadd.f32 %v379, %v1786
  %v1788 = vpop.f32.mrb[0].mxu0
  %v1789 = vadd.f32 %v383, %v1788
  %1790 = vmatprep.mubr.f32.mxu0 %v1664
  %1791 = vmatmul.mubr.f32.gmra.mrb[0].mxu0 %v1663
  %v1792 = vpop.f32.mrb[0].mxu0
  %v1793 = vadd.f32 %v379, %v1792
  %v1794 = vpop.f32.mrb[0].mxu0
  %v1795 = vadd.f32 %v383, %v1794
  %1796 = vmatprep.mubr.f32.mxu0 %v1673
  %1797 = vmatmul.mubr.f32.gmra.mrb[0].mxu0 %v1672
  %v1798 = vpop.f32.mrb[0].mxu0
  %v1799 = vadd.f32 %v379, %v1798
  %v1800 = vpop.f32.mrb[0].mxu0
  %v1801 = vadd.f32 %v383, %v1800
  %1802 = vmatprep.mubr.f32.mxu0 %v1682
  %1803 = vmatmul.mubr.f32.gmra.mrb[0].mxu0 %v1681
  %v1804 = vpop.f32.mrb[0].mxu0
  %v1805 = vadd.f32 %v379, %v1804
  %v1806 = vpop.f32.mrb[0].mxu0
  %v1807 = vadd.f32 %v383, %v1806
  %1808 = vmatprep.mubr.f32.mxu0 %v1691
  %1809 = vmatmul.mubr.f32.gmra.mrb[0].mxu0 %v1690
  %v1810 = vpop.f32.mrb[0].mxu0
  %v1811 = vadd.f32 %v379, %v1810
  %v1812 = vpop.f32.mrb[0].mxu0
  %v1813 = vadd.f32 %v383, %v1812
  %1814 = vmatprep.mubr.f32.mxu0 %v1700
  %1815 = vmatmul.mubr.f32.gmra.mrb[0].mxu0 %v1699
  %v1816 = vpop.f32.mrb[0].mxu0
  %v1817 = vadd.f32 %v379, %v1816
  %v1818 = vpop.f32.mrb[0].mxu0
  %v1819 = vadd.f32 %v383, %v1818
  %1820 = vdwg.mxu0
  %1821 = vmatprep.subr.mxu0 %v151
  %1822 = vmatpush1.msra.mxu0 %v150
  %1823 = vmatprep.subr.mxu0 %v153
  %1824 = vmatpush1.msra.mxu0 %v152
  %1825 = vmatprep.subr.mxu0 %v155
  %1826 = vmatpush1.msra.mxu0 %v154
  %1827 = vmatprep.subr.mxu0 %v157
  %1828 = vmatpush1.msra.mxu0 %v156
  %1829 = vmatprep.subr.mxu0 %v159
  %1830 = vmatpush1.msra.mxu0 %v158
  %1831 = vmatprep.subr.mxu0 %v161
  %1832 = vmatpush1.msra.mxu0 %v160
  %1833 = vmatprep.subr.mxu0 %v163
  %1834 = vmatpush1.msra.mxu0 %v162
  %1835 = vmatprep.subr.mxu0 %v165
  %1836 = vmatpush1.msra.mxu0 %v164
  %1837 = vmatprep.subr.mxu0 %v167
  %1838 = vmatpush1.msra.mxu0 %v166
  %1839 = vmatprep.subr.mxu0 %v169
  %1840 = vmatpush1.msra.mxu0 %v168
  %1841 = vmatprep.subr.mxu0 %v171
  %1842 = vmatpush1.msra.mxu0 %v170
  %1843 = vmatprep.subr.mxu0 %v173
  %1844 = vmatpush1.msra.mxu0 %v172
  %1845 = vmatprep.subr.mxu0 %v175
  %1846 = vmatpush1.msra.mxu0 %v174
  %1847 = vmatprep.subr.mxu0 %v177
  %1848 = vmatpush1.msra.mxu0 %v176
  %1849 = vmatprep.subr.mxu0 %v179
  %1850 = vmatpush1.msra.mxu0 %v178
  %1851 = vmatprep.subr.mxu0 %v181
  %1852 = vmatpush1.msra.mxu0 %v180
  %1853 = vmatprep.subr.mxu0 %v183
  %1854 = vmatpush1.msra.mxu0 %v182
  %1855 = vmatprep.subr.mxu0 %v185
  %1856 = vmatpush1.msra.mxu0 %v184
  %1857 = vmatprep.subr.mxu0 %v187
  %1858 = vmatpush1.msra.mxu0 %v186
  %1859 = vmatprep.subr.mxu0 %v189
  %1860 = vmatpush1.msra.mxu0 %v188
  %1861 = vmatprep.subr.mxu0 %v191
  %1862 = vmatpush1.msra.mxu0 %v190
  %1863 = vmatprep.subr.mxu0 %v193
  %1864 = vmatpush1.msra.mxu0 %v192
  %1865 = vmatprep.subr.mxu0 %v195
  %1866 = vmatpush1.msra.mxu0 %v194
  %1867 = vmatprep.subr.mxu0 %v197
  %1868 = vmatpush1.msra.mxu0 %v196
  %1869 = vmatprep.subr.mxu0 %v199
  %1870 = vmatpush1.msra.mxu0 %v198
  %1871 = vmatprep.subr.mxu0 %v201
  %1872 = vmatpush1.msra.mxu0 %v200
  %1873 = vmatprep.subr.mxu0 %v203
  %1874 = vmatpush1.msra.mxu0 %v202
  %1875 = vmatprep.subr.mxu0 %v205
  %1876 = vmatpush1.msra.mxu0 %v204
  %1877 = vmatprep.subr.mxu0 %v207
  %1878 = vmatpush1.msra.mxu0 %v206
  %1879 = vmatprep.subr.mxu0 %v209
  %1880 = vmatpush1.msra.mxu0 %v208
  %1881 = vmatprep.subr.mxu0 %v211
  %1882 = vmatpush1.msra.mxu0 %v210
  %1883 = vmatprep.subr.mxu0 %v213
  %1884 = vmatpush1.msra.mxu0 %v212
  %1885 = vmatprep.mubr.f32.mxu0 %v1639
  %1886 = vmatmul.mubr.f32.gmra.mrb[0].mxu0 %v1638
  %v1887 = vpop.f32.mrb[0].mxu0
  %v1888 = vadd.f32 %v1775, %v1887
  %v1889 = vpop.f32.mrb[0].mxu0
  %v1890 = vadd.f32 %v1777, %v1889
  %1891 = vmatprep.mubr.f32.mxu0 %v1648
  %1892 = vmatmul.mubr.f32.gmra.mrb[0].mxu0 %v1647
  %v1893 = vpop.f32.mrb[0].mxu0
  %v1894 = vadd.f32 %v1781, %v1893
  %v1895 = vpop.f32.mrb[0].mxu0
  %v1896 = vadd.f32 %v1783, %v1895
  %1897 = vmatprep.mubr.f32.mxu0 %v1657
  %1898 = vmatmul.mubr.f32.gmra.mrb[0].mxu0 %v1656
  %v1899 = vpop.f32.mrb[0].mxu0
  %v1900 = vadd.f32 %v1787, %v1899
  %v1901 = vpop.f32.mrb[0].mxu0
  %v1902 = vadd.f32 %v1789, %v1901
  %1903 = vmatprep.mubr.f32.mxu0 %v1666
  %1904 = vmatmul.mubr.f32.gmra.mrb[0].mxu0 %v1665
  %v1905 = vpop.f32.mrb[0].mxu0
  %v1906 = vadd.f32 %v1793, %v1905
  %v1907 = vpop.f32.mrb[0].mxu0
  %v1908 = vadd.f32 %v1795, %v1907
  %1909 = vmatprep.mubr.f32.mxu0 %v1675
  %1910 = vmatmul.mubr.f32.gmra.mrb[0].mxu0 %v1674
  %v1911 = vpop.f32.mrb[0].mxu0
  %v1912 = vadd.f32 %v1799, %v1911
  %v1913 = vpop.f32.mrb[0].mxu0
  %v1914 = vadd.f32 %v1801, %v1913
  %1915 = vmatprep.mubr.f32.mxu0 %v1684
  %1916 = vmatmul.mubr.f32.gmra.mrb[0].mxu0 %v1683
  %v1917 = vpop.f32.mrb[0].mxu0
  %v1918 = vadd.f32 %v1805, %v1917
  %v1919 = vpop.f32.mrb[0].mxu0
  %v1920 = vadd.f32 %v1807, %v1919
  %1921 = vmatprep.mubr.f32.mxu0 %v1693
  %1922 = vmatmul.mubr.f32.gmra.mrb[0].mxu0 %v1692
  %v1923 = vpop.f32.mrb[0].mxu0
  %v1924 = vadd.f32 %v1811, %v1923
  %v1925 = vpop.f32.mrb[0].mxu0
  %v1926 = vadd.f32 %v1813, %v1925
  %1927 = vmatprep.mubr.f32.mxu0 %v1702
  %1928 = vmatmul.mubr.f32.gmra.mrb[0].mxu0 %v1701
  %v1929 = vpop.f32.mrb[0].mxu0
  %v1930 = vadd.f32 %v1817, %v1929
  %v1931 = vpop.f32.mrb[0].mxu0
  %v1932 = vadd.f32 %v1819, %v1931
  %1933 = vdwg.mxu0
  %1934 = vmatprep.subr.mxu0 %v215
  %1935 = vmatpush1.msra.mxu0 %v214
  %1936 = vmatprep.subr.mxu0 %v217
  %1937 = vmatpush1.msra.mxu0 %v216
  %1938 = vmatprep.subr.mxu0 %v219
  %1939 = vmatpush1.msra.mxu0 %v218
  %1940 = vmatprep.subr.mxu0 %v221
  %1941 = vmatpush1.msra.mxu0 %v220
  %1942 = vmatprep.subr.mxu0 %v223
  %1943 = vmatpush1.msra.mxu0 %v222
  %1944 = vmatprep.subr.mxu0 %v225
  %1945 = vmatpush1.msra.mxu0 %v224
  %1946 = vmatprep.subr.mxu0 %v227
  %1947 = vmatpush1.msra.mxu0 %v226
  %1948 = vmatprep.subr.mxu0 %v229
  %1949 = vmatpush1.msra.mxu0 %v228
  %1950 = vmatprep.subr.mxu0 %v231
  %1951 = vmatpush1.msra.mxu0 %v230
  %1952 = vmatprep.subr.mxu0 %v233
  %1953 = vmatpush1.msra.mxu0 %v232
  %1954 = vmatprep.subr.mxu0 %v235
  %1955 = vmatpush1.msra.mxu0 %v234
  %1956 = vmatprep.subr.mxu0 %v237
  %1957 = vmatpush1.msra.mxu0 %v236
  %1958 = vmatprep.subr.mxu0 %v239
  %1959 = vmatpush1.msra.mxu0 %v238
  %1960 = vmatprep.subr.mxu0 %v241
  %1961 = vmatpush1.msra.mxu0 %v240
  %1962 = vmatprep.subr.mxu0 %v243
  %1963 = vmatpush1.msra.mxu0 %v242
  %1964 = vmatprep.subr.mxu0 %v245
  %1965 = vmatpush1.msra.mxu0 %v244
  %1966 = vmatprep.subr.mxu0 %v247
  %1967 = vmatpush1.msra.mxu0 %v246
  %1968 = vmatprep.subr.mxu0 %v249
  %1969 = vmatpush1.msra.mxu0 %v248
  %1970 = vmatprep.subr.mxu0 %v251
  %1971 = vmatpush1.msra.mxu0 %v250
  %1972 = vmatprep.subr.mxu0 %v253
  %1973 = vmatpush1.msra.mxu0 %v252
  %1974 = vmatprep.subr.mxu0 %v255
  %1975 = vmatpush1.msra.mxu0 %v254
  %1976 = vmatprep.subr.mxu0 %v257
  %1977 = vmatpush1.msra.mxu0 %v256
  %1978 = vmatprep.subr.mxu0 %v259
  %1979 = vmatpush1.msra.mxu0 %v258
  %1980 = vmatprep.subr.mxu0 %v261
  %1981 = vmatpush1.msra.mxu0 %v260
  %1982 = vmatprep.subr.mxu0 %v263
  %1983 = vmatpush1.msra.mxu0 %v262
  %1984 = vmatprep.subr.mxu0 %v265
  %1985 = vmatpush1.msra.mxu0 %v264
  %1986 = vmatprep.subr.mxu0 %v267
  %1987 = vmatpush1.msra.mxu0 %v266
  %1988 = vmatprep.subr.mxu0 %v269
  %1989 = vmatpush1.msra.mxu0 %v268
  %1990 = vmatprep.subr.mxu0 %v271
  %1991 = vmatpush1.msra.mxu0 %v270
  %1992 = vmatprep.subr.mxu0 %v273
  %1993 = vmatpush1.msra.mxu0 %v272
  %1994 = vmatprep.subr.mxu0 %v275
  %1995 = vmatpush1.msra.mxu0 %v274
  %1996 = vmatprep.subr.mxu0 %v277
  %1997 = vmatpush1.msra.mxu0 %v276
  %1998 = vmatprep.mubr.f32.mxu0 %v1641
  %1999 = vmatmul.mubr.f32.gmra.mrb[0].mxu0 %v1640
  %v2000 = vpop.f32.mrb[0].mxu0
  %v2001 = vadd.f32 %v1888, %v2000
  %v2002 = vpop.f32.mrb[0].mxu0
  %v2003 = vadd.f32 %v1890, %v2002
  %2004 = vmatprep.mubr.f32.mxu0 %v1650
  %2005 = vmatmul.mubr.f32.gmra.mrb[0].mxu0 %v1649
  %v2006 = vpop.f32.mrb[0].mxu0
  %v2007 = vadd.f32 %v1894, %v2006
  %v2008 = vpop.f32.mrb[0].mxu0
  %v2009 = vadd.f32 %v1896, %v2008
  %2010 = vmatprep.mubr.f32.mxu0 %v1659
  %2011 = vmatmul.mubr.f32.gmra.mrb[0].mxu0 %v1658
  %v2012 = vpop.f32.mrb[0].mxu0
  %v2013 = vadd.f32 %v1900, %v2012
  %v2014 = vpop.f32.mrb[0].mxu0
  %v2015 = vadd.f32 %v1902, %v2014
  %2016 = vmatprep.mubr.f32.mxu0 %v1668
  %2017 = vmatmul.mubr.f32.gmra.mrb[0].mxu0 %v1667
  %v2018 = vpop.f32.mrb[0].mxu0
  %v2019 = vadd.f32 %v1906, %v2018
  %v2020 = vpop.f32.mrb[0].mxu0
  %v2021 = vadd.f32 %v1908, %v2020
  %2022 = vmatprep.mubr.f32.mxu0 %v1677
  %2023 = vmatmul.mubr.f32.gmra.mrb[0].mxu0 %v1676
  %v2024 = vpop.f32.mrb[0].mxu0
  %v2025 = vadd.f32 %v1912, %v2024
  %v2026 = vpop.f32.mrb[0].mxu0
  %v2027 = vadd.f32 %v1914, %v2026
  %2028 = vmatprep.mubr.f32.mxu0 %v1686
  %2029 = vmatmul.mubr.f32.gmra.mrb[0].mxu0 %v1685
  %v2030 = vpop.f32.mrb[0].mxu0
  %v2031 = vadd.f32 %v1918, %v2030
  %v2032 = vpop.f32.mrb[0].mxu0
  %v2033 = vadd.f32 %v1920, %v2032
  %2034 = vmatprep.mubr.f32.mxu0 %v1695
  %2035 = vmatmul.mubr.f32.gmra.mrb[0].mxu0 %v1694
  %v2036 = vpop.f32.mrb[0].mxu0
  %v2037 = vadd.f32 %v1924, %v2036
  %v2038 = vpop.f32.mrb[0].mxu0
  %v2039 = vadd.f32 %v1926, %v2038
  %2040 = vmatprep.mubr.f32.mxu0 %v1704
  %2041 = vmatmul.mubr.f32.gmra.mrb[0].mxu0 %v1703
  %v2042 = vpop.f32.mrb[0].mxu0
  %v2043 = vadd.f32 %v1930, %v2042
  %v2044 = vpop.f32.mrb[0].mxu0
  %v2045 = vadd.f32 %v1932, %v2044
  %2046 = vdwg.mxu0
  %2047 = vmatprep.subr.mxu0 %v279
  %2048 = vmatpush1.msra.mxu0 %v278
  %2049 = vmatprep.subr.mxu0 %v281
  %2050 = vmatpush1.msra.mxu0 %v280
  %2051 = vmatprep.subr.mxu0 %v283
  %2052 = vmatpush1.msra.mxu0 %v282
  %2053 = vmatprep.subr.mxu0 %v285
  %2054 = vmatpush1.msra.mxu0 %v284
  %2055 = vmatprep.subr.mxu0 %v287
  %2056 = vmatpush1.msra.mxu0 %v286
  %2057 = vmatprep.subr.mxu0 %v289
  %2058 = vmatpush1.msra.mxu0 %v288
  %2059 = vmatprep.subr.mxu0 %v291
  %2060 = vmatpush1.msra.mxu0 %v290
  %2061 = vmatprep.subr.mxu0 %v293
  %2062 = vmatpush1.msra.mxu0 %v292
  %2063 = vmatprep.subr.mxu0 %v295
  %2064 = vmatpush1.msra.mxu0 %v294
  %2065 = vmatprep.subr.mxu0 %v297
  %2066 = vmatpush1.msra.mxu0 %v296
  %2067 = vmatprep.subr.mxu0 %v299
  %2068 = vmatpush1.msra.mxu0 %v298
  %2069 = vmatprep.subr.mxu0 %v301
  %2070 = vmatpush1.msra.mxu0 %v300
  %2071 = vmatprep.subr.mxu0 %v303
  %2072 = vmatpush1.msra.mxu0 %v302
  %2073 = vmatprep.subr.mxu0 %v305
  %2074 = vmatpush1.msra.mxu0 %v304
  %2075 = vmatprep.subr.mxu0 %v307
  %2076 = vmatpush1.msra.mxu0 %v306
  %2077 = vmatprep.subr.mxu0 %v309
  %2078 = vmatpush1.msra.mxu0 %v308
  %2079 = vmatprep.subr.mxu0 %v311
  %2080 = vmatpush1.msra.mxu0 %v310
  %2081 = vmatprep.subr.mxu0 %v313
  %2082 = vmatpush1.msra.mxu0 %v312
  %2083 = vmatprep.subr.mxu0 %v315
  %2084 = vmatpush1.msra.mxu0 %v314
  %2085 = vmatprep.subr.mxu0 %v317
  %2086 = vmatpush1.msra.mxu0 %v316
  %2087 = vmatprep.subr.mxu0 %v319
  %2088 = vmatpush1.msra.mxu0 %v318
  %2089 = vmatprep.subr.mxu0 %v321
  %2090 = vmatpush1.msra.mxu0 %v320
  %2091 = vmatprep.subr.mxu0 %v323
  %2092 = vmatpush1.msra.mxu0 %v322
  %2093 = vmatprep.subr.mxu0 %v325
  %2094 = vmatpush1.msra.mxu0 %v324
  %2095 = vmatprep.subr.mxu0 %v327
  %2096 = vmatpush1.msra.mxu0 %v326
  %2097 = vmatprep.subr.mxu0 %v329
  %2098 = vmatpush1.msra.mxu0 %v328
  %2099 = vmatprep.subr.mxu0 %v331
  %2100 = vmatpush1.msra.mxu0 %v330
  %2101 = vmatprep.subr.mxu0 %v333
  %2102 = vmatpush1.msra.mxu0 %v332
  %2103 = vmatprep.subr.mxu0 %v335
  %2104 = vmatpush1.msra.mxu0 %v334
  %2105 = vmatprep.subr.mxu0 %v337
  %2106 = vmatpush1.msra.mxu0 %v336
  %2107 = vmatprep.subr.mxu0 %v339
  %2108 = vmatpush1.msra.mxu0 %v338
  %2109 = vmatprep.subr.mxu0 %v341
  %2110 = vmatpush1.msra.mxu0 %v340
  %2111 = vmatprep.mubr.f32.mxu0 %v1643
  %2112 = vmatmul.mubr.f32.gmra.mrb[0].mxu0 %v1642
  %v2113 = vpop.f32.mrb[0].mxu0
  %v2114 = vadd.f32 %v2001, %v2113
  %v2115 = vpop.f32.mrb[0].mxu0
  %v2116 = vadd.f32 %v2003, %v2115
  %2117 = vmatprep.mubr.f32.mxu0 %v1652
  %2118 = vmatmul.mubr.f32.gmra.mrb[0].mxu0 %v1651
  %v2119 = vpop.f32.mrb[0].mxu0
  %v2120 = vadd.f32 %v2007, %v2119
  %v2121 = vpop.f32.mrb[0].mxu0
  %v2122 = vadd.f32 %v2009, %v2121
  %2123 = vmatprep.mubr.f32.mxu0 %v1661
  %2124 = vmatmul.mubr.f32.gmra.mrb[0].mxu0 %v1660
  %v2125 = vpop.f32.mrb[0].mxu0
  %v2126 = vadd.f32 %v2013, %v2125
  %v2127 = vpop.f32.mrb[0].mxu0
  %v2128 = vadd.f32 %v2015, %v2127
  %2129 = vmatprep.mubr.f32.mxu0 %v1670
  %2130 = vmatmul.mubr.f32.gmra.mrb[0].mxu0 %v1669
  %v2131 = vpop.f32.mrb[0].mxu0
  %v2132 = vadd.f32 %v2019, %v2131
  %v2133 = vpop.f32.mrb[0].mxu0
  %v2134 = vadd.f32 %v2021, %v2133
  %2135 = vmatprep.mubr.f32.mxu0 %v1679
  %2136 = vmatmul.mubr.f32.gmra.mrb[0].mxu0 %v1678
  %v2137 = vpop.f32.mrb[0].mxu0
  %v2138 = vadd.f32 %v2025, %v2137
  %v2139 = vpop.f32.mrb[0].mxu0
  %v2140 = vadd.f32 %v2027, %v2139
  %2141 = vmatprep.mubr.f32.mxu0 %v1688
  %2142 = vmatmul.mubr.f32.gmra.mrb[0].mxu0 %v1687
  %v2143 = vpop.f32.mrb[0].mxu0
  %v2144 = vadd.f32 %v2031, %v2143
  %v2145 = vpop.f32.mrb[0].mxu0
  %v2146 = vadd.f32 %v2033, %v2145
  %2147 = vmatprep.mubr.f32.mxu0 %v1697
  %2148 = vmatmul.mubr.f32.gmra.mrb[0].mxu0 %v1696
  %v2149 = vpop.f32.mrb[0].mxu0
  %v2150 = vadd.f32 %v2037, %v2149
  %v2151 = vpop.f32.mrb[0].mxu0
  %v2152 = vadd.f32 %v2039, %v2151
  %2153 = vmatprep.mubr.f32.mxu0 %v1706
  %2154 = vmatmul.mubr.f32.gmra.mrb[0].mxu0 %v1705
  %v2155 = vpop.f32.mrb[0].mxu0
  %v2156 = vadd.f32 %v2043, %v2155
  %v2157 = vpop.f32.mrb[0].mxu0
  %v2158 = vadd.f32 %v2045, %v2157
  %2159 = vdwg.mxu0
  %2160 = vmatprep.subr.mxu0 %v343
  %2161 = vmatpush1.msra.mxu0 %v342
  %2162 = vmatprep.subr.mxu0 %v345
  %2163 = vmatpush1.msra.mxu0 %v344
  %2164 = vmatprep.subr.mxu0 %v347
  %2165 = vmatpush1.msra.mxu0 %v346
  %2166 = vmatprep.subr.mxu0 %v349
  %2167 = vmatpush1.msra.mxu0 %v348
  %2168 = vmatprep.subr.mxu0 %v351
  %2169 = vmatpush1.msra.mxu0 %v350
  %2170 = vmatprep.subr.mxu0 %v353
  %2171 = vmatpush1.msra.mxu0 %v352
  %2172 = vmatprep.subr.mxu0 %v355
  %2173 = vmatpush1.msra.mxu0 %v354
  %2174 = vmatprep.subr.mxu0 %v357
  %2175 = vmatpush1.msra.mxu0 %v356
  %2176 = vmatprep.subr.mxu0 %v359
  %2177 = vmatpush1.msra.mxu0 %v358
  %2178 = vmatprep.subr.mxu0 %v361
  %2179 = vmatpush1.msra.mxu0 %v360
  %2180 = vmatprep.subr.mxu0 %v363
  %2181 = vmatpush1.msra.mxu0 %v362
  %2182 = vmatprep.subr.mxu0 %v365
  %2183 = vmatpush1.msra.mxu0 %v364
  %2184 = vmatprep.subr.mxu0 %v367
  %2185 = vmatpush1.msra.mxu0 %v366
  %2186 = vmatprep.subr.mxu0 %v369
  %2187 = vmatpush1.msra.mxu0 %v368
  %2188 = vmatprep.subr.mxu0 %v371
  %2189 = vmatpush1.msra.mxu0 %v370
  %2190 = vmatprep.subr.mxu0 %v373
  %2191 = vmatpush1.msra.mxu0 %v372
  %2192 = vmatprep.subr.mxu0 0.0
  %2193 = vmatpush1.msra.mxu0 0.0
  %2194 = vmatprep.subr.mxu0 0.0
  %2195 = vmatpush1.msra.mxu0 0.0
  %2196 = vmatprep.subr.mxu0 0.0
  %2197 = vmatpush1.msra.mxu0 0.0
  %2198 = vmatprep.subr.mxu0 0.0
  %2199 = vmatpush1.msra.mxu0 0.0
  %2200 = vmatprep.subr.mxu0 0.0
  %2201 = vmatpush1.msra.mxu0 0.0
  %2202 = vmatprep.subr.mxu0 0.0
  %2203 = vmatpush1.msra.mxu0 0.0
  %2204 = vmatprep.subr.mxu0 0.0
  %2205 = vmatpush1.msra.mxu0 0.0
  %2206 = vmatprep.subr.mxu0 0.0
  %2207 = vmatpush1.msra.mxu0 0.0
  %2208 = vmatprep.subr.mxu0 0.0
  %2209 = vmatpush1.msra.mxu0 0.0
  %2210 = vmatprep.subr.mxu0 0.0
  %2211 = vmatpush1.msra.mxu0 0.0
  %2212 = vmatprep.subr.mxu0 0.0
  %2213 = vmatpush1.msra.mxu0 0.0
  %2214 = vmatprep.subr.mxu0 0.0
  %2215 = vmatpush1.msra.mxu0 0.0
  %2216 = vmatprep.subr.mxu0 0.0
  %2217 = vmatpush1.msra.mxu0 0.0
  %2218 = vmatprep.subr.mxu0 0.0
  %2219 = vmatpush1.msra.mxu0 0.0
  %2220 = vmatprep.subr.mxu0 0.0
  %2221 = vmatpush1.msra.mxu0 0.0
  %2222 = vmatprep.subr.mxu0 0.0
  %2223 = vmatpush1.msra.mxu0 0.0
  %2224 = vmatprep.mubr.f32.mxu0 0.0
  %2225 = vmatmul.mubr.f32.gmra.mrb[0].mxu0 %v1644
  %v2226 = vpop.f32.mrb[0].mxu0
  %v2227 = vadd.f32 %v2114, %v2226
  %v2228 = vpop.f32.mrb[0].mxu0
  %v2229 = vadd.f32 %v2116, %v2228
  %2230 = vmatprep.mubr.f32.mxu0 0.0
  %2231 = vmatmul.mubr.f32.gmra.mrb[0].mxu0 %v1653
  %v2232 = vpop.f32.mrb[0].mxu0
  %v2233 = vadd.f32 %v2120, %v2232
  %v2234 = vpop.f32.mrb[0].mxu0
  %v2235 = vadd.f32 %v2122, %v2234
  %2236 = vmatprep.mubr.f32.mxu0 0.0
  %2237 = vmatmul.mubr.f32.gmra.mrb[0].mxu0 %v1662
  %v2238 = vpop.f32.mrb[0].mxu0
  %v2239 = vadd.f32 %v2126, %v2238
  %v2240 = vpop.f32.mrb[0].mxu0
  %v2241 = vadd.f32 %v2128, %v2240
  %2242 = vmatprep.mubr.f32.mxu0 0.0
  %2243 = vmatmul.mubr.f32.gmra.mrb[0].mxu0 %v1671
  %v2244 = vpop.f32.mrb[0].mxu0
  %v2245 = vadd.f32 %v2132, %v2244
  %v2246 = vpop.f32.mrb[0].mxu0
  %v2247 = vadd.f32 %v2134, %v2246
  %2248 = vmatprep.mubr.f32.mxu0 0.0
  %2249 = vmatmul.mubr.f32.gmra.mrb[0].mxu0 %v1680
  %v2250 = vpop.f32.mrb[0].mxu0
  %v2251 = vadd.f32 %v2138, %v2250
  %v2252 = vpop.f32.mrb[0].mxu0
  %v2253 = vadd.f32 %v2140, %v2252
  %2254 = vmatprep.mubr.f32.mxu0 0.0
  %2255 = vmatmul.mubr.f32.gmra.mrb[0].mxu0 %v1689
  %v2256 = vpop.f32.mrb[0].mxu0
  %v2257 = vadd.f32 %v2144, %v2256
  %v2258 = vpop.f32.mrb[0].mxu0
  %v2259 = vadd.f32 %v2146, %v2258
  %2260 = vmatprep.mubr.f32.mxu0 0.0
  %2261 = vmatmul.mubr.f32.gmra.mrb[0].mxu0 %v1698
  %v2262 = vpop.f32.mrb[0].mxu0
  %v2263 = vadd.f32 %v2150, %v2262
  %v2264 = vpop.f32.mrb[0].mxu0
  %v2265 = vadd.f32 %v2152, %v2264
  %2266 = vmatprep.mubr.f32.mxu0 0.0
  %2267 = vmatmul.mubr.f32.gmra.mrb[0].mxu0 %v1707
  %v2268 = vpop.f32.mrb[0].mxu0
  %v2269 = vadd.f32 %v2156, %v2268
  %v2270 = vpop.f32.mrb[0].mxu0
  %v2271 = vadd.f32 %v2158, %v2270
  %2272 = vdwg.mxu0
  %v2273 = vmax.f32 %v2227, 0.0
  %v2274 = vmax.f32 %v2229, 0.0
  %v2275 = vmax.f32 %v2233, 0.0
  %v2276 = vmax.f32 %v2235, 0.0
  %v2277 = vmax.f32 %v2239, 0.0
  %v2278 = vmax.f32 %v2241, 0.0
  %v2279 = vmax.f32 %v2245, 0.0
  %v2280 = vmax.f32 %v2247, 0.0
  %v2281 = vmax.f32 %v2251, 0.0
  %v2282 = vmax.f32 %v2253, 0.0
  %v2283 = vmax.f32 %v2257, 0.0
  %v2284 = vmax.f32 %v2259, 0.0
  %v2285 = vmax.f32 %v2263, 0.0
  %v2286 = vmax.f32 %v2265, 0.0
  %v2287 = vmax.f32 %v2269, 0.0
  %v2288 = vmax.f32 %v2271, 0.0
  %v2289 = vmax.f32 %v1620, %v2273
  %v2290 = vmax.f32 %v1621, %v2274
  %v2291 = vmax.f32 %v1622, %v2275
  %v2292 = vmax.f32 %v1623, %v2276
  %v2293 = vmax.f32 %v1624, %v2277
  %v2294 = vmax.f32 %v1625, %v2278
  %v2295 = vmax.f32 %v1626, %v2279
  %v2296 = vmax.f32 %v1627, %v2280
  %v2297 = vmax.f32 %v1628, %v2281
  %v2298 = vmax.f32 %v1629, %v2282
  %v2299 = vmax.f32 %v1630, %v2283
  %v2300 = vmax.f32 %v1631, %v2284
  %v2301 = vmax.f32 %v1632, %v2285
  %v2302 = vmax.f32 %v1633, %v2286
  %v2303 = vmax.f32 %v1634, %v2287
  %v2304 = vmax.f32 %v1635, %v2288
  %v2305 = vld [vmem:[%s0 + $0x6c0] sm:$0xff]
  %v2306 = vld [vmem:[%s0 + $0x6c8] sm:$0xff]
  %v2307 = vld [vmem:[%s0 + $0x6d0] sm:$0xff]
  %v2308 = vld [vmem:[%s0 + $0x6d8] sm:$0xff]
  %v2309 = vld [vmem:[%s0 + $0x6e0] sm:$0xff]
  %v2310 = vld [vmem:[%s0 + $0x6e8] sm:$0xff]
  %v2311 = vld [vmem:[%s0 + $0x6f0] sm:$0xff]
  %v2312 = vld [vmem:[%s0 + $0x6f8] sm:$0xff]
  %v2313 = vld [vmem:[%s0 + $0x700] sm:$0xff]
  %v2314 = vld [vmem:[%s0 + $0x708] sm:$0xff]
  %v2315 = vld [vmem:[%s0 + $0x710] sm:$0xff]
  %v2316 = vld [vmem:[%s0 + $0x718] sm:$0xff]
  %v2317 = vld [vmem:[%s0 + $0x720] sm:$0xff]
  %v2318 = vld [vmem:[%s0 + $0x728] sm:$0xff]
  %v2319 = vld [vmem:[%s0 + $0x730] sm:$0xff]
  %v2320 = vld [vmem:[%s0 + $0x738] sm:$0xff]
  %v2321 = vld [vmem:[%s0 + $0x740] sm:$0xff]
  %v2322 = vld [vmem:[%s0 + $0x748] sm:$0xff]
  %v2323 = vld [vmem:[%s0 + $0x750] sm:$0xff]
  %v2324 = vld [vmem:[%s0 + $0x758] sm:$0xff]
  %v2325 = vld [vmem:[%s0 + $0x760] sm:$0xff]
  %v2326 = vld [vmem:[%s0 + $0x768] sm:$0xff]
  %v2327 = vld [vmem:[%s0 + $0x770] sm:$0xff]
  %v2328 = vld [vmem:[%s0 + $0x778] sm:$0xff]
  %v2329 = vld [vmem:[%s0 + $0x780] sm:$0xff]
  %v2330 = vld [vmem:[%s0 + $0x788] sm:$0xff]
  %v2331 = vld [vmem:[%s0 + $0x790] sm:$0xff]
  %v2332 = vld [vmem:[%s0 + $0x798] sm:$0xff]
  %v2333 = vld [vmem:[%s0 + $0x7a0] sm:$0xff]
  %v2334 = vld [vmem:[%s0 + $0x7a8] sm:$0xff]
  %v2335 = vld [vmem:[%s0 + $0x7b0] sm:$0xff]
  %v2336 = vld [vmem:[%s0 + $0x7b8] sm:$0xff]
  %v2337 = vld [vmem:[%s0 + $0x7c0] sm:$0xff]
  %v2338 = vld [vmem:[%s0 + $0x7c8] sm:$0xff]
  %v2339 = vld [vmem:[%s0 + $0x7d0] sm:$0xff]
  %v2340 = vld [vmem:[%s0 + $0x7d8] sm:$0xff]
  %v2341 = vld [vmem:[%s0 + $0x7e0] sm:$0xff]
  %v2342 = vld [vmem:[%s0 + $0x7e8] sm:$0xff]
  %v2343 = vld [vmem:[%s0 + $0x7f0] sm:$0xff]
  %v2344 = vld [vmem:[%s0 + $0x7f8] sm:$0xff]
  %v2345 = vld [vmem:[%s0 + $0x800] sm:$0xff]
  %v2346 = vld [vmem:[%s0 + $0x808] sm:$0xff]
  %v2347 = vld [vmem:[%s0 + $0x810] sm:$0xff]
  %v2348 = vld [vmem:[%s0 + $0x818] sm:$0xff]
  %v2349 = vld [vmem:[%s0 + $0x820] sm:$0xff]
  %v2350 = vld [vmem:[%s0 + $0x828] sm:$0xff]
  %v2351 = vld [vmem:[%s0 + $0x830] sm:$0xff]
  %v2352 = vld [vmem:[%s0 + $0x838] sm:$0xff]
  %v2353 = vld [vmem:[%s0 + $0x840] sm:$0xff]
  %v2354 = vld [vmem:[%s0 + $0x848] sm:$0xff]
  %v2355 = vld [vmem:[%s0 + $0x850] sm:$0xff]
  %v2356 = vld [vmem:[%s0 + $0x858] sm:$0xff]
  %v2357 = vld [vmem:[%s0 + $0x860] sm:$0xff]
  %v2358 = vld [vmem:[%s0 + $0x868] sm:$0xff]
  %v2359 = vld [vmem:[%s0 + $0x870] sm:$0xff]
  %v2360 = vld [vmem:[%s0 + $0x878] sm:$0xff]
  %v2361 = vld [vmem:[%s0 + $0x880] sm:$0xff]
  %v2362 = vld [vmem:[%s0 + $0x888] sm:$0xff]
  %v2363 = vld [vmem:[%s0 + $0x890] sm:$0xff]
  %v2364 = vld [vmem:[%s0 + $0x898] sm:$0xff]
  %v2365 = vld [vmem:[%s0 + $0x8a0] sm:$0xff]
  %v2366 = vld [vmem:[%s0 + $0x8a8] sm:$0xff]
  %v2367 = vld [vmem:[%s0 + $0x8b0] sm:$0xff]
  %v2368 = vld [vmem:[%s0 + $0x8b8] sm:$0xff]
  %v2369 = vld [vmem:[%s0 + $0x8c0] sm:$0xff]
  %v2370 = vld [vmem:[%s0 + $0x8c8] sm:$0xff]
  %v2371 = vld [vmem:[%s0 + $0x8d0] sm:$0xff]
  %v2372 = vld [vmem:[%s0 + $0x8d8] sm:$0xff]
  %v2373 = vld [vmem:[%s0 + $0x8e0] sm:$0xff]
  %v2374 = vld [vmem:[%s0 + $0x8e8] sm:$0xff]
  %v2375 = vld [vmem:[%s0 + $0x8f0] sm:$0xff]
  %v2376 = vld [vmem:[%s0 + $0x8f8] sm:$0xff]
  %2377 = vmatprep.subr.mxu0 %v87
  %2378 = vmatpush1.msra.mxu0 %v86
  %2379 = vmatprep.subr.mxu0 %v89
  %2380 = vmatpush1.msra.mxu0 %v88
  %2381 = vmatprep.subr.mxu0 %v91
  %2382 = vmatpush1.msra.mxu0 %v90
  %2383 = vmatprep.subr.mxu0 %v93
  %2384 = vmatpush1.msra.mxu0 %v92
  %2385 = vmatprep.subr.mxu0 %v95
  %2386 = vmatpush1.msra.mxu0 %v94
  %2387 = vmatprep.subr.mxu0 %v97
  %2388 = vmatpush1.msra.mxu0 %v96
  %2389 = vmatprep.subr.mxu0 %v99
  %2390 = vmatpush1.msra.mxu0 %v98
  %2391 = vmatprep.subr.mxu0 %v101
  %2392 = vmatpush1.msra.mxu0 %v100
  %2393 = vmatprep.subr.mxu0 %v103
  %2394 = vmatpush1.msra.mxu0 %v102
  %2395 = vmatprep.subr.mxu0 %v105
  %2396 = vmatpush1.msra.mxu0 %v104
  %2397 = vmatprep.subr.mxu0 %v107
  %2398 = vmatpush1.msra.mxu0 %v106
  %2399 = vmatprep.subr.mxu0 %v109
  %2400 = vmatpush1.msra.mxu0 %v108
  %2401 = vmatprep.subr.mxu0 %v111
  %2402 = vmatpush1.msra.mxu0 %v110
  %2403 = vmatprep.subr.mxu0 %v113
  %2404 = vmatpush1.msra.mxu0 %v112
  %2405 = vmatprep.subr.mxu0 %v115
  %2406 = vmatpush1.msra.mxu0 %v114
  %2407 = vmatprep.subr.mxu0 %v117
  %2408 = vmatpush1.msra.mxu0 %v116
  %2409 = vmatprep.subr.mxu0 %v119
  %2410 = vmatpush1.msra.mxu0 %v118
  %2411 = vmatprep.subr.mxu0 %v121
  %2412 = vmatpush1.msra.mxu0 %v120
  %2413 = vmatprep.subr.mxu0 %v123
  %2414 = vmatpush1.msra.mxu0 %v122
  %2415 = vmatprep.subr.mxu0 %v125
  %2416 = vmatpush1.msra.mxu0 %v124
  %2417 = vmatprep.subr.mxu0 %v127
  %2418 = vmatpush1.msra.mxu0 %v126
  %2419 = vmatprep.subr.mxu0 %v129
  %2420 = vmatpush1.msra.mxu0 %v128
  %2421 = vmatprep.subr.mxu0 %v131
  %2422 = vmatpush1.msra.mxu0 %v130
  %2423 = vmatprep.subr.mxu0 %v133
  %2424 = vmatpush1.msra.mxu0 %v132
  %2425 = vmatprep.subr.mxu0 %v135
  %2426 = vmatpush1.msra.mxu0 %v134
  %2427 = vmatprep.subr.mxu0 %v137
  %2428 = vmatpush1.msra.mxu0 %v136
  %2429 = vmatprep.subr.mxu0 %v139
  %2430 = vmatpush1.msra.mxu0 %v138
  %2431 = vmatprep.subr.mxu0 %v141
  %2432 = vmatpush1.msra.mxu0 %v140
  %2433 = vmatprep.subr.mxu0 %v143
  %2434 = vmatpush1.msra.mxu0 %v142
  %2435 = vmatprep.subr.mxu0 %v145
  %2436 = vmatpush1.msra.mxu0 %v144
  %2437 = vmatprep.subr.mxu0 %v147
  %2438 = vmatpush1.msra.mxu0 %v146
  %2439 = vmatprep.subr.mxu0 %v149
  %2440 = vmatpush1.msra.mxu0 %v148
  %2441 = vmatprep.mubr.f32.mxu0 %v2306
  %2442 = vmatmul.mubr.f32.gmra.mrb[0].mxu0 %v2305
  %v2443 = vpop.f32.mrb[0].mxu0
  %v2444 = vadd.f32 %v379, %v2443
  %v2445 = vpop.f32.mrb[0].mxu0
  %v2446 = vadd.f32 %v383, %v2445
  %2447 = vmatprep.mubr.f32.mxu0 %v2315
  %2448 = vmatmul.mubr.f32.gmra.mrb[0].mxu0 %v2314
  %v2449 = vpop.f32.mrb[0].mxu0
  %v2450 = vadd.f32 %v379, %v2449
  %v2451 = vpop.f32.mrb[0].mxu0
  %v2452 = vadd.f32 %v383, %v2451
  %2453 = vmatprep.mubr.f32.mxu0 %v2324
  %2454 = vmatmul.mubr.f32.gmra.mrb[0].mxu0 %v2323
  %v2455 = vpop.f32.mrb[0].mxu0
  %v2456 = vadd.f32 %v379, %v2455
  %v2457 = vpop.f32.mrb[0].mxu0
  %v2458 = vadd.f32 %v383, %v2457
  %2459 = vmatprep.mubr.f32.mxu0 %v2333
  %2460 = vmatmul.mubr.f32.gmra.mrb[0].mxu0 %v2332
  %v2461 = vpop.f32.mrb[0].mxu0
  %v2462 = vadd.f32 %v379, %v2461
  %v2463 = vpop.f32.mrb[0].mxu0
  %v2464 = vadd.f32 %v383, %v2463
  %2465 = vmatprep.mubr.f32.mxu0 %v2342
  %2466 = vmatmul.mubr.f32.gmra.mrb[0].mxu0 %v2341
  %v2467 = vpop.f32.mrb[0].mxu0
  %v2468 = vadd.f32 %v379, %v2467
  %v2469 = vpop.f32.mrb[0].mxu0
  %v2470 = vadd.f32 %v383, %v2469
  %2471 = vmatprep.mubr.f32.mxu0 %v2351
  %2472 = vmatmul.mubr.f32.gmra.mrb[0].mxu0 %v2350
  %v2473 = vpop.f32.mrb[0].mxu0
  %v2474 = vadd.f32 %v379, %v2473
  %v2475 = vpop.f32.mrb[0].mxu0
  %v2476 = vadd.f32 %v383, %v2475
  %2477 = vmatprep.mubr.f32.mxu0 %v2360
  %2478 = vmatmul.mubr.f32.gmra.mrb[0].mxu0 %v2359
  %v2479 = vpop.f32.mrb[0].mxu0
  %v2480 = vadd.f32 %v379, %v2479
  %v2481 = vpop.f32.mrb[0].mxu0
  %v2482 = vadd.f32 %v383, %v2481
  %2483 = vmatprep.mubr.f32.mxu0 %v2369
  %2484 = vmatmul.mubr.f32.gmra.mrb[0].mxu0 %v2368
  %v2485 = vpop.f32.mrb[0].mxu0
  %v2486 = vadd.f32 %v379, %v2485
  %v2487 = vpop.f32.mrb[0].mxu0
  %v2488 = vadd.f32 %v383, %v2487
  %2489 = vdwg.mxu0
  %2490 = vmatprep.subr.mxu0 %v151
  %2491 = vmatpush1.msra.mxu0 %v150
  %2492 = vmatprep.subr.mxu0 %v153
  %2493 = vmatpush1.msra.mxu0 %v152
  %2494 = vmatprep.subr.mxu0 %v155
  %2495 = vmatpush1.msra.mxu0 %v154
  %2496 = vmatprep.subr.mxu0 %v157
  %2497 = vmatpush1.msra.mxu0 %v156
  %2498 = vmatprep.subr.mxu0 %v159
  %2499 = vmatpush1.msra.mxu0 %v158
  %2500 = vmatprep.subr.mxu0 %v161
  %2501 = vmatpush1.msra.mxu0 %v160
  %2502 = vmatprep.subr.mxu0 %v163
  %2503 = vmatpush1.msra.mxu0 %v162
  %2504 = vmatprep.subr.mxu0 %v165
  %2505 = vmatpush1.msra.mxu0 %v164
  %2506 = vmatprep.subr.mxu0 %v167
  %2507 = vmatpush1.msra.mxu0 %v166
  %2508 = vmatprep.subr.mxu0 %v169
  %2509 = vmatpush1.msra.mxu0 %v168
  %2510 = vmatprep.subr.mxu0 %v171
  %2511 = vmatpush1.msra.mxu0 %v170
  %2512 = vmatprep.subr.mxu0 %v173
  %2513 = vmatpush1.msra.mxu0 %v172
  %2514 = vmatprep.subr.mxu0 %v175
  %2515 = vmatpush1.msra.mxu0 %v174
  %2516 = vmatprep.subr.mxu0 %v177
  %2517 = vmatpush1.msra.mxu0 %v176
  %2518 = vmatprep.subr.mxu0 %v179
  %2519 = vmatpush1.msra.mxu0 %v178
  %2520 = vmatprep.subr.mxu0 %v181
  %2521 = vmatpush1.msra.mxu0 %v180
  %2522 = vmatprep.subr.mxu0 %v183
  %2523 = vmatpush1.msra.mxu0 %v182
  %2524 = vmatprep.subr.mxu0 %v185
  %2525 = vmatpush1.msra.mxu0 %v184
  %2526 = vmatprep.subr.mxu0 %v187
  %2527 = vmatpush1.msra.mxu0 %v186
  %2528 = vmatprep.subr.mxu0 %v189
  %2529 = vmatpush1.msra.mxu0 %v188
  %2530 = vmatprep.subr.mxu0 %v191
  %2531 = vmatpush1.msra.mxu0 %v190
  %2532 = vmatprep.subr.mxu0 %v193
  %2533 = vmatpush1.msra.mxu0 %v192
  %2534 = vmatprep.subr.mxu0 %v195
  %2535 = vmatpush1.msra.mxu0 %v194
  %2536 = vmatprep.subr.mxu0 %v197
  %2537 = vmatpush1.msra.mxu0 %v196
  %2538 = vmatprep.subr.mxu0 %v199
  %2539 = vmatpush1.msra.mxu0 %v198
  %2540 = vmatprep.subr.mxu0 %v201
  %2541 = vmatpush1.msra.mxu0 %v200
  %2542 = vmatprep.subr.mxu0 %v203
  %2543 = vmatpush1.msra.mxu0 %v202
  %2544 = vmatprep.subr.mxu0 %v205
  %2545 = vmatpush1.msra.mxu0 %v204
  %2546 = vmatprep.subr.mxu0 %v207
  %2547 = vmatpush1.msra.mxu0 %v206
  %2548 = vmatprep.subr.mxu0 %v209
  %2549 = vmatpush1.msra.mxu0 %v208
  %2550 = vmatprep.subr.mxu0 %v211
  %2551 = vmatpush1.msra.mxu0 %v210
  %2552 = vmatprep.subr.mxu0 %v213
  %2553 = vmatpush1.msra.mxu0 %v212
  %2554 = vmatprep.mubr.f32.mxu0 %v2308
  %2555 = vmatmul.mubr.f32.gmra.mrb[0].mxu0 %v2307
  %v2556 = vpop.f32.mrb[0].mxu0
  %v2557 = vadd.f32 %v2444, %v2556
  %v2558 = vpop.f32.mrb[0].mxu0
  %v2559 = vadd.f32 %v2446, %v2558
  %2560 = vmatprep.mubr.f32.mxu0 %v2317
  %2561 = vmatmul.mubr.f32.gmra.mrb[0].mxu0 %v2316
  %v2562 = vpop.f32.mrb[0].mxu0
  %v2563 = vadd.f32 %v2450, %v2562
  %v2564 = vpop.f32.mrb[0].mxu0
  %v2565 = vadd.f32 %v2452, %v2564
  %2566 = vmatprep.mubr.f32.mxu0 %v2326
  %2567 = vmatmul.mubr.f32.gmra.mrb[0].mxu0 %v2325
  %v2568 = vpop.f32.mrb[0].mxu0
  %v2569 = vadd.f32 %v2456, %v2568
  %v2570 = vpop.f32.mrb[0].mxu0
  %v2571 = vadd.f32 %v2458, %v2570
  %2572 = vmatprep.mubr.f32.mxu0 %v2335
  %2573 = vmatmul.mubr.f32.gmra.mrb[0].mxu0 %v2334
  %v2574 = vpop.f32.mrb[0].mxu0
  %v2575 = vadd.f32 %v2462, %v2574
  %v2576 = vpop.f32.mrb[0].mxu0
  %v2577 = vadd.f32 %v2464, %v2576
  %2578 = vmatprep.mubr.f32.mxu0 %v2344
  %2579 = vmatmul.mubr.f32.gmra.mrb[0].mxu0 %v2343
  %v2580 = vpop.f32.mrb[0].mxu0
  %v2581 = vadd.f32 %v2468, %v2580
  %v2582 = vpop.f32.mrb[0].mxu0
  %v2583 = vadd.f32 %v2470, %v2582
  %2584 = vmatprep.mubr.f32.mxu0 %v2353
  %2585 = vmatmul.mubr.f32.gmra.mrb[0].mxu0 %v2352
  %v2586 = vpop.f32.mrb[0].mxu0
  %v2587 = vadd.f32 %v2474, %v2586
  %v2588 = vpop.f32.mrb[0].mxu0
  %v2589 = vadd.f32 %v2476, %v2588
  %2590 = vmatprep.mubr.f32.mxu0 %v2362
  %2591 = vmatmul.mubr.f32.gmra.mrb[0].mxu0 %v2361
  %v2592 = vpop.f32.mrb[0].mxu0
  %v2593 = vadd.f32 %v2480, %v2592
  %v2594 = vpop.f32.mrb[0].mxu0
  %v2595 = vadd.f32 %v2482, %v2594
  %2596 = vmatprep.mubr.f32.mxu0 %v2371
  %2597 = vmatmul.mubr.f32.gmra.mrb[0].mxu0 %v2370
  %v2598 = vpop.f32.mrb[0].mxu0
  %v2599 = vadd.f32 %v2486, %v2598
  %v2600 = vpop.f32.mrb[0].mxu0
  %v2601 = vadd.f32 %v2488, %v2600
  %2602 = vdwg.mxu0
  %2603 = vmatprep.subr.mxu0 %v215
  %2604 = vmatpush1.msra.mxu0 %v214
  %2605 = vmatprep.subr.mxu0 %v217
  %2606 = vmatpush1.msra.mxu0 %v216
  %2607 = vmatprep.subr.mxu0 %v219
  %2608 = vmatpush1.msra.mxu0 %v218
  %2609 = vmatprep.subr.mxu0 %v221
  %2610 = vmatpush1.msra.mxu0 %v220
  %2611 = vmatprep.subr.mxu0 %v223
  %2612 = vmatpush1.msra.mxu0 %v222
  %2613 = vmatprep.subr.mxu0 %v225
  %2614 = vmatpush1.msra.mxu0 %v224
  %2615 = vmatprep.subr.mxu0 %v227
  %2616 = vmatpush1.msra.mxu0 %v226
  %2617 = vmatprep.subr.mxu0 %v229
  %2618 = vmatpush1.msra.mxu0 %v228
  %2619 = vmatprep.subr.mxu0 %v231
  %2620 = vmatpush1.msra.mxu0 %v230
  %2621 = vmatprep.subr.mxu0 %v233
  %2622 = vmatpush1.msra.mxu0 %v232
  %2623 = vmatprep.subr.mxu0 %v235
  %2624 = vmatpush1.msra.mxu0 %v234
  %2625 = vmatprep.subr.mxu0 %v237
  %2626 = vmatpush1.msra.mxu0 %v236
  %2627 = vmatprep.subr.mxu0 %v239
  %2628 = vmatpush1.msra.mxu0 %v238
  %2629 = vmatprep.subr.mxu0 %v241
  %2630 = vmatpush1.msra.mxu0 %v240
  %2631 = vmatprep.subr.mxu0 %v243
  %2632 = vmatpush1.msra.mxu0 %v242
  %2633 = vmatprep.subr.mxu0 %v245
  %2634 = vmatpush1.msra.mxu0 %v244
  %2635 = vmatprep.subr.mxu0 %v247
  %2636 = vmatpush1.msra.mxu0 %v246
  %2637 = vmatprep.subr.mxu0 %v249
  %2638 = vmatpush1.msra.mxu0 %v248
  %2639 = vmatprep.subr.mxu0 %v251
  %2640 = vmatpush1.msra.mxu0 %v250
  %2641 = vmatprep.subr.mxu0 %v253
  %2642 = vmatpush1.msra.mxu0 %v252
  %2643 = vmatprep.subr.mxu0 %v255
  %2644 = vmatpush1.msra.mxu0 %v254
  %2645 = vmatprep.subr.mxu0 %v257
  %2646 = vmatpush1.msra.mxu0 %v256
  %2647 = vmatprep.subr.mxu0 %v259
  %2648 = vmatpush1.msra.mxu0 %v258
  %2649 = vmatprep.subr.mxu0 %v261
  %2650 = vmatpush1.msra.mxu0 %v260
  %2651 = vmatprep.subr.mxu0 %v263
  %2652 = vmatpush1.msra.mxu0 %v262
  %2653 = vmatprep.subr.mxu0 %v265
  %2654 = vmatpush1.msra.mxu0 %v264
  %2655 = vmatprep.subr.mxu0 %v267
  %2656 = vmatpush1.msra.mxu0 %v266
  %2657 = vmatprep.subr.mxu0 %v269
  %2658 = vmatpush1.msra.mxu0 %v268
  %2659 = vmatprep.subr.mxu0 %v271
  %2660 = vmatpush1.msra.mxu0 %v270
  %2661 = vmatprep.subr.mxu0 %v273
  %2662 = vmatpush1.msra.mxu0 %v272
  %2663 = vmatprep.subr.mxu0 %v275
  %2664 = vmatpush1.msra.mxu0 %v274
  %2665 = vmatprep.subr.mxu0 %v277
  %2666 = vmatpush1.msra.mxu0 %v276
  %2667 = vmatprep.mubr.f32.mxu0 %v2310
  %2668 = vmatmul.mubr.f32.gmra.mrb[0].mxu0 %v2309
  %v2669 = vpop.f32.mrb[0].mxu0
  %v2670 = vadd.f32 %v2557, %v2669
  %v2671 = vpop.f32.mrb[0].mxu0
  %v2672 = vadd.f32 %v2559, %v2671
  %2673 = vmatprep.mubr.f32.mxu0 %v2319
  %2674 = vmatmul.mubr.f32.gmra.mrb[0].mxu0 %v2318
  %v2675 = vpop.f32.mrb[0].mxu0
  %v2676 = vadd.f32 %v2563, %v2675
  %v2677 = vpop.f32.mrb[0].mxu0
  %v2678 = vadd.f32 %v2565, %v2677
  %2679 = vmatprep.mubr.f32.mxu0 %v2328
  %2680 = vmatmul.mubr.f32.gmra.mrb[0].mxu0 %v2327
  %v2681 = vpop.f32.mrb[0].mxu0
  %v2682 = vadd.f32 %v2569, %v2681
  %v2683 = vpop.f32.mrb[0].mxu0
  %v2684 = vadd.f32 %v2571, %v2683
  %2685 = vmatprep.mubr.f32.mxu0 %v2337
  %2686 = vmatmul.mubr.f32.gmra.mrb[0].mxu0 %v2336
  %v2687 = vpop.f32.mrb[0].mxu0
  %v2688 = vadd.f32 %v2575, %v2687
  %v2689 = vpop.f32.mrb[0].mxu0
  %v2690 = vadd.f32 %v2577, %v2689
  %2691 = vmatprep.mubr.f32.mxu0 %v2346
  %2692 = vmatmul.mubr.f32.gmra.mrb[0].mxu0 %v2345
  %v2693 = vpop.f32.mrb[0].mxu0
  %v2694 = vadd.f32 %v2581, %v2693
  %v2695 = vpop.f32.mrb[0].mxu0
  %v2696 = vadd.f32 %v2583, %v2695
  %2697 = vmatprep.mubr.f32.mxu0 %v2355
  %2698 = vmatmul.mubr.f32.gmra.mrb[0].mxu0 %v2354
  %v2699 = vpop.f32.mrb[0].mxu0
  %v2700 = vadd.f32 %v2587, %v2699
  %v2701 = vpop.f32.mrb[0].mxu0
  %v2702 = vadd.f32 %v2589, %v2701
  %2703 = vmatprep.mubr.f32.mxu0 %v2364
  %2704 = vmatmul.mubr.f32.gmra.mrb[0].mxu0 %v2363
  %v2705 = vpop.f32.mrb[0].mxu0
  %v2706 = vadd.f32 %v2593, %v2705
  %v2707 = vpop.f32.mrb[0].mxu0
  %v2708 = vadd.f32 %v2595, %v2707
  %2709 = vmatprep.mubr.f32.mxu0 %v2373
  %2710 = vmatmul.mubr.f32.gmra.mrb[0].mxu0 %v2372
  %v2711 = vpop.f32.mrb[0].mxu0
  %v2712 = vadd.f32 %v2599, %v2711
  %v2713 = vpop.f32.mrb[0].mxu0
  %v2714 = vadd.f32 %v2601, %v2713
  %2715 = vdwg.mxu0
  %2716 = vmatprep.subr.mxu0 %v279
  %2717 = vmatpush1.msra.mxu0 %v278
  %2718 = vmatprep.subr.mxu0 %v281
  %2719 = vmatpush1.msra.mxu0 %v280
  %2720 = vmatprep.subr.mxu0 %v283
  %2721 = vmatpush1.msra.mxu0 %v282
  %2722 = vmatprep.subr.mxu0 %v285
  %2723 = vmatpush1.msra.mxu0 %v284
  %2724 = vmatprep.subr.mxu0 %v287
  %2725 = vmatpush1.msra.mxu0 %v286
  %2726 = vmatprep.subr.mxu0 %v289
  %2727 = vmatpush1.msra.mxu0 %v288
  %2728 = vmatprep.subr.mxu0 %v291
  %2729 = vmatpush1.msra.mxu0 %v290
  %2730 = vmatprep.subr.mxu0 %v293
  %2731 = vmatpush1.msra.mxu0 %v292
  %2732 = vmatprep.subr.mxu0 %v295
  %2733 = vmatpush1.msra.mxu0 %v294
  %2734 = vmatprep.subr.mxu0 %v297
  %2735 = vmatpush1.msra.mxu0 %v296
  %2736 = vmatprep.subr.mxu0 %v299
  %2737 = vmatpush1.msra.mxu0 %v298
  %2738 = vmatprep.subr.mxu0 %v301
  %2739 = vmatpush1.msra.mxu0 %v300
  %2740 = vmatprep.subr.mxu0 %v303
  %2741 = vmatpush1.msra.mxu0 %v302
  %2742 = vmatprep.subr.mxu0 %v305
  %2743 = vmatpush1.msra.mxu0 %v304
  %2744 = vmatprep.subr.mxu0 %v307
  %2745 = vmatpush1.msra.mxu0 %v306
  %2746 = vmatprep.subr.mxu0 %v309
  %2747 = vmatpush1.msra.mxu0 %v308
  %2748 = vmatprep.subr.mxu0 %v311
  %2749 = vmatpush1.msra.mxu0 %v310
  %2750 = vmatprep.subr.mxu0 %v313
  %2751 = vmatpush1.msra.mxu0 %v312
  %2752 = vmatprep.subr.mxu0 %v315
  %2753 = vmatpush1.msra.mxu0 %v314
  %2754 = vmatprep.subr.mxu0 %v317
  %2755 = vmatpush1.msra.mxu0 %v316
  %2756 = vmatprep.subr.mxu0 %v319
  %2757 = vmatpush1.msra.mxu0 %v318
  %2758 = vmatprep.subr.mxu0 %v321
  %2759 = vmatpush1.msra.mxu0 %v320
  %2760 = vmatprep.subr.mxu0 %v323
  %2761 = vmatpush1.msra.mxu0 %v322
  %2762 = vmatprep.subr.mxu0 %v325
  %2763 = vmatpush1.msra.mxu0 %v324
  %2764 = vmatprep.subr.mxu0 %v327
  %2765 = vmatpush1.msra.mxu0 %v326
  %2766 = vmatprep.subr.mxu0 %v329
  %2767 = vmatpush1.msra.mxu0 %v328
  %2768 = vmatprep.subr.mxu0 %v331
  %2769 = vmatpush1.msra.mxu0 %v330
  %2770 = vmatprep.subr.mxu0 %v333
  %2771 = vmatpush1.msra.mxu0 %v332
  %2772 = vmatprep.subr.mxu0 %v335
  %2773 = vmatpush1.msra.mxu0 %v334
  %2774 = vmatprep.subr.mxu0 %v337
  %2775 = vmatpush1.msra.mxu0 %v336
  %2776 = vmatprep.subr.mxu0 %v339
  %2777 = vmatpush1.msra.mxu0 %v338
  %2778 = vmatprep.subr.mxu0 %v341
  %2779 = vmatpush1.msra.mxu0 %v340
  %2780 = vmatprep.mubr.f32.mxu0 %v2312
  %2781 = vmatmul.mubr.f32.gmra.mrb[0].mxu0 %v2311
  %v2782 = vpop.f32.mrb[0].mxu0
  %v2783 = vadd.f32 %v2670, %v2782
  %v2784 = vpop.f32.mrb[0].mxu0
  %v2785 = vadd.f32 %v2672, %v2784
  %2786 = vmatprep.mubr.f32.mxu0 %v2321
  %2787 = vmatmul.mubr.f32.gmra.mrb[0].mxu0 %v2320
  %v2788 = vpop.f32.mrb[0].mxu0
  %v2789 = vadd.f32 %v2676, %v2788
  %v2790 = vpop.f32.mrb[0].mxu0
  %v2791 = vadd.f32 %v2678, %v2790
  %2792 = vmatprep.mubr.f32.mxu0 %v2330
  %2793 = vmatmul.mubr.f32.gmra.mrb[0].mxu0 %v2329
  %v2794 = vpop.f32.mrb[0].mxu0
  %v2795 = vadd.f32 %v2682, %v2794
  %v2796 = vpop.f32.mrb[0].mxu0
  %v2797 = vadd.f32 %v2684, %v2796
  %2798 = vmatprep.mubr.f32.mxu0 %v2339
  %2799 = vmatmul.mubr.f32.gmra.mrb[0].mxu0 %v2338
  %v2800 = vpop.f32.mrb[0].mxu0
  %v2801 = vadd.f32 %v2688, %v2800
  %v2802 = vpop.f32.mrb[0].mxu0
  %v2803 = vadd.f32 %v2690, %v2802
  %2804 = vmatprep.mubr.f32.mxu0 %v2348
  %2805 = vmatmul.mubr.f32.gmra.mrb[0].mxu0 %v2347
  %v2806 = vpop.f32.mrb[0].mxu0
  %v2807 = vadd.f32 %v2694, %v2806
  %v2808 = vpop.f32.mrb[0].mxu0
  %v2809 = vadd.f32 %v2696, %v2808
  %2810 = vmatprep.mubr.f32.mxu0 %v2357
  %2811 = vmatmul.mubr.f32.gmra.mrb[0].mxu0 %v2356
  %v2812 = vpop.f32.mrb[0].mxu0
  %v2813 = vadd.f32 %v2700, %v2812
  %v2814 = vpop.f32.mrb[0].mxu0
  %v2815 = vadd.f32 %v2702, %v2814
  %2816 = vmatprep.mubr.f32.mxu0 %v2366
  %2817 = vmatmul.mubr.f32.gmra.mrb[0].mxu0 %v2365
  %v2818 = vpop.f32.mrb[0].mxu0
  %v2819 = vadd.f32 %v2706, %v2818
  %v2820 = vpop.f32.mrb[0].mxu0
  %v2821 = vadd.f32 %v2708, %v2820
  %2822 = vmatprep.mubr.f32.mxu0 %v2375
  %2823 = vmatmul.mubr.f32.gmra.mrb[0].mxu0 %v2374
  %v2824 = vpop.f32.mrb[0].mxu0
  %v2825 = vadd.f32 %v2712, %v2824
  %v2826 = vpop.f32.mrb[0].mxu0
  %v2827 = vadd.f32 %v2714, %v2826
  %2828 = vdwg.mxu0
  %2829 = vmatprep.subr.mxu0 %v343
  %2830 = vmatpush1.msra.mxu0 %v342
  %2831 = vmatprep.subr.mxu0 %v345
  %2832 = vmatpush1.msra.mxu0 %v344
  %2833 = vmatprep.subr.mxu0 %v347
  %2834 = vmatpush1.msra.mxu0 %v346
  %2835 = vmatprep.subr.mxu0 %v349
  %2836 = vmatpush1.msra.mxu0 %v348
  %2837 = vmatprep.subr.mxu0 %v351
  %2838 = vmatpush1.msra.mxu0 %v350
  %2839 = vmatprep.subr.mxu0 %v353
  %2840 = vmatpush1.msra.mxu0 %v352
  %2841 = vmatprep.subr.mxu0 %v355
  %2842 = vmatpush1.msra.mxu0 %v354
  %2843 = vmatprep.subr.mxu0 %v357
  %2844 = vmatpush1.msra.mxu0 %v356
  %2845 = vmatprep.subr.mxu0 %v359
  %2846 = vmatpush1.msra.mxu0 %v358
  %2847 = vmatprep.subr.mxu0 %v361
  %2848 = vmatpush1.msra.mxu0 %v360
  %2849 = vmatprep.subr.mxu0 %v363
  %2850 = vmatpush1.msra.mxu0 %v362
  %2851 = vmatprep.subr.mxu0 %v365
  %2852 = vmatpush1.msra.mxu0 %v364
  %2853 = vmatprep.subr.mxu0 %v367
  %2854 = vmatpush1.msra.mxu0 %v366
  %2855 = vmatprep.subr.mxu0 %v369
  %2856 = vmatpush1.msra.mxu0 %v368
  %2857 = vmatprep.subr.mxu0 %v371
  %2858 = vmatpush1.msra.mxu0 %v370
  %2859 = vmatprep.subr.mxu0 %v373
  %2860 = vmatpush1.msra.mxu0 %v372
  %2861 = vmatprep.subr.mxu0 0.0
  %2862 = vmatpush1.msra.mxu0 0.0
  %2863 = vmatprep.subr.mxu0 0.0
  %2864 = vmatpush1.msra.mxu0 0.0
  %2865 = vmatprep.subr.mxu0 0.0
  %2866 = vmatpush1.msra.mxu0 0.0
  %2867 = vmatprep.subr.mxu0 0.0
  %2868 = vmatpush1.msra.mxu0 0.0
  %2869 = vmatprep.subr.mxu0 0.0
  %2870 = vmatpush1.msra.mxu0 0.0
  %2871 = vmatprep.subr.mxu0 0.0
  %2872 = vmatpush1.msra.mxu0 0.0
  %2873 = vmatprep.subr.mxu0 0.0
  %2874 = vmatpush1.msra.mxu0 0.0
  %2875 = vmatprep.subr.mxu0 0.0
  %2876 = vmatpush1.msra.mxu0 0.0
  %2877 = vmatprep.subr.mxu0 0.0
  %2878 = vmatpush1.msra.mxu0 0.0
  %2879 = vmatprep.subr.mxu0 0.0
  %2880 = vmatpush1.msra.mxu0 0.0
  %2881 = vmatprep.subr.mxu0 0.0
  %2882 = vmatpush1.msra.mxu0 0.0
  %2883 = vmatprep.subr.mxu0 0.0
  %2884 = vmatpush1.msra.mxu0 0.0
  %2885 = vmatprep.subr.mxu0 0.0
  %2886 = vmatpush1.msra.mxu0 0.0
  %2887 = vmatprep.subr.mxu0 0.0
  %2888 = vmatpush1.msra.mxu0 0.0
  %2889 = vmatprep.subr.mxu0 0.0
  %2890 = vmatpush1.msra.mxu0 0.0
  %2891 = vmatprep.subr.mxu0 0.0
  %2892 = vmatpush1.msra.mxu0 0.0
  %2893 = vmatprep.mubr.f32.mxu0 0.0
  %2894 = vmatmul.mubr.f32.gmra.mrb[0].mxu0 %v2313
  %v2895 = vpop.f32.mrb[0].mxu0
  %v2896 = vadd.f32 %v2783, %v2895
  %v2897 = vpop.f32.mrb[0].mxu0
  %v2898 = vadd.f32 %v2785, %v2897
  %2899 = vmatprep.mubr.f32.mxu0 0.0
  %2900 = vmatmul.mubr.f32.gmra.mrb[0].mxu0 %v2322
  %v2901 = vpop.f32.mrb[0].mxu0
  %v2902 = vadd.f32 %v2789, %v2901
  %v2903 = vpop.f32.mrb[0].mxu0
  %v2904 = vadd.f32 %v2791, %v2903
  %2905 = vmatprep.mubr.f32.mxu0 0.0
  %2906 = vmatmul.mubr.f32.gmra.mrb[0].mxu0 %v2331
  %v2907 = vpop.f32.mrb[0].mxu0
  %v2908 = vadd.f32 %v2795, %v2907
  %v2909 = vpop.f32.mrb[0].mxu0
  %v2910 = vadd.f32 %v2797, %v2909
  %2911 = vmatprep.mubr.f32.mxu0 0.0
  %2912 = vmatmul.mubr.f32.gmra.mrb[0].mxu0 %v2340
  %v2913 = vpop.f32.mrb[0].mxu0
  %v2914 = vadd.f32 %v2801, %v2913
  %v2915 = vpop.f32.mrb[0].mxu0
  %v2916 = vadd.f32 %v2803, %v2915
  %2917 = vmatprep.mubr.f32.mxu0 0.0
  %2918 = vmatmul.mubr.f32.gmra.mrb[0].mxu0 %v2349
  %v2919 = vpop.f32.mrb[0].mxu0
  %v2920 = vadd.f32 %v2807, %v2919
  %v2921 = vpop.f32.mrb[0].mxu0
  %v2922 = vadd.f32 %v2809, %v2921
  %2923 = vmatprep.mubr.f32.mxu0 0.0
  %2924 = vmatmul.mubr.f32.gmra.mrb[0].mxu0 %v2358
  %v2925 = vpop.f32.mrb[0].mxu0
  %v2926 = vadd.f32 %v2813, %v2925
  %v2927 = vpop.f32.mrb[0].mxu0
  %v2928 = vadd.f32 %v2815, %v2927
  %2929 = vmatprep.mubr.f32.mxu0 0.0
  %2930 = vmatmul.mubr.f32.gmra.mrb[0].mxu0 %v2367
  %v2931 = vpop.f32.mrb[0].mxu0
  %v2932 = vadd.f32 %v2819, %v2931
  %v2933 = vpop.f32.mrb[0].mxu0
  %v2934 = vadd.f32 %v2821, %v2933
  %2935 = vmatprep.mubr.f32.mxu0 0.0
  %2936 = vmatmul.mubr.f32.gmra.mrb[0].mxu0 %v2376
  %v2937 = vpop.f32.mrb[0].mxu0
  %v2938 = vadd.f32 %v2825, %v2937
  %v2939 = vpop.f32.mrb[0].mxu0
  %v2940 = vadd.f32 %v2827, %v2939
  %2941 = vdwg.mxu0
  %v2942 = vmax.f32 %v2896, 0.0
  %v2943 = vmax.f32 %v2898, 0.0
  %v2944 = vmax.f32 %v2902, 0.0
  %v2945 = vmax.f32 %v2904, 0.0
  %v2946 = vmax.f32 %v2908, 0.0
  %v2947 = vmax.f32 %v2910, 0.0
  %v2948 = vmax.f32 %v2914, 0.0
  %v2949 = vmax.f32 %v2916, 0.0
  %v2950 = vmax.f32 %v2920, 0.0
  %v2951 = vmax.f32 %v2922, 0.0
  %v2952 = vmax.f32 %v2926, 0.0
  %v2953 = vmax.f32 %v2928, 0.0
  %v2954 = vmax.f32 %v2932, 0.0
  %v2955 = vmax.f32 %v2934, 0.0
  %v2956 = vmax.f32 %v2938, 0.0
  %v2957 = vmax.f32 %v2940, 0.0
  %v2958 = vmax.f32 %v2289, %v2942
  %v2959 = vmax.f32 %v2290, %v2943
  %v2960 = vmax.f32 %v2291, %v2944
  %v2961 = vmax.f32 %v2292, %v2945
  %v2962 = vmax.f32 %v2293, %v2946
  %v2963 = vmax.f32 %v2294, %v2947
  %v2964 = vmax.f32 %v2295, %v2948
  %v2965 = vmax.f32 %v2296, %v2949
  %v2966 = vmax.f32 %v2297, %v2950
  %v2967 = vmax.f32 %v2298, %v2951
  %v2968 = vmax.f32 %v2299, %v2952
  %v2969 = vmax.f32 %v2300, %v2953
  %v2970 = vmax.f32 %v2301, %v2954
  %v2971 = vmax.f32 %v2302, %v2955
  %v2972 = vmax.f32 %v2303, %v2956
  %v2973 = vmax.f32 %v2304, %v2957
  %2974 = vst [vmem:[%s3] sm:$0xff] %v2958
  %2975 = vst [vmem:[%s3 + $0x8] sm:$0xff] %v2959
  %2976 = vst [vmem:[%s3 + $0x10] sm:$0xff] %v2960
  %2977 = vst [vmem:[%s3 + $0x18] sm:$0xff] %v2961
  %2978 = vst [vmem:[%s3 + $0x20] sm:$0xff] %v2962
  %2979 = vst [vmem:[%s3 + $0x28] sm:$0xff] %v2963
  %2980 = vst [vmem:[%s3 + $0x30] sm:$0xff] %v2964
  %2981 = vst [vmem:[%s3 + $0x38] sm:$0xff] %v2965
  %2982 = vst [vmem:[%s3 + $0x40] sm:$0xff] %v2966
  %2983 = vst [vmem:[%s3 + $0x48] sm:$0xff] %v2967
  %2984 = vst [vmem:[%s3 + $0x50] sm:$0xff] %v2968
  %2985 = vst [vmem:[%s3 + $0x58] sm:$0xff] %v2969
  %2986 = vst [vmem:[%s3 + $0x60] sm:$0xff] %v2970
  %2987 = vst [vmem:[%s3 + $0x68] sm:$0xff] %v2971
  %2988 = vst [vmem:[%s3 + $0x70] sm:$0xff] %v2972
  %2989 = vst [vmem:[%s3 + $0x78] sm:$0xff] %v2973
  // Predicated region
  $region14: #{siamese_forward.4} parent=0 // pred_check
    _
  $region15: #{siamese_forward.4} parent=0 // pred_check_branch
    %2991 = sbr.rel (0) target = $region17
  $region16: #{siamese_forward.4} parent=0 // pred_region
    _
  $region17: #{siamese_forward.4} parent=0 // pred_fallthru
    _
  // Predicated region
  $region18: #{siamese_forward.4} parent=0 // pred_check
    _
  $region19: #{siamese_forward.4} parent=0 // pred_check_branch
    %2993 = sbr.rel (0) target = $region21
  $region20: #{siamese_forward.4} parent=0 // pred_region
    _
  $region21: #{siamese_forward.4} parent=0 // pred_fallthru
    _

// kernel: siamese_forward.5
$region0: #{siamese_forward.5}
  #allocation0 [shape = 'u32[]', space=smem, size = 0x4, offset = 0x4, fixed_abs, tag = 'smem constant byte address 0x4 - core index']
  #allocation1 [shape = 'u32[144,128]{1,0:T(1,128)}', space=vmem, size = 0x12000, scoped, tag = 'internal scratch']
  %s0 = inlined_call_operand.vmem [shape: f32[4,4096], index: 0, kind: input, shape index: {}]
  %s1 = inlined_call_operand.vmem [shape: f32[4096,512], index: 1, kind: input, shape index: {}]
  %s2 = inlined_call_operand.vmem [shape: f32[1,512], index: 2, kind: input, shape index: {}]
  %s3 = inlined_call_operand.vmem [shape: f32[512,256], index: 3, kind: input, shape index: {}]
  %s4 = inlined_call_operand.vmem [shape: f32[1,256], index: 4, kind: input, shape index: {}]
  %s5 = inlined_call_operand.vmem [shape: f32[2,1], index: 5, kind: output, shape index: {}]
  %s6 = sld [smem:[#allocation0]]
  $region30: #{siamese_forward.5} parent=0
    _
  %s8 = ssub.s32 1, %s6
  %s9 = scalar_select 0, %s8, %s6
  // Predicated region
  $region2: #{siamese_forward.5} parent=0 // pred_check
    _
  $region3: #{siamese_forward.5} parent=0 // pred_check_branch
    %11 = sbr.rel (0) target = $region5
  $region4: #{siamese_forward.5} parent=0 // pred_region
    _
  $region5: #{siamese_forward.5} parent=0 // pred_fallthru
    _
  // Predicated region
  $region6: #{siamese_forward.5} parent=0 // pred_check
    _
  $region7: #{siamese_forward.5} parent=0 // pred_check_branch
    %13 = sbr.rel (0) target = $region9
  $region8: #{siamese_forward.5} parent=0 // pred_region
    _
  $region9: #{siamese_forward.5} parent=0 // pred_fallthru
    _
  // Predicated region
  $region10: #{siamese_forward.5} parent=0 // pred_check
    _
  $region11: #{siamese_forward.5} parent=0 // pred_check_branch
    %15 = sbr.rel (0) target = $region13
  $region12: #{siamese_forward.5} parent=0 // pred_region
    _
  $region13: #{siamese_forward.5} parent=0 // pred_fallthru
    _
  // Predicated region
  $region14: #{siamese_forward.5} parent=0 // pred_check
    _
  $region15: #{siamese_forward.5} parent=0 // pred_check_branch
    %17 = sbr.rel (0) target = $region17
  $region16: #{siamese_forward.5} parent=0 // pred_region
    _
  $region17: #{siamese_forward.5} parent=0 // pred_fallthru
    _
  // Predicated region
  $region18: #{siamese_forward.5} parent=0 // pred_check
    _
  $region19: #{siamese_forward.5} parent=0 // pred_check_branch
    %19 = sbr.rel (0) target = $region21
  $region20: #{siamese_forward.5} parent=0 // pred_region
    _
  $region21: #{siamese_forward.5} parent=0 // pred_fallthru
    _
  %v20 = vld [vmem:[%s0] sm:$0xff]
  %v21 = vld [vmem:[%s0 + $0x8] sm:$0xff]
  %v22 = vld [vmem:[%s0 + $0x10] sm:$0xff]
  %v23 = vld [vmem:[%s0 + $0x18] sm:$0xff]
  %v24 = vld [vmem:[%s0 + $0x20] sm:$0xff]
  %v25 = vld [vmem:[%s0 + $0x28] sm:$0xff]
  %v26 = vld [vmem:[%s0 + $0x30] sm:$0xff]
  %v27 = vld [vmem:[%s0 + $0x38] sm:$0xff]
  %v28 = vld [vmem:[%s0 + $0x40] sm:$0xff]
  %v29 = vld [vmem:[%s0 + $0x48] sm:$0xff]
  %v30 = vld [vmem:[%s0 + $0x50] sm:$0xff]
  %v31 = vld [vmem:[%s0 + $0x58] sm:$0xff]
  %v32 = vld [vmem:[%s0 + $0x60] sm:$0xff]
  %v33 = vld [vmem:[%s0 + $0x68] sm:$0xff]
  %v34 = vld [vmem:[%s0 + $0x70] sm:$0xff]
  %v35 = vld [vmem:[%s0 + $0x78] sm:$0xff]
  %v36 = vld [vmem:[%s1] sm:$0xff]
  %v37 = vld [vmem:[%s1 + $0x8] sm:$0xff]
  %v38 = vld [vmem:[%s1 + $0x10] sm:$0xff]
  %v39 = vld [vmem:[%s1 + $0x18] sm:$0xff]
  %v40 = vld [vmem:[%s1 + $0x20] sm:$0xff]
  %v41 = vld [vmem:[%s1 + $0x28] sm:$0xff]
  %v42 = vld [vmem:[%s1 + $0x30] sm:$0xff]
  %v43 = vld [vmem:[%s1 + $0x38] sm:$0xff]
  %v44 = vld [vmem:[%s1 + $0x40] sm:$0xff]
  %v45 = vld [vmem:[%s1 + $0x48] sm:$0xff]
  %v46 = vld [vmem:[%s1 + $0x50] sm:$0xff]
  %v47 = vld [vmem:[%s1 + $0x58] sm:$0xff]
  %v48 = vld [vmem:[%s1 + $0x60] sm:$0xff]
  %v49 = vld [vmem:[%s1 + $0x68] sm:$0xff]
  %v50 = vld [vmem:[%s1 + $0x70] sm:$0xff]
  %v51 = vld [vmem:[%s1 + $0x78] sm:$0xff]
  %v52 = vld [vmem:[%s1 + $0x80] sm:$0xff]
  %v53 = vld [vmem:[%s1 + $0x88] sm:$0xff]
  %v54 = vld [vmem:[%s1 + $0x90] sm:$0xff]
  %v55 = vld [vmem:[%s1 + $0x98] sm:$0xff]
  %v56 = vld [vmem:[%s1 + $0xa0] sm:$0xff]
  %v57 = vld [vmem:[%s1 + $0xa8] sm:$0xff]
  %v58 = vld [vmem:[%s1 + $0xb0] sm:$0xff]
  %v59 = vld [vmem:[%s1 + $0xb8] sm:$0xff]
  %v60 = vld [vmem:[%s1 + $0xc0] sm:$0xff]
  %v61 = vld [vmem:[%s1 + $0xc8] sm:$0xff]
  %v62 = vld [vmem:[%s1 + $0xd0] sm:$0xff]
  %v63 = vld [vmem:[%s1 + $0xd8] sm:$0xff]
  %v64 = vld [vmem:[%s1 + $0xe0] sm:$0xff]
  %v65 = vld [vmem:[%s1 + $0xe8] sm:$0xff]
  %v66 = vld [vmem:[%s1 + $0xf0] sm:$0xff]
  %v67 = vld [vmem:[%s1 + $0xf8] sm:$0xff]
  %v68 = vld [vmem:[%s1 + $0x100] sm:$0xff]
  %v69 = vld [vmem:[%s1 + $0x108] sm:$0xff]
  %v70 = vld [vmem:[%s1 + $0x110] sm:$0xff]
  %v71 = vld [vmem:[%s1 + $0x118] sm:$0xff]
  %v72 = vld [vmem:[%s1 + $0x120] sm:$0xff]
  %v73 = vld [vmem:[%s1 + $0x128] sm:$0xff]
  %v74 = vld [vmem:[%s1 + $0x130] sm:$0xff]
  %v75 = vld [vmem:[%s1 + $0x138] sm:$0xff]
  %v76 = vld [vmem:[%s1 + $0x140] sm:$0xff]
  %v77 = vld [vmem:[%s1 + $0x148] sm:$0xff]
  %v78 = vld [vmem:[%s1 + $0x150] sm:$0xff]
  %v79 = vld [vmem:[%s1 + $0x158] sm:$0xff]
  %v80 = vld [vmem:[%s1 + $0x160] sm:$0xff]
  %v81 = vld [vmem:[%s1 + $0x168] sm:$0xff]
  %v82 = vld [vmem:[%s1 + $0x170] sm:$0xff]
  %v83 = vld [vmem:[%s1 + $0x178] sm:$0xff]
  %v84 = vld [vmem:[%s1 + $0x180] sm:$0xff]
  %v85 = vld [vmem:[%s1 + $0x188] sm:$0xff]
  %v86 = vld [vmem:[%s1 + $0x190] sm:$0xff]
  %v87 = vld [vmem:[%s1 + $0x198] sm:$0xff]
  %v88 = vld [vmem:[%s1 + $0x1a0] sm:$0xff]
  %v89 = vld [vmem:[%s1 + $0x1a8] sm:$0xff]
  %v90 = vld [vmem:[%s1 + $0x1b0] sm:$0xff]
  %v91 = vld [vmem:[%s1 + $0x1b8] sm:$0xff]
  %v92 = vld [vmem:[%s1 + $0x1c0] sm:$0xff]
  %v93 = vld [vmem:[%s1 + $0x1c8] sm:$0xff]
  %v94 = vld [vmem:[%s1 + $0x1d0] sm:$0xff]
  %v95 = vld [vmem:[%s1 + $0x1d8] sm:$0xff]
  %v96 = vld [vmem:[%s1 + $0x1e0] sm:$0xff]
  %v97 = vld [vmem:[%s1 + $0x1e8] sm:$0xff]
  %v98 = vld [vmem:[%s1 + $0x1f0] sm:$0xff]
  %v99 = vld [vmem:[%s1 + $0x1f8] sm:$0xff]
  %v100 = vld [vmem:[%s1 + $0x200] sm:$0xff]
  %v101 = vld [vmem:[%s1 + $0x208] sm:$0xff]
  %v102 = vld [vmem:[%s1 + $0x210] sm:$0xff]
  %v103 = vld [vmem:[%s1 + $0x218] sm:$0xff]
  %v104 = vld [vmem:[%s1 + $0x220] sm:$0xff]
  %v105 = vld [vmem:[%s1 + $0x228] sm:$0xff]
  %v106 = vld [vmem:[%s1 + $0x230] sm:$0xff]
  %v107 = vld [vmem:[%s1 + $0x238] sm:$0xff]
  %v108 = vld [vmem:[%s1 + $0x240] sm:$0xff]
  %v109 = vld [vmem:[%s1 + $0x248] sm:$0xff]
  %v110 = vld [vmem:[%s1 + $0x250] sm:$0xff]
  %v111 = vld [vmem:[%s1 + $0x258] sm:$0xff]
  %v112 = vld [vmem:[%s1 + $0x260] sm:$0xff]
  %v113 = vld [vmem:[%s1 + $0x268] sm:$0xff]
  %v114 = vld [vmem:[%s1 + $0x270] sm:$0xff]
  %v115 = vld [vmem:[%s1 + $0x278] sm:$0xff]
  %v116 = vld [vmem:[%s1 + $0x280] sm:$0xff]
  %v117 = vld [vmem:[%s1 + $0x288] sm:$0xff]
  %v118 = vld [vmem:[%s1 + $0x290] sm:$0xff]
  %v119 = vld [vmem:[%s1 + $0x298] sm:$0xff]
  %v120 = vld [vmem:[%s1 + $0x2a0] sm:$0xff]
  %v121 = vld [vmem:[%s1 + $0x2a8] sm:$0xff]
  %v122 = vld [vmem:[%s1 + $0x2b0] sm:$0xff]
  %v123 = vld [vmem:[%s1 + $0x2b8] sm:$0xff]
  %v124 = vld [vmem:[%s1 + $0x2c0] sm:$0xff]
  %v125 = vld [vmem:[%s1 + $0x2c8] sm:$0xff]
  %v126 = vld [vmem:[%s1 + $0x2d0] sm:$0xff]
  %v127 = vld [vmem:[%s1 + $0x2d8] sm:$0xff]
  %v128 = vld [vmem:[%s1 + $0x2e0] sm:$0xff]
  %v129 = vld [vmem:[%s1 + $0x2e8] sm:$0xff]
  %v130 = vld [vmem:[%s1 + $0x2f0] sm:$0xff]
  %v131 = vld [vmem:[%s1 + $0x2f8] sm:$0xff]
  %v132 = vld [vmem:[%s1 + $0x300] sm:$0xff]
  %v133 = vld [vmem:[%s1 + $0x308] sm:$0xff]
  %v134 = vld [vmem:[%s1 + $0x310] sm:$0xff]
  %v135 = vld [vmem:[%s1 + $0x318] sm:$0xff]
  %v136 = vld [vmem:[%s1 + $0x320] sm:$0xff]
  %v137 = vld [vmem:[%s1 + $0x328] sm:$0xff]
  %v138 = vld [vmem:[%s1 + $0x330] sm:$0xff]
  %v139 = vld [vmem:[%s1 + $0x338] sm:$0xff]
  %v140 = vld [vmem:[%s1 + $0x340] sm:$0xff]
  %v141 = vld [vmem:[%s1 + $0x348] sm:$0xff]
  %v142 = vld [vmem:[%s1 + $0x350] sm:$0xff]
  %v143 = vld [vmem:[%s1 + $0x358] sm:$0xff]
  %v144 = vld [vmem:[%s1 + $0x360] sm:$0xff]
  %v145 = vld [vmem:[%s1 + $0x368] sm:$0xff]
  %v146 = vld [vmem:[%s1 + $0x370] sm:$0xff]
  %v147 = vld [vmem:[%s1 + $0x378] sm:$0xff]
  %v148 = vld [vmem:[%s1 + $0x380] sm:$0xff]
  %v149 = vld [vmem:[%s1 + $0x388] sm:$0xff]
  %v150 = vld [vmem:[%s1 + $0x390] sm:$0xff]
  %v151 = vld [vmem:[%s1 + $0x398] sm:$0xff]
  %v152 = vld [vmem:[%s1 + $0x3a0] sm:$0xff]
  %v153 = vld [vmem:[%s1 + $0x3a8] sm:$0xff]
  %v154 = vld [vmem:[%s1 + $0x3b0] sm:$0xff]
  %v155 = vld [vmem:[%s1 + $0x3b8] sm:$0xff]
  %v156 = vld [vmem:[%s1 + $0x3c0] sm:$0xff]
  %v157 = vld [vmem:[%s1 + $0x3c8] sm:$0xff]
  %v158 = vld [vmem:[%s1 + $0x3d0] sm:$0xff]
  %v159 = vld [vmem:[%s1 + $0x3d8] sm:$0xff]
  %v160 = vld [vmem:[%s1 + $0x3e0] sm:$0xff]
  %v161 = vld [vmem:[%s1 + $0x3e8] sm:$0xff]
  %v162 = vld [vmem:[%s1 + $0x3f0] sm:$0xff]
  %v163 = vld [vmem:[%s1 + $0x3f8] sm:$0xff]
  %v164 = vld [vmem:[%s1 + $0x400] sm:$0xff]
  %v165 = vld [vmem:[%s1 + $0x408] sm:$0xff]
  %v166 = vld [vmem:[%s1 + $0x410] sm:$0xff]
  %v167 = vld [vmem:[%s1 + $0x418] sm:$0xff]
  %v168 = vld [vmem:[%s1 + $0x420] sm:$0xff]
  %v169 = vld [vmem:[%s1 + $0x428] sm:$0xff]
  %v170 = vld [vmem:[%s1 + $0x430] sm:$0xff]
  %v171 = vld [vmem:[%s1 + $0x438] sm:$0xff]
  %v172 = vld [vmem:[%s1 + $0x440] sm:$0xff]
  %v173 = vld [vmem:[%s1 + $0x448] sm:$0xff]
  %v174 = vld [vmem:[%s1 + $0x450] sm:$0xff]
  %v175 = vld [vmem:[%s1 + $0x458] sm:$0xff]
  %v176 = vld [vmem:[%s1 + $0x460] sm:$0xff]
  %v177 = vld [vmem:[%s1 + $0x468] sm:$0xff]
  %v178 = vld [vmem:[%s1 + $0x470] sm:$0xff]
  %v179 = vld [vmem:[%s1 + $0x478] sm:$0xff]
  %v180 = vld [vmem:[%s1 + $0x480] sm:$0xff]
  %v181 = vld [vmem:[%s1 + $0x488] sm:$0xff]
  %v182 = vld [vmem:[%s1 + $0x490] sm:$0xff]
  %v183 = vld [vmem:[%s1 + $0x498] sm:$0xff]
  %v184 = vld [vmem:[%s1 + $0x4a0] sm:$0xff]
  %v185 = vld [vmem:[%s1 + $0x4a8] sm:$0xff]
  %v186 = vld [vmem:[%s1 + $0x4b0] sm:$0xff]
  %v187 = vld [vmem:[%s1 + $0x4b8] sm:$0xff]
  %v188 = vld [vmem:[%s1 + $0x4c0] sm:$0xff]
  %v189 = vld [vmem:[%s1 + $0x4c8] sm:$0xff]
  %v190 = vld [vmem:[%s1 + $0x4d0] sm:$0xff]
  %v191 = vld [vmem:[%s1 + $0x4d8] sm:$0xff]
  %v192 = vld [vmem:[%s1 + $0x4e0] sm:$0xff]
  %v193 = vld [vmem:[%s1 + $0x4e8] sm:$0xff]
  %v194 = vld [vmem:[%s1 + $0x4f0] sm:$0xff]
  %v195 = vld [vmem:[%s1 + $0x4f8] sm:$0xff]
  %v196 = vld [vmem:[%s1 + $0x500] sm:$0xff]
  %v197 = vld [vmem:[%s1 + $0x508] sm:$0xff]
  %v198 = vld [vmem:[%s1 + $0x510] sm:$0xff]
  %v199 = vld [vmem:[%s1 + $0x518] sm:$0xff]
  %v200 = vld [vmem:[%s1 + $0x520] sm:$0xff]
  %v201 = vld [vmem:[%s1 + $0x528] sm:$0xff]
  %v202 = vld [vmem:[%s1 + $0x530] sm:$0xff]
  %v203 = vld [vmem:[%s1 + $0x538] sm:$0xff]
  %v204 = vld [vmem:[%s1 + $0x540] sm:$0xff]
  %v205 = vld [vmem:[%s1 + $0x548] sm:$0xff]
  %v206 = vld [vmem:[%s1 + $0x550] sm:$0xff]
  %v207 = vld [vmem:[%s1 + $0x558] sm:$0xff]
  %v208 = vld [vmem:[%s1 + $0x560] sm:$0xff]
  %v209 = vld [vmem:[%s1 + $0x568] sm:$0xff]
  %v210 = vld [vmem:[%s1 + $0x570] sm:$0xff]
  %v211 = vld [vmem:[%s1 + $0x578] sm:$0xff]
  %v212 = vld [vmem:[%s1 + $0x580] sm:$0xff]
  %v213 = vld [vmem:[%s1 + $0x588] sm:$0xff]
  %v214 = vld [vmem:[%s1 + $0x590] sm:$0xff]
  %v215 = vld [vmem:[%s1 + $0x598] sm:$0xff]
  %v216 = vld [vmem:[%s1 + $0x5a0] sm:$0xff]
  %v217 = vld [vmem:[%s1 + $0x5a8] sm:$0xff]
  %v218 = vld [vmem:[%s1 + $0x5b0] sm:$0xff]
  %v219 = vld [vmem:[%s1 + $0x5b8] sm:$0xff]
  %v220 = vld [vmem:[%s1 + $0x5c0] sm:$0xff]
  %v221 = vld [vmem:[%s1 + $0x5c8] sm:$0xff]
  %v222 = vld [vmem:[%s1 + $0x5d0] sm:$0xff]
  %v223 = vld [vmem:[%s1 + $0x5d8] sm:$0xff]
  %v224 = vld [vmem:[%s1 + $0x5e0] sm:$0xff]
  %v225 = vld [vmem:[%s1 + $0x5e8] sm:$0xff]
  %v226 = vld [vmem:[%s1 + $0x5f0] sm:$0xff]
  %v227 = vld [vmem:[%s1 + $0x5f8] sm:$0xff]
  %v228 = vld [vmem:[%s1 + $0x600] sm:$0xff]
  %v229 = vld [vmem:[%s1 + $0x608] sm:$0xff]
  %v230 = vld [vmem:[%s1 + $0x610] sm:$0xff]
  %v231 = vld [vmem:[%s1 + $0x618] sm:$0xff]
  %v232 = vld [vmem:[%s1 + $0x620] sm:$0xff]
  %v233 = vld [vmem:[%s1 + $0x628] sm:$0xff]
  %v234 = vld [vmem:[%s1 + $0x630] sm:$0xff]
  %v235 = vld [vmem:[%s1 + $0x638] sm:$0xff]
  %v236 = vld [vmem:[%s1 + $0x640] sm:$0xff]
  %v237 = vld [vmem:[%s1 + $0x648] sm:$0xff]
  %v238 = vld [vmem:[%s1 + $0x650] sm:$0xff]
  %v239 = vld [vmem:[%s1 + $0x658] sm:$0xff]
  %v240 = vld [vmem:[%s1 + $0x660] sm:$0xff]
  %v241 = vld [vmem:[%s1 + $0x668] sm:$0xff]
  %v242 = vld [vmem:[%s1 + $0x670] sm:$0xff]
  %v243 = vld [vmem:[%s1 + $0x678] sm:$0xff]
  %v244 = vld [vmem:[%s1 + $0x680] sm:$0xff]
  %v245 = vld [vmem:[%s1 + $0x688] sm:$0xff]
  %v246 = vld [vmem:[%s1 + $0x690] sm:$0xff]
  %v247 = vld [vmem:[%s1 + $0x698] sm:$0xff]
  %v248 = vld [vmem:[%s1 + $0x6a0] sm:$0xff]
  %v249 = vld [vmem:[%s1 + $0x6a8] sm:$0xff]
  %v250 = vld [vmem:[%s1 + $0x6b0] sm:$0xff]
  %v251 = vld [vmem:[%s1 + $0x6b8] sm:$0xff]
  %v252 = vld [vmem:[%s1 + $0x6c0] sm:$0xff]
  %v253 = vld [vmem:[%s1 + $0x6c8] sm:$0xff]
  %v254 = vld [vmem:[%s1 + $0x6d0] sm:$0xff]
  %v255 = vld [vmem:[%s1 + $0x6d8] sm:$0xff]
  %v256 = vld [vmem:[%s1 + $0x6e0] sm:$0xff]
  %v257 = vld [vmem:[%s1 + $0x6e8] sm:$0xff]
  %v258 = vld [vmem:[%s1 + $0x6f0] sm:$0xff]
  %v259 = vld [vmem:[%s1 + $0x6f8] sm:$0xff]
  %v260 = vld [vmem:[%s1 + $0x700] sm:$0xff]
  %v261 = vld [vmem:[%s1 + $0x708] sm:$0xff]
  %v262 = vld [vmem:[%s1 + $0x710] sm:$0xff]
  %v263 = vld [vmem:[%s1 + $0x718] sm:$0xff]
  %v264 = vld [vmem:[%s1 + $0x720] sm:$0xff]
  %v265 = vld [vmem:[%s1 + $0x728] sm:$0xff]
  %v266 = vld [vmem:[%s1 + $0x730] sm:$0xff]
  %v267 = vld [vmem:[%s1 + $0x738] sm:$0xff]
  %v268 = vld [vmem:[%s1 + $0x740] sm:$0xff]
  %v269 = vld [vmem:[%s1 + $0x748] sm:$0xff]
  %v270 = vld [vmem:[%s1 + $0x750] sm:$0xff]
  %v271 = vld [vmem:[%s1 + $0x758] sm:$0xff]
  %v272 = vld [vmem:[%s1 + $0x760] sm:$0xff]
  %v273 = vld [vmem:[%s1 + $0x768] sm:$0xff]
  %v274 = vld [vmem:[%s1 + $0x770] sm:$0xff]
  %v275 = vld [vmem:[%s1 + $0x778] sm:$0xff]
  %v276 = vld [vmem:[%s1 + $0x780] sm:$0xff]
  %v277 = vld [vmem:[%s1 + $0x788] sm:$0xff]
  %v278 = vld [vmem:[%s1 + $0x790] sm:$0xff]
  %v279 = vld [vmem:[%s1 + $0x798] sm:$0xff]
  %v280 = vld [vmem:[%s1 + $0x7a0] sm:$0xff]
  %v281 = vld [vmem:[%s1 + $0x7a8] sm:$0xff]
  %v282 = vld [vmem:[%s1 + $0x7b0] sm:$0xff]
  %v283 = vld [vmem:[%s1 + $0x7b8] sm:$0xff]
  %v284 = vld [vmem:[%s1 + $0x7c0] sm:$0xff]
  %v285 = vld [vmem:[%s1 + $0x7c8] sm:$0xff]
  %v286 = vld [vmem:[%s1 + $0x7d0] sm:$0xff]
  %v287 = vld [vmem:[%s1 + $0x7d8] sm:$0xff]
  %v288 = vld [vmem:[%s1 + $0x7e0] sm:$0xff]
  %v289 = vld [vmem:[%s1 + $0x7e8] sm:$0xff]
  %v290 = vld [vmem:[%s1 + $0x7f0] sm:$0xff]
  %v291 = vld [vmem:[%s1 + $0x7f8] sm:$0xff]
  %v292 = vld [vmem:[%s1 + $0x800] sm:$0xff]
  %v293 = vld [vmem:[%s1 + $0x808] sm:$0xff]
  %v294 = vld [vmem:[%s1 + $0x810] sm:$0xff]
  %v295 = vld [vmem:[%s1 + $0x818] sm:$0xff]
  %v296 = vld [vmem:[%s1 + $0x820] sm:$0xff]
  %v297 = vld [vmem:[%s1 + $0x828] sm:$0xff]
  %v298 = vld [vmem:[%s1 + $0x830] sm:$0xff]
  %v299 = vld [vmem:[%s1 + $0x838] sm:$0xff]
  %v300 = vld [vmem:[%s1 + $0x840] sm:$0xff]
  %v301 = vld [vmem:[%s1 + $0x848] sm:$0xff]
  %v302 = vld [vmem:[%s1 + $0x850] sm:$0xff]
  %v303 = vld [vmem:[%s1 + $0x858] sm:$0xff]
  %v304 = vld [vmem:[%s1 + $0x860] sm:$0xff]
  %v305 = vld [vmem:[%s1 + $0x868] sm:$0xff]
  %v306 = vld [vmem:[%s1 + $0x870] sm:$0xff]
  %v307 = vld [vmem:[%s1 + $0x878] sm:$0xff]
  %v308 = vld [vmem:[%s1 + $0x880] sm:$0xff]
  %v309 = vld [vmem:[%s1 + $0x888] sm:$0xff]
  %v310 = vld [vmem:[%s1 + $0x890] sm:$0xff]
  %v311 = vld [vmem:[%s1 + $0x898] sm:$0xff]
  %v312 = vld [vmem:[%s1 + $0x8a0] sm:$0xff]
  %v313 = vld [vmem:[%s1 + $0x8a8] sm:$0xff]
  %v314 = vld [vmem:[%s1 + $0x8b0] sm:$0xff]
  %v315 = vld [vmem:[%s1 + $0x8b8] sm:$0xff]
  %v316 = vld [vmem:[%s1 + $0x8c0] sm:$0xff]
  %v317 = vld [vmem:[%s1 + $0x8c8] sm:$0xff]
  %v318 = vld [vmem:[%s1 + $0x8d0] sm:$0xff]
  %v319 = vld [vmem:[%s1 + $0x8d8] sm:$0xff]
  %v320 = vld [vmem:[%s1 + $0x8e0] sm:$0xff]
  %v321 = vld [vmem:[%s1 + $0x8e8] sm:$0xff]
  %v322 = vld [vmem:[%s1 + $0x8f0] sm:$0xff]
  %v323 = vld [vmem:[%s1 + $0x8f8] sm:$0xff]
  %v324 = vld [vmem:[%s1 + $0x900] sm:$0xff]
  %v325 = vld [vmem:[%s1 + $0x908] sm:$0xff]
  %v326 = vld [vmem:[%s1 + $0x910] sm:$0xff]
  %v327 = vld [vmem:[%s1 + $0x918] sm:$0xff]
  %v328 = vld [vmem:[%s1 + $0x920] sm:$0xff]
  %v329 = vld [vmem:[%s1 + $0x928] sm:$0xff]
  %v330 = vld [vmem:[%s1 + $0x930] sm:$0xff]
  %v331 = vld [vmem:[%s1 + $0x938] sm:$0xff]
  %v332 = vld [vmem:[%s1 + $0x940] sm:$0xff]
  %v333 = vld [vmem:[%s1 + $0x948] sm:$0xff]
  %v334 = vld [vmem:[%s1 + $0x950] sm:$0xff]
  %v335 = vld [vmem:[%s1 + $0x958] sm:$0xff]
  %v336 = vld [vmem:[%s1 + $0x960] sm:$0xff]
  %v337 = vld [vmem:[%s1 + $0x968] sm:$0xff]
  %v338 = vld [vmem:[%s1 + $0x970] sm:$0xff]
  %v339 = vld [vmem:[%s1 + $0x978] sm:$0xff]
  %v340 = vld [vmem:[%s1 + $0x980] sm:$0xff]
  %v341 = vld [vmem:[%s1 + $0x988] sm:$0xff]
  %v342 = vld [vmem:[%s1 + $0x990] sm:$0xff]
  %v343 = vld [vmem:[%s1 + $0x998] sm:$0xff]
  %v344 = vld [vmem:[%s1 + $0x9a0] sm:$0xff]
  %v345 = vld [vmem:[%s1 + $0x9a8] sm:$0xff]
  %v346 = vld [vmem:[%s1 + $0x9b0] sm:$0xff]
  %v347 = vld [vmem:[%s1 + $0x9b8] sm:$0xff]
  %v348 = vld [vmem:[%s1 + $0x9c0] sm:$0xff]
  %v349 = vld [vmem:[%s1 + $0x9c8] sm:$0xff]
  %v350 = vld [vmem:[%s1 + $0x9d0] sm:$0xff]
  %v351 = vld [vmem:[%s1 + $0x9d8] sm:$0xff]
  %v352 = vld [vmem:[%s1 + $0x9e0] sm:$0xff]
  %v353 = vld [vmem:[%s1 + $0x9e8] sm:$0xff]
  %v354 = vld [vmem:[%s1 + $0x9f0] sm:$0xff]
  %v355 = vld [vmem:[%s1 + $0x9f8] sm:$0xff]
  %v356 = vld [vmem:[%s1 + $0xa00] sm:$0xff]
  %v357 = vld [vmem:[%s1 + $0xa08] sm:$0xff]
  %v358 = vld [vmem:[%s1 + $0xa10] sm:$0xff]
  %v359 = vld [vmem:[%s1 + $0xa18] sm:$0xff]
  %v360 = vld [vmem:[%s1 + $0xa20] sm:$0xff]
  %v361 = vld [vmem:[%s1 + $0xa28] sm:$0xff]
  %v362 = vld [vmem:[%s1 + $0xa30] sm:$0xff]
  %v363 = vld [vmem:[%s1 + $0xa38] sm:$0xff]
  %v364 = vld [vmem:[%s1 + $0xa40] sm:$0xff]
  %v365 = vld [vmem:[%s1 + $0xa48] sm:$0xff]
  %v366 = vld [vmem:[%s1 + $0xa50] sm:$0xff]
  %v367 = vld [vmem:[%s1 + $0xa58] sm:$0xff]
  %v368 = vld [vmem:[%s1 + $0xa60] sm:$0xff]
  %v369 = vld [vmem:[%s1 + $0xa68] sm:$0xff]
  %v370 = vld [vmem:[%s1 + $0xa70] sm:$0xff]
  %v371 = vld [vmem:[%s1 + $0xa78] sm:$0xff]
  %v372 = vld [vmem:[%s1 + $0xa80] sm:$0xff]
  %v373 = vld [vmem:[%s1 + $0xa88] sm:$0xff]
  %v374 = vld [vmem:[%s1 + $0xa90] sm:$0xff]
  %v375 = vld [vmem:[%s1 + $0xa98] sm:$0xff]
  %v376 = vld [vmem:[%s1 + $0xaa0] sm:$0xff]
  %v377 = vld [vmem:[%s1 + $0xaa8] sm:$0xff]
  %v378 = vld [vmem:[%s1 + $0xab0] sm:$0xff]
  %v379 = vld [vmem:[%s1 + $0xab8] sm:$0xff]
  %v380 = vld [vmem:[%s1 + $0xac0] sm:$0xff]
  %v381 = vld [vmem:[%s1 + $0xac8] sm:$0xff]
  %v382 = vld [vmem:[%s1 + $0xad0] sm:$0xff]
  %v383 = vld [vmem:[%s1 + $0xad8] sm:$0xff]
  %v384 = vld [vmem:[%s1 + $0xae0] sm:$0xff]
  %v385 = vld [vmem:[%s1 + $0xae8] sm:$0xff]
  %v386 = vld [vmem:[%s1 + $0xaf0] sm:$0xff]
  %v387 = vld [vmem:[%s1 + $0xaf8] sm:$0xff]
  %v388 = vld [vmem:[%s1 + $0xb00] sm:$0xff]
  %v389 = vld [vmem:[%s1 + $0xb08] sm:$0xff]
  %v390 = vld [vmem:[%s1 + $0xb10] sm:$0xff]
  %v391 = vld [vmem:[%s1 + $0xb18] sm:$0xff]
  %v392 = vld [vmem:[%s1 + $0xb20] sm:$0xff]
  %v393 = vld [vmem:[%s1 + $0xb28] sm:$0xff]
  %v394 = vld [vmem:[%s1 + $0xb30] sm:$0xff]
  %v395 = vld [vmem:[%s1 + $0xb38] sm:$0xff]
  %v396 = vld [vmem:[%s1 + $0xb40] sm:$0xff]
  %v397 = vld [vmem:[%s1 + $0xb48] sm:$0xff]
  %v398 = vld [vmem:[%s1 + $0xb50] sm:$0xff]
  %v399 = vld [vmem:[%s1 + $0xb58] sm:$0xff]
  %v400 = vld [vmem:[%s1 + $0xb60] sm:$0xff]
  %v401 = vld [vmem:[%s1 + $0xb68] sm:$0xff]
  %v402 = vld [vmem:[%s1 + $0xb70] sm:$0xff]
  %v403 = vld [vmem:[%s1 + $0xb78] sm:$0xff]
  %v404 = vld [vmem:[%s1 + $0xb80] sm:$0xff]
  %v405 = vld [vmem:[%s1 + $0xb88] sm:$0xff]
  %v406 = vld [vmem:[%s1 + $0xb90] sm:$0xff]
  %v407 = vld [vmem:[%s1 + $0xb98] sm:$0xff]
  %v408 = vld [vmem:[%s1 + $0xba0] sm:$0xff]
  %v409 = vld [vmem:[%s1 + $0xba8] sm:$0xff]
  %v410 = vld [vmem:[%s1 + $0xbb0] sm:$0xff]
  %v411 = vld [vmem:[%s1 + $0xbb8] sm:$0xff]
  %v412 = vld [vmem:[%s1 + $0xbc0] sm:$0xff]
  %v413 = vld [vmem:[%s1 + $0xbc8] sm:$0xff]
  %v414 = vld [vmem:[%s1 + $0xbd0] sm:$0xff]
  %v415 = vld [vmem:[%s1 + $0xbd8] sm:$0xff]
  %v416 = vld [vmem:[%s1 + $0xbe0] sm:$0xff]
  %v417 = vld [vmem:[%s1 + $0xbe8] sm:$0xff]
  %v418 = vld [vmem:[%s1 + $0xbf0] sm:$0xff]
  %v419 = vld [vmem:[%s1 + $0xbf8] sm:$0xff]
  %v420 = vld [vmem:[%s1 + $0xc00] sm:$0xff]
  %v421 = vld [vmem:[%s1 + $0xc08] sm:$0xff]
  %v422 = vld [vmem:[%s1 + $0xc10] sm:$0xff]
  %v423 = vld [vmem:[%s1 + $0xc18] sm:$0xff]
  %v424 = vld [vmem:[%s1 + $0xc20] sm:$0xff]
  %v425 = vld [vmem:[%s1 + $0xc28] sm:$0xff]
  %v426 = vld [vmem:[%s1 + $0xc30] sm:$0xff]
  %v427 = vld [vmem:[%s1 + $0xc38] sm:$0xff]
  %v428 = vld [vmem:[%s1 + $0xc40] sm:$0xff]
  %v429 = vld [vmem:[%s1 + $0xc48] sm:$0xff]
  %v430 = vld [vmem:[%s1 + $0xc50] sm:$0xff]
  %v431 = vld [vmem:[%s1 + $0xc58] sm:$0xff]
  %v432 = vld [vmem:[%s1 + $0xc60] sm:$0xff]
  %v433 = vld [vmem:[%s1 + $0xc68] sm:$0xff]
  %v434 = vld [vmem:[%s1 + $0xc70] sm:$0xff]
  %v435 = vld [vmem:[%s1 + $0xc78] sm:$0xff]
  %v436 = vld [vmem:[%s1 + $0xc80] sm:$0xff]
  %v437 = vld [vmem:[%s1 + $0xc88] sm:$0xff]
  %v438 = vld [vmem:[%s1 + $0xc90] sm:$0xff]
  %v439 = vld [vmem:[%s1 + $0xc98] sm:$0xff]
  %v440 = vld [vmem:[%s1 + $0xca0] sm:$0xff]
  %v441 = vld [vmem:[%s1 + $0xca8] sm:$0xff]
  %v442 = vld [vmem:[%s1 + $0xcb0] sm:$0xff]
  %v443 = vld [vmem:[%s1 + $0xcb8] sm:$0xff]
  %v444 = vld [vmem:[%s1 + $0xcc0] sm:$0xff]
  %v445 = vld [vmem:[%s1 + $0xcc8] sm:$0xff]
  %v446 = vld [vmem:[%s1 + $0xcd0] sm:$0xff]
  %v447 = vld [vmem:[%s1 + $0xcd8] sm:$0xff]
  %v448 = vld [vmem:[%s1 + $0xce0] sm:$0xff]
  %v449 = vld [vmem:[%s1 + $0xce8] sm:$0xff]
  %v450 = vld [vmem:[%s1 + $0xcf0] sm:$0xff]
  %v451 = vld [vmem:[%s1 + $0xcf8] sm:$0xff]
  %v452 = vld [vmem:[%s1 + $0xd00] sm:$0xff]
  %v453 = vld [vmem:[%s1 + $0xd08] sm:$0xff]
  %v454 = vld [vmem:[%s1 + $0xd10] sm:$0xff]
  %v455 = vld [vmem:[%s1 + $0xd18] sm:$0xff]
  %v456 = vld [vmem:[%s1 + $0xd20] sm:$0xff]
  %v457 = vld [vmem:[%s1 + $0xd28] sm:$0xff]
  %v458 = vld [vmem:[%s1 + $0xd30] sm:$0xff]
  %v459 = vld [vmem:[%s1 + $0xd38] sm:$0xff]
  %v460 = vld [vmem:[%s1 + $0xd40] sm:$0xff]
  %v461 = vld [vmem:[%s1 + $0xd48] sm:$0xff]
  %v462 = vld [vmem:[%s1 + $0xd50] sm:$0xff]
  %v463 = vld [vmem:[%s1 + $0xd58] sm:$0xff]
  %v464 = vld [vmem:[%s1 + $0xd60] sm:$0xff]
  %v465 = vld [vmem:[%s1 + $0xd68] sm:$0xff]
  %v466 = vld [vmem:[%s1 + $0xd70] sm:$0xff]
  %v467 = vld [vmem:[%s1 + $0xd78] sm:$0xff]
  %v468 = vld [vmem:[%s1 + $0xd80] sm:$0xff]
  %v469 = vld [vmem:[%s1 + $0xd88] sm:$0xff]
  %v470 = vld [vmem:[%s1 + $0xd90] sm:$0xff]
  %v471 = vld [vmem:[%s1 + $0xd98] sm:$0xff]
  %v472 = vld [vmem:[%s1 + $0xda0] sm:$0xff]
  %v473 = vld [vmem:[%s1 + $0xda8] sm:$0xff]
  %v474 = vld [vmem:[%s1 + $0xdb0] sm:$0xff]
  %v475 = vld [vmem:[%s1 + $0xdb8] sm:$0xff]
  %v476 = vld [vmem:[%s1 + $0xdc0] sm:$0xff]
  %v477 = vld [vmem:[%s1 + $0xdc8] sm:$0xff]
  %v478 = vld [vmem:[%s1 + $0xdd0] sm:$0xff]
  %v479 = vld [vmem:[%s1 + $0xdd8] sm:$0xff]
  %v480 = vld [vmem:[%s1 + $0xde0] sm:$0xff]
  %v481 = vld [vmem:[%s1 + $0xde8] sm:$0xff]
  %v482 = vld [vmem:[%s1 + $0xdf0] sm:$0xff]
  %v483 = vld [vmem:[%s1 + $0xdf8] sm:$0xff]
  %v484 = vld [vmem:[%s1 + $0xe00] sm:$0xff]
  %v485 = vld [vmem:[%s1 + $0xe08] sm:$0xff]
  %v486 = vld [vmem:[%s1 + $0xe10] sm:$0xff]
  %v487 = vld [vmem:[%s1 + $0xe18] sm:$0xff]
  %v488 = vld [vmem:[%s1 + $0xe20] sm:$0xff]
  %v489 = vld [vmem:[%s1 + $0xe28] sm:$0xff]
  %v490 = vld [vmem:[%s1 + $0xe30] sm:$0xff]
  %v491 = vld [vmem:[%s1 + $0xe38] sm:$0xff]
  %v492 = vld [vmem:[%s1 + $0xe40] sm:$0xff]
  %v493 = vld [vmem:[%s1 + $0xe48] sm:$0xff]
  %v494 = vld [vmem:[%s1 + $0xe50] sm:$0xff]
  %v495 = vld [vmem:[%s1 + $0xe58] sm:$0xff]
  %v496 = vld [vmem:[%s1 + $0xe60] sm:$0xff]
  %v497 = vld [vmem:[%s1 + $0xe68] sm:$0xff]
  %v498 = vld [vmem:[%s1 + $0xe70] sm:$0xff]
  %v499 = vld [vmem:[%s1 + $0xe78] sm:$0xff]
  %v500 = vld [vmem:[%s1 + $0xe80] sm:$0xff]
  %v501 = vld [vmem:[%s1 + $0xe88] sm:$0xff]
  %v502 = vld [vmem:[%s1 + $0xe90] sm:$0xff]
  %v503 = vld [vmem:[%s1 + $0xe98] sm:$0xff]
  %v504 = vld [vmem:[%s1 + $0xea0] sm:$0xff]
  %v505 = vld [vmem:[%s1 + $0xea8] sm:$0xff]
  %v506 = vld [vmem:[%s1 + $0xeb0] sm:$0xff]
  %v507 = vld [vmem:[%s1 + $0xeb8] sm:$0xff]
  %v508 = vld [vmem:[%s1 + $0xec0] sm:$0xff]
  %v509 = vld [vmem:[%s1 + $0xec8] sm:$0xff]
  %v510 = vld [vmem:[%s1 + $0xed0] sm:$0xff]
  %v511 = vld [vmem:[%s1 + $0xed8] sm:$0xff]
  %v512 = vld [vmem:[%s1 + $0xee0] sm:$0xff]
  %v513 = vld [vmem:[%s1 + $0xee8] sm:$0xff]
  %v514 = vld [vmem:[%s1 + $0xef0] sm:$0xff]
  %v515 = vld [vmem:[%s1 + $0xef8] sm:$0xff]
  %v516 = vld [vmem:[%s1 + $0xf00] sm:$0xff]
  %v517 = vld [vmem:[%s1 + $0xf08] sm:$0xff]
  %v518 = vld [vmem:[%s1 + $0xf10] sm:$0xff]
  %v519 = vld [vmem:[%s1 + $0xf18] sm:$0xff]
  %v520 = vld [vmem:[%s1 + $0xf20] sm:$0xff]
  %v521 = vld [vmem:[%s1 + $0xf28] sm:$0xff]
  %v522 = vld [vmem:[%s1 + $0xf30] sm:$0xff]
  %v523 = vld [vmem:[%s1 + $0xf38] sm:$0xff]
  %v524 = vld [vmem:[%s1 + $0xf40] sm:$0xff]
  %v525 = vld [vmem:[%s1 + $0xf48] sm:$0xff]
  %v526 = vld [vmem:[%s1 + $0xf50] sm:$0xff]
  %v527 = vld [vmem:[%s1 + $0xf58] sm:$0xff]
  %v528 = vld [vmem:[%s1 + $0xf60] sm:$0xff]
  %v529 = vld [vmem:[%s1 + $0xf68] sm:$0xff]
  %v530 = vld [vmem:[%s1 + $0xf70] sm:$0xff]
  %v531 = vld [vmem:[%s1 + $0xf78] sm:$0xff]
  %v532 = vld [vmem:[%s1 + $0xf80] sm:$0xff]
  %v533 = vld [vmem:[%s1 + $0xf88] sm:$0xff]
  %v534 = vld [vmem:[%s1 + $0xf90] sm:$0xff]
  %v535 = vld [vmem:[%s1 + $0xf98] sm:$0xff]
  %v536 = vld [vmem:[%s1 + $0xfa0] sm:$0xff]
  %v537 = vld [vmem:[%s1 + $0xfa8] sm:$0xff]
  %v538 = vld [vmem:[%s1 + $0xfb0] sm:$0xff]
  %v539 = vld [vmem:[%s1 + $0xfb8] sm:$0xff]
  %v540 = vld [vmem:[%s1 + $0xfc0] sm:$0xff]
  %v541 = vld [vmem:[%s1 + $0xfc8] sm:$0xff]
  %v542 = vld [vmem:[%s1 + $0xfd0] sm:$0xff]
  %v543 = vld [vmem:[%s1 + $0xfd8] sm:$0xff]
  %v544 = vld [vmem:[%s1 + $0xfe0] sm:$0xff]
  %v545 = vld [vmem:[%s1 + $0xfe8] sm:$0xff]
  %v546 = vld [vmem:[%s1 + $0xff0] sm:$0xff]
  %v547 = vld [vmem:[%s1 + $0xff8] sm:$0xff]
  %v548 = vld [vmem:[%s1 + $0x1000] sm:$0xff]
  %v549 = vld [vmem:[%s1 + $0x1008] sm:$0xff]
  %v550 = vld [vmem:[%s1 + $0x1010] sm:$0xff]
  %v551 = vld [vmem:[%s1 + $0x1018] sm:$0xff]
  %v552 = vld [vmem:[%s1 + $0x1020] sm:$0xff]
  %v553 = vld [vmem:[%s1 + $0x1028] sm:$0xff]
  %v554 = vld [vmem:[%s1 + $0x1030] sm:$0xff]
  %v555 = vld [vmem:[%s1 + $0x1038] sm:$0xff]
  %v556 = vld [vmem:[%s1 + $0x1040] sm:$0xff]
  %v557 = vld [vmem:[%s1 + $0x1048] sm:$0xff]
  %v558 = vld [vmem:[%s1 + $0x1050] sm:$0xff]
  %v559 = vld [vmem:[%s1 + $0x1058] sm:$0xff]
  %v560 = vld [vmem:[%s1 + $0x1060] sm:$0xff]
  %v561 = vld [vmem:[%s1 + $0x1068] sm:$0xff]
  %v562 = vld [vmem:[%s1 + $0x1070] sm:$0xff]
  %v563 = vld [vmem:[%s1 + $0x1078] sm:$0xff]
  %v564 = vld [vmem:[%s1 + $0x1080] sm:$0xff]
  %v565 = vld [vmem:[%s1 + $0x1088] sm:$0xff]
  %v566 = vld [vmem:[%s1 + $0x1090] sm:$0xff]
  %v567 = vld [vmem:[%s1 + $0x1098] sm:$0xff]
  %v568 = vld [vmem:[%s1 + $0x10a0] sm:$0xff]
  %v569 = vld [vmem:[%s1 + $0x10a8] sm:$0xff]
  %v570 = vld [vmem:[%s1 + $0x10b0] sm:$0xff]
  %v571 = vld [vmem:[%s1 + $0x10b8] sm:$0xff]
  %v572 = vld [vmem:[%s1 + $0x10c0] sm:$0xff]
  %v573 = vld [vmem:[%s1 + $0x10c8] sm:$0xff]
  %v574 = vld [vmem:[%s1 + $0x10d0] sm:$0xff]
  %v575 = vld [vmem:[%s1 + $0x10d8] sm:$0xff]
  %v576 = vld [vmem:[%s1 + $0x10e0] sm:$0xff]
  %v577 = vld [vmem:[%s1 + $0x10e8] sm:$0xff]
  %v578 = vld [vmem:[%s1 + $0x10f0] sm:$0xff]
  %v579 = vld [vmem:[%s1 + $0x10f8] sm:$0xff]
  %v580 = vld [vmem:[%s1 + $0x1100] sm:$0xff]
  %v581 = vld [vmem:[%s1 + $0x1108] sm:$0xff]
  %v582 = vld [vmem:[%s1 + $0x1110] sm:$0xff]
  %v583 = vld [vmem:[%s1 + $0x1118] sm:$0xff]
  %v584 = vld [vmem:[%s1 + $0x1120] sm:$0xff]
  %v585 = vld [vmem:[%s1 + $0x1128] sm:$0xff]
  %v586 = vld [vmem:[%s1 + $0x1130] sm:$0xff]
  %v587 = vld [vmem:[%s1 + $0x1138] sm:$0xff]
  %v588 = vld [vmem:[%s1 + $0x1140] sm:$0xff]
  %v589 = vld [vmem:[%s1 + $0x1148] sm:$0xff]
  %v590 = vld [vmem:[%s1 + $0x1150] sm:$0xff]
  %v591 = vld [vmem:[%s1 + $0x1158] sm:$0xff]
  %v592 = vld [vmem:[%s1 + $0x1160] sm:$0xff]
  %v593 = vld [vmem:[%s1 + $0x1168] sm:$0xff]
  %v594 = vld [vmem:[%s1 + $0x1170] sm:$0xff]
  %v595 = vld [vmem:[%s1 + $0x1178] sm:$0xff]
  %v596 = vld [vmem:[%s1 + $0x1180] sm:$0xff]
  %v597 = vld [vmem:[%s1 + $0x1188] sm:$0xff]
  %v598 = vld [vmem:[%s1 + $0x1190] sm:$0xff]
  %v599 = vld [vmem:[%s1 + $0x1198] sm:$0xff]
  %v600 = vld [vmem:[%s1 + $0x11a0] sm:$0xff]
  %v601 = vld [vmem:[%s1 + $0x11a8] sm:$0xff]
  %v602 = vld [vmem:[%s1 + $0x11b0] sm:$0xff]
  %v603 = vld [vmem:[%s1 + $0x11b8] sm:$0xff]
  %v604 = vld [vmem:[%s1 + $0x11c0] sm:$0xff]
  %v605 = vld [vmem:[%s1 + $0x11c8] sm:$0xff]
  %v606 = vld [vmem:[%s1 + $0x11d0] sm:$0xff]
  %v607 = vld [vmem:[%s1 + $0x11d8] sm:$0xff]
  %v608 = vld [vmem:[%s1 + $0x11e0] sm:$0xff]
  %v609 = vld [vmem:[%s1 + $0x11e8] sm:$0xff]
  %v610 = vld [vmem:[%s1 + $0x11f0] sm:$0xff]
  %v611 = vld [vmem:[%s1 + $0x11f8] sm:$0xff]
  %v612 = vld [vmem:[%s1 + $0x1200] sm:$0xff]
  %v613 = vld [vmem:[%s1 + $0x1208] sm:$0xff]
  %v614 = vld [vmem:[%s1 + $0x1210] sm:$0xff]
  %v615 = vld [vmem:[%s1 + $0x1218] sm:$0xff]
  %v616 = vld [vmem:[%s1 + $0x1220] sm:$0xff]
  %v617 = vld [vmem:[%s1 + $0x1228] sm:$0xff]
  %v618 = vld [vmem:[%s1 + $0x1230] sm:$0xff]
  %v619 = vld [vmem:[%s1 + $0x1238] sm:$0xff]
  %v620 = vld [vmem:[%s1 + $0x1240] sm:$0xff]
  %v621 = vld [vmem:[%s1 + $0x1248] sm:$0xff]
  %v622 = vld [vmem:[%s1 + $0x1250] sm:$0xff]
  %v623 = vld [vmem:[%s1 + $0x1258] sm:$0xff]
  %v624 = vld [vmem:[%s1 + $0x1260] sm:$0xff]
  %v625 = vld [vmem:[%s1 + $0x1268] sm:$0xff]
  %v626 = vld [vmem:[%s1 + $0x1270] sm:$0xff]
  %v627 = vld [vmem:[%s1 + $0x1278] sm:$0xff]
  %v628 = vld [vmem:[%s1 + $0x1280] sm:$0xff]
  %v629 = vld [vmem:[%s1 + $0x1288] sm:$0xff]
  %v630 = vld [vmem:[%s1 + $0x1290] sm:$0xff]
  %v631 = vld [vmem:[%s1 + $0x1298] sm:$0xff]
  %v632 = vld [vmem:[%s1 + $0x12a0] sm:$0xff]
  %v633 = vld [vmem:[%s1 + $0x12a8] sm:$0xff]
  %v634 = vld [vmem:[%s1 + $0x12b0] sm:$0xff]
  %v635 = vld [vmem:[%s1 + $0x12b8] sm:$0xff]
  %v636 = vld [vmem:[%s1 + $0x12c0] sm:$0xff]
  %v637 = vld [vmem:[%s1 + $0x12c8] sm:$0xff]
  %v638 = vld [vmem:[%s1 + $0x12d0] sm:$0xff]
  %v639 = vld [vmem:[%s1 + $0x12d8] sm:$0xff]
  %v640 = vld [vmem:[%s1 + $0x12e0] sm:$0xff]
  %v641 = vld [vmem:[%s1 + $0x12e8] sm:$0xff]
  %v642 = vld [vmem:[%s1 + $0x12f0] sm:$0xff]
  %v643 = vld [vmem:[%s1 + $0x12f8] sm:$0xff]
  %v644 = vld [vmem:[%s1 + $0x1300] sm:$0xff]
  %v645 = vld [vmem:[%s1 + $0x1308] sm:$0xff]
  %v646 = vld [vmem:[%s1 + $0x1310] sm:$0xff]
  %v647 = vld [vmem:[%s1 + $0x1318] sm:$0xff]
  %v648 = vld [vmem:[%s1 + $0x1320] sm:$0xff]
  %v649 = vld [vmem:[%s1 + $0x1328] sm:$0xff]
  %v650 = vld [vmem:[%s1 + $0x1330] sm:$0xff]
  %v651 = vld [vmem:[%s1 + $0x1338] sm:$0xff]
  %v652 = vld [vmem:[%s1 + $0x1340] sm:$0xff]
  %v653 = vld [vmem:[%s1 + $0x1348] sm:$0xff]
  %v654 = vld [vmem:[%s1 + $0x1350] sm:$0xff]
  %v655 = vld [vmem:[%s1 + $0x1358] sm:$0xff]
  %v656 = vld [vmem:[%s1 + $0x1360] sm:$0xff]
  %v657 = vld [vmem:[%s1 + $0x1368] sm:$0xff]
  %v658 = vld [vmem:[%s1 + $0x1370] sm:$0xff]
  %v659 = vld [vmem:[%s1 + $0x1378] sm:$0xff]
  %v660 = vld [vmem:[%s1 + $0x1380] sm:$0xff]
  %v661 = vld [vmem:[%s1 + $0x1388] sm:$0xff]
  %v662 = vld [vmem:[%s1 + $0x1390] sm:$0xff]
  %v663 = vld [vmem:[%s1 + $0x1398] sm:$0xff]
  %v664 = vld [vmem:[%s1 + $0x13a0] sm:$0xff]
  %v665 = vld [vmem:[%s1 + $0x13a8] sm:$0xff]
  %v666 = vld [vmem:[%s1 + $0x13b0] sm:$0xff]
  %v667 = vld [vmem:[%s1 + $0x13b8] sm:$0xff]
  %v668 = vld [vmem:[%s1 + $0x13c0] sm:$0xff]
  %v669 = vld [vmem:[%s1 + $0x13c8] sm:$0xff]
  %v670 = vld [vmem:[%s1 + $0x13d0] sm:$0xff]
  %v671 = vld [vmem:[%s1 + $0x13d8] sm:$0xff]
  %v672 = vld [vmem:[%s1 + $0x13e0] sm:$0xff]
  %v673 = vld [vmem:[%s1 + $0x13e8] sm:$0xff]
  %v674 = vld [vmem:[%s1 + $0x13f0] sm:$0xff]
  %v675 = vld [vmem:[%s1 + $0x13f8] sm:$0xff]
  %v676 = vld [vmem:[%s1 + $0x1400] sm:$0xff]
  %v677 = vld [vmem:[%s1 + $0x1408] sm:$0xff]
  %v678 = vld [vmem:[%s1 + $0x1410] sm:$0xff]
  %v679 = vld [vmem:[%s1 + $0x1418] sm:$0xff]
  %v680 = vld [vmem:[%s1 + $0x1420] sm:$0xff]
  %v681 = vld [vmem:[%s1 + $0x1428] sm:$0xff]
  %v682 = vld [vmem:[%s1 + $0x1430] sm:$0xff]
  %v683 = vld [vmem:[%s1 + $0x1438] sm:$0xff]
  %v684 = vld [vmem:[%s1 + $0x1440] sm:$0xff]
  %v685 = vld [vmem:[%s1 + $0x1448] sm:$0xff]
  %v686 = vld [vmem:[%s1 + $0x1450] sm:$0xff]
  %v687 = vld [vmem:[%s1 + $0x1458] sm:$0xff]
  %v688 = vld [vmem:[%s1 + $0x1460] sm:$0xff]
  %v689 = vld [vmem:[%s1 + $0x1468] sm:$0xff]
  %v690 = vld [vmem:[%s1 + $0x1470] sm:$0xff]
  %v691 = vld [vmem:[%s1 + $0x1478] sm:$0xff]
  %v692 = vld [vmem:[%s1 + $0x1480] sm:$0xff]
  %v693 = vld [vmem:[%s1 + $0x1488] sm:$0xff]
  %v694 = vld [vmem:[%s1 + $0x1490] sm:$0xff]
  %v695 = vld [vmem:[%s1 + $0x1498] sm:$0xff]
  %v696 = vld [vmem:[%s1 + $0x14a0] sm:$0xff]
  %v697 = vld [vmem:[%s1 + $0x14a8] sm:$0xff]
  %v698 = vld [vmem:[%s1 + $0x14b0] sm:$0xff]
  %v699 = vld [vmem:[%s1 + $0x14b8] sm:$0xff]
  %v700 = vld [vmem:[%s1 + $0x14c0] sm:$0xff]
  %v701 = vld [vmem:[%s1 + $0x14c8] sm:$0xff]
  %v702 = vld [vmem:[%s1 + $0x14d0] sm:$0xff]
  %v703 = vld [vmem:[%s1 + $0x14d8] sm:$0xff]
  %v704 = vld [vmem:[%s1 + $0x14e0] sm:$0xff]
  %v705 = vld [vmem:[%s1 + $0x14e8] sm:$0xff]
  %v706 = vld [vmem:[%s1 + $0x14f0] sm:$0xff]
  %v707 = vld [vmem:[%s1 + $0x14f8] sm:$0xff]
  %v708 = vld [vmem:[%s1 + $0x1500] sm:$0xff]
  %v709 = vld [vmem:[%s1 + $0x1508] sm:$0xff]
  %v710 = vld [vmem:[%s1 + $0x1510] sm:$0xff]
  %v711 = vld [vmem:[%s1 + $0x1518] sm:$0xff]
  %v712 = vld [vmem:[%s1 + $0x1520] sm:$0xff]
  %v713 = vld [vmem:[%s1 + $0x1528] sm:$0xff]
  %v714 = vld [vmem:[%s1 + $0x1530] sm:$0xff]
  %v715 = vld [vmem:[%s1 + $0x1538] sm:$0xff]
  %v716 = vld [vmem:[%s1 + $0x1540] sm:$0xff]
  %v717 = vld [vmem:[%s1 + $0x1548] sm:$0xff]
  %v718 = vld [vmem:[%s1 + $0x1550] sm:$0xff]
  %v719 = vld [vmem:[%s1 + $0x1558] sm:$0xff]
  %v720 = vld [vmem:[%s1 + $0x1560] sm:$0xff]
  %v721 = vld [vmem:[%s1 + $0x1568] sm:$0xff]
  %v722 = vld [vmem:[%s1 + $0x1570] sm:$0xff]
  %v723 = vld [vmem:[%s1 + $0x1578] sm:$0xff]
  %v724 = vld [vmem:[%s1 + $0x1580] sm:$0xff]
  %v725 = vld [vmem:[%s1 + $0x1588] sm:$0xff]
  %v726 = vld [vmem:[%s1 + $0x1590] sm:$0xff]
  %v727 = vld [vmem:[%s1 + $0x1598] sm:$0xff]
  %v728 = vld [vmem:[%s1 + $0x15a0] sm:$0xff]
  %v729 = vld [vmem:[%s1 + $0x15a8] sm:$0xff]
  %v730 = vld [vmem:[%s1 + $0x15b0] sm:$0xff]
  %v731 = vld [vmem:[%s1 + $0x15b8] sm:$0xff]
  %v732 = vld [vmem:[%s1 + $0x15c0] sm:$0xff]
  %v733 = vld [vmem:[%s1 + $0x15c8] sm:$0xff]
  %v734 = vld [vmem:[%s1 + $0x15d0] sm:$0xff]
  %v735 = vld [vmem:[%s1 + $0x15d8] sm:$0xff]
  %v736 = vld [vmem:[%s1 + $0x15e0] sm:$0xff]
  %v737 = vld [vmem:[%s1 + $0x15e8] sm:$0xff]
  %v738 = vld [vmem:[%s1 + $0x15f0] sm:$0xff]
  %v739 = vld [vmem:[%s1 + $0x15f8] sm:$0xff]
  %v740 = vld [vmem:[%s1 + $0x1600] sm:$0xff]
  %v741 = vld [vmem:[%s1 + $0x1608] sm:$0xff]
  %v742 = vld [vmem:[%s1 + $0x1610] sm:$0xff]
  %v743 = vld [vmem:[%s1 + $0x1618] sm:$0xff]
  %v744 = vld [vmem:[%s1 + $0x1620] sm:$0xff]
  %v745 = vld [vmem:[%s1 + $0x1628] sm:$0xff]
  %v746 = vld [vmem:[%s1 + $0x1630] sm:$0xff]
  %v747 = vld [vmem:[%s1 + $0x1638] sm:$0xff]
  %v748 = vld [vmem:[%s1 + $0x1640] sm:$0xff]
  %v749 = vld [vmem:[%s1 + $0x1648] sm:$0xff]
  %v750 = vld [vmem:[%s1 + $0x1650] sm:$0xff]
  %v751 = vld [vmem:[%s1 + $0x1658] sm:$0xff]
  %v752 = vld [vmem:[%s1 + $0x1660] sm:$0xff]
  %v753 = vld [vmem:[%s1 + $0x1668] sm:$0xff]
  %v754 = vld [vmem:[%s1 + $0x1670] sm:$0xff]
  %v755 = vld [vmem:[%s1 + $0x1678] sm:$0xff]
  %v756 = vld [vmem:[%s1 + $0x1680] sm:$0xff]
  %v757 = vld [vmem:[%s1 + $0x1688] sm:$0xff]
  %v758 = vld [vmem:[%s1 + $0x1690] sm:$0xff]
  %v759 = vld [vmem:[%s1 + $0x1698] sm:$0xff]
  %v760 = vld [vmem:[%s1 + $0x16a0] sm:$0xff]
  %v761 = vld [vmem:[%s1 + $0x16a8] sm:$0xff]
  %v762 = vld [vmem:[%s1 + $0x16b0] sm:$0xff]
  %v763 = vld [vmem:[%s1 + $0x16b8] sm:$0xff]
  %v764 = vld [vmem:[%s1 + $0x16c0] sm:$0xff]
  %v765 = vld [vmem:[%s1 + $0x16c8] sm:$0xff]
  %v766 = vld [vmem:[%s1 + $0x16d0] sm:$0xff]
  %v767 = vld [vmem:[%s1 + $0x16d8] sm:$0xff]
  %v768 = vld [vmem:[%s1 + $0x16e0] sm:$0xff]
  %v769 = vld [vmem:[%s1 + $0x16e8] sm:$0xff]
  %v770 = vld [vmem:[%s1 + $0x16f0] sm:$0xff]
  %v771 = vld [vmem:[%s1 + $0x16f8] sm:$0xff]
  %v772 = vld [vmem:[%s1 + $0x1700] sm:$0xff]
  %v773 = vld [vmem:[%s1 + $0x1708] sm:$0xff]
  %v774 = vld [vmem:[%s1 + $0x1710] sm:$0xff]
  %v775 = vld [vmem:[%s1 + $0x1718] sm:$0xff]
  %v776 = vld [vmem:[%s1 + $0x1720] sm:$0xff]
  %v777 = vld [vmem:[%s1 + $0x1728] sm:$0xff]
  %v778 = vld [vmem:[%s1 + $0x1730] sm:$0xff]
  %v779 = vld [vmem:[%s1 + $0x1738] sm:$0xff]
  %v780 = vld [vmem:[%s1 + $0x1740] sm:$0xff]
  %v781 = vld [vmem:[%s1 + $0x1748] sm:$0xff]
  %v782 = vld [vmem:[%s1 + $0x1750] sm:$0xff]
  %v783 = vld [vmem:[%s1 + $0x1758] sm:$0xff]
  %v784 = vld [vmem:[%s1 + $0x1760] sm:$0xff]
  %v785 = vld [vmem:[%s1 + $0x1768] sm:$0xff]
  %v786 = vld [vmem:[%s1 + $0x1770] sm:$0xff]
  %v787 = vld [vmem:[%s1 + $0x1778] sm:$0xff]
  %v788 = vld [vmem:[%s1 + $0x1780] sm:$0xff]
  %v789 = vld [vmem:[%s1 + $0x1788] sm:$0xff]
  %v790 = vld [vmem:[%s1 + $0x1790] sm:$0xff]
  %v791 = vld [vmem:[%s1 + $0x1798] sm:$0xff]
  %v792 = vld [vmem:[%s1 + $0x17a0] sm:$0xff]
  %v793 = vld [vmem:[%s1 + $0x17a8] sm:$0xff]
  %v794 = vld [vmem:[%s1 + $0x17b0] sm:$0xff]
  %v795 = vld [vmem:[%s1 + $0x17b8] sm:$0xff]
  %v796 = vld [vmem:[%s1 + $0x17c0] sm:$0xff]
  %v797 = vld [vmem:[%s1 + $0x17c8] sm:$0xff]
  %v798 = vld [vmem:[%s1 + $0x17d0] sm:$0xff]
  %v799 = vld [vmem:[%s1 + $0x17d8] sm:$0xff]
  %v800 = vld [vmem:[%s1 + $0x17e0] sm:$0xff]
  %v801 = vld [vmem:[%s1 + $0x17e8] sm:$0xff]
  %v802 = vld [vmem:[%s1 + $0x17f0] sm:$0xff]
  %v803 = vld [vmem:[%s1 + $0x17f8] sm:$0xff]
  %v804 = vld [vmem:[%s1 + $0x1800] sm:$0xff]
  %v805 = vld [vmem:[%s1 + $0x1808] sm:$0xff]
  %v806 = vld [vmem:[%s1 + $0x1810] sm:$0xff]
  %v807 = vld [vmem:[%s1 + $0x1818] sm:$0xff]
  %v808 = vld [vmem:[%s1 + $0x1820] sm:$0xff]
  %v809 = vld [vmem:[%s1 + $0x1828] sm:$0xff]
  %v810 = vld [vmem:[%s1 + $0x1830] sm:$0xff]
  %v811 = vld [vmem:[%s1 + $0x1838] sm:$0xff]
  %v812 = vld [vmem:[%s1 + $0x1840] sm:$0xff]
  %v813 = vld [vmem:[%s1 + $0x1848] sm:$0xff]
  %v814 = vld [vmem:[%s1 + $0x1850] sm:$0xff]
  %v815 = vld [vmem:[%s1 + $0x1858] sm:$0xff]
  %v816 = vld [vmem:[%s1 + $0x1860] sm:$0xff]
  %v817 = vld [vmem:[%s1 + $0x1868] sm:$0xff]
  %v818 = vld [vmem:[%s1 + $0x1870] sm:$0xff]
  %v819 = vld [vmem:[%s1 + $0x1878] sm:$0xff]
  %v820 = vld [vmem:[%s1 + $0x1880] sm:$0xff]
  %v821 = vld [vmem:[%s1 + $0x1888] sm:$0xff]
  %v822 = vld [vmem:[%s1 + $0x1890] sm:$0xff]
  %v823 = vld [vmem:[%s1 + $0x1898] sm:$0xff]
  %v824 = vld [vmem:[%s1 + $0x18a0] sm:$0xff]
  %v825 = vld [vmem:[%s1 + $0x18a8] sm:$0xff]
  %v826 = vld [vmem:[%s1 + $0x18b0] sm:$0xff]
  %v827 = vld [vmem:[%s1 + $0x18b8] sm:$0xff]
  %v828 = vld [vmem:[%s1 + $0x18c0] sm:$0xff]
  %v829 = vld [vmem:[%s1 + $0x18c8] sm:$0xff]
  %v830 = vld [vmem:[%s1 + $0x18d0] sm:$0xff]
  %v831 = vld [vmem:[%s1 + $0x18d8] sm:$0xff]
  %v832 = vld [vmem:[%s1 + $0x18e0] sm:$0xff]
  %v833 = vld [vmem:[%s1 + $0x18e8] sm:$0xff]
  %v834 = vld [vmem:[%s1 + $0x18f0] sm:$0xff]
  %v835 = vld [vmem:[%s1 + $0x18f8] sm:$0xff]
  %v836 = vld [vmem:[%s1 + $0x1900] sm:$0xff]
  %v837 = vld [vmem:[%s1 + $0x1908] sm:$0xff]
  %v838 = vld [vmem:[%s1 + $0x1910] sm:$0xff]
  %v839 = vld [vmem:[%s1 + $0x1918] sm:$0xff]
  %v840 = vld [vmem:[%s1 + $0x1920] sm:$0xff]
  %v841 = vld [vmem:[%s1 + $0x1928] sm:$0xff]
  %v842 = vld [vmem:[%s1 + $0x1930] sm:$0xff]
  %v843 = vld [vmem:[%s1 + $0x1938] sm:$0xff]
  %v844 = vld [vmem:[%s1 + $0x1940] sm:$0xff]
  %v845 = vld [vmem:[%s1 + $0x1948] sm:$0xff]
  %v846 = vld [vmem:[%s1 + $0x1950] sm:$0xff]
  %v847 = vld [vmem:[%s1 + $0x1958] sm:$0xff]
  %v848 = vld [vmem:[%s1 + $0x1960] sm:$0xff]
  %v849 = vld [vmem:[%s1 + $0x1968] sm:$0xff]
  %v850 = vld [vmem:[%s1 + $0x1970] sm:$0xff]
  %v851 = vld [vmem:[%s1 + $0x1978] sm:$0xff]
  %v852 = vld [vmem:[%s1 + $0x1980] sm:$0xff]
  %v853 = vld [vmem:[%s1 + $0x1988] sm:$0xff]
  %v854 = vld [vmem:[%s1 + $0x1990] sm:$0xff]
  %v855 = vld [vmem:[%s1 + $0x1998] sm:$0xff]
  %v856 = vld [vmem:[%s1 + $0x19a0] sm:$0xff]
  %v857 = vld [vmem:[%s1 + $0x19a8] sm:$0xff]
  %v858 = vld [vmem:[%s1 + $0x19b0] sm:$0xff]
  %v859 = vld [vmem:[%s1 + $0x19b8] sm:$0xff]
  %v860 = vld [vmem:[%s1 + $0x19c0] sm:$0xff]
  %v861 = vld [vmem:[%s1 + $0x19c8] sm:$0xff]
  %v862 = vld [vmem:[%s1 + $0x19d0] sm:$0xff]
  %v863 = vld [vmem:[%s1 + $0x19d8] sm:$0xff]
  %v864 = vld [vmem:[%s1 + $0x19e0] sm:$0xff]
  %v865 = vld [vmem:[%s1 + $0x19e8] sm:$0xff]
  %v866 = vld [vmem:[%s1 + $0x19f0] sm:$0xff]
  %v867 = vld [vmem:[%s1 + $0x19f8] sm:$0xff]
  %v868 = vld [vmem:[%s1 + $0x1a00] sm:$0xff]
  %v869 = vld [vmem:[%s1 + $0x1a08] sm:$0xff]
  %v870 = vld [vmem:[%s1 + $0x1a10] sm:$0xff]
  %v871 = vld [vmem:[%s1 + $0x1a18] sm:$0xff]
  %v872 = vld [vmem:[%s1 + $0x1a20] sm:$0xff]
  %v873 = vld [vmem:[%s1 + $0x1a28] sm:$0xff]
  %v874 = vld [vmem:[%s1 + $0x1a30] sm:$0xff]
  %v875 = vld [vmem:[%s1 + $0x1a38] sm:$0xff]
  %v876 = vld [vmem:[%s1 + $0x1a40] sm:$0xff]
  %v877 = vld [vmem:[%s1 + $0x1a48] sm:$0xff]
  %v878 = vld [vmem:[%s1 + $0x1a50] sm:$0xff]
  %v879 = vld [vmem:[%s1 + $0x1a58] sm:$0xff]
  %v880 = vld [vmem:[%s1 + $0x1a60] sm:$0xff]
  %v881 = vld [vmem:[%s1 + $0x1a68] sm:$0xff]
  %v882 = vld [vmem:[%s1 + $0x1a70] sm:$0xff]
  %v883 = vld [vmem:[%s1 + $0x1a78] sm:$0xff]
  %v884 = vld [vmem:[%s1 + $0x1a80] sm:$0xff]
  %v885 = vld [vmem:[%s1 + $0x1a88] sm:$0xff]
  %v886 = vld [vmem:[%s1 + $0x1a90] sm:$0xff]
  %v887 = vld [vmem:[%s1 + $0x1a98] sm:$0xff]
  %v888 = vld [vmem:[%s1 + $0x1aa0] sm:$0xff]
  %v889 = vld [vmem:[%s1 + $0x1aa8] sm:$0xff]
  %v890 = vld [vmem:[%s1 + $0x1ab0] sm:$0xff]
  %v891 = vld [vmem:[%s1 + $0x1ab8] sm:$0xff]
  %v892 = vld [vmem:[%s1 + $0x1ac0] sm:$0xff]
  %v893 = vld [vmem:[%s1 + $0x1ac8] sm:$0xff]
  %v894 = vld [vmem:[%s1 + $0x1ad0] sm:$0xff]
  %v895 = vld [vmem:[%s1 + $0x1ad8] sm:$0xff]
  %v896 = vld [vmem:[%s1 + $0x1ae0] sm:$0xff]
  %v897 = vld [vmem:[%s1 + $0x1ae8] sm:$0xff]
  %v898 = vld [vmem:[%s1 + $0x1af0] sm:$0xff]
  %v899 = vld [vmem:[%s1 + $0x1af8] sm:$0xff]
  %v900 = vld [vmem:[%s1 + $0x1b00] sm:$0xff]
  %v901 = vld [vmem:[%s1 + $0x1b08] sm:$0xff]
  %v902 = vld [vmem:[%s1 + $0x1b10] sm:$0xff]
  %v903 = vld [vmem:[%s1 + $0x1b18] sm:$0xff]
  %v904 = vld [vmem:[%s1 + $0x1b20] sm:$0xff]
  %v905 = vld [vmem:[%s1 + $0x1b28] sm:$0xff]
  %v906 = vld [vmem:[%s1 + $0x1b30] sm:$0xff]
  %v907 = vld [vmem:[%s1 + $0x1b38] sm:$0xff]
  %v908 = vld [vmem:[%s1 + $0x1b40] sm:$0xff]
  %v909 = vld [vmem:[%s1 + $0x1b48] sm:$0xff]
  %v910 = vld [vmem:[%s1 + $0x1b50] sm:$0xff]
  %v911 = vld [vmem:[%s1 + $0x1b58] sm:$0xff]
  %v912 = vld [vmem:[%s1 + $0x1b60] sm:$0xff]
  %v913 = vld [vmem:[%s1 + $0x1b68] sm:$0xff]
  %v914 = vld [vmem:[%s1 + $0x1b70] sm:$0xff]
  %v915 = vld [vmem:[%s1 + $0x1b78] sm:$0xff]
  %v916 = vld [vmem:[%s1 + $0x1b80] sm:$0xff]
  %v917 = vld [vmem:[%s1 + $0x1b88] sm:$0xff]
  %v918 = vld [vmem:[%s1 + $0x1b90] sm:$0xff]
  %v919 = vld [vmem:[%s1 + $0x1b98] sm:$0xff]
  %v920 = vld [vmem:[%s1 + $0x1ba0] sm:$0xff]
  %v921 = vld [vmem:[%s1 + $0x1ba8] sm:$0xff]
  %v922 = vld [vmem:[%s1 + $0x1bb0] sm:$0xff]
  %v923 = vld [vmem:[%s1 + $0x1bb8] sm:$0xff]
  %v924 = vld [vmem:[%s1 + $0x1bc0] sm:$0xff]
  %v925 = vld [vmem:[%s1 + $0x1bc8] sm:$0xff]
  %v926 = vld [vmem:[%s1 + $0x1bd0] sm:$0xff]
  %v927 = vld [vmem:[%s1 + $0x1bd8] sm:$0xff]
  %v928 = vld [vmem:[%s1 + $0x1be0] sm:$0xff]
  %v929 = vld [vmem:[%s1 + $0x1be8] sm:$0xff]
  %v930 = vld [vmem:[%s1 + $0x1bf0] sm:$0xff]
  %v931 = vld [vmem:[%s1 + $0x1bf8] sm:$0xff]
  %v932 = vld [vmem:[%s1 + $0x1c00] sm:$0xff]
  %v933 = vld [vmem:[%s1 + $0x1c08] sm:$0xff]
  %v934 = vld [vmem:[%s1 + $0x1c10] sm:$0xff]
  %v935 = vld [vmem:[%s1 + $0x1c18] sm:$0xff]
  %v936 = vld [vmem:[%s1 + $0x1c20] sm:$0xff]
  %v937 = vld [vmem:[%s1 + $0x1c28] sm:$0xff]
  %v938 = vld [vmem:[%s1 + $0x1c30] sm:$0xff]
  %v939 = vld [vmem:[%s1 + $0x1c38] sm:$0xff]
  %v940 = vld [vmem:[%s1 + $0x1c40] sm:$0xff]
  %v941 = vld [vmem:[%s1 + $0x1c48] sm:$0xff]
  %v942 = vld [vmem:[%s1 + $0x1c50] sm:$0xff]
  %v943 = vld [vmem:[%s1 + $0x1c58] sm:$0xff]
  %v944 = vld [vmem:[%s1 + $0x1c60] sm:$0xff]
  %v945 = vld [vmem:[%s1 + $0x1c68] sm:$0xff]
  %v946 = vld [vmem:[%s1 + $0x1c70] sm:$0xff]
  %v947 = vld [vmem:[%s1 + $0x1c78] sm:$0xff]
  %v948 = vld [vmem:[%s1 + $0x1c80] sm:$0xff]
  %v949 = vld [vmem:[%s1 + $0x1c88] sm:$0xff]
  %v950 = vld [vmem:[%s1 + $0x1c90] sm:$0xff]
  %v951 = vld [vmem:[%s1 + $0x1c98] sm:$0xff]
  %v952 = vld [vmem:[%s1 + $0x1ca0] sm:$0xff]
  %v953 = vld [vmem:[%s1 + $0x1ca8] sm:$0xff]
  %v954 = vld [vmem:[%s1 + $0x1cb0] sm:$0xff]
  %v955 = vld [vmem:[%s1 + $0x1cb8] sm:$0xff]
  %v956 = vld [vmem:[%s1 + $0x1cc0] sm:$0xff]
  %v957 = vld [vmem:[%s1 + $0x1cc8] sm:$0xff]
  %v958 = vld [vmem:[%s1 + $0x1cd0] sm:$0xff]
  %v959 = vld [vmem:[%s1 + $0x1cd8] sm:$0xff]
  %v960 = vld [vmem:[%s1 + $0x1ce0] sm:$0xff]
  %v961 = vld [vmem:[%s1 + $0x1ce8] sm:$0xff]
  %v962 = vld [vmem:[%s1 + $0x1cf0] sm:$0xff]
  %v963 = vld [vmem:[%s1 + $0x1cf8] sm:$0xff]
  %v964 = vld [vmem:[%s1 + $0x1d00] sm:$0xff]
  %v965 = vld [vmem:[%s1 + $0x1d08] sm:$0xff]
  %v966 = vld [vmem:[%s1 + $0x1d10] sm:$0xff]
  %v967 = vld [vmem:[%s1 + $0x1d18] sm:$0xff]
  %v968 = vld [vmem:[%s1 + $0x1d20] sm:$0xff]
  %v969 = vld [vmem:[%s1 + $0x1d28] sm:$0xff]
  %v970 = vld [vmem:[%s1 + $0x1d30] sm:$0xff]
  %v971 = vld [vmem:[%s1 + $0x1d38] sm:$0xff]
  %v972 = vld [vmem:[%s1 + $0x1d40] sm:$0xff]
  %v973 = vld [vmem:[%s1 + $0x1d48] sm:$0xff]
  %v974 = vld [vmem:[%s1 + $0x1d50] sm:$0xff]
  %v975 = vld [vmem:[%s1 + $0x1d58] sm:$0xff]
  %v976 = vld [vmem:[%s1 + $0x1d60] sm:$0xff]
  %v977 = vld [vmem:[%s1 + $0x1d68] sm:$0xff]
  %v978 = vld [vmem:[%s1 + $0x1d70] sm:$0xff]
  %v979 = vld [vmem:[%s1 + $0x1d78] sm:$0xff]
  %v980 = vld [vmem:[%s1 + $0x1d80] sm:$0xff]
  %v981 = vld [vmem:[%s1 + $0x1d88] sm:$0xff]
  %v982 = vld [vmem:[%s1 + $0x1d90] sm:$0xff]
  %v983 = vld [vmem:[%s1 + $0x1d98] sm:$0xff]
  %v984 = vld [vmem:[%s1 + $0x1da0] sm:$0xff]
  %v985 = vld [vmem:[%s1 + $0x1da8] sm:$0xff]
  %v986 = vld [vmem:[%s1 + $0x1db0] sm:$0xff]
  %v987 = vld [vmem:[%s1 + $0x1db8] sm:$0xff]
  %v988 = vld [vmem:[%s1 + $0x1dc0] sm:$0xff]
  %v989 = vld [vmem:[%s1 + $0x1dc8] sm:$0xff]
  %v990 = vld [vmem:[%s1 + $0x1dd0] sm:$0xff]
  %v991 = vld [vmem:[%s1 + $0x1dd8] sm:$0xff]
  %v992 = vld [vmem:[%s1 + $0x1de0] sm:$0xff]
  %v993 = vld [vmem:[%s1 + $0x1de8] sm:$0xff]
  %v994 = vld [vmem:[%s1 + $0x1df0] sm:$0xff]
  %v995 = vld [vmem:[%s1 + $0x1df8] sm:$0xff]
  %v996 = vld [vmem:[%s1 + $0x1e00] sm:$0xff]
  %v997 = vld [vmem:[%s1 + $0x1e08] sm:$0xff]
  %v998 = vld [vmem:[%s1 + $0x1e10] sm:$0xff]
  %v999 = vld [vmem:[%s1 + $0x1e18] sm:$0xff]
  %v1000 = vld [vmem:[%s1 + $0x1e20] sm:$0xff]
  %v1001 = vld [vmem:[%s1 + $0x1e28] sm:$0xff]
  %v1002 = vld [vmem:[%s1 + $0x1e30] sm:$0xff]
  %v1003 = vld [vmem:[%s1 + $0x1e38] sm:$0xff]
  %v1004 = vld [vmem:[%s1 + $0x1e40] sm:$0xff]
  %v1005 = vld [vmem:[%s1 + $0x1e48] sm:$0xff]
  %v1006 = vld [vmem:[%s1 + $0x1e50] sm:$0xff]
  %v1007 = vld [vmem:[%s1 + $0x1e58] sm:$0xff]
  %v1008 = vld [vmem:[%s1 + $0x1e60] sm:$0xff]
  %v1009 = vld [vmem:[%s1 + $0x1e68] sm:$0xff]
  %v1010 = vld [vmem:[%s1 + $0x1e70] sm:$0xff]
  %v1011 = vld [vmem:[%s1 + $0x1e78] sm:$0xff]
  %v1012 = vld [vmem:[%s1 + $0x1e80] sm:$0xff]
  %v1013 = vld [vmem:[%s1 + $0x1e88] sm:$0xff]
  %v1014 = vld [vmem:[%s1 + $0x1e90] sm:$0xff]
  %v1015 = vld [vmem:[%s1 + $0x1e98] sm:$0xff]
  %v1016 = vld [vmem:[%s1 + $0x1ea0] sm:$0xff]
  %v1017 = vld [vmem:[%s1 + $0x1ea8] sm:$0xff]
  %v1018 = vld [vmem:[%s1 + $0x1eb0] sm:$0xff]
  %v1019 = vld [vmem:[%s1 + $0x1eb8] sm:$0xff]
  %v1020 = vld [vmem:[%s1 + $0x1ec0] sm:$0xff]
  %v1021 = vld [vmem:[%s1 + $0x1ec8] sm:$0xff]
  %v1022 = vld [vmem:[%s1 + $0x1ed0] sm:$0xff]
  %v1023 = vld [vmem:[%s1 + $0x1ed8] sm:$0xff]
  %v1024 = vld [vmem:[%s1 + $0x1ee0] sm:$0xff]
  %v1025 = vld [vmem:[%s1 + $0x1ee8] sm:$0xff]
  %v1026 = vld [vmem:[%s1 + $0x1ef0] sm:$0xff]
  %v1027 = vld [vmem:[%s1 + $0x1ef8] sm:$0xff]
  %v1028 = vld [vmem:[%s1 + $0x1f00] sm:$0xff]
  %v1029 = vld [vmem:[%s1 + $0x1f08] sm:$0xff]
  %v1030 = vld [vmem:[%s1 + $0x1f10] sm:$0xff]
  %v1031 = vld [vmem:[%s1 + $0x1f18] sm:$0xff]
  %v1032 = vld [vmem:[%s1 + $0x1f20] sm:$0xff]
  %v1033 = vld [vmem:[%s1 + $0x1f28] sm:$0xff]
  %v1034 = vld [vmem:[%s1 + $0x1f30] sm:$0xff]
  %v1035 = vld [vmem:[%s1 + $0x1f38] sm:$0xff]
  %v1036 = vld [vmem:[%s1 + $0x1f40] sm:$0xff]
  %v1037 = vld [vmem:[%s1 + $0x1f48] sm:$0xff]
  %v1038 = vld [vmem:[%s1 + $0x1f50] sm:$0xff]
  %v1039 = vld [vmem:[%s1 + $0x1f58] sm:$0xff]
  %v1040 = vld [vmem:[%s1 + $0x1f60] sm:$0xff]
  %v1041 = vld [vmem:[%s1 + $0x1f68] sm:$0xff]
  %v1042 = vld [vmem:[%s1 + $0x1f70] sm:$0xff]
  %v1043 = vld [vmem:[%s1 + $0x1f78] sm:$0xff]
  %v1044 = vld [vmem:[%s1 + $0x1f80] sm:$0xff]
  %v1045 = vld [vmem:[%s1 + $0x1f88] sm:$0xff]
  %v1046 = vld [vmem:[%s1 + $0x1f90] sm:$0xff]
  %v1047 = vld [vmem:[%s1 + $0x1f98] sm:$0xff]
  %v1048 = vld [vmem:[%s1 + $0x1fa0] sm:$0xff]
  %v1049 = vld [vmem:[%s1 + $0x1fa8] sm:$0xff]
  %v1050 = vld [vmem:[%s1 + $0x1fb0] sm:$0xff]
  %v1051 = vld [vmem:[%s1 + $0x1fb8] sm:$0xff]
  %v1052 = vld [vmem:[%s1 + $0x1fc0] sm:$0xff]
  %v1053 = vld [vmem:[%s1 + $0x1fc8] sm:$0xff]
  %v1054 = vld [vmem:[%s1 + $0x1fd0] sm:$0xff]
  %v1055 = vld [vmem:[%s1 + $0x1fd8] sm:$0xff]
  %v1056 = vld [vmem:[%s1 + $0x1fe0] sm:$0xff]
  %v1057 = vld [vmem:[%s1 + $0x1fe8] sm:$0xff]
  %v1058 = vld [vmem:[%s1 + $0x1ff0] sm:$0xff]
  %v1059 = vld [vmem:[%s1 + $0x1ff8] sm:$0xff]
  %v1060 = vld [vmem:[%s1 + $0x2000] sm:$0xff]
  %v1061 = vld [vmem:[%s1 + $0x2008] sm:$0xff]
  %v1062 = vld [vmem:[%s1 + $0x2010] sm:$0xff]
  %v1063 = vld [vmem:[%s1 + $0x2018] sm:$0xff]
  %v1064 = vld [vmem:[%s1 + $0x2020] sm:$0xff]
  %v1065 = vld [vmem:[%s1 + $0x2028] sm:$0xff]
  %v1066 = vld [vmem:[%s1 + $0x2030] sm:$0xff]
  %v1067 = vld [vmem:[%s1 + $0x2038] sm:$0xff]
  %v1068 = vld [vmem:[%s1 + $0x2040] sm:$0xff]
  %v1069 = vld [vmem:[%s1 + $0x2048] sm:$0xff]
  %v1070 = vld [vmem:[%s1 + $0x2050] sm:$0xff]
  %v1071 = vld [vmem:[%s1 + $0x2058] sm:$0xff]
  %v1072 = vld [vmem:[%s1 + $0x2060] sm:$0xff]
  %v1073 = vld [vmem:[%s1 + $0x2068] sm:$0xff]
  %v1074 = vld [vmem:[%s1 + $0x2070] sm:$0xff]
  %v1075 = vld [vmem:[%s1 + $0x2078] sm:$0xff]
  %v1076 = vld [vmem:[%s1 + $0x2080] sm:$0xff]
  %v1077 = vld [vmem:[%s1 + $0x2088] sm:$0xff]
  %v1078 = vld [vmem:[%s1 + $0x2090] sm:$0xff]
  %v1079 = vld [vmem:[%s1 + $0x2098] sm:$0xff]
  %v1080 = vld [vmem:[%s1 + $0x20a0] sm:$0xff]
  %v1081 = vld [vmem:[%s1 + $0x20a8] sm:$0xff]
  %v1082 = vld [vmem:[%s1 + $0x20b0] sm:$0xff]
  %v1083 = vld [vmem:[%s1 + $0x20b8] sm:$0xff]
  %v1084 = vld [vmem:[%s1 + $0x20c0] sm:$0xff]
  %v1085 = vld [vmem:[%s1 + $0x20c8] sm:$0xff]
  %v1086 = vld [vmem:[%s1 + $0x20d0] sm:$0xff]
  %v1087 = vld [vmem:[%s1 + $0x20d8] sm:$0xff]
  %v1088 = vld [vmem:[%s1 + $0x20e0] sm:$0xff]
  %v1089 = vld [vmem:[%s1 + $0x20e8] sm:$0xff]
  %v1090 = vld [vmem:[%s1 + $0x20f0] sm:$0xff]
  %v1091 = vld [vmem:[%s1 + $0x20f8] sm:$0xff]
  %v1092 = vld [vmem:[%s1 + $0x2100] sm:$0xff]
  %v1093 = vld [vmem:[%s1 + $0x2108] sm:$0xff]
  %v1094 = vld [vmem:[%s1 + $0x2110] sm:$0xff]
  %v1095 = vld [vmem:[%s1 + $0x2118] sm:$0xff]
  %v1096 = vld [vmem:[%s1 + $0x2120] sm:$0xff]
  %v1097 = vld [vmem:[%s1 + $0x2128] sm:$0xff]
  %v1098 = vld [vmem:[%s1 + $0x2130] sm:$0xff]
  %v1099 = vld [vmem:[%s1 + $0x2138] sm:$0xff]
  %v1100 = vld [vmem:[%s1 + $0x2140] sm:$0xff]
  %v1101 = vld [vmem:[%s1 + $0x2148] sm:$0xff]
  %v1102 = vld [vmem:[%s1 + $0x2150] sm:$0xff]
  %v1103 = vld [vmem:[%s1 + $0x2158] sm:$0xff]
  %v1104 = vld [vmem:[%s1 + $0x2160] sm:$0xff]
  %v1105 = vld [vmem:[%s1 + $0x2168] sm:$0xff]
  %v1106 = vld [vmem:[%s1 + $0x2170] sm:$0xff]
  %v1107 = vld [vmem:[%s1 + $0x2178] sm:$0xff]
  %v1108 = vld [vmem:[%s1 + $0x2180] sm:$0xff]
  %v1109 = vld [vmem:[%s1 + $0x2188] sm:$0xff]
  %v1110 = vld [vmem:[%s1 + $0x2190] sm:$0xff]
  %v1111 = vld [vmem:[%s1 + $0x2198] sm:$0xff]
  %v1112 = vld [vmem:[%s1 + $0x21a0] sm:$0xff]
  %v1113 = vld [vmem:[%s1 + $0x21a8] sm:$0xff]
  %v1114 = vld [vmem:[%s1 + $0x21b0] sm:$0xff]
  %v1115 = vld [vmem:[%s1 + $0x21b8] sm:$0xff]
  %v1116 = vld [vmem:[%s1 + $0x21c0] sm:$0xff]
  %v1117 = vld [vmem:[%s1 + $0x21c8] sm:$0xff]
  %v1118 = vld [vmem:[%s1 + $0x21d0] sm:$0xff]
  %v1119 = vld [vmem:[%s1 + $0x21d8] sm:$0xff]
  %v1120 = vld [vmem:[%s1 + $0x21e0] sm:$0xff]
  %v1121 = vld [vmem:[%s1 + $0x21e8] sm:$0xff]
  %v1122 = vld [vmem:[%s1 + $0x21f0] sm:$0xff]
  %v1123 = vld [vmem:[%s1 + $0x21f8] sm:$0xff]
  %v1124 = vld [vmem:[%s1 + $0x2200] sm:$0xff]
  %v1125 = vld [vmem:[%s1 + $0x2208] sm:$0xff]
  %v1126 = vld [vmem:[%s1 + $0x2210] sm:$0xff]
  %v1127 = vld [vmem:[%s1 + $0x2218] sm:$0xff]
  %v1128 = vld [vmem:[%s1 + $0x2220] sm:$0xff]
  %v1129 = vld [vmem:[%s1 + $0x2228] sm:$0xff]
  %v1130 = vld [vmem:[%s1 + $0x2230] sm:$0xff]
  %v1131 = vld [vmem:[%s1 + $0x2238] sm:$0xff]
  %v1132 = vld [vmem:[%s1 + $0x2240] sm:$0xff]
  %v1133 = vld [vmem:[%s1 + $0x2248] sm:$0xff]
  %v1134 = vld [vmem:[%s1 + $0x2250] sm:$0xff]
  %v1135 = vld [vmem:[%s1 + $0x2258] sm:$0xff]
  %v1136 = vld [vmem:[%s1 + $0x2260] sm:$0xff]
  %v1137 = vld [vmem:[%s1 + $0x2268] sm:$0xff]
  %v1138 = vld [vmem:[%s1 + $0x2270] sm:$0xff]
  %v1139 = vld [vmem:[%s1 + $0x2278] sm:$0xff]
  %v1140 = vld [vmem:[%s1 + $0x2280] sm:$0xff]
  %v1141 = vld [vmem:[%s1 + $0x2288] sm:$0xff]
  %v1142 = vld [vmem:[%s1 + $0x2290] sm:$0xff]
  %v1143 = vld [vmem:[%s1 + $0x2298] sm:$0xff]
  %v1144 = vld [vmem:[%s1 + $0x22a0] sm:$0xff]
  %v1145 = vld [vmem:[%s1 + $0x22a8] sm:$0xff]
  %v1146 = vld [vmem:[%s1 + $0x22b0] sm:$0xff]
  %v1147 = vld [vmem:[%s1 + $0x22b8] sm:$0xff]
  %v1148 = vld [vmem:[%s1 + $0x22c0] sm:$0xff]
  %v1149 = vld [vmem:[%s1 + $0x22c8] sm:$0xff]
  %v1150 = vld [vmem:[%s1 + $0x22d0] sm:$0xff]
  %v1151 = vld [vmem:[%s1 + $0x22d8] sm:$0xff]
  %v1152 = vld [vmem:[%s1 + $0x22e0] sm:$0xff]
  %v1153 = vld [vmem:[%s1 + $0x22e8] sm:$0xff]
  %v1154 = vld [vmem:[%s1 + $0x22f0] sm:$0xff]
  %v1155 = vld [vmem:[%s1 + $0x22f8] sm:$0xff]
  %v1156 = vld [vmem:[%s1 + $0x2300] sm:$0xff]
  %v1157 = vld [vmem:[%s1 + $0x2308] sm:$0xff]
  %v1158 = vld [vmem:[%s1 + $0x2310] sm:$0xff]
  %v1159 = vld [vmem:[%s1 + $0x2318] sm:$0xff]
  %v1160 = vld [vmem:[%s1 + $0x2320] sm:$0xff]
  %v1161 = vld [vmem:[%s1 + $0x2328] sm:$0xff]
  %v1162 = vld [vmem:[%s1 + $0x2330] sm:$0xff]
  %v1163 = vld [vmem:[%s1 + $0x2338] sm:$0xff]
  %v1164 = vld [vmem:[%s1 + $0x2340] sm:$0xff]
  %v1165 = vld [vmem:[%s1 + $0x2348] sm:$0xff]
  %v1166 = vld [vmem:[%s1 + $0x2350] sm:$0xff]
  %v1167 = vld [vmem:[%s1 + $0x2358] sm:$0xff]
  %v1168 = vld [vmem:[%s1 + $0x2360] sm:$0xff]
  %v1169 = vld [vmem:[%s1 + $0x2368] sm:$0xff]
  %v1170 = vld [vmem:[%s1 + $0x2370] sm:$0xff]
  %v1171 = vld [vmem:[%s1 + $0x2378] sm:$0xff]
  %v1172 = vld [vmem:[%s1 + $0x2380] sm:$0xff]
  %v1173 = vld [vmem:[%s1 + $0x2388] sm:$0xff]
  %v1174 = vld [vmem:[%s1 + $0x2390] sm:$0xff]
  %v1175 = vld [vmem:[%s1 + $0x2398] sm:$0xff]
  %v1176 = vld [vmem:[%s1 + $0x23a0] sm:$0xff]
  %v1177 = vld [vmem:[%s1 + $0x23a8] sm:$0xff]
  %v1178 = vld [vmem:[%s1 + $0x23b0] sm:$0xff]
  %v1179 = vld [vmem:[%s1 + $0x23b8] sm:$0xff]
  %v1180 = vld [vmem:[%s1 + $0x23c0] sm:$0xff]
  %v1181 = vld [vmem:[%s1 + $0x23c8] sm:$0xff]
  %v1182 = vld [vmem:[%s1 + $0x23d0] sm:$0xff]
  %v1183 = vld [vmem:[%s1 + $0x23d8] sm:$0xff]
  %v1184 = vld [vmem:[%s1 + $0x23e0] sm:$0xff]
  %v1185 = vld [vmem:[%s1 + $0x23e8] sm:$0xff]
  %v1186 = vld [vmem:[%s1 + $0x23f0] sm:$0xff]
  %v1187 = vld [vmem:[%s1 + $0x23f8] sm:$0xff]
  %v1188 = vld [vmem:[%s1 + $0x2400] sm:$0xff]
  %v1189 = vld [vmem:[%s1 + $0x2408] sm:$0xff]
  %v1190 = vld [vmem:[%s1 + $0x2410] sm:$0xff]
  %v1191 = vld [vmem:[%s1 + $0x2418] sm:$0xff]
  %v1192 = vld [vmem:[%s1 + $0x2420] sm:$0xff]
  %v1193 = vld [vmem:[%s1 + $0x2428] sm:$0xff]
  %v1194 = vld [vmem:[%s1 + $0x2430] sm:$0xff]
  %v1195 = vld [vmem:[%s1 + $0x2438] sm:$0xff]
  %v1196 = vld [vmem:[%s1 + $0x2440] sm:$0xff]
  %v1197 = vld [vmem:[%s1 + $0x2448] sm:$0xff]
  %v1198 = vld [vmem:[%s1 + $0x2450] sm:$0xff]
  %v1199 = vld [vmem:[%s1 + $0x2458] sm:$0xff]
  %v1200 = vld [vmem:[%s1 + $0x2460] sm:$0xff]
  %v1201 = vld [vmem:[%s1 + $0x2468] sm:$0xff]
  %v1202 = vld [vmem:[%s1 + $0x2470] sm:$0xff]
  %v1203 = vld [vmem:[%s1 + $0x2478] sm:$0xff]
  %v1204 = vld [vmem:[%s1 + $0x2480] sm:$0xff]
  %v1205 = vld [vmem:[%s1 + $0x2488] sm:$0xff]
  %v1206 = vld [vmem:[%s1 + $0x2490] sm:$0xff]
  %v1207 = vld [vmem:[%s1 + $0x2498] sm:$0xff]
  %v1208 = vld [vmem:[%s1 + $0x24a0] sm:$0xff]
  %v1209 = vld [vmem:[%s1 + $0x24a8] sm:$0xff]
  %v1210 = vld [vmem:[%s1 + $0x24b0] sm:$0xff]
  %v1211 = vld [vmem:[%s1 + $0x24b8] sm:$0xff]
  %v1212 = vld [vmem:[%s1 + $0x24c0] sm:$0xff]
  %v1213 = vld [vmem:[%s1 + $0x24c8] sm:$0xff]
  %v1214 = vld [vmem:[%s1 + $0x24d0] sm:$0xff]
  %v1215 = vld [vmem:[%s1 + $0x24d8] sm:$0xff]
  %v1216 = vld [vmem:[%s1 + $0x24e0] sm:$0xff]
  %v1217 = vld [vmem:[%s1 + $0x24e8] sm:$0xff]
  %v1218 = vld [vmem:[%s1 + $0x24f0] sm:$0xff]
  %v1219 = vld [vmem:[%s1 + $0x24f8] sm:$0xff]
  %v1220 = vld [vmem:[%s1 + $0x2500] sm:$0xff]
  %v1221 = vld [vmem:[%s1 + $0x2508] sm:$0xff]
  %v1222 = vld [vmem:[%s1 + $0x2510] sm:$0xff]
  %v1223 = vld [vmem:[%s1 + $0x2518] sm:$0xff]
  %v1224 = vld [vmem:[%s1 + $0x2520] sm:$0xff]
  %v1225 = vld [vmem:[%s1 + $0x2528] sm:$0xff]
  %v1226 = vld [vmem:[%s1 + $0x2530] sm:$0xff]
  %v1227 = vld [vmem:[%s1 + $0x2538] sm:$0xff]
  %v1228 = vld [vmem:[%s1 + $0x2540] sm:$0xff]
  %v1229 = vld [vmem:[%s1 + $0x2548] sm:$0xff]
  %v1230 = vld [vmem:[%s1 + $0x2550] sm:$0xff]
  %v1231 = vld [vmem:[%s1 + $0x2558] sm:$0xff]
  %v1232 = vld [vmem:[%s1 + $0x2560] sm:$0xff]
  %v1233 = vld [vmem:[%s1 + $0x2568] sm:$0xff]
  %v1234 = vld [vmem:[%s1 + $0x2570] sm:$0xff]
  %v1235 = vld [vmem:[%s1 + $0x2578] sm:$0xff]
  %v1236 = vld [vmem:[%s1 + $0x2580] sm:$0xff]
  %v1237 = vld [vmem:[%s1 + $0x2588] sm:$0xff]
  %v1238 = vld [vmem:[%s1 + $0x2590] sm:$0xff]
  %v1239 = vld [vmem:[%s1 + $0x2598] sm:$0xff]
  %v1240 = vld [vmem:[%s1 + $0x25a0] sm:$0xff]
  %v1241 = vld [vmem:[%s1 + $0x25a8] sm:$0xff]
  %v1242 = vld [vmem:[%s1 + $0x25b0] sm:$0xff]
  %v1243 = vld [vmem:[%s1 + $0x25b8] sm:$0xff]
  %v1244 = vld [vmem:[%s1 + $0x25c0] sm:$0xff]
  %v1245 = vld [vmem:[%s1 + $0x25c8] sm:$0xff]
  %v1246 = vld [vmem:[%s1 + $0x25d0] sm:$0xff]
  %v1247 = vld [vmem:[%s1 + $0x25d8] sm:$0xff]
  %v1248 = vld [vmem:[%s1 + $0x25e0] sm:$0xff]
  %v1249 = vld [vmem:[%s1 + $0x25e8] sm:$0xff]
  %v1250 = vld [vmem:[%s1 + $0x25f0] sm:$0xff]
  %v1251 = vld [vmem:[%s1 + $0x25f8] sm:$0xff]
  %v1252 = vld [vmem:[%s1 + $0x2600] sm:$0xff]
  %v1253 = vld [vmem:[%s1 + $0x2608] sm:$0xff]
  %v1254 = vld [vmem:[%s1 + $0x2610] sm:$0xff]
  %v1255 = vld [vmem:[%s1 + $0x2618] sm:$0xff]
  %v1256 = vld [vmem:[%s1 + $0x2620] sm:$0xff]
  %v1257 = vld [vmem:[%s1 + $0x2628] sm:$0xff]
  %v1258 = vld [vmem:[%s1 + $0x2630] sm:$0xff]
  %v1259 = vld [vmem:[%s1 + $0x2638] sm:$0xff]
  %v1260 = vld [vmem:[%s1 + $0x2640] sm:$0xff]
  %v1261 = vld [vmem:[%s1 + $0x2648] sm:$0xff]
  %v1262 = vld [vmem:[%s1 + $0x2650] sm:$0xff]
  %v1263 = vld [vmem:[%s1 + $0x2658] sm:$0xff]
  %v1264 = vld [vmem:[%s1 + $0x2660] sm:$0xff]
  %v1265 = vld [vmem:[%s1 + $0x2668] sm:$0xff]
  %v1266 = vld [vmem:[%s1 + $0x2670] sm:$0xff]
  %v1267 = vld [vmem:[%s1 + $0x2678] sm:$0xff]
  %v1268 = vld [vmem:[%s1 + $0x2680] sm:$0xff]
  %v1269 = vld [vmem:[%s1 + $0x2688] sm:$0xff]
  %v1270 = vld [vmem:[%s1 + $0x2690] sm:$0xff]
  %v1271 = vld [vmem:[%s1 + $0x2698] sm:$0xff]
  %v1272 = vld [vmem:[%s1 + $0x26a0] sm:$0xff]
  %v1273 = vld [vmem:[%s1 + $0x26a8] sm:$0xff]
  %v1274 = vld [vmem:[%s1 + $0x26b0] sm:$0xff]
  %v1275 = vld [vmem:[%s1 + $0x26b8] sm:$0xff]
  %v1276 = vld [vmem:[%s1 + $0x26c0] sm:$0xff]
  %v1277 = vld [vmem:[%s1 + $0x26c8] sm:$0xff]
  %v1278 = vld [vmem:[%s1 + $0x26d0] sm:$0xff]
  %v1279 = vld [vmem:[%s1 + $0x26d8] sm:$0xff]
  %v1280 = vld [vmem:[%s1 + $0x26e0] sm:$0xff]
  %v1281 = vld [vmem:[%s1 + $0x26e8] sm:$0xff]
  %v1282 = vld [vmem:[%s1 + $0x26f0] sm:$0xff]
  %v1283 = vld [vmem:[%s1 + $0x26f8] sm:$0xff]
  %v1284 = vld [vmem:[%s1 + $0x2700] sm:$0xff]
  %v1285 = vld [vmem:[%s1 + $0x2708] sm:$0xff]
  %v1286 = vld [vmem:[%s1 + $0x2710] sm:$0xff]
  %v1287 = vld [vmem:[%s1 + $0x2718] sm:$0xff]
  %v1288 = vld [vmem:[%s1 + $0x2720] sm:$0xff]
  %v1289 = vld [vmem:[%s1 + $0x2728] sm:$0xff]
  %v1290 = vld [vmem:[%s1 + $0x2730] sm:$0xff]
  %v1291 = vld [vmem:[%s1 + $0x2738] sm:$0xff]
  %v1292 = vld [vmem:[%s1 + $0x2740] sm:$0xff]
  %v1293 = vld [vmem:[%s1 + $0x2748] sm:$0xff]
  %v1294 = vld [vmem:[%s1 + $0x2750] sm:$0xff]
  %v1295 = vld [vmem:[%s1 + $0x2758] sm:$0xff]
  %v1296 = vld [vmem:[%s1 + $0x2760] sm:$0xff]
  %v1297 = vld [vmem:[%s1 + $0x2768] sm:$0xff]
  %v1298 = vld [vmem:[%s1 + $0x2770] sm:$0xff]
  %v1299 = vld [vmem:[%s1 + $0x2778] sm:$0xff]
  %v1300 = vld [vmem:[%s1 + $0x2780] sm:$0xff]
  %v1301 = vld [vmem:[%s1 + $0x2788] sm:$0xff]
  %v1302 = vld [vmem:[%s1 + $0x2790] sm:$0xff]
  %v1303 = vld [vmem:[%s1 + $0x2798] sm:$0xff]
  %v1304 = vld [vmem:[%s1 + $0x27a0] sm:$0xff]
  %v1305 = vld [vmem:[%s1 + $0x27a8] sm:$0xff]
  %v1306 = vld [vmem:[%s1 + $0x27b0] sm:$0xff]
  %v1307 = vld [vmem:[%s1 + $0x27b8] sm:$0xff]
  %v1308 = vld [vmem:[%s1 + $0x27c0] sm:$0xff]
  %v1309 = vld [vmem:[%s1 + $0x27c8] sm:$0xff]
  %v1310 = vld [vmem:[%s1 + $0x27d0] sm:$0xff]
  %v1311 = vld [vmem:[%s1 + $0x27d8] sm:$0xff]
  %v1312 = vld [vmem:[%s1 + $0x27e0] sm:$0xff]
  %v1313 = vld [vmem:[%s1 + $0x27e8] sm:$0xff]
  %v1314 = vld [vmem:[%s1 + $0x27f0] sm:$0xff]
  %v1315 = vld [vmem:[%s1 + $0x27f8] sm:$0xff]
  %v1316 = vld [vmem:[%s1 + $0x2800] sm:$0xff]
  %v1317 = vld [vmem:[%s1 + $0x2808] sm:$0xff]
  %v1318 = vld [vmem:[%s1 + $0x2810] sm:$0xff]
  %v1319 = vld [vmem:[%s1 + $0x2818] sm:$0xff]
  %v1320 = vld [vmem:[%s1 + $0x2820] sm:$0xff]
  %v1321 = vld [vmem:[%s1 + $0x2828] sm:$0xff]
  %v1322 = vld [vmem:[%s1 + $0x2830] sm:$0xff]
  %v1323 = vld [vmem:[%s1 + $0x2838] sm:$0xff]
  %v1324 = vld [vmem:[%s1 + $0x2840] sm:$0xff]
  %v1325 = vld [vmem:[%s1 + $0x2848] sm:$0xff]
  %v1326 = vld [vmem:[%s1 + $0x2850] sm:$0xff]
  %v1327 = vld [vmem:[%s1 + $0x2858] sm:$0xff]
  %v1328 = vld [vmem:[%s1 + $0x2860] sm:$0xff]
  %v1329 = vld [vmem:[%s1 + $0x2868] sm:$0xff]
  %v1330 = vld [vmem:[%s1 + $0x2870] sm:$0xff]
  %v1331 = vld [vmem:[%s1 + $0x2878] sm:$0xff]
  %v1332 = vld [vmem:[%s1 + $0x2880] sm:$0xff]
  %v1333 = vld [vmem:[%s1 + $0x2888] sm:$0xff]
  %v1334 = vld [vmem:[%s1 + $0x2890] sm:$0xff]
  %v1335 = vld [vmem:[%s1 + $0x2898] sm:$0xff]
  %v1336 = vld [vmem:[%s1 + $0x28a0] sm:$0xff]
  %v1337 = vld [vmem:[%s1 + $0x28a8] sm:$0xff]
  %v1338 = vld [vmem:[%s1 + $0x28b0] sm:$0xff]
  %v1339 = vld [vmem:[%s1 + $0x28b8] sm:$0xff]
  %v1340 = vld [vmem:[%s1 + $0x28c0] sm:$0xff]
  %v1341 = vld [vmem:[%s1 + $0x28c8] sm:$0xff]
  %v1342 = vld [vmem:[%s1 + $0x28d0] sm:$0xff]
  %v1343 = vld [vmem:[%s1 + $0x28d8] sm:$0xff]
  %v1344 = vld [vmem:[%s1 + $0x28e0] sm:$0xff]
  %v1345 = vld [vmem:[%s1 + $0x28e8] sm:$0xff]
  %v1346 = vld [vmem:[%s1 + $0x28f0] sm:$0xff]
  %v1347 = vld [vmem:[%s1 + $0x28f8] sm:$0xff]
  %v1348 = vld [vmem:[%s1 + $0x2900] sm:$0xff]
  %v1349 = vld [vmem:[%s1 + $0x2908] sm:$0xff]
  %v1350 = vld [vmem:[%s1 + $0x2910] sm:$0xff]
  %v1351 = vld [vmem:[%s1 + $0x2918] sm:$0xff]
  %v1352 = vld [vmem:[%s1 + $0x2920] sm:$0xff]
  %v1353 = vld [vmem:[%s1 + $0x2928] sm:$0xff]
  %v1354 = vld [vmem:[%s1 + $0x2930] sm:$0xff]
  %v1355 = vld [vmem:[%s1 + $0x2938] sm:$0xff]
  %v1356 = vld [vmem:[%s1 + $0x2940] sm:$0xff]
  %v1357 = vld [vmem:[%s1 + $0x2948] sm:$0xff]
  %v1358 = vld [vmem:[%s1 + $0x2950] sm:$0xff]
  %v1359 = vld [vmem:[%s1 + $0x2958] sm:$0xff]
  %v1360 = vld [vmem:[%s1 + $0x2960] sm:$0xff]
  %v1361 = vld [vmem:[%s1 + $0x2968] sm:$0xff]
  %v1362 = vld [vmem:[%s1 + $0x2970] sm:$0xff]
  %v1363 = vld [vmem:[%s1 + $0x2978] sm:$0xff]
  %v1364 = vld [vmem:[%s1 + $0x2980] sm:$0xff]
  %v1365 = vld [vmem:[%s1 + $0x2988] sm:$0xff]
  %v1366 = vld [vmem:[%s1 + $0x2990] sm:$0xff]
  %v1367 = vld [vmem:[%s1 + $0x2998] sm:$0xff]
  %v1368 = vld [vmem:[%s1 + $0x29a0] sm:$0xff]
  %v1369 = vld [vmem:[%s1 + $0x29a8] sm:$0xff]
  %v1370 = vld [vmem:[%s1 + $0x29b0] sm:$0xff]
  %v1371 = vld [vmem:[%s1 + $0x29b8] sm:$0xff]
  %v1372 = vld [vmem:[%s1 + $0x29c0] sm:$0xff]
  %v1373 = vld [vmem:[%s1 + $0x29c8] sm:$0xff]
  %v1374 = vld [vmem:[%s1 + $0x29d0] sm:$0xff]
  %v1375 = vld [vmem:[%s1 + $0x29d8] sm:$0xff]
  %v1376 = vld [vmem:[%s1 + $0x29e0] sm:$0xff]
  %v1377 = vld [vmem:[%s1 + $0x29e8] sm:$0xff]
  %v1378 = vld [vmem:[%s1 + $0x29f0] sm:$0xff]
  %v1379 = vld [vmem:[%s1 + $0x29f8] sm:$0xff]
  %v1380 = vld [vmem:[%s1 + $0x2a00] sm:$0xff]
  %v1381 = vld [vmem:[%s1 + $0x2a08] sm:$0xff]
  %v1382 = vld [vmem:[%s1 + $0x2a10] sm:$0xff]
  %v1383 = vld [vmem:[%s1 + $0x2a18] sm:$0xff]
  %v1384 = vld [vmem:[%s1 + $0x2a20] sm:$0xff]
  %v1385 = vld [vmem:[%s1 + $0x2a28] sm:$0xff]
  %v1386 = vld [vmem:[%s1 + $0x2a30] sm:$0xff]
  %v1387 = vld [vmem:[%s1 + $0x2a38] sm:$0xff]
  %v1388 = vld [vmem:[%s1 + $0x2a40] sm:$0xff]
  %v1389 = vld [vmem:[%s1 + $0x2a48] sm:$0xff]
  %v1390 = vld [vmem:[%s1 + $0x2a50] sm:$0xff]
  %v1391 = vld [vmem:[%s1 + $0x2a58] sm:$0xff]
  %v1392 = vld [vmem:[%s1 + $0x2a60] sm:$0xff]
  %v1393 = vld [vmem:[%s1 + $0x2a68] sm:$0xff]
  %v1394 = vld [vmem:[%s1 + $0x2a70] sm:$0xff]
  %v1395 = vld [vmem:[%s1 + $0x2a78] sm:$0xff]
  %v1396 = vld [vmem:[%s1 + $0x2a80] sm:$0xff]
  %v1397 = vld [vmem:[%s1 + $0x2a88] sm:$0xff]
  %v1398 = vld [vmem:[%s1 + $0x2a90] sm:$0xff]
  %v1399 = vld [vmem:[%s1 + $0x2a98] sm:$0xff]
  %v1400 = vld [vmem:[%s1 + $0x2aa0] sm:$0xff]
  %v1401 = vld [vmem:[%s1 + $0x2aa8] sm:$0xff]
  %v1402 = vld [vmem:[%s1 + $0x2ab0] sm:$0xff]
  %v1403 = vld [vmem:[%s1 + $0x2ab8] sm:$0xff]
  %v1404 = vld [vmem:[%s1 + $0x2ac0] sm:$0xff]
  %v1405 = vld [vmem:[%s1 + $0x2ac8] sm:$0xff]
  %v1406 = vld [vmem:[%s1 + $0x2ad0] sm:$0xff]
  %v1407 = vld [vmem:[%s1 + $0x2ad8] sm:$0xff]
  %v1408 = vld [vmem:[%s1 + $0x2ae0] sm:$0xff]
  %v1409 = vld [vmem:[%s1 + $0x2ae8] sm:$0xff]
  %v1410 = vld [vmem:[%s1 + $0x2af0] sm:$0xff]
  %v1411 = vld [vmem:[%s1 + $0x2af8] sm:$0xff]
  %v1412 = vld [vmem:[%s1 + $0x2b00] sm:$0xff]
  %v1413 = vld [vmem:[%s1 + $0x2b08] sm:$0xff]
  %v1414 = vld [vmem:[%s1 + $0x2b10] sm:$0xff]
  %v1415 = vld [vmem:[%s1 + $0x2b18] sm:$0xff]
  %v1416 = vld [vmem:[%s1 + $0x2b20] sm:$0xff]
  %v1417 = vld [vmem:[%s1 + $0x2b28] sm:$0xff]
  %v1418 = vld [vmem:[%s1 + $0x2b30] sm:$0xff]
  %v1419 = vld [vmem:[%s1 + $0x2b38] sm:$0xff]
  %v1420 = vld [vmem:[%s1 + $0x2b40] sm:$0xff]
  %v1421 = vld [vmem:[%s1 + $0x2b48] sm:$0xff]
  %v1422 = vld [vmem:[%s1 + $0x2b50] sm:$0xff]
  %v1423 = vld [vmem:[%s1 + $0x2b58] sm:$0xff]
  %v1424 = vld [vmem:[%s1 + $0x2b60] sm:$0xff]
  %v1425 = vld [vmem:[%s1 + $0x2b68] sm:$0xff]
  %v1426 = vld [vmem:[%s1 + $0x2b70] sm:$0xff]
  %v1427 = vld [vmem:[%s1 + $0x2b78] sm:$0xff]
  %v1428 = vld [vmem:[%s1 + $0x2b80] sm:$0xff]
  %v1429 = vld [vmem:[%s1 + $0x2b88] sm:$0xff]
  %v1430 = vld [vmem:[%s1 + $0x2b90] sm:$0xff]
  %v1431 = vld [vmem:[%s1 + $0x2b98] sm:$0xff]
  %v1432 = vld [vmem:[%s1 + $0x2ba0] sm:$0xff]
  %v1433 = vld [vmem:[%s1 + $0x2ba8] sm:$0xff]
  %v1434 = vld [vmem:[%s1 + $0x2bb0] sm:$0xff]
  %v1435 = vld [vmem:[%s1 + $0x2bb8] sm:$0xff]
  %v1436 = vld [vmem:[%s1 + $0x2bc0] sm:$0xff]
  %v1437 = vld [vmem:[%s1 + $0x2bc8] sm:$0xff]
  %v1438 = vld [vmem:[%s1 + $0x2bd0] sm:$0xff]
  %v1439 = vld [vmem:[%s1 + $0x2bd8] sm:$0xff]
  %v1440 = vld [vmem:[%s1 + $0x2be0] sm:$0xff]
  %v1441 = vld [vmem:[%s1 + $0x2be8] sm:$0xff]
  %v1442 = vld [vmem:[%s1 + $0x2bf0] sm:$0xff]
  %v1443 = vld [vmem:[%s1 + $0x2bf8] sm:$0xff]
  %v1444 = vld [vmem:[%s1 + $0x2c00] sm:$0xff]
  %v1445 = vld [vmem:[%s1 + $0x2c08] sm:$0xff]
  %v1446 = vld [vmem:[%s1 + $0x2c10] sm:$0xff]
  %v1447 = vld [vmem:[%s1 + $0x2c18] sm:$0xff]
  %v1448 = vld [vmem:[%s1 + $0x2c20] sm:$0xff]
  %v1449 = vld [vmem:[%s1 + $0x2c28] sm:$0xff]
  %v1450 = vld [vmem:[%s1 + $0x2c30] sm:$0xff]
  %v1451 = vld [vmem:[%s1 + $0x2c38] sm:$0xff]
  %v1452 = vld [vmem:[%s1 + $0x2c40] sm:$0xff]
  %v1453 = vld [vmem:[%s1 + $0x2c48] sm:$0xff]
  %v1454 = vld [vmem:[%s1 + $0x2c50] sm:$0xff]
  %v1455 = vld [vmem:[%s1 + $0x2c58] sm:$0xff]
  %v1456 = vld [vmem:[%s1 + $0x2c60] sm:$0xff]
  %v1457 = vld [vmem:[%s1 + $0x2c68] sm:$0xff]
  %v1458 = vld [vmem:[%s1 + $0x2c70] sm:$0xff]
  %v1459 = vld [vmem:[%s1 + $0x2c78] sm:$0xff]
  %v1460 = vld [vmem:[%s1 + $0x2c80] sm:$0xff]
  %v1461 = vld [vmem:[%s1 + $0x2c88] sm:$0xff]
  %v1462 = vld [vmem:[%s1 + $0x2c90] sm:$0xff]
  %v1463 = vld [vmem:[%s1 + $0x2c98] sm:$0xff]
  %v1464 = vld [vmem:[%s1 + $0x2ca0] sm:$0xff]
  %v1465 = vld [vmem:[%s1 + $0x2ca8] sm:$0xff]
  %v1466 = vld [vmem:[%s1 + $0x2cb0] sm:$0xff]
  %v1467 = vld [vmem:[%s1 + $0x2cb8] sm:$0xff]
  %v1468 = vld [vmem:[%s1 + $0x2cc0] sm:$0xff]
  %v1469 = vld [vmem:[%s1 + $0x2cc8] sm:$0xff]
  %v1470 = vld [vmem:[%s1 + $0x2cd0] sm:$0xff]
  %v1471 = vld [vmem:[%s1 + $0x2cd8] sm:$0xff]
  %v1472 = vld [vmem:[%s1 + $0x2ce0] sm:$0xff]
  %v1473 = vld [vmem:[%s1 + $0x2ce8] sm:$0xff]
  %v1474 = vld [vmem:[%s1 + $0x2cf0] sm:$0xff]
  %v1475 = vld [vmem:[%s1 + $0x2cf8] sm:$0xff]
  %v1476 = vld [vmem:[%s1 + $0x2d00] sm:$0xff]
  %v1477 = vld [vmem:[%s1 + $0x2d08] sm:$0xff]
  %v1478 = vld [vmem:[%s1 + $0x2d10] sm:$0xff]
  %v1479 = vld [vmem:[%s1 + $0x2d18] sm:$0xff]
  %v1480 = vld [vmem:[%s1 + $0x2d20] sm:$0xff]
  %v1481 = vld [vmem:[%s1 + $0x2d28] sm:$0xff]
  %v1482 = vld [vmem:[%s1 + $0x2d30] sm:$0xff]
  %v1483 = vld [vmem:[%s1 + $0x2d38] sm:$0xff]
  %v1484 = vld [vmem:[%s1 + $0x2d40] sm:$0xff]
  %v1485 = vld [vmem:[%s1 + $0x2d48] sm:$0xff]
  %v1486 = vld [vmem:[%s1 + $0x2d50] sm:$0xff]
  %v1487 = vld [vmem:[%s1 + $0x2d58] sm:$0xff]
  %v1488 = vld [vmem:[%s1 + $0x2d60] sm:$0xff]
  %v1489 = vld [vmem:[%s1 + $0x2d68] sm:$0xff]
  %v1490 = vld [vmem:[%s1 + $0x2d70] sm:$0xff]
  %v1491 = vld [vmem:[%s1 + $0x2d78] sm:$0xff]
  %v1492 = vld [vmem:[%s1 + $0x2d80] sm:$0xff]
  %v1493 = vld [vmem:[%s1 + $0x2d88] sm:$0xff]
  %v1494 = vld [vmem:[%s1 + $0x2d90] sm:$0xff]
  %v1495 = vld [vmem:[%s1 + $0x2d98] sm:$0xff]
  %v1496 = vld [vmem:[%s1 + $0x2da0] sm:$0xff]
  %v1497 = vld [vmem:[%s1 + $0x2da8] sm:$0xff]
  %v1498 = vld [vmem:[%s1 + $0x2db0] sm:$0xff]
  %v1499 = vld [vmem:[%s1 + $0x2db8] sm:$0xff]
  %v1500 = vld [vmem:[%s1 + $0x2dc0] sm:$0xff]
  %v1501 = vld [vmem:[%s1 + $0x2dc8] sm:$0xff]
  %v1502 = vld [vmem:[%s1 + $0x2dd0] sm:$0xff]
  %v1503 = vld [vmem:[%s1 + $0x2dd8] sm:$0xff]
  %v1504 = vld [vmem:[%s1 + $0x2de0] sm:$0xff]
  %v1505 = vld [vmem:[%s1 + $0x2de8] sm:$0xff]
  %v1506 = vld [vmem:[%s1 + $0x2df0] sm:$0xff]
  %v1507 = vld [vmem:[%s1 + $0x2df8] sm:$0xff]
  %v1508 = vld [vmem:[%s1 + $0x2e00] sm:$0xff]
  %v1509 = vld [vmem:[%s1 + $0x2e08] sm:$0xff]
  %v1510 = vld [vmem:[%s1 + $0x2e10] sm:$0xff]
  %v1511 = vld [vmem:[%s1 + $0x2e18] sm:$0xff]
  %v1512 = vld [vmem:[%s1 + $0x2e20] sm:$0xff]
  %v1513 = vld [vmem:[%s1 + $0x2e28] sm:$0xff]
  %v1514 = vld [vmem:[%s1 + $0x2e30] sm:$0xff]
  %v1515 = vld [vmem:[%s1 + $0x2e38] sm:$0xff]
  %v1516 = vld [vmem:[%s1 + $0x2e40] sm:$0xff]
  %v1517 = vld [vmem:[%s1 + $0x2e48] sm:$0xff]
  %v1518 = vld [vmem:[%s1 + $0x2e50] sm:$0xff]
  %v1519 = vld [vmem:[%s1 + $0x2e58] sm:$0xff]
  %v1520 = vld [vmem:[%s1 + $0x2e60] sm:$0xff]
  %v1521 = vld [vmem:[%s1 + $0x2e68] sm:$0xff]
  %v1522 = vld [vmem:[%s1 + $0x2e70] sm:$0xff]
  %v1523 = vld [vmem:[%s1 + $0x2e78] sm:$0xff]
  %v1524 = vld [vmem:[%s1 + $0x2e80] sm:$0xff]
  %v1525 = vld [vmem:[%s1 + $0x2e88] sm:$0xff]
  %v1526 = vld [vmem:[%s1 + $0x2e90] sm:$0xff]
  %v1527 = vld [vmem:[%s1 + $0x2e98] sm:$0xff]
  %v1528 = vld [vmem:[%s1 + $0x2ea0] sm:$0xff]
  %v1529 = vld [vmem:[%s1 + $0x2ea8] sm:$0xff]
  %v1530 = vld [vmem:[%s1 + $0x2eb0] sm:$0xff]
  %v1531 = vld [vmem:[%s1 + $0x2eb8] sm:$0xff]
  %v1532 = vld [vmem:[%s1 + $0x2ec0] sm:$0xff]
  %v1533 = vld [vmem:[%s1 + $0x2ec8] sm:$0xff]
  %v1534 = vld [vmem:[%s1 + $0x2ed0] sm:$0xff]
  %v1535 = vld [vmem:[%s1 + $0x2ed8] sm:$0xff]
  %v1536 = vld [vmem:[%s1 + $0x2ee0] sm:$0xff]
  %v1537 = vld [vmem:[%s1 + $0x2ee8] sm:$0xff]
  %v1538 = vld [vmem:[%s1 + $0x2ef0] sm:$0xff]
  %v1539 = vld [vmem:[%s1 + $0x2ef8] sm:$0xff]
  %v1540 = vld [vmem:[%s1 + $0x2f00] sm:$0xff]
  %v1541 = vld [vmem:[%s1 + $0x2f08] sm:$0xff]
  %v1542 = vld [vmem:[%s1 + $0x2f10] sm:$0xff]
  %v1543 = vld [vmem:[%s1 + $0x2f18] sm:$0xff]
  %v1544 = vld [vmem:[%s1 + $0x2f20] sm:$0xff]
  %v1545 = vld [vmem:[%s1 + $0x2f28] sm:$0xff]
  %v1546 = vld [vmem:[%s1 + $0x2f30] sm:$0xff]
  %v1547 = vld [vmem:[%s1 + $0x2f38] sm:$0xff]
  %v1548 = vld [vmem:[%s1 + $0x2f40] sm:$0xff]
  %v1549 = vld [vmem:[%s1 + $0x2f48] sm:$0xff]
  %v1550 = vld [vmem:[%s1 + $0x2f50] sm:$0xff]
  %v1551 = vld [vmem:[%s1 + $0x2f58] sm:$0xff]
  %v1552 = vld [vmem:[%s1 + $0x2f60] sm:$0xff]
  %v1553 = vld [vmem:[%s1 + $0x2f68] sm:$0xff]
  %v1554 = vld [vmem:[%s1 + $0x2f70] sm:$0xff]
  %v1555 = vld [vmem:[%s1 + $0x2f78] sm:$0xff]
  %v1556 = vld [vmem:[%s1 + $0x2f80] sm:$0xff]
  %v1557 = vld [vmem:[%s1 + $0x2f88] sm:$0xff]
  %v1558 = vld [vmem:[%s1 + $0x2f90] sm:$0xff]
  %v1559 = vld [vmem:[%s1 + $0x2f98] sm:$0xff]
  %v1560 = vld [vmem:[%s1 + $0x2fa0] sm:$0xff]
  %v1561 = vld [vmem:[%s1 + $0x2fa8] sm:$0xff]
  %v1562 = vld [vmem:[%s1 + $0x2fb0] sm:$0xff]
  %v1563 = vld [vmem:[%s1 + $0x2fb8] sm:$0xff]
  %v1564 = vld [vmem:[%s1 + $0x2fc0] sm:$0xff]
  %v1565 = vld [vmem:[%s1 + $0x2fc8] sm:$0xff]
  %v1566 = vld [vmem:[%s1 + $0x2fd0] sm:$0xff]
  %v1567 = vld [vmem:[%s1 + $0x2fd8] sm:$0xff]
  %v1568 = vld [vmem:[%s1 + $0x2fe0] sm:$0xff]
  %v1569 = vld [vmem:[%s1 + $0x2fe8] sm:$0xff]
  %v1570 = vld [vmem:[%s1 + $0x2ff0] sm:$0xff]
  %v1571 = vld [vmem:[%s1 + $0x2ff8] sm:$0xff]
  %v1572 = vld [vmem:[%s1 + $0x3000] sm:$0xff]
  %v1573 = vld [vmem:[%s1 + $0x3008] sm:$0xff]
  %v1574 = vld [vmem:[%s1 + $0x3010] sm:$0xff]
  %v1575 = vld [vmem:[%s1 + $0x3018] sm:$0xff]
  %v1576 = vld [vmem:[%s1 + $0x3020] sm:$0xff]
  %v1577 = vld [vmem:[%s1 + $0x3028] sm:$0xff]
  %v1578 = vld [vmem:[%s1 + $0x3030] sm:$0xff]
  %v1579 = vld [vmem:[%s1 + $0x3038] sm:$0xff]
  %v1580 = vld [vmem:[%s1 + $0x3040] sm:$0xff]
  %v1581 = vld [vmem:[%s1 + $0x3048] sm:$0xff]
  %v1582 = vld [vmem:[%s1 + $0x3050] sm:$0xff]
  %v1583 = vld [vmem:[%s1 + $0x3058] sm:$0xff]
  %v1584 = vld [vmem:[%s1 + $0x3060] sm:$0xff]
  %v1585 = vld [vmem:[%s1 + $0x3068] sm:$0xff]
  %v1586 = vld [vmem:[%s1 + $0x3070] sm:$0xff]
  %v1587 = vld [vmem:[%s1 + $0x3078] sm:$0xff]
  %v1588 = vld [vmem:[%s1 + $0x3080] sm:$0xff]
  %v1589 = vld [vmem:[%s1 + $0x3088] sm:$0xff]
  %v1590 = vld [vmem:[%s1 + $0x3090] sm:$0xff]
  %v1591 = vld [vmem:[%s1 + $0x3098] sm:$0xff]
  %v1592 = vld [vmem:[%s1 + $0x30a0] sm:$0xff]
  %v1593 = vld [vmem:[%s1 + $0x30a8] sm:$0xff]
  %v1594 = vld [vmem:[%s1 + $0x30b0] sm:$0xff]
  %v1595 = vld [vmem:[%s1 + $0x30b8] sm:$0xff]
  %v1596 = vld [vmem:[%s1 + $0x30c0] sm:$0xff]
  %v1597 = vld [vmem:[%s1 + $0x30c8] sm:$0xff]
  %v1598 = vld [vmem:[%s1 + $0x30d0] sm:$0xff]
  %v1599 = vld [vmem:[%s1 + $0x30d8] sm:$0xff]
  %v1600 = vld [vmem:[%s1 + $0x30e0] sm:$0xff]
  %v1601 = vld [vmem:[%s1 + $0x30e8] sm:$0xff]
  %v1602 = vld [vmem:[%s1 + $0x30f0] sm:$0xff]
  %v1603 = vld [vmem:[%s1 + $0x30f8] sm:$0xff]
  %v1604 = vld [vmem:[%s1 + $0x3100] sm:$0xff]
  %v1605 = vld [vmem:[%s1 + $0x3108] sm:$0xff]
  %v1606 = vld [vmem:[%s1 + $0x3110] sm:$0xff]
  %v1607 = vld [vmem:[%s1 + $0x3118] sm:$0xff]
  %v1608 = vld [vmem:[%s1 + $0x3120] sm:$0xff]
  %v1609 = vld [vmem:[%s1 + $0x3128] sm:$0xff]
  %v1610 = vld [vmem:[%s1 + $0x3130] sm:$0xff]
  %v1611 = vld [vmem:[%s1 + $0x3138] sm:$0xff]
  %v1612 = vld [vmem:[%s1 + $0x3140] sm:$0xff]
  %v1613 = vld [vmem:[%s1 + $0x3148] sm:$0xff]
  %v1614 = vld [vmem:[%s1 + $0x3150] sm:$0xff]
  %v1615 = vld [vmem:[%s1 + $0x3158] sm:$0xff]
  %v1616 = vld [vmem:[%s1 + $0x3160] sm:$0xff]
  %v1617 = vld [vmem:[%s1 + $0x3168] sm:$0xff]
  %v1618 = vld [vmem:[%s1 + $0x3170] sm:$0xff]
  %v1619 = vld [vmem:[%s1 + $0x3178] sm:$0xff]
  %v1620 = vld [vmem:[%s1 + $0x3180] sm:$0xff]
  %v1621 = vld [vmem:[%s1 + $0x3188] sm:$0xff]
  %v1622 = vld [vmem:[%s1 + $0x3190] sm:$0xff]
  %v1623 = vld [vmem:[%s1 + $0x3198] sm:$0xff]
  %v1624 = vld [vmem:[%s1 + $0x31a0] sm:$0xff]
  %v1625 = vld [vmem:[%s1 + $0x31a8] sm:$0xff]
  %v1626 = vld [vmem:[%s1 + $0x31b0] sm:$0xff]
  %v1627 = vld [vmem:[%s1 + $0x31b8] sm:$0xff]
  %v1628 = vld [vmem:[%s1 + $0x31c0] sm:$0xff]
  %v1629 = vld [vmem:[%s1 + $0x31c8] sm:$0xff]
  %v1630 = vld [vmem:[%s1 + $0x31d0] sm:$0xff]
  %v1631 = vld [vmem:[%s1 + $0x31d8] sm:$0xff]
  %v1632 = vld [vmem:[%s1 + $0x31e0] sm:$0xff]
  %v1633 = vld [vmem:[%s1 + $0x31e8] sm:$0xff]
  %v1634 = vld [vmem:[%s1 + $0x31f0] sm:$0xff]
  %v1635 = vld [vmem:[%s1 + $0x31f8] sm:$0xff]
  %v1636 = vld [vmem:[%s1 + $0x3200] sm:$0xff]
  %v1637 = vld [vmem:[%s1 + $0x3208] sm:$0xff]
  %v1638 = vld [vmem:[%s1 + $0x3210] sm:$0xff]
  %v1639 = vld [vmem:[%s1 + $0x3218] sm:$0xff]
  %v1640 = vld [vmem:[%s1 + $0x3220] sm:$0xff]
  %v1641 = vld [vmem:[%s1 + $0x3228] sm:$0xff]
  %v1642 = vld [vmem:[%s1 + $0x3230] sm:$0xff]
  %v1643 = vld [vmem:[%s1 + $0x3238] sm:$0xff]
  %v1644 = vld [vmem:[%s1 + $0x3240] sm:$0xff]
  %v1645 = vld [vmem:[%s1 + $0x3248] sm:$0xff]
  %v1646 = vld [vmem:[%s1 + $0x3250] sm:$0xff]
  %v1647 = vld [vmem:[%s1 + $0x3258] sm:$0xff]
  %v1648 = vld [vmem:[%s1 + $0x3260] sm:$0xff]
  %v1649 = vld [vmem:[%s1 + $0x3268] sm:$0xff]
  %v1650 = vld [vmem:[%s1 + $0x3270] sm:$0xff]
  %v1651 = vld [vmem:[%s1 + $0x3278] sm:$0xff]
  %v1652 = vld [vmem:[%s1 + $0x3280] sm:$0xff]
  %v1653 = vld [vmem:[%s1 + $0x3288] sm:$0xff]
  %v1654 = vld [vmem:[%s1 + $0x3290] sm:$0xff]
  %v1655 = vld [vmem:[%s1 + $0x3298] sm:$0xff]
  %v1656 = vld [vmem:[%s1 + $0x32a0] sm:$0xff]
  %v1657 = vld [vmem:[%s1 + $0x32a8] sm:$0xff]
  %v1658 = vld [vmem:[%s1 + $0x32b0] sm:$0xff]
  %v1659 = vld [vmem:[%s1 + $0x32b8] sm:$0xff]
  %v1660 = vld [vmem:[%s1 + $0x32c0] sm:$0xff]
  %v1661 = vld [vmem:[%s1 + $0x32c8] sm:$0xff]
  %v1662 = vld [vmem:[%s1 + $0x32d0] sm:$0xff]
  %v1663 = vld [vmem:[%s1 + $0x32d8] sm:$0xff]
  %v1664 = vld [vmem:[%s1 + $0x32e0] sm:$0xff]
  %v1665 = vld [vmem:[%s1 + $0x32e8] sm:$0xff]
  %v1666 = vld [vmem:[%s1 + $0x32f0] sm:$0xff]
  %v1667 = vld [vmem:[%s1 + $0x32f8] sm:$0xff]
  %v1668 = vld [vmem:[%s1 + $0x3300] sm:$0xff]
  %v1669 = vld [vmem:[%s1 + $0x3308] sm:$0xff]
  %v1670 = vld [vmem:[%s1 + $0x3310] sm:$0xff]
  %v1671 = vld [vmem:[%s1 + $0x3318] sm:$0xff]
  %v1672 = vld [vmem:[%s1 + $0x3320] sm:$0xff]
  %v1673 = vld [vmem:[%s1 + $0x3328] sm:$0xff]
  %v1674 = vld [vmem:[%s1 + $0x3330] sm:$0xff]
  %v1675 = vld [vmem:[%s1 + $0x3338] sm:$0xff]
  %v1676 = vld [vmem:[%s1 + $0x3340] sm:$0xff]
  %v1677 = vld [vmem:[%s1 + $0x3348] sm:$0xff]
  %v1678 = vld [vmem:[%s1 + $0x3350] sm:$0xff]
  %v1679 = vld [vmem:[%s1 + $0x3358] sm:$0xff]
  %v1680 = vld [vmem:[%s1 + $0x3360] sm:$0xff]
  %v1681 = vld [vmem:[%s1 + $0x3368] sm:$0xff]
  %v1682 = vld [vmem:[%s1 + $0x3370] sm:$0xff]
  %v1683 = vld [vmem:[%s1 + $0x3378] sm:$0xff]
  %v1684 = vld [vmem:[%s1 + $0x3380] sm:$0xff]
  %v1685 = vld [vmem:[%s1 + $0x3388] sm:$0xff]
  %v1686 = vld [vmem:[%s1 + $0x3390] sm:$0xff]
  %v1687 = vld [vmem:[%s1 + $0x3398] sm:$0xff]
  %v1688 = vld [vmem:[%s1 + $0x33a0] sm:$0xff]
  %v1689 = vld [vmem:[%s1 + $0x33a8] sm:$0xff]
  %v1690 = vld [vmem:[%s1 + $0x33b0] sm:$0xff]
  %v1691 = vld [vmem:[%s1 + $0x33b8] sm:$0xff]
  %v1692 = vld [vmem:[%s1 + $0x33c0] sm:$0xff]
  %v1693 = vld [vmem:[%s1 + $0x33c8] sm:$0xff]
  %v1694 = vld [vmem:[%s1 + $0x33d0] sm:$0xff]
  %v1695 = vld [vmem:[%s1 + $0x33d8] sm:$0xff]
  %v1696 = vld [vmem:[%s1 + $0x33e0] sm:$0xff]
  %v1697 = vld [vmem:[%s1 + $0x33e8] sm:$0xff]
  %v1698 = vld [vmem:[%s1 + $0x33f0] sm:$0xff]
  %v1699 = vld [vmem:[%s1 + $0x33f8] sm:$0xff]
  %v1700 = vld [vmem:[%s1 + $0x3400] sm:$0xff]
  %v1701 = vld [vmem:[%s1 + $0x3408] sm:$0xff]
  %v1702 = vld [vmem:[%s1 + $0x3410] sm:$0xff]
  %v1703 = vld [vmem:[%s1 + $0x3418] sm:$0xff]
  %v1704 = vld [vmem:[%s1 + $0x3420] sm:$0xff]
  %v1705 = vld [vmem:[%s1 + $0x3428] sm:$0xff]
  %v1706 = vld [vmem:[%s1 + $0x3430] sm:$0xff]
  %v1707 = vld [vmem:[%s1 + $0x3438] sm:$0xff]
  %v1708 = vld [vmem:[%s1 + $0x3440] sm:$0xff]
  %v1709 = vld [vmem:[%s1 + $0x3448] sm:$0xff]
  %v1710 = vld [vmem:[%s1 + $0x3450] sm:$0xff]
  %v1711 = vld [vmem:[%s1 + $0x3458] sm:$0xff]
  %v1712 = vld [vmem:[%s1 + $0x3460] sm:$0xff]
  %v1713 = vld [vmem:[%s1 + $0x3468] sm:$0xff]
  %v1714 = vld [vmem:[%s1 + $0x3470] sm:$0xff]
  %v1715 = vld [vmem:[%s1 + $0x3478] sm:$0xff]
  %v1716 = vld [vmem:[%s1 + $0x3480] sm:$0xff]
  %v1717 = vld [vmem:[%s1 + $0x3488] sm:$0xff]
  %v1718 = vld [vmem:[%s1 + $0x3490] sm:$0xff]
  %v1719 = vld [vmem:[%s1 + $0x3498] sm:$0xff]
  %v1720 = vld [vmem:[%s1 + $0x34a0] sm:$0xff]
  %v1721 = vld [vmem:[%s1 + $0x34a8] sm:$0xff]
  %v1722 = vld [vmem:[%s1 + $0x34b0] sm:$0xff]
  %v1723 = vld [vmem:[%s1 + $0x34b8] sm:$0xff]
  %v1724 = vld [vmem:[%s1 + $0x34c0] sm:$0xff]
  %v1725 = vld [vmem:[%s1 + $0x34c8] sm:$0xff]
  %v1726 = vld [vmem:[%s1 + $0x34d0] sm:$0xff]
  %v1727 = vld [vmem:[%s1 + $0x34d8] sm:$0xff]
  %v1728 = vld [vmem:[%s1 + $0x34e0] sm:$0xff]
  %v1729 = vld [vmem:[%s1 + $0x34e8] sm:$0xff]
  %v1730 = vld [vmem:[%s1 + $0x34f0] sm:$0xff]
  %v1731 = vld [vmem:[%s1 + $0x34f8] sm:$0xff]
  %v1732 = vld [vmem:[%s1 + $0x3500] sm:$0xff]
  %v1733 = vld [vmem:[%s1 + $0x3508] sm:$0xff]
  %v1734 = vld [vmem:[%s1 + $0x3510] sm:$0xff]
  %v1735 = vld [vmem:[%s1 + $0x3518] sm:$0xff]
  %v1736 = vld [vmem:[%s1 + $0x3520] sm:$0xff]
  %v1737 = vld [vmem:[%s1 + $0x3528] sm:$0xff]
  %v1738 = vld [vmem:[%s1 + $0x3530] sm:$0xff]
  %v1739 = vld [vmem:[%s1 + $0x3538] sm:$0xff]
  %v1740 = vld [vmem:[%s1 + $0x3540] sm:$0xff]
  %v1741 = vld [vmem:[%s1 + $0x3548] sm:$0xff]
  %v1742 = vld [vmem:[%s1 + $0x3550] sm:$0xff]
  %v1743 = vld [vmem:[%s1 + $0x3558] sm:$0xff]
  %v1744 = vld [vmem:[%s1 + $0x3560] sm:$0xff]
  %v1745 = vld [vmem:[%s1 + $0x3568] sm:$0xff]
  %v1746 = vld [vmem:[%s1 + $0x3570] sm:$0xff]
  %v1747 = vld [vmem:[%s1 + $0x3578] sm:$0xff]
  %v1748 = vld [vmem:[%s1 + $0x3580] sm:$0xff]
  %v1749 = vld [vmem:[%s1 + $0x3588] sm:$0xff]
  %v1750 = vld [vmem:[%s1 + $0x3590] sm:$0xff]
  %v1751 = vld [vmem:[%s1 + $0x3598] sm:$0xff]
  %v1752 = vld [vmem:[%s1 + $0x35a0] sm:$0xff]
  %v1753 = vld [vmem:[%s1 + $0x35a8] sm:$0xff]
  %v1754 = vld [vmem:[%s1 + $0x35b0] sm:$0xff]
  %v1755 = vld [vmem:[%s1 + $0x35b8] sm:$0xff]
  %v1756 = vld [vmem:[%s1 + $0x35c0] sm:$0xff]
  %v1757 = vld [vmem:[%s1 + $0x35c8] sm:$0xff]
  %v1758 = vld [vmem:[%s1 + $0x35d0] sm:$0xff]
  %v1759 = vld [vmem:[%s1 + $0x35d8] sm:$0xff]
  %v1760 = vld [vmem:[%s1 + $0x35e0] sm:$0xff]
  %v1761 = vld [vmem:[%s1 + $0x35e8] sm:$0xff]
  %v1762 = vld [vmem:[%s1 + $0x35f0] sm:$0xff]
  %v1763 = vld [vmem:[%s1 + $0x35f8] sm:$0xff]
  %v1764 = vld [vmem:[%s1 + $0x3600] sm:$0xff]
  %v1765 = vld [vmem:[%s1 + $0x3608] sm:$0xff]
  %v1766 = vld [vmem:[%s1 + $0x3610] sm:$0xff]
  %v1767 = vld [vmem:[%s1 + $0x3618] sm:$0xff]
  %v1768 = vld [vmem:[%s1 + $0x3620] sm:$0xff]
  %v1769 = vld [vmem:[%s1 + $0x3628] sm:$0xff]
  %v1770 = vld [vmem:[%s1 + $0x3630] sm:$0xff]
  %v1771 = vld [vmem:[%s1 + $0x3638] sm:$0xff]
  %v1772 = vld [vmem:[%s1 + $0x3640] sm:$0xff]
  %v1773 = vld [vmem:[%s1 + $0x3648] sm:$0xff]
  %v1774 = vld [vmem:[%s1 + $0x3650] sm:$0xff]
  %v1775 = vld [vmem:[%s1 + $0x3658] sm:$0xff]
  %v1776 = vld [vmem:[%s1 + $0x3660] sm:$0xff]
  %v1777 = vld [vmem:[%s1 + $0x3668] sm:$0xff]
  %v1778 = vld [vmem:[%s1 + $0x3670] sm:$0xff]
  %v1779 = vld [vmem:[%s1 + $0x3678] sm:$0xff]
  %v1780 = vld [vmem:[%s1 + $0x3680] sm:$0xff]
  %v1781 = vld [vmem:[%s1 + $0x3688] sm:$0xff]
  %v1782 = vld [vmem:[%s1 + $0x3690] sm:$0xff]
  %v1783 = vld [vmem:[%s1 + $0x3698] sm:$0xff]
  %v1784 = vld [vmem:[%s1 + $0x36a0] sm:$0xff]
  %v1785 = vld [vmem:[%s1 + $0x36a8] sm:$0xff]
  %v1786 = vld [vmem:[%s1 + $0x36b0] sm:$0xff]
  %v1787 = vld [vmem:[%s1 + $0x36b8] sm:$0xff]
  %v1788 = vld [vmem:[%s1 + $0x36c0] sm:$0xff]
  %v1789 = vld [vmem:[%s1 + $0x36c8] sm:$0xff]
  %v1790 = vld [vmem:[%s1 + $0x36d0] sm:$0xff]
  %v1791 = vld [vmem:[%s1 + $0x36d8] sm:$0xff]
  %v1792 = vld [vmem:[%s1 + $0x36e0] sm:$0xff]
  %v1793 = vld [vmem:[%s1 + $0x36e8] sm:$0xff]
  %v1794 = vld [vmem:[%s1 + $0x36f0] sm:$0xff]
  %v1795 = vld [vmem:[%s1 + $0x36f8] sm:$0xff]
  %v1796 = vld [vmem:[%s1 + $0x3700] sm:$0xff]
  %v1797 = vld [vmem:[%s1 + $0x3708] sm:$0xff]
  %v1798 = vld [vmem:[%s1 + $0x3710] sm:$0xff]
  %v1799 = vld [vmem:[%s1 + $0x3718] sm:$0xff]
  %v1800 = vld [vmem:[%s1 + $0x3720] sm:$0xff]
  %v1801 = vld [vmem:[%s1 + $0x3728] sm:$0xff]
  %v1802 = vld [vmem:[%s1 + $0x3730] sm:$0xff]
  %v1803 = vld [vmem:[%s1 + $0x3738] sm:$0xff]
  %v1804 = vld [vmem:[%s1 + $0x3740] sm:$0xff]
  %v1805 = vld [vmem:[%s1 + $0x3748] sm:$0xff]
  %v1806 = vld [vmem:[%s1 + $0x3750] sm:$0xff]
  %v1807 = vld [vmem:[%s1 + $0x3758] sm:$0xff]
  %v1808 = vld [vmem:[%s1 + $0x3760] sm:$0xff]
  %v1809 = vld [vmem:[%s1 + $0x3768] sm:$0xff]
  %v1810 = vld [vmem:[%s1 + $0x3770] sm:$0xff]
  %v1811 = vld [vmem:[%s1 + $0x3778] sm:$0xff]
  %v1812 = vld [vmem:[%s1 + $0x3780] sm:$0xff]
  %v1813 = vld [vmem:[%s1 + $0x3788] sm:$0xff]
  %v1814 = vld [vmem:[%s1 + $0x3790] sm:$0xff]
  %v1815 = vld [vmem:[%s1 + $0x3798] sm:$0xff]
  %v1816 = vld [vmem:[%s1 + $0x37a0] sm:$0xff]
  %v1817 = vld [vmem:[%s1 + $0x37a8] sm:$0xff]
  %v1818 = vld [vmem:[%s1 + $0x37b0] sm:$0xff]
  %v1819 = vld [vmem:[%s1 + $0x37b8] sm:$0xff]
  %v1820 = vld [vmem:[%s1 + $0x37c0] sm:$0xff]
  %v1821 = vld [vmem:[%s1 + $0x37c8] sm:$0xff]
  %v1822 = vld [vmem:[%s1 + $0x37d0] sm:$0xff]
  %v1823 = vld [vmem:[%s1 + $0x37d8] sm:$0xff]
  %v1824 = vld [vmem:[%s1 + $0x37e0] sm:$0xff]
  %v1825 = vld [vmem:[%s1 + $0x37e8] sm:$0xff]
  %v1826 = vld [vmem:[%s1 + $0x37f0] sm:$0xff]
  %v1827 = vld [vmem:[%s1 + $0x37f8] sm:$0xff]
  %v1828 = vld [vmem:[%s1 + $0x3800] sm:$0xff]
  %v1829 = vld [vmem:[%s1 + $0x3808] sm:$0xff]
  %v1830 = vld [vmem:[%s1 + $0x3810] sm:$0xff]
  %v1831 = vld [vmem:[%s1 + $0x3818] sm:$0xff]
  %v1832 = vld [vmem:[%s1 + $0x3820] sm:$0xff]
  %v1833 = vld [vmem:[%s1 + $0x3828] sm:$0xff]
  %v1834 = vld [vmem:[%s1 + $0x3830] sm:$0xff]
  %v1835 = vld [vmem:[%s1 + $0x3838] sm:$0xff]
  %v1836 = vld [vmem:[%s1 + $0x3840] sm:$0xff]
  %v1837 = vld [vmem:[%s1 + $0x3848] sm:$0xff]
  %v1838 = vld [vmem:[%s1 + $0x3850] sm:$0xff]
  %v1839 = vld [vmem:[%s1 + $0x3858] sm:$0xff]
  %v1840 = vld [vmem:[%s1 + $0x3860] sm:$0xff]
  %v1841 = vld [vmem:[%s1 + $0x3868] sm:$0xff]
  %v1842 = vld [vmem:[%s1 + $0x3870] sm:$0xff]
  %v1843 = vld [vmem:[%s1 + $0x3878] sm:$0xff]
  %v1844 = vld [vmem:[%s1 + $0x3880] sm:$0xff]
  %v1845 = vld [vmem:[%s1 + $0x3888] sm:$0xff]
  %v1846 = vld [vmem:[%s1 + $0x3890] sm:$0xff]
  %v1847 = vld [vmem:[%s1 + $0x3898] sm:$0xff]
  %v1848 = vld [vmem:[%s1 + $0x38a0] sm:$0xff]
  %v1849 = vld [vmem:[%s1 + $0x38a8] sm:$0xff]
  %v1850 = vld [vmem:[%s1 + $0x38b0] sm:$0xff]
  %v1851 = vld [vmem:[%s1 + $0x38b8] sm:$0xff]
  %v1852 = vld [vmem:[%s1 + $0x38c0] sm:$0xff]
  %v1853 = vld [vmem:[%s1 + $0x38c8] sm:$0xff]
  %v1854 = vld [vmem:[%s1 + $0x38d0] sm:$0xff]
  %v1855 = vld [vmem:[%s1 + $0x38d8] sm:$0xff]
  %v1856 = vld [vmem:[%s1 + $0x38e0] sm:$0xff]
  %v1857 = vld [vmem:[%s1 + $0x38e8] sm:$0xff]
  %v1858 = vld [vmem:[%s1 + $0x38f0] sm:$0xff]
  %v1859 = vld [vmem:[%s1 + $0x38f8] sm:$0xff]
  %v1860 = vld [vmem:[%s1 + $0x3900] sm:$0xff]
  %v1861 = vld [vmem:[%s1 + $0x3908] sm:$0xff]
  %v1862 = vld [vmem:[%s1 + $0x3910] sm:$0xff]
  %v1863 = vld [vmem:[%s1 + $0x3918] sm:$0xff]
  %v1864 = vld [vmem:[%s1 + $0x3920] sm:$0xff]
  %v1865 = vld [vmem:[%s1 + $0x3928] sm:$0xff]
  %v1866 = vld [vmem:[%s1 + $0x3930] sm:$0xff]
  %v1867 = vld [vmem:[%s1 + $0x3938] sm:$0xff]
  %v1868 = vld [vmem:[%s1 + $0x3940] sm:$0xff]
  %v1869 = vld [vmem:[%s1 + $0x3948] sm:$0xff]
  %v1870 = vld [vmem:[%s1 + $0x3950] sm:$0xff]
  %v1871 = vld [vmem:[%s1 + $0x3958] sm:$0xff]
  %v1872 = vld [vmem:[%s1 + $0x3960] sm:$0xff]
  %v1873 = vld [vmem:[%s1 + $0x3968] sm:$0xff]
  %v1874 = vld [vmem:[%s1 + $0x3970] sm:$0xff]
  %v1875 = vld [vmem:[%s1 + $0x3978] sm:$0xff]
  %v1876 = vld [vmem:[%s1 + $0x3980] sm:$0xff]
  %v1877 = vld [vmem:[%s1 + $0x3988] sm:$0xff]
  %v1878 = vld [vmem:[%s1 + $0x3990] sm:$0xff]
  %v1879 = vld [vmem:[%s1 + $0x3998] sm:$0xff]
  %v1880 = vld [vmem:[%s1 + $0x39a0] sm:$0xff]
  %v1881 = vld [vmem:[%s1 + $0x39a8] sm:$0xff]
  %v1882 = vld [vmem:[%s1 + $0x39b0] sm:$0xff]
  %v1883 = vld [vmem:[%s1 + $0x39b8] sm:$0xff]
  %v1884 = vld [vmem:[%s1 + $0x39c0] sm:$0xff]
  %v1885 = vld [vmem:[%s1 + $0x39c8] sm:$0xff]
  %v1886 = vld [vmem:[%s1 + $0x39d0] sm:$0xff]
  %v1887 = vld [vmem:[%s1 + $0x39d8] sm:$0xff]
  %v1888 = vld [vmem:[%s1 + $0x39e0] sm:$0xff]
  %v1889 = vld [vmem:[%s1 + $0x39e8] sm:$0xff]
  %v1890 = vld [vmem:[%s1 + $0x39f0] sm:$0xff]
  %v1891 = vld [vmem:[%s1 + $0x39f8] sm:$0xff]
  %v1892 = vld [vmem:[%s1 + $0x3a00] sm:$0xff]
  %v1893 = vld [vmem:[%s1 + $0x3a08] sm:$0xff]
  %v1894 = vld [vmem:[%s1 + $0x3a10] sm:$0xff]
  %v1895 = vld [vmem:[%s1 + $0x3a18] sm:$0xff]
  %v1896 = vld [vmem:[%s1 + $0x3a20] sm:$0xff]
  %v1897 = vld [vmem:[%s1 + $0x3a28] sm:$0xff]
  %v1898 = vld [vmem:[%s1 + $0x3a30] sm:$0xff]
  %v1899 = vld [vmem:[%s1 + $0x3a38] sm:$0xff]
  %v1900 = vld [vmem:[%s1 + $0x3a40] sm:$0xff]
  %v1901 = vld [vmem:[%s1 + $0x3a48] sm:$0xff]
  %v1902 = vld [vmem:[%s1 + $0x3a50] sm:$0xff]
  %v1903 = vld [vmem:[%s1 + $0x3a58] sm:$0xff]
  %v1904 = vld [vmem:[%s1 + $0x3a60] sm:$0xff]
  %v1905 = vld [vmem:[%s1 + $0x3a68] sm:$0xff]
  %v1906 = vld [vmem:[%s1 + $0x3a70] sm:$0xff]
  %v1907 = vld [vmem:[%s1 + $0x3a78] sm:$0xff]
  %v1908 = vld [vmem:[%s1 + $0x3a80] sm:$0xff]
  %v1909 = vld [vmem:[%s1 + $0x3a88] sm:$0xff]
  %v1910 = vld [vmem:[%s1 + $0x3a90] sm:$0xff]
  %v1911 = vld [vmem:[%s1 + $0x3a98] sm:$0xff]
  %v1912 = vld [vmem:[%s1 + $0x3aa0] sm:$0xff]
  %v1913 = vld [vmem:[%s1 + $0x3aa8] sm:$0xff]
  %v1914 = vld [vmem:[%s1 + $0x3ab0] sm:$0xff]
  %v1915 = vld [vmem:[%s1 + $0x3ab8] sm:$0xff]
  %v1916 = vld [vmem:[%s1 + $0x3ac0] sm:$0xff]
  %v1917 = vld [vmem:[%s1 + $0x3ac8] sm:$0xff]
  %v1918 = vld [vmem:[%s1 + $0x3ad0] sm:$0xff]
  %v1919 = vld [vmem:[%s1 + $0x3ad8] sm:$0xff]
  %v1920 = vld [vmem:[%s1 + $0x3ae0] sm:$0xff]
  %v1921 = vld [vmem:[%s1 + $0x3ae8] sm:$0xff]
  %v1922 = vld [vmem:[%s1 + $0x3af0] sm:$0xff]
  %v1923 = vld [vmem:[%s1 + $0x3af8] sm:$0xff]
  %v1924 = vld [vmem:[%s1 + $0x3b00] sm:$0xff]
  %v1925 = vld [vmem:[%s1 + $0x3b08] sm:$0xff]
  %v1926 = vld [vmem:[%s1 + $0x3b10] sm:$0xff]
  %v1927 = vld [vmem:[%s1 + $0x3b18] sm:$0xff]
  %v1928 = vld [vmem:[%s1 + $0x3b20] sm:$0xff]
  %v1929 = vld [vmem:[%s1 + $0x3b28] sm:$0xff]
  %v1930 = vld [vmem:[%s1 + $0x3b30] sm:$0xff]
  %v1931 = vld [vmem:[%s1 + $0x3b38] sm:$0xff]
  %v1932 = vld [vmem:[%s1 + $0x3b40] sm:$0xff]
  %v1933 = vld [vmem:[%s1 + $0x3b48] sm:$0xff]
  %v1934 = vld [vmem:[%s1 + $0x3b50] sm:$0xff]
  %v1935 = vld [vmem:[%s1 + $0x3b58] sm:$0xff]
  %v1936 = vld [vmem:[%s1 + $0x3b60] sm:$0xff]
  %v1937 = vld [vmem:[%s1 + $0x3b68] sm:$0xff]
  %v1938 = vld [vmem:[%s1 + $0x3b70] sm:$0xff]
  %v1939 = vld [vmem:[%s1 + $0x3b78] sm:$0xff]
  %v1940 = vld [vmem:[%s1 + $0x3b80] sm:$0xff]
  %v1941 = vld [vmem:[%s1 + $0x3b88] sm:$0xff]
  %v1942 = vld [vmem:[%s1 + $0x3b90] sm:$0xff]
  %v1943 = vld [vmem:[%s1 + $0x3b98] sm:$0xff]
  %v1944 = vld [vmem:[%s1 + $0x3ba0] sm:$0xff]
  %v1945 = vld [vmem:[%s1 + $0x3ba8] sm:$0xff]
  %v1946 = vld [vmem:[%s1 + $0x3bb0] sm:$0xff]
  %v1947 = vld [vmem:[%s1 + $0x3bb8] sm:$0xff]
  %v1948 = vld [vmem:[%s1 + $0x3bc0] sm:$0xff]
  %v1949 = vld [vmem:[%s1 + $0x3bc8] sm:$0xff]
  %v1950 = vld [vmem:[%s1 + $0x3bd0] sm:$0xff]
  %v1951 = vld [vmem:[%s1 + $0x3bd8] sm:$0xff]
  %v1952 = vld [vmem:[%s1 + $0x3be0] sm:$0xff]
  %v1953 = vld [vmem:[%s1 + $0x3be8] sm:$0xff]
  %v1954 = vld [vmem:[%s1 + $0x3bf0] sm:$0xff]
  %v1955 = vld [vmem:[%s1 + $0x3bf8] sm:$0xff]
  %v1956 = vld [vmem:[%s1 + $0x3c00] sm:$0xff]
  %v1957 = vld [vmem:[%s1 + $0x3c08] sm:$0xff]
  %v1958 = vld [vmem:[%s1 + $0x3c10] sm:$0xff]
  %v1959 = vld [vmem:[%s1 + $0x3c18] sm:$0xff]
  %v1960 = vld [vmem:[%s1 + $0x3c20] sm:$0xff]
  %v1961 = vld [vmem:[%s1 + $0x3c28] sm:$0xff]
  %v1962 = vld [vmem:[%s1 + $0x3c30] sm:$0xff]
  %v1963 = vld [vmem:[%s1 + $0x3c38] sm:$0xff]
  %v1964 = vld [vmem:[%s1 + $0x3c40] sm:$0xff]
  %v1965 = vld [vmem:[%s1 + $0x3c48] sm:$0xff]
  %v1966 = vld [vmem:[%s1 + $0x3c50] sm:$0xff]
  %v1967 = vld [vmem:[%s1 + $0x3c58] sm:$0xff]
  %v1968 = vld [vmem:[%s1 + $0x3c60] sm:$0xff]
  %v1969 = vld [vmem:[%s1 + $0x3c68] sm:$0xff]
  %v1970 = vld [vmem:[%s1 + $0x3c70] sm:$0xff]
  %v1971 = vld [vmem:[%s1 + $0x3c78] sm:$0xff]
  %v1972 = vld [vmem:[%s1 + $0x3c80] sm:$0xff]
  %v1973 = vld [vmem:[%s1 + $0x3c88] sm:$0xff]
  %v1974 = vld [vmem:[%s1 + $0x3c90] sm:$0xff]
  %v1975 = vld [vmem:[%s1 + $0x3c98] sm:$0xff]
  %v1976 = vld [vmem:[%s1 + $0x3ca0] sm:$0xff]
  %v1977 = vld [vmem:[%s1 + $0x3ca8] sm:$0xff]
  %v1978 = vld [vmem:[%s1 + $0x3cb0] sm:$0xff]
  %v1979 = vld [vmem:[%s1 + $0x3cb8] sm:$0xff]
  %v1980 = vld [vmem:[%s1 + $0x3cc0] sm:$0xff]
  %v1981 = vld [vmem:[%s1 + $0x3cc8] sm:$0xff]
  %v1982 = vld [vmem:[%s1 + $0x3cd0] sm:$0xff]
  %v1983 = vld [vmem:[%s1 + $0x3cd8] sm:$0xff]
  %v1984 = vld [vmem:[%s1 + $0x3ce0] sm:$0xff]
  %v1985 = vld [vmem:[%s1 + $0x3ce8] sm:$0xff]
  %v1986 = vld [vmem:[%s1 + $0x3cf0] sm:$0xff]
  %v1987 = vld [vmem:[%s1 + $0x3cf8] sm:$0xff]
  %v1988 = vld [vmem:[%s1 + $0x3d00] sm:$0xff]
  %v1989 = vld [vmem:[%s1 + $0x3d08] sm:$0xff]
  %v1990 = vld [vmem:[%s1 + $0x3d10] sm:$0xff]
  %v1991 = vld [vmem:[%s1 + $0x3d18] sm:$0xff]
  %v1992 = vld [vmem:[%s1 + $0x3d20] sm:$0xff]
  %v1993 = vld [vmem:[%s1 + $0x3d28] sm:$0xff]
  %v1994 = vld [vmem:[%s1 + $0x3d30] sm:$0xff]
  %v1995 = vld [vmem:[%s1 + $0x3d38] sm:$0xff]
  %v1996 = vld [vmem:[%s1 + $0x3d40] sm:$0xff]
  %v1997 = vld [vmem:[%s1 + $0x3d48] sm:$0xff]
  %v1998 = vld [vmem:[%s1 + $0x3d50] sm:$0xff]
  %v1999 = vld [vmem:[%s1 + $0x3d58] sm:$0xff]
  %v2000 = vld [vmem:[%s1 + $0x3d60] sm:$0xff]
  %v2001 = vld [vmem:[%s1 + $0x3d68] sm:$0xff]
  %v2002 = vld [vmem:[%s1 + $0x3d70] sm:$0xff]
  %v2003 = vld [vmem:[%s1 + $0x3d78] sm:$0xff]
  %v2004 = vld [vmem:[%s1 + $0x3d80] sm:$0xff]
  %v2005 = vld [vmem:[%s1 + $0x3d88] sm:$0xff]
  %v2006 = vld [vmem:[%s1 + $0x3d90] sm:$0xff]
  %v2007 = vld [vmem:[%s1 + $0x3d98] sm:$0xff]
  %v2008 = vld [vmem:[%s1 + $0x3da0] sm:$0xff]
  %v2009 = vld [vmem:[%s1 + $0x3da8] sm:$0xff]
  %v2010 = vld [vmem:[%s1 + $0x3db0] sm:$0xff]
  %v2011 = vld [vmem:[%s1 + $0x3db8] sm:$0xff]
  %v2012 = vld [vmem:[%s1 + $0x3dc0] sm:$0xff]
  %v2013 = vld [vmem:[%s1 + $0x3dc8] sm:$0xff]
  %v2014 = vld [vmem:[%s1 + $0x3dd0] sm:$0xff]
  %v2015 = vld [vmem:[%s1 + $0x3dd8] sm:$0xff]
  %v2016 = vld [vmem:[%s1 + $0x3de0] sm:$0xff]
  %v2017 = vld [vmem:[%s1 + $0x3de8] sm:$0xff]
  %v2018 = vld [vmem:[%s1 + $0x3df0] sm:$0xff]
  %v2019 = vld [vmem:[%s1 + $0x3df8] sm:$0xff]
  %v2020 = vld [vmem:[%s1 + $0x3e00] sm:$0xff]
  %v2021 = vld [vmem:[%s1 + $0x3e08] sm:$0xff]
  %v2022 = vld [vmem:[%s1 + $0x3e10] sm:$0xff]
  %v2023 = vld [vmem:[%s1 + $0x3e18] sm:$0xff]
  %v2024 = vld [vmem:[%s1 + $0x3e20] sm:$0xff]
  %v2025 = vld [vmem:[%s1 + $0x3e28] sm:$0xff]
  %v2026 = vld [vmem:[%s1 + $0x3e30] sm:$0xff]
  %v2027 = vld [vmem:[%s1 + $0x3e38] sm:$0xff]
  %v2028 = vld [vmem:[%s1 + $0x3e40] sm:$0xff]
  %v2029 = vld [vmem:[%s1 + $0x3e48] sm:$0xff]
  %v2030 = vld [vmem:[%s1 + $0x3e50] sm:$0xff]
  %v2031 = vld [vmem:[%s1 + $0x3e58] sm:$0xff]
  %v2032 = vld [vmem:[%s1 + $0x3e60] sm:$0xff]
  %v2033 = vld [vmem:[%s1 + $0x3e68] sm:$0xff]
  %v2034 = vld [vmem:[%s1 + $0x3e70] sm:$0xff]
  %v2035 = vld [vmem:[%s1 + $0x3e78] sm:$0xff]
  %v2036 = vld [vmem:[%s1 + $0x3e80] sm:$0xff]
  %v2037 = vld [vmem:[%s1 + $0x3e88] sm:$0xff]
  %v2038 = vld [vmem:[%s1 + $0x3e90] sm:$0xff]
  %v2039 = vld [vmem:[%s1 + $0x3e98] sm:$0xff]
  %v2040 = vld [vmem:[%s1 + $0x3ea0] sm:$0xff]
  %v2041 = vld [vmem:[%s1 + $0x3ea8] sm:$0xff]
  %v2042 = vld [vmem:[%s1 + $0x3eb0] sm:$0xff]
  %v2043 = vld [vmem:[%s1 + $0x3eb8] sm:$0xff]
  %v2044 = vld [vmem:[%s1 + $0x3ec0] sm:$0xff]
  %v2045 = vld [vmem:[%s1 + $0x3ec8] sm:$0xff]
  %v2046 = vld [vmem:[%s1 + $0x3ed0] sm:$0xff]
  %v2047 = vld [vmem:[%s1 + $0x3ed8] sm:$0xff]
  %v2048 = vld [vmem:[%s1 + $0x3ee0] sm:$0xff]
  %v2049 = vld [vmem:[%s1 + $0x3ee8] sm:$0xff]
  %v2050 = vld [vmem:[%s1 + $0x3ef0] sm:$0xff]
  %v2051 = vld [vmem:[%s1 + $0x3ef8] sm:$0xff]
  %v2052 = vld [vmem:[%s1 + $0x3f00] sm:$0xff]
  %v2053 = vld [vmem:[%s1 + $0x3f08] sm:$0xff]
  %v2054 = vld [vmem:[%s1 + $0x3f10] sm:$0xff]
  %v2055 = vld [vmem:[%s1 + $0x3f18] sm:$0xff]
  %v2056 = vld [vmem:[%s1 + $0x3f20] sm:$0xff]
  %v2057 = vld [vmem:[%s1 + $0x3f28] sm:$0xff]
  %v2058 = vld [vmem:[%s1 + $0x3f30] sm:$0xff]
  %v2059 = vld [vmem:[%s1 + $0x3f38] sm:$0xff]
  %v2060 = vld [vmem:[%s1 + $0x3f40] sm:$0xff]
  %v2061 = vld [vmem:[%s1 + $0x3f48] sm:$0xff]
  %v2062 = vld [vmem:[%s1 + $0x3f50] sm:$0xff]
  %v2063 = vld [vmem:[%s1 + $0x3f58] sm:$0xff]
  %v2064 = vld [vmem:[%s1 + $0x3f60] sm:$0xff]
  %v2065 = vld [vmem:[%s1 + $0x3f68] sm:$0xff]
  %v2066 = vld [vmem:[%s1 + $0x3f70] sm:$0xff]
  %v2067 = vld [vmem:[%s1 + $0x3f78] sm:$0xff]
  %v2068 = vld [vmem:[%s1 + $0x3f80] sm:$0xff]
  %v2069 = vld [vmem:[%s1 + $0x3f88] sm:$0xff]
  %v2070 = vld [vmem:[%s1 + $0x3f90] sm:$0xff]
  %v2071 = vld [vmem:[%s1 + $0x3f98] sm:$0xff]
  %v2072 = vld [vmem:[%s1 + $0x3fa0] sm:$0xff]
  %v2073 = vld [vmem:[%s1 + $0x3fa8] sm:$0xff]
  %v2074 = vld [vmem:[%s1 + $0x3fb0] sm:$0xff]
  %v2075 = vld [vmem:[%s1 + $0x3fb8] sm:$0xff]
  %v2076 = vld [vmem:[%s1 + $0x3fc0] sm:$0xff]
  %v2077 = vld [vmem:[%s1 + $0x3fc8] sm:$0xff]
  %v2078 = vld [vmem:[%s1 + $0x3fd0] sm:$0xff]
  %v2079 = vld [vmem:[%s1 + $0x3fd8] sm:$0xff]
  %v2080 = vld [vmem:[%s1 + $0x3fe0] sm:$0xff]
  %v2081 = vld [vmem:[%s1 + $0x3fe8] sm:$0xff]
  %v2082 = vld [vmem:[%s1 + $0x3ff0] sm:$0xff]
  %v2083 = vld [vmem:[%s1 + $0x3ff8] sm:$0xff]
  %v2084 = vld [vmem:[%s2] sm:$0xf]
  %v2086 = vlaneseq
  %v2087 = vshrl.u32 %v2086, 7
  %v2088 = vsub.s32 0, %v2087
  %v2089 = vrot.slane %v2084, %v2088
  %v2090 = vlaneseq
  %v2091 = vshrl.u32 %v2090, 7
  %v2092 = vsub.s32 1, %v2091
  %v2093 = vrot.slane %v2084, %v2092
  %v2094 = vlaneseq
  %v2095 = vshrl.u32 %v2094, 7
  %v2096 = vsub.s32 2, %v2095
  %v2097 = vrot.slane %v2084, %v2096
  %v2098 = vlaneseq
  %v2099 = vshrl.u32 %v2098, 7
  %v2100 = vsub.s32 3, %v2099
  %v2101 = vrot.slane %v2084, %v2100
  %v2122 = vcombine.high %v20, %v20
  %v2123 = vcombine.high %v21, %v21
  %v2124 = vcombine.high %v22, %v22
  %v2125 = vcombine.high %v23, %v23
  %v2126 = vcombine.high %v24, %v24
  %v2127 = vcombine.high %v25, %v25
  %v2128 = vcombine.high %v26, %v26
  %v2129 = vcombine.high %v27, %v27
  %v2130 = vcombine.high %v28, %v28
  %v2131 = vcombine.high %v29, %v29
  %v2132 = vcombine.high %v30, %v30
  %v2133 = vcombine.high %v31, %v31
  %v2134 = vcombine.high %v32, %v32
  %v2135 = vcombine.high %v33, %v33
  %v2136 = vcombine.high %v34, %v34
  %v2137 = vcombine.high %v35, %v35
  %2154 = vmatprep.subr.mxu0 %v37
  %2155 = vmatpush1.msra.mxu0 %v36
  %2156 = vmatprep.subr.mxu0 %v41
  %2157 = vmatpush1.msra.mxu0 %v40
  %2158 = vmatprep.subr.mxu0 %v45
  %2159 = vmatpush1.msra.mxu0 %v44
  %2160 = vmatprep.subr.mxu0 %v49
  %2161 = vmatpush1.msra.mxu0 %v48
  %2162 = vmatprep.subr.mxu0 %v53
  %2163 = vmatpush1.msra.mxu0 %v52
  %2164 = vmatprep.subr.mxu0 %v57
  %2165 = vmatpush1.msra.mxu0 %v56
  %2166 = vmatprep.subr.mxu0 %v61
  %2167 = vmatpush1.msra.mxu0 %v60
  %2168 = vmatprep.subr.mxu0 %v65
  %2169 = vmatpush1.msra.mxu0 %v64
  %2170 = vmatprep.subr.mxu0 %v69
  %2171 = vmatpush1.msra.mxu0 %v68
  %2172 = vmatprep.subr.mxu0 %v73
  %2173 = vmatpush1.msra.mxu0 %v72
  %2174 = vmatprep.subr.mxu0 %v77
  %2175 = vmatpush1.msra.mxu0 %v76
  %2176 = vmatprep.subr.mxu0 %v81
  %2177 = vmatpush1.msra.mxu0 %v80
  %2178 = vmatprep.subr.mxu0 %v85
  %2179 = vmatpush1.msra.mxu0 %v84
  %2180 = vmatprep.subr.mxu0 %v89
  %2181 = vmatpush1.msra.mxu0 %v88
  %2182 = vmatprep.subr.mxu0 %v93
  %2183 = vmatpush1.msra.mxu0 %v92
  %2184 = vmatprep.subr.mxu0 %v97
  %2185 = vmatpush1.msra.mxu0 %v96
  %2186 = vmatprep.subr.mxu0 %v101
  %2187 = vmatpush1.msra.mxu0 %v100
  %2188 = vmatprep.subr.mxu0 %v105
  %2189 = vmatpush1.msra.mxu0 %v104
  %2190 = vmatprep.subr.mxu0 %v109
  %2191 = vmatpush1.msra.mxu0 %v108
  %2192 = vmatprep.subr.mxu0 %v113
  %2193 = vmatpush1.msra.mxu0 %v112
  %2194 = vmatprep.subr.mxu0 %v117
  %2195 = vmatpush1.msra.mxu0 %v116
  %2196 = vmatprep.subr.mxu0 %v121
  %2197 = vmatpush1.msra.mxu0 %v120
  %2198 = vmatprep.subr.mxu0 %v125
  %2199 = vmatpush1.msra.mxu0 %v124
  %2200 = vmatprep.subr.mxu0 %v129
  %2201 = vmatpush1.msra.mxu0 %v128
  %2202 = vmatprep.subr.mxu0 %v133
  %2203 = vmatpush1.msra.mxu0 %v132
  %2204 = vmatprep.subr.mxu0 %v137
  %2205 = vmatpush1.msra.mxu0 %v136
  %2206 = vmatprep.subr.mxu0 %v141
  %2207 = vmatpush1.msra.mxu0 %v140
  %2208 = vmatprep.subr.mxu0 %v145
  %2209 = vmatpush1.msra.mxu0 %v144
  %2210 = vmatprep.subr.mxu0 %v149
  %2211 = vmatpush1.msra.mxu0 %v148
  %2212 = vmatprep.subr.mxu0 %v153
  %2213 = vmatpush1.msra.mxu0 %v152
  %2214 = vmatprep.subr.mxu0 %v157
  %2215 = vmatpush1.msra.mxu0 %v156
  %2216 = vmatprep.subr.mxu0 %v161
  %2217 = vmatpush1.msra.mxu0 %v160
  %2218 = vmatprep.mubr.f32.mxu0 %v2122
  %2219 = vmatmul.mubr.f32.gmra.mrb[0].mxu0 %v20
  %v2220 = vpop.f32.mrb[0].mxu0
  %v2221 = vadd.f32 %v2089, %v2220
  %v2222 = vpop.f32.mrb[0].mxu0
  %v2223 = vadd.f32 %v2093, %v2222
  %2224 = vdwg.mxu0
  %2225 = vmatprep.subr.mxu0 %v165
  %2226 = vmatpush1.msra.mxu0 %v164
  %2227 = vmatprep.subr.mxu0 %v169
  %2228 = vmatpush1.msra.mxu0 %v168
  %2229 = vmatprep.subr.mxu0 %v173
  %2230 = vmatpush1.msra.mxu0 %v172
  %2231 = vmatprep.subr.mxu0 %v177
  %2232 = vmatpush1.msra.mxu0 %v176
  %2233 = vmatprep.subr.mxu0 %v181
  %2234 = vmatpush1.msra.mxu0 %v180
  %2235 = vmatprep.subr.mxu0 %v185
  %2236 = vmatpush1.msra.mxu0 %v184
  %2237 = vmatprep.subr.mxu0 %v189
  %2238 = vmatpush1.msra.mxu0 %v188
  %2239 = vmatprep.subr.mxu0 %v193
  %2240 = vmatpush1.msra.mxu0 %v192
  %2241 = vmatprep.subr.mxu0 %v197
  %2242 = vmatpush1.msra.mxu0 %v196
  %2243 = vmatprep.subr.mxu0 %v201
  %2244 = vmatpush1.msra.mxu0 %v200
  %2245 = vmatprep.subr.mxu0 %v205
  %2246 = vmatpush1.msra.mxu0 %v204
  %2247 = vmatprep.subr.mxu0 %v209
  %2248 = vmatpush1.msra.mxu0 %v208
  %2249 = vmatprep.subr.mxu0 %v213
  %2250 = vmatpush1.msra.mxu0 %v212
  %2251 = vmatprep.subr.mxu0 %v217
  %2252 = vmatpush1.msra.mxu0 %v216
  %2253 = vmatprep.subr.mxu0 %v221
  %2254 = vmatpush1.msra.mxu0 %v220
  %2255 = vmatprep.subr.mxu0 %v225
  %2256 = vmatpush1.msra.mxu0 %v224
  %2257 = vmatprep.subr.mxu0 %v229
  %2258 = vmatpush1.msra.mxu0 %v228
  %2259 = vmatprep.subr.mxu0 %v233
  %2260 = vmatpush1.msra.mxu0 %v232
  %2261 = vmatprep.subr.mxu0 %v237
  %2262 = vmatpush1.msra.mxu0 %v236
  %2263 = vmatprep.subr.mxu0 %v241
  %2264 = vmatpush1.msra.mxu0 %v240
  %2265 = vmatprep.subr.mxu0 %v245
  %2266 = vmatpush1.msra.mxu0 %v244
  %2267 = vmatprep.subr.mxu0 %v249
  %2268 = vmatpush1.msra.mxu0 %v248
  %2269 = vmatprep.subr.mxu0 %v253
  %2270 = vmatpush1.msra.mxu0 %v252
  %2271 = vmatprep.subr.mxu0 %v257
  %2272 = vmatpush1.msra.mxu0 %v256
  %2273 = vmatprep.subr.mxu0 %v261
  %2274 = vmatpush1.msra.mxu0 %v260
  %2275 = vmatprep.subr.mxu0 %v265
  %2276 = vmatpush1.msra.mxu0 %v264
  %2277 = vmatprep.subr.mxu0 %v269
  %2278 = vmatpush1.msra.mxu0 %v268
  %2279 = vmatprep.subr.mxu0 %v273
  %2280 = vmatpush1.msra.mxu0 %v272
  %2281 = vmatprep.subr.mxu0 %v277
  %2282 = vmatpush1.msra.mxu0 %v276
  %2283 = vmatprep.subr.mxu0 %v281
  %2284 = vmatpush1.msra.mxu0 %v280
  %2285 = vmatprep.subr.mxu0 %v285
  %2286 = vmatpush1.msra.mxu0 %v284
  %2287 = vmatprep.subr.mxu0 %v289
  %2288 = vmatpush1.msra.mxu0 %v288
  %2289 = vmatprep.mubr.f32.mxu0 %v2123
  %2290 = vmatmul.mubr.f32.gmra.mrb[0].mxu0 %v21
  %v2291 = vpop.f32.mrb[0].mxu0
  %v2292 = vadd.f32 %v2221, %v2291
  %v2293 = vpop.f32.mrb[0].mxu0
  %v2294 = vadd.f32 %v2223, %v2293
  %2295 = vdwg.mxu0
  %2296 = vmatprep.subr.mxu0 %v293
  %2297 = vmatpush1.msra.mxu0 %v292
  %2298 = vmatprep.subr.mxu0 %v297
  %2299 = vmatpush1.msra.mxu0 %v296
  %2300 = vmatprep.subr.mxu0 %v301
  %2301 = vmatpush1.msra.mxu0 %v300
  %2302 = vmatprep.subr.mxu0 %v305
  %2303 = vmatpush1.msra.mxu0 %v304
  %2304 = vmatprep.subr.mxu0 %v309
  %2305 = vmatpush1.msra.mxu0 %v308
  %2306 = vmatprep.subr.mxu0 %v313
  %2307 = vmatpush1.msra.mxu0 %v312
  %2308 = vmatprep.subr.mxu0 %v317
  %2309 = vmatpush1.msra.mxu0 %v316
  %2310 = vmatprep.subr.mxu0 %v321
  %2311 = vmatpush1.msra.mxu0 %v320
  %2312 = vmatprep.subr.mxu0 %v325
  %2313 = vmatpush1.msra.mxu0 %v324
  %2314 = vmatprep.subr.mxu0 %v329
  %2315 = vmatpush1.msra.mxu0 %v328
  %2316 = vmatprep.subr.mxu0 %v333
  %2317 = vmatpush1.msra.mxu0 %v332
  %2318 = vmatprep.subr.mxu0 %v337
  %2319 = vmatpush1.msra.mxu0 %v336
  %2320 = vmatprep.subr.mxu0 %v341
  %2321 = vmatpush1.msra.mxu0 %v340
  %2322 = vmatprep.subr.mxu0 %v345
  %2323 = vmatpush1.msra.mxu0 %v344
  %2324 = vmatprep.subr.mxu0 %v349
  %2325 = vmatpush1.msra.mxu0 %v348
  %2326 = vmatprep.subr.mxu0 %v353
  %2327 = vmatpush1.msra.mxu0 %v352
  %2328 = vmatprep.subr.mxu0 %v357
  %2329 = vmatpush1.msra.mxu0 %v356
  %2330 = vmatprep.subr.mxu0 %v361
  %2331 = vmatpush1.msra.mxu0 %v360
  %2332 = vmatprep.subr.mxu0 %v365
  %2333 = vmatpush1.msra.mxu0 %v364
  %2334 = vmatprep.subr.mxu0 %v369
  %2335 = vmatpush1.msra.mxu0 %v368
  %2336 = vmatprep.subr.mxu0 %v373
  %2337 = vmatpush1.msra.mxu0 %v372
  %2338 = vmatprep.subr.mxu0 %v377
  %2339 = vmatpush1.msra.mxu0 %v376
  %2340 = vmatprep.subr.mxu0 %v381
  %2341 = vmatpush1.msra.mxu0 %v380
  %2342 = vmatprep.subr.mxu0 %v385
  %2343 = vmatpush1.msra.mxu0 %v384
  %2344 = vmatprep.subr.mxu0 %v389
  %2345 = vmatpush1.msra.mxu0 %v388
  %2346 = vmatprep.subr.mxu0 %v393
  %2347 = vmatpush1.msra.mxu0 %v392
  %2348 = vmatprep.subr.mxu0 %v397
  %2349 = vmatpush1.msra.mxu0 %v396
  %2350 = vmatprep.subr.mxu0 %v401
  %2351 = vmatpush1.msra.mxu0 %v400
  %2352 = vmatprep.subr.mxu0 %v405
  %2353 = vmatpush1.msra.mxu0 %v404
  %2354 = vmatprep.subr.mxu0 %v409
  %2355 = vmatpush1.msra.mxu0 %v408
  %2356 = vmatprep.subr.mxu0 %v413
  %2357 = vmatpush1.msra.mxu0 %v412
  %2358 = vmatprep.subr.mxu0 %v417
  %2359 = vmatpush1.msra.mxu0 %v416
  %2360 = vmatprep.mubr.f32.mxu0 %v2124
  %2361 = vmatmul.mubr.f32.gmra.mrb[0].mxu0 %v22
  %v2362 = vpop.f32.mrb[0].mxu0
  %v2363 = vadd.f32 %v2292, %v2362
  %v2364 = vpop.f32.mrb[0].mxu0
  %v2365 = vadd.f32 %v2294, %v2364
  %2366 = vdwg.mxu0
  %2367 = vmatprep.subr.mxu0 %v421
  %2368 = vmatpush1.msra.mxu0 %v420
  %2369 = vmatprep.subr.mxu0 %v425
  %2370 = vmatpush1.msra.mxu0 %v424
  %2371 = vmatprep.subr.mxu0 %v429
  %2372 = vmatpush1.msra.mxu0 %v428
  %2373 = vmatprep.subr.mxu0 %v433
  %2374 = vmatpush1.msra.mxu0 %v432
  %2375 = vmatprep.subr.mxu0 %v437
  %2376 = vmatpush1.msra.mxu0 %v436
  %2377 = vmatprep.subr.mxu0 %v441
  %2378 = vmatpush1.msra.mxu0 %v440
  %2379 = vmatprep.subr.mxu0 %v445
  %2380 = vmatpush1.msra.mxu0 %v444
  %2381 = vmatprep.subr.mxu0 %v449
  %2382 = vmatpush1.msra.mxu0 %v448
  %2383 = vmatprep.subr.mxu0 %v453
  %2384 = vmatpush1.msra.mxu0 %v452
  %2385 = vmatprep.subr.mxu0 %v457
  %2386 = vmatpush1.msra.mxu0 %v456
  %2387 = vmatprep.subr.mxu0 %v461
  %2388 = vmatpush1.msra.mxu0 %v460
  %2389 = vmatprep.subr.mxu0 %v465
  %2390 = vmatpush1.msra.mxu0 %v464
  %2391 = vmatprep.subr.mxu0 %v469
  %2392 = vmatpush1.msra.mxu0 %v468
  %2393 = vmatprep.subr.mxu0 %v473
  %2394 = vmatpush1.msra.mxu0 %v472
  %2395 = vmatprep.subr.mxu0 %v477
  %2396 = vmatpush1.msra.mxu0 %v476
  %2397 = vmatprep.subr.mxu0 %v481
  %2398 = vmatpush1.msra.mxu0 %v480
  %2399 = vmatprep.subr.mxu0 %v485
  %2400 = vmatpush1.msra.mxu0 %v484
  %2401 = vmatprep.subr.mxu0 %v489
  %2402 = vmatpush1.msra.mxu0 %v488
  %2403 = vmatprep.subr.mxu0 %v493
  %2404 = vmatpush1.msra.mxu0 %v492
  %2405 = vmatprep.subr.mxu0 %v497
  %2406 = vmatpush1.msra.mxu0 %v496
  %2407 = vmatprep.subr.mxu0 %v501
  %2408 = vmatpush1.msra.mxu0 %v500
  %2409 = vmatprep.subr.mxu0 %v505
  %2410 = vmatpush1.msra.mxu0 %v504
  %2411 = vmatprep.subr.mxu0 %v509
  %2412 = vmatpush1.msra.mxu0 %v508
  %2413 = vmatprep.subr.mxu0 %v513
  %2414 = vmatpush1.msra.mxu0 %v512
  %2415 = vmatprep.subr.mxu0 %v517
  %2416 = vmatpush1.msra.mxu0 %v516
  %2417 = vmatprep.subr.mxu0 %v521
  %2418 = vmatpush1.msra.mxu0 %v520
  %2419 = vmatprep.subr.mxu0 %v525
  %2420 = vmatpush1.msra.mxu0 %v524
  %2421 = vmatprep.subr.mxu0 %v529
  %2422 = vmatpush1.msra.mxu0 %v528
  %2423 = vmatprep.subr.mxu0 %v533
  %2424 = vmatpush1.msra.mxu0 %v532
  %2425 = vmatprep.subr.mxu0 %v537
  %2426 = vmatpush1.msra.mxu0 %v536
  %2427 = vmatprep.subr.mxu0 %v541
  %2428 = vmatpush1.msra.mxu0 %v540
  %2429 = vmatprep.subr.mxu0 %v545
  %2430 = vmatpush1.msra.mxu0 %v544
  %2431 = vmatprep.mubr.f32.mxu0 %v2125
  %2432 = vmatmul.mubr.f32.gmra.mrb[0].mxu0 %v23
  %v2433 = vpop.f32.mrb[0].mxu0
  %v2434 = vadd.f32 %v2363, %v2433
  %v2435 = vpop.f32.mrb[0].mxu0
  %v2436 = vadd.f32 %v2365, %v2435
  %2437 = vdwg.mxu0
  %2438 = vmatprep.subr.mxu0 %v549
  %2439 = vmatpush1.msra.mxu0 %v548
  %2440 = vmatprep.subr.mxu0 %v553
  %2441 = vmatpush1.msra.mxu0 %v552
  %2442 = vmatprep.subr.mxu0 %v557
  %2443 = vmatpush1.msra.mxu0 %v556
  %2444 = vmatprep.subr.mxu0 %v561
  %2445 = vmatpush1.msra.mxu0 %v560
  %2446 = vmatprep.subr.mxu0 %v565
  %2447 = vmatpush1.msra.mxu0 %v564
  %2448 = vmatprep.subr.mxu0 %v569
  %2449 = vmatpush1.msra.mxu0 %v568
  %2450 = vmatprep.subr.mxu0 %v573
  %2451 = vmatpush1.msra.mxu0 %v572
  %2452 = vmatprep.subr.mxu0 %v577
  %2453 = vmatpush1.msra.mxu0 %v576
  %2454 = vmatprep.subr.mxu0 %v581
  %2455 = vmatpush1.msra.mxu0 %v580
  %2456 = vmatprep.subr.mxu0 %v585
  %2457 = vmatpush1.msra.mxu0 %v584
  %2458 = vmatprep.subr.mxu0 %v589
  %2459 = vmatpush1.msra.mxu0 %v588
  %2460 = vmatprep.subr.mxu0 %v593
  %2461 = vmatpush1.msra.mxu0 %v592
  %2462 = vmatprep.subr.mxu0 %v597
  %2463 = vmatpush1.msra.mxu0 %v596
  %2464 = vmatprep.subr.mxu0 %v601
  %2465 = vmatpush1.msra.mxu0 %v600
  %2466 = vmatprep.subr.mxu0 %v605
  %2467 = vmatpush1.msra.mxu0 %v604
  %2468 = vmatprep.subr.mxu0 %v609
  %2469 = vmatpush1.msra.mxu0 %v608
  %2470 = vmatprep.subr.mxu0 %v613
  %2471 = vmatpush1.msra.mxu0 %v612
  %2472 = vmatprep.subr.mxu0 %v617
  %2473 = vmatpush1.msra.mxu0 %v616
  %2474 = vmatprep.subr.mxu0 %v621
  %2475 = vmatpush1.msra.mxu0 %v620
  %2476 = vmatprep.subr.mxu0 %v625
  %2477 = vmatpush1.msra.mxu0 %v624
  %2478 = vmatprep.subr.mxu0 %v629
  %2479 = vmatpush1.msra.mxu0 %v628
  %2480 = vmatprep.subr.mxu0 %v633
  %2481 = vmatpush1.msra.mxu0 %v632
  %2482 = vmatprep.subr.mxu0 %v637
  %2483 = vmatpush1.msra.mxu0 %v636
  %2484 = vmatprep.subr.mxu0 %v641
  %2485 = vmatpush1.msra.mxu0 %v640
  %2486 = vmatprep.subr.mxu0 %v645
  %2487 = vmatpush1.msra.mxu0 %v644
  %2488 = vmatprep.subr.mxu0 %v649
  %2489 = vmatpush1.msra.mxu0 %v648
  %2490 = vmatprep.subr.mxu0 %v653
  %2491 = vmatpush1.msra.mxu0 %v652
  %2492 = vmatprep.subr.mxu0 %v657
  %2493 = vmatpush1.msra.mxu0 %v656
  %2494 = vmatprep.subr.mxu0 %v661
  %2495 = vmatpush1.msra.mxu0 %v660
  %2496 = vmatprep.subr.mxu0 %v665
  %2497 = vmatpush1.msra.mxu0 %v664
  %2498 = vmatprep.subr.mxu0 %v669
  %2499 = vmatpush1.msra.mxu0 %v668
  %2500 = vmatprep.subr.mxu0 %v673
  %2501 = vmatpush1.msra.mxu0 %v672
  %2502 = vmatprep.mubr.f32.mxu0 %v2126
  %2503 = vmatmul.mubr.f32.gmra.mrb[0].mxu0 %v24
  %v2504 = vpop.f32.mrb[0].mxu0
  %v2505 = vadd.f32 %v2434, %v2504
  %v2506 = vpop.f32.mrb[0].mxu0
  %v2507 = vadd.f32 %v2436, %v2506
  %2508 = vdwg.mxu0
  %2509 = vmatprep.subr.mxu0 %v677
  %2510 = vmatpush1.msra.mxu0 %v676
  %2511 = vmatprep.subr.mxu0 %v681
  %2512 = vmatpush1.msra.mxu0 %v680
  %2513 = vmatprep.subr.mxu0 %v685
  %2514 = vmatpush1.msra.mxu0 %v684
  %2515 = vmatprep.subr.mxu0 %v689
  %2516 = vmatpush1.msra.mxu0 %v688
  %2517 = vmatprep.subr.mxu0 %v693
  %2518 = vmatpush1.msra.mxu0 %v692
  %2519 = vmatprep.subr.mxu0 %v697
  %2520 = vmatpush1.msra.mxu0 %v696
  %2521 = vmatprep.subr.mxu0 %v701
  %2522 = vmatpush1.msra.mxu0 %v700
  %2523 = vmatprep.subr.mxu0 %v705
  %2524 = vmatpush1.msra.mxu0 %v704
  %2525 = vmatprep.subr.mxu0 %v709
  %2526 = vmatpush1.msra.mxu0 %v708
  %2527 = vmatprep.subr.mxu0 %v713
  %2528 = vmatpush1.msra.mxu0 %v712
  %2529 = vmatprep.subr.mxu0 %v717
  %2530 = vmatpush1.msra.mxu0 %v716
  %2531 = vmatprep.subr.mxu0 %v721
  %2532 = vmatpush1.msra.mxu0 %v720
  %2533 = vmatprep.subr.mxu0 %v725
  %2534 = vmatpush1.msra.mxu0 %v724
  %2535 = vmatprep.subr.mxu0 %v729
  %2536 = vmatpush1.msra.mxu0 %v728
  %2537 = vmatprep.subr.mxu0 %v733
  %2538 = vmatpush1.msra.mxu0 %v732
  %2539 = vmatprep.subr.mxu0 %v737
  %2540 = vmatpush1.msra.mxu0 %v736
  %2541 = vmatprep.subr.mxu0 %v741
  %2542 = vmatpush1.msra.mxu0 %v740
  %2543 = vmatprep.subr.mxu0 %v745
  %2544 = vmatpush1.msra.mxu0 %v744
  %2545 = vmatprep.subr.mxu0 %v749
  %2546 = vmatpush1.msra.mxu0 %v748
  %2547 = vmatprep.subr.mxu0 %v753
  %2548 = vmatpush1.msra.mxu0 %v752
  %2549 = vmatprep.subr.mxu0 %v757
  %2550 = vmatpush1.msra.mxu0 %v756
  %2551 = vmatprep.subr.mxu0 %v761
  %2552 = vmatpush1.msra.mxu0 %v760
  %2553 = vmatprep.subr.mxu0 %v765
  %2554 = vmatpush1.msra.mxu0 %v764
  %2555 = vmatprep.subr.mxu0 %v769
  %2556 = vmatpush1.msra.mxu0 %v768
  %2557 = vmatprep.subr.mxu0 %v773
  %2558 = vmatpush1.msra.mxu0 %v772
  %2559 = vmatprep.subr.mxu0 %v777
  %2560 = vmatpush1.msra.mxu0 %v776
  %2561 = vmatprep.subr.mxu0 %v781
  %2562 = vmatpush1.msra.mxu0 %v780
  %2563 = vmatprep.subr.mxu0 %v785
  %2564 = vmatpush1.msra.mxu0 %v784
  %2565 = vmatprep.subr.mxu0 %v789
  %2566 = vmatpush1.msra.mxu0 %v788
  %2567 = vmatprep.subr.mxu0 %v793
  %2568 = vmatpush1.msra.mxu0 %v792
  %2569 = vmatprep.subr.mxu0 %v797
  %2570 = vmatpush1.msra.mxu0 %v796
  %2571 = vmatprep.subr.mxu0 %v801
  %2572 = vmatpush1.msra.mxu0 %v800
  %2573 = vmatprep.mubr.f32.mxu0 %v2127
  %2574 = vmatmul.mubr.f32.gmra.mrb[0].mxu0 %v25
  %v2575 = vpop.f32.mrb[0].mxu0
  %v2576 = vadd.f32 %v2505, %v2575
  %v2577 = vpop.f32.mrb[0].mxu0
  %v2578 = vadd.f32 %v2507, %v2577
  %2579 = vdwg.mxu0
  %2580 = vmatprep.subr.mxu0 %v805
  %2581 = vmatpush1.msra.mxu0 %v804
  %2582 = vmatprep.subr.mxu0 %v809
  %2583 = vmatpush1.msra.mxu0 %v808
  %2584 = vmatprep.subr.mxu0 %v813
  %2585 = vmatpush1.msra.mxu0 %v812
  %2586 = vmatprep.subr.mxu0 %v817
  %2587 = vmatpush1.msra.mxu0 %v816
  %2588 = vmatprep.subr.mxu0 %v821
  %2589 = vmatpush1.msra.mxu0 %v820
  %2590 = vmatprep.subr.mxu0 %v825
  %2591 = vmatpush1.msra.mxu0 %v824
  %2592 = vmatprep.subr.mxu0 %v829
  %2593 = vmatpush1.msra.mxu0 %v828
  %2594 = vmatprep.subr.mxu0 %v833
  %2595 = vmatpush1.msra.mxu0 %v832
  %2596 = vmatprep.subr.mxu0 %v837
  %2597 = vmatpush1.msra.mxu0 %v836
  %2598 = vmatprep.subr.mxu0 %v841
  %2599 = vmatpush1.msra.mxu0 %v840
  %2600 = vmatprep.subr.mxu0 %v845
  %2601 = vmatpush1.msra.mxu0 %v844
  %2602 = vmatprep.subr.mxu0 %v849
  %2603 = vmatpush1.msra.mxu0 %v848
  %2604 = vmatprep.subr.mxu0 %v853
  %2605 = vmatpush1.msra.mxu0 %v852
  %2606 = vmatprep.subr.mxu0 %v857
  %2607 = vmatpush1.msra.mxu0 %v856
  %2608 = vmatprep.subr.mxu0 %v861
  %2609 = vmatpush1.msra.mxu0 %v860
  %2610 = vmatprep.subr.mxu0 %v865
  %2611 = vmatpush1.msra.mxu0 %v864
  %2612 = vmatprep.subr.mxu0 %v869
  %2613 = vmatpush1.msra.mxu0 %v868
  %2614 = vmatprep.subr.mxu0 %v873
  %2615 = vmatpush1.msra.mxu0 %v872
  %2616 = vmatprep.subr.mxu0 %v877
  %2617 = vmatpush1.msra.mxu0 %v876
  %2618 = vmatprep.subr.mxu0 %v881
  %2619 = vmatpush1.msra.mxu0 %v880
  %2620 = vmatprep.subr.mxu0 %v885
  %2621 = vmatpush1.msra.mxu0 %v884
  %2622 = vmatprep.subr.mxu0 %v889
  %2623 = vmatpush1.msra.mxu0 %v888
  %2624 = vmatprep.subr.mxu0 %v893
  %2625 = vmatpush1.msra.mxu0 %v892
  %2626 = vmatprep.subr.mxu0 %v897
  %2627 = vmatpush1.msra.mxu0 %v896
  %2628 = vmatprep.subr.mxu0 %v901
  %2629 = vmatpush1.msra.mxu0 %v900
  %2630 = vmatprep.subr.mxu0 %v905
  %2631 = vmatpush1.msra.mxu0 %v904
  %2632 = vmatprep.subr.mxu0 %v909
  %2633 = vmatpush1.msra.mxu0 %v908
  %2634 = vmatprep.subr.mxu0 %v913
  %2635 = vmatpush1.msra.mxu0 %v912
  %2636 = vmatprep.subr.mxu0 %v917
  %2637 = vmatpush1.msra.mxu0 %v916
  %2638 = vmatprep.subr.mxu0 %v921
  %2639 = vmatpush1.msra.mxu0 %v920
  %2640 = vmatprep.subr.mxu0 %v925
  %2641 = vmatpush1.msra.mxu0 %v924
  %2642 = vmatprep.subr.mxu0 %v929
  %2643 = vmatpush1.msra.mxu0 %v928
  %2644 = vmatprep.mubr.f32.mxu0 %v2128
  %2645 = vmatmul.mubr.f32.gmra.mrb[0].mxu0 %v26
  %v2646 = vpop.f32.mrb[0].mxu0
  %v2647 = vadd.f32 %v2576, %v2646
  %v2648 = vpop.f32.mrb[0].mxu0
  %v2649 = vadd.f32 %v2578, %v2648
  %2650 = vdwg.mxu0
  %2651 = vmatprep.subr.mxu0 %v933
  %2652 = vmatpush1.msra.mxu0 %v932
  %2653 = vmatprep.subr.mxu0 %v937
  %2654 = vmatpush1.msra.mxu0 %v936
  %2655 = vmatprep.subr.mxu0 %v941
  %2656 = vmatpush1.msra.mxu0 %v940
  %2657 = vmatprep.subr.mxu0 %v945
  %2658 = vmatpush1.msra.mxu0 %v944
  %2659 = vmatprep.subr.mxu0 %v949
  %2660 = vmatpush1.msra.mxu0 %v948
  %2661 = vmatprep.subr.mxu0 %v953
  %2662 = vmatpush1.msra.mxu0 %v952
  %2663 = vmatprep.subr.mxu0 %v957
  %2664 = vmatpush1.msra.mxu0 %v956
  %2665 = vmatprep.subr.mxu0 %v961
  %2666 = vmatpush1.msra.mxu0 %v960
  %2667 = vmatprep.subr.mxu0 %v965
  %2668 = vmatpush1.msra.mxu0 %v964
  %2669 = vmatprep.subr.mxu0 %v969
  %2670 = vmatpush1.msra.mxu0 %v968
  %2671 = vmatprep.subr.mxu0 %v973
  %2672 = vmatpush1.msra.mxu0 %v972
  %2673 = vmatprep.subr.mxu0 %v977
  %2674 = vmatpush1.msra.mxu0 %v976
  %2675 = vmatprep.subr.mxu0 %v981
  %2676 = vmatpush1.msra.mxu0 %v980
  %2677 = vmatprep.subr.mxu0 %v985
  %2678 = vmatpush1.msra.mxu0 %v984
  %2679 = vmatprep.subr.mxu0 %v989
  %2680 = vmatpush1.msra.mxu0 %v988
  %2681 = vmatprep.subr.mxu0 %v993
  %2682 = vmatpush1.msra.mxu0 %v992
  %2683 = vmatprep.subr.mxu0 %v997
  %2684 = vmatpush1.msra.mxu0 %v996
  %2685 = vmatprep.subr.mxu0 %v1001
  %2686 = vmatpush1.msra.mxu0 %v1000
  %2687 = vmatprep.subr.mxu0 %v1005
  %2688 = vmatpush1.msra.mxu0 %v1004
  %2689 = vmatprep.subr.mxu0 %v1009
  %2690 = vmatpush1.msra.mxu0 %v1008
  %2691 = vmatprep.subr.mxu0 %v1013
  %2692 = vmatpush1.msra.mxu0 %v1012
  %2693 = vmatprep.subr.mxu0 %v1017
  %2694 = vmatpush1.msra.mxu0 %v1016
  %2695 = vmatprep.subr.mxu0 %v1021
  %2696 = vmatpush1.msra.mxu0 %v1020
  %2697 = vmatprep.subr.mxu0 %v1025
  %2698 = vmatpush1.msra.mxu0 %v1024
  %2699 = vmatprep.subr.mxu0 %v1029
  %2700 = vmatpush1.msra.mxu0 %v1028
  %2701 = vmatprep.subr.mxu0 %v1033
  %2702 = vmatpush1.msra.mxu0 %v1032
  %2703 = vmatprep.subr.mxu0 %v1037
  %2704 = vmatpush1.msra.mxu0 %v1036
  %2705 = vmatprep.subr.mxu0 %v1041
  %2706 = vmatpush1.msra.mxu0 %v1040
  %2707 = vmatprep.subr.mxu0 %v1045
  %2708 = vmatpush1.msra.mxu0 %v1044
  %2709 = vmatprep.subr.mxu0 %v1049
  %2710 = vmatpush1.msra.mxu0 %v1048
  %2711 = vmatprep.subr.mxu0 %v1053
  %2712 = vmatpush1.msra.mxu0 %v1052
  %2713 = vmatprep.subr.mxu0 %v1057
  %2714 = vmatpush1.msra.mxu0 %v1056
  %2715 = vmatprep.mubr.f32.mxu0 %v2129
  %2716 = vmatmul.mubr.f32.gmra.mrb[0].mxu0 %v27
  %v2717 = vpop.f32.mrb[0].mxu0
  %v2718 = vadd.f32 %v2647, %v2717
  %v2719 = vpop.f32.mrb[0].mxu0
  %v2720 = vadd.f32 %v2649, %v2719
  %2721 = vdwg.mxu0
  %2722 = vmatprep.subr.mxu0 %v1061
  %2723 = vmatpush1.msra.mxu0 %v1060
  %2724 = vmatprep.subr.mxu0 %v1065
  %2725 = vmatpush1.msra.mxu0 %v1064
  %2726 = vmatprep.subr.mxu0 %v1069
  %2727 = vmatpush1.msra.mxu0 %v1068
  %2728 = vmatprep.subr.mxu0 %v1073
  %2729 = vmatpush1.msra.mxu0 %v1072
  %2730 = vmatprep.subr.mxu0 %v1077
  %2731 = vmatpush1.msra.mxu0 %v1076
  %2732 = vmatprep.subr.mxu0 %v1081
  %2733 = vmatpush1.msra.mxu0 %v1080
  %2734 = vmatprep.subr.mxu0 %v1085
  %2735 = vmatpush1.msra.mxu0 %v1084
  %2736 = vmatprep.subr.mxu0 %v1089
  %2737 = vmatpush1.msra.mxu0 %v1088
  %2738 = vmatprep.subr.mxu0 %v1093
  %2739 = vmatpush1.msra.mxu0 %v1092
  %2740 = vmatprep.subr.mxu0 %v1097
  %2741 = vmatpush1.msra.mxu0 %v1096
  %2742 = vmatprep.subr.mxu0 %v1101
  %2743 = vmatpush1.msra.mxu0 %v1100
  %2744 = vmatprep.subr.mxu0 %v1105
  %2745 = vmatpush1.msra.mxu0 %v1104
  %2746 = vmatprep.subr.mxu0 %v1109
  %2747 = vmatpush1.msra.mxu0 %v1108
  %2748 = vmatprep.subr.mxu0 %v1113
  %2749 = vmatpush1.msra.mxu0 %v1112
  %2750 = vmatprep.subr.mxu0 %v1117
  %2751 = vmatpush1.msra.mxu0 %v1116
  %2752 = vmatprep.subr.mxu0 %v1121
  %2753 = vmatpush1.msra.mxu0 %v1120
  %2754 = vmatprep.subr.mxu0 %v1125
  %2755 = vmatpush1.msra.mxu0 %v1124
  %2756 = vmatprep.subr.mxu0 %v1129
  %2757 = vmatpush1.msra.mxu0 %v1128
  %2758 = vmatprep.subr.mxu0 %v1133
  %2759 = vmatpush1.msra.mxu0 %v1132
  %2760 = vmatprep.subr.mxu0 %v1137
  %2761 = vmatpush1.msra.mxu0 %v1136
  %2762 = vmatprep.subr.mxu0 %v1141
  %2763 = vmatpush1.msra.mxu0 %v1140
  %2764 = vmatprep.subr.mxu0 %v1145
  %2765 = vmatpush1.msra.mxu0 %v1144
  %2766 = vmatprep.subr.mxu0 %v1149
  %2767 = vmatpush1.msra.mxu0 %v1148
  %2768 = vmatprep.subr.mxu0 %v1153
  %2769 = vmatpush1.msra.mxu0 %v1152
  %2770 = vmatprep.subr.mxu0 %v1157
  %2771 = vmatpush1.msra.mxu0 %v1156
  %2772 = vmatprep.subr.mxu0 %v1161
  %2773 = vmatpush1.msra.mxu0 %v1160
  %2774 = vmatprep.subr.mxu0 %v1165
  %2775 = vmatpush1.msra.mxu0 %v1164
  %2776 = vmatprep.subr.mxu0 %v1169
  %2777 = vmatpush1.msra.mxu0 %v1168
  %2778 = vmatprep.subr.mxu0 %v1173
  %2779 = vmatpush1.msra.mxu0 %v1172
  %2780 = vmatprep.subr.mxu0 %v1177
  %2781 = vmatpush1.msra.mxu0 %v1176
  %2782 = vmatprep.subr.mxu0 %v1181
  %2783 = vmatpush1.msra.mxu0 %v1180
  %2784 = vmatprep.subr.mxu0 %v1185
  %2785 = vmatpush1.msra.mxu0 %v1184
  %2786 = vmatprep.mubr.f32.mxu0 %v2130
  %2787 = vmatmul.mubr.f32.gmra.mrb[0].mxu0 %v28
  %v2788 = vpop.f32.mrb[0].mxu0
  %v2789 = vadd.f32 %v2718, %v2788
  %v2790 = vpop.f32.mrb[0].mxu0
  %v2791 = vadd.f32 %v2720, %v2790
  %2792 = vdwg.mxu0
  %2793 = vmatprep.subr.mxu0 %v1189
  %2794 = vmatpush1.msra.mxu0 %v1188
  %2795 = vmatprep.subr.mxu0 %v1193
  %2796 = vmatpush1.msra.mxu0 %v1192
  %2797 = vmatprep.subr.mxu0 %v1197
  %2798 = vmatpush1.msra.mxu0 %v1196
  %2799 = vmatprep.subr.mxu0 %v1201
  %2800 = vmatpush1.msra.mxu0 %v1200
  %2801 = vmatprep.subr.mxu0 %v1205
  %2802 = vmatpush1.msra.mxu0 %v1204
  %2803 = vmatprep.subr.mxu0 %v1209
  %2804 = vmatpush1.msra.mxu0 %v1208
  %2805 = vmatprep.subr.mxu0 %v1213
  %2806 = vmatpush1.msra.mxu0 %v1212
  %2807 = vmatprep.subr.mxu0 %v1217
  %2808 = vmatpush1.msra.mxu0 %v1216
  %2809 = vmatprep.subr.mxu0 %v1221
  %2810 = vmatpush1.msra.mxu0 %v1220
  %2811 = vmatprep.subr.mxu0 %v1225
  %2812 = vmatpush1.msra.mxu0 %v1224
  %2813 = vmatprep.subr.mxu0 %v1229
  %2814 = vmatpush1.msra.mxu0 %v1228
  %2815 = vmatprep.subr.mxu0 %v1233
  %2816 = vmatpush1.msra.mxu0 %v1232
  %2817 = vmatprep.subr.mxu0 %v1237
  %2818 = vmatpush1.msra.mxu0 %v1236
  %2819 = vmatprep.subr.mxu0 %v1241
  %2820 = vmatpush1.msra.mxu0 %v1240
  %2821 = vmatprep.subr.mxu0 %v1245
  %2822 = vmatpush1.msra.mxu0 %v1244
  %2823 = vmatprep.subr.mxu0 %v1249
  %2824 = vmatpush1.msra.mxu0 %v1248
  %2825 = vmatprep.subr.mxu0 %v1253
  %2826 = vmatpush1.msra.mxu0 %v1252
  %2827 = vmatprep.subr.mxu0 %v1257
  %2828 = vmatpush1.msra.mxu0 %v1256
  %2829 = vmatprep.subr.mxu0 %v1261
  %2830 = vmatpush1.msra.mxu0 %v1260
  %2831 = vmatprep.subr.mxu0 %v1265
  %2832 = vmatpush1.msra.mxu0 %v1264
  %2833 = vmatprep.subr.mxu0 %v1269
  %2834 = vmatpush1.msra.mxu0 %v1268
  %2835 = vmatprep.subr.mxu0 %v1273
  %2836 = vmatpush1.msra.mxu0 %v1272
  %2837 = vmatprep.subr.mxu0 %v1277
  %2838 = vmatpush1.msra.mxu0 %v1276
  %2839 = vmatprep.subr.mxu0 %v1281
  %2840 = vmatpush1.msra.mxu0 %v1280
  %2841 = vmatprep.subr.mxu0 %v1285
  %2842 = vmatpush1.msra.mxu0 %v1284
  %2843 = vmatprep.subr.mxu0 %v1289
  %2844 = vmatpush1.msra.mxu0 %v1288
  %2845 = vmatprep.subr.mxu0 %v1293
  %2846 = vmatpush1.msra.mxu0 %v1292
  %2847 = vmatprep.subr.mxu0 %v1297
  %2848 = vmatpush1.msra.mxu0 %v1296
  %2849 = vmatprep.subr.mxu0 %v1301
  %2850 = vmatpush1.msra.mxu0 %v1300
  %2851 = vmatprep.subr.mxu0 %v1305
  %2852 = vmatpush1.msra.mxu0 %v1304
  %2853 = vmatprep.subr.mxu0 %v1309
  %2854 = vmatpush1.msra.mxu0 %v1308
  %2855 = vmatprep.subr.mxu0 %v1313
  %2856 = vmatpush1.msra.mxu0 %v1312
  %2857 = vmatprep.mubr.f32.mxu0 %v2131
  %2858 = vmatmul.mubr.f32.gmra.mrb[0].mxu0 %v29
  %v2859 = vpop.f32.mrb[0].mxu0
  %v2860 = vadd.f32 %v2789, %v2859
  %v2861 = vpop.f32.mrb[0].mxu0
  %v2862 = vadd.f32 %v2791, %v2861
  %2863 = vdwg.mxu0
  %2864 = vmatprep.subr.mxu0 %v1317
  %2865 = vmatpush1.msra.mxu0 %v1316
  %2866 = vmatprep.subr.mxu0 %v1321
  %2867 = vmatpush1.msra.mxu0 %v1320
  %2868 = vmatprep.subr.mxu0 %v1325
  %2869 = vmatpush1.msra.mxu0 %v1324
  %2870 = vmatprep.subr.mxu0 %v1329
  %2871 = vmatpush1.msra.mxu0 %v1328
  %2872 = vmatprep.subr.mxu0 %v1333
  %2873 = vmatpush1.msra.mxu0 %v1332
  %2874 = vmatprep.subr.mxu0 %v1337
  %2875 = vmatpush1.msra.mxu0 %v1336
  %2876 = vmatprep.subr.mxu0 %v1341
  %2877 = vmatpush1.msra.mxu0 %v1340
  %2878 = vmatprep.subr.mxu0 %v1345
  %2879 = vmatpush1.msra.mxu0 %v1344
  %2880 = vmatprep.subr.mxu0 %v1349
  %2881 = vmatpush1.msra.mxu0 %v1348
  %2882 = vmatprep.subr.mxu0 %v1353
  %2883 = vmatpush1.msra.mxu0 %v1352
  %2884 = vmatprep.subr.mxu0 %v1357
  %2885 = vmatpush1.msra.mxu0 %v1356
  %2886 = vmatprep.subr.mxu0 %v1361
  %2887 = vmatpush1.msra.mxu0 %v1360
  %2888 = vmatprep.subr.mxu0 %v1365
  %2889 = vmatpush1.msra.mxu0 %v1364
  %2890 = vmatprep.subr.mxu0 %v1369
  %2891 = vmatpush1.msra.mxu0 %v1368
  %2892 = vmatprep.subr.mxu0 %v1373
  %2893 = vmatpush1.msra.mxu0 %v1372
  %2894 = vmatprep.subr.mxu0 %v1377
  %2895 = vmatpush1.msra.mxu0 %v1376
  %2896 = vmatprep.subr.mxu0 %v1381
  %2897 = vmatpush1.msra.mxu0 %v1380
  %2898 = vmatprep.subr.mxu0 %v1385
  %2899 = vmatpush1.msra.mxu0 %v1384
  %2900 = vmatprep.subr.mxu0 %v1389
  %2901 = vmatpush1.msra.mxu0 %v1388
  %2902 = vmatprep.subr.mxu0 %v1393
  %2903 = vmatpush1.msra.mxu0 %v1392
  %2904 = vmatprep.subr.mxu0 %v1397
  %2905 = vmatpush1.msra.mxu0 %v1396
  %2906 = vmatprep.subr.mxu0 %v1401
  %2907 = vmatpush1.msra.mxu0 %v1400
  %2908 = vmatprep.subr.mxu0 %v1405
  %2909 = vmatpush1.msra.mxu0 %v1404
  %2910 = vmatprep.subr.mxu0 %v1409
  %2911 = vmatpush1.msra.mxu0 %v1408
  %2912 = vmatprep.subr.mxu0 %v1413
  %2913 = vmatpush1.msra.mxu0 %v1412
  %2914 = vmatprep.subr.mxu0 %v1417
  %2915 = vmatpush1.msra.mxu0 %v1416
  %2916 = vmatprep.subr.mxu0 %v1421
  %2917 = vmatpush1.msra.mxu0 %v1420
  %2918 = vmatprep.subr.mxu0 %v1425
  %2919 = vmatpush1.msra.mxu0 %v1424
  %2920 = vmatprep.subr.mxu0 %v1429
  %2921 = vmatpush1.msra.mxu0 %v1428
  %2922 = vmatprep.subr.mxu0 %v1433
  %2923 = vmatpush1.msra.mxu0 %v1432
  %2924 = vmatprep.subr.mxu0 %v1437
  %2925 = vmatpush1.msra.mxu0 %v1436
  %2926 = vmatprep.subr.mxu0 %v1441
  %2927 = vmatpush1.msra.mxu0 %v1440
  %2928 = vmatprep.mubr.f32.mxu0 %v2132
  %2929 = vmatmul.mubr.f32.gmra.mrb[0].mxu0 %v30
  %v2930 = vpop.f32.mrb[0].mxu0
  %v2931 = vadd.f32 %v2860, %v2930
  %v2932 = vpop.f32.mrb[0].mxu0
  %v2933 = vadd.f32 %v2862, %v2932
  %2934 = vdwg.mxu0
  %2935 = vmatprep.subr.mxu0 %v1445
  %2936 = vmatpush1.msra.mxu0 %v1444
  %2937 = vmatprep.subr.mxu0 %v1449
  %2938 = vmatpush1.msra.mxu0 %v1448
  %2939 = vmatprep.subr.mxu0 %v1453
  %2940 = vmatpush1.msra.mxu0 %v1452
  %2941 = vmatprep.subr.mxu0 %v1457
  %2942 = vmatpush1.msra.mxu0 %v1456
  %2943 = vmatprep.subr.mxu0 %v1461
  %2944 = vmatpush1.msra.mxu0 %v1460
  %2945 = vmatprep.subr.mxu0 %v1465
  %2946 = vmatpush1.msra.mxu0 %v1464
  %2947 = vmatprep.subr.mxu0 %v1469
  %2948 = vmatpush1.msra.mxu0 %v1468
  %2949 = vmatprep.subr.mxu0 %v1473
  %2950 = vmatpush1.msra.mxu0 %v1472
  %2951 = vmatprep.subr.mxu0 %v1477
  %2952 = vmatpush1.msra.mxu0 %v1476
  %2953 = vmatprep.subr.mxu0 %v1481
  %2954 = vmatpush1.msra.mxu0 %v1480
  %2955 = vmatprep.subr.mxu0 %v1485
  %2956 = vmatpush1.msra.mxu0 %v1484
  %2957 = vmatprep.subr.mxu0 %v1489
  %2958 = vmatpush1.msra.mxu0 %v1488
  %2959 = vmatprep.subr.mxu0 %v1493
  %2960 = vmatpush1.msra.mxu0 %v1492
  %2961 = vmatprep.subr.mxu0 %v1497
  %2962 = vmatpush1.msra.mxu0 %v1496
  %2963 = vmatprep.subr.mxu0 %v1501
  %2964 = vmatpush1.msra.mxu0 %v1500
  %2965 = vmatprep.subr.mxu0 %v1505
  %2966 = vmatpush1.msra.mxu0 %v1504
  %2967 = vmatprep.subr.mxu0 %v1509
  %2968 = vmatpush1.msra.mxu0 %v1508
  %2969 = vmatprep.subr.mxu0 %v1513
  %2970 = vmatpush1.msra.mxu0 %v1512
  %2971 = vmatprep.subr.mxu0 %v1517
  %2972 = vmatpush1.msra.mxu0 %v1516
  %2973 = vmatprep.subr.mxu0 %v1521
  %2974 = vmatpush1.msra.mxu0 %v1520
  %2975 = vmatprep.subr.mxu0 %v1525
  %2976 = vmatpush1.msra.mxu0 %v1524
  %2977 = vmatprep.subr.mxu0 %v1529
  %2978 = vmatpush1.msra.mxu0 %v1528
  %2979 = vmatprep.subr.mxu0 %v1533
  %2980 = vmatpush1.msra.mxu0 %v1532
  %2981 = vmatprep.subr.mxu0 %v1537
  %2982 = vmatpush1.msra.mxu0 %v1536
  %2983 = vmatprep.subr.mxu0 %v1541
  %2984 = vmatpush1.msra.mxu0 %v1540
  %2985 = vmatprep.subr.mxu0 %v1545
  %2986 = vmatpush1.msra.mxu0 %v1544
  %2987 = vmatprep.subr.mxu0 %v1549
  %2988 = vmatpush1.msra.mxu0 %v1548
  %2989 = vmatprep.subr.mxu0 %v1553
  %2990 = vmatpush1.msra.mxu0 %v1552
  %2991 = vmatprep.subr.mxu0 %v1557
  %2992 = vmatpush1.msra.mxu0 %v1556
  %2993 = vmatprep.subr.mxu0 %v1561
  %2994 = vmatpush1.msra.mxu0 %v1560
  %2995 = vmatprep.subr.mxu0 %v1565
  %2996 = vmatpush1.msra.mxu0 %v1564
  %2997 = vmatprep.subr.mxu0 %v1569
  %2998 = vmatpush1.msra.mxu0 %v1568
  %2999 = vmatprep.mubr.f32.mxu0 %v2133
  %3000 = vmatmul.mubr.f32.gmra.mrb[0].mxu0 %v31
  %v3001 = vpop.f32.mrb[0].mxu0
  %v3002 = vadd.f32 %v2931, %v3001
  %v3003 = vpop.f32.mrb[0].mxu0
  %v3004 = vadd.f32 %v2933, %v3003
  %3005 = vdwg.mxu0
  %3006 = vmatprep.subr.mxu0 %v1573
  %3007 = vmatpush1.msra.mxu0 %v1572
  %3008 = vmatprep.subr.mxu0 %v1577
  %3009 = vmatpush1.msra.mxu0 %v1576
  %3010 = vmatprep.subr.mxu0 %v1581
  %3011 = vmatpush1.msra.mxu0 %v1580
  %3012 = vmatprep.subr.mxu0 %v1585
  %3013 = vmatpush1.msra.mxu0 %v1584
  %3014 = vmatprep.subr.mxu0 %v1589
  %3015 = vmatpush1.msra.mxu0 %v1588
  %3016 = vmatprep.subr.mxu0 %v1593
  %3017 = vmatpush1.msra.mxu0 %v1592
  %3018 = vmatprep.subr.mxu0 %v1597
  %3019 = vmatpush1.msra.mxu0 %v1596
  %3020 = vmatprep.subr.mxu0 %v1601
  %3021 = vmatpush1.msra.mxu0 %v1600
  %3022 = vmatprep.subr.mxu0 %v1605
  %3023 = vmatpush1.msra.mxu0 %v1604
  %3024 = vmatprep.subr.mxu0 %v1609
  %3025 = vmatpush1.msra.mxu0 %v1608
  %3026 = vmatprep.subr.mxu0 %v1613
  %3027 = vmatpush1.msra.mxu0 %v1612
  %3028 = vmatprep.subr.mxu0 %v1617
  %3029 = vmatpush1.msra.mxu0 %v1616
  %3030 = vmatprep.subr.mxu0 %v1621
  %3031 = vmatpush1.msra.mxu0 %v1620
  %3032 = vmatprep.subr.mxu0 %v1625
  %3033 = vmatpush1.msra.mxu0 %v1624
  %3034 = vmatprep.subr.mxu0 %v1629
  %3035 = vmatpush1.msra.mxu0 %v1628
  %3036 = vmatprep.subr.mxu0 %v1633
  %3037 = vmatpush1.msra.mxu0 %v1632
  %3038 = vmatprep.subr.mxu0 %v1637
  %3039 = vmatpush1.msra.mxu0 %v1636
  %3040 = vmatprep.subr.mxu0 %v1641
  %3041 = vmatpush1.msra.mxu0 %v1640
  %3042 = vmatprep.subr.mxu0 %v1645
  %3043 = vmatpush1.msra.mxu0 %v1644
  %3044 = vmatprep.subr.mxu0 %v1649
  %3045 = vmatpush1.msra.mxu0 %v1648
  %3046 = vmatprep.subr.mxu0 %v1653
  %3047 = vmatpush1.msra.mxu0 %v1652
  %3048 = vmatprep.subr.mxu0 %v1657
  %3049 = vmatpush1.msra.mxu0 %v1656
  %3050 = vmatprep.subr.mxu0 %v1661
  %3051 = vmatpush1.msra.mxu0 %v1660
  %3052 = vmatprep.subr.mxu0 %v1665
  %3053 = vmatpush1.msra.mxu0 %v1664
  %3054 = vmatprep.subr.mxu0 %v1669
  %3055 = vmatpush1.msra.mxu0 %v1668
  %3056 = vmatprep.subr.mxu0 %v1673
  %3057 = vmatpush1.msra.mxu0 %v1672
  %3058 = vmatprep.subr.mxu0 %v1677
  %3059 = vmatpush1.msra.mxu0 %v1676
  %3060 = vmatprep.subr.mxu0 %v1681
  %3061 = vmatpush1.msra.mxu0 %v1680
  %3062 = vmatprep.subr.mxu0 %v1685
  %3063 = vmatpush1.msra.mxu0 %v1684
  %3064 = vmatprep.subr.mxu0 %v1689
  %3065 = vmatpush1.msra.mxu0 %v1688
  %3066 = vmatprep.subr.mxu0 %v1693
  %3067 = vmatpush1.msra.mxu0 %v1692
  %3068 = vmatprep.subr.mxu0 %v1697
  %3069 = vmatpush1.msra.mxu0 %v1696
  %3070 = vmatprep.mubr.f32.mxu0 %v2134
  %3071 = vmatmul.mubr.f32.gmra.mrb[0].mxu0 %v32
  %v3072 = vpop.f32.mrb[0].mxu0
  %v3073 = vadd.f32 %v3002, %v3072
  %v3074 = vpop.f32.mrb[0].mxu0
  %v3075 = vadd.f32 %v3004, %v3074
  %3076 = vdwg.mxu0
  %3077 = vmatprep.subr.mxu0 %v1701
  %3078 = vmatpush1.msra.mxu0 %v1700
  %3079 = vmatprep.subr.mxu0 %v1705
  %3080 = vmatpush1.msra.mxu0 %v1704
  %3081 = vmatprep.subr.mxu0 %v1709
  %3082 = vmatpush1.msra.mxu0 %v1708
  %3083 = vmatprep.subr.mxu0 %v1713
  %3084 = vmatpush1.msra.mxu0 %v1712
  %3085 = vmatprep.subr.mxu0 %v1717
  %3086 = vmatpush1.msra.mxu0 %v1716
  %3087 = vmatprep.subr.mxu0 %v1721
  %3088 = vmatpush1.msra.mxu0 %v1720
  %3089 = vmatprep.subr.mxu0 %v1725
  %3090 = vmatpush1.msra.mxu0 %v1724
  %3091 = vmatprep.subr.mxu0 %v1729
  %3092 = vmatpush1.msra.mxu0 %v1728
  %3093 = vmatprep.subr.mxu0 %v1733
  %3094 = vmatpush1.msra.mxu0 %v1732
  %3095 = vmatprep.subr.mxu0 %v1737
  %3096 = vmatpush1.msra.mxu0 %v1736
  %3097 = vmatprep.subr.mxu0 %v1741
  %3098 = vmatpush1.msra.mxu0 %v1740
  %3099 = vmatprep.subr.mxu0 %v1745
  %3100 = vmatpush1.msra.mxu0 %v1744
  %3101 = vmatprep.subr.mxu0 %v1749
  %3102 = vmatpush1.msra.mxu0 %v1748
  %3103 = vmatprep.subr.mxu0 %v1753
  %3104 = vmatpush1.msra.mxu0 %v1752
  %3105 = vmatprep.subr.mxu0 %v1757
  %3106 = vmatpush1.msra.mxu0 %v1756
  %3107 = vmatprep.subr.mxu0 %v1761
  %3108 = vmatpush1.msra.mxu0 %v1760
  %3109 = vmatprep.subr.mxu0 %v1765
  %3110 = vmatpush1.msra.mxu0 %v1764
  %3111 = vmatprep.subr.mxu0 %v1769
  %3112 = vmatpush1.msra.mxu0 %v1768
  %3113 = vmatprep.subr.mxu0 %v1773
  %3114 = vmatpush1.msra.mxu0 %v1772
  %3115 = vmatprep.subr.mxu0 %v1777
  %3116 = vmatpush1.msra.mxu0 %v1776
  %3117 = vmatprep.subr.mxu0 %v1781
  %3118 = vmatpush1.msra.mxu0 %v1780
  %3119 = vmatprep.subr.mxu0 %v1785
  %3120 = vmatpush1.msra.mxu0 %v1784
  %3121 = vmatprep.subr.mxu0 %v1789
  %3122 = vmatpush1.msra.mxu0 %v1788
  %3123 = vmatprep.subr.mxu0 %v1793
  %3124 = vmatpush1.msra.mxu0 %v1792
  %3125 = vmatprep.subr.mxu0 %v1797
  %3126 = vmatpush1.msra.mxu0 %v1796
  %3127 = vmatprep.subr.mxu0 %v1801
  %3128 = vmatpush1.msra.mxu0 %v1800
  %3129 = vmatprep.subr.mxu0 %v1805
  %3130 = vmatpush1.msra.mxu0 %v1804
  %3131 = vmatprep.subr.mxu0 %v1809
  %3132 = vmatpush1.msra.mxu0 %v1808
  %3133 = vmatprep.subr.mxu0 %v1813
  %3134 = vmatpush1.msra.mxu0 %v1812
  %3135 = vmatprep.subr.mxu0 %v1817
  %3136 = vmatpush1.msra.mxu0 %v1816
  %3137 = vmatprep.subr.mxu0 %v1821
  %3138 = vmatpush1.msra.mxu0 %v1820
  %3139 = vmatprep.subr.mxu0 %v1825
  %3140 = vmatpush1.msra.mxu0 %v1824
  %3141 = vmatprep.mubr.f32.mxu0 %v2135
  %3142 = vmatmul.mubr.f32.gmra.mrb[0].mxu0 %v33
  %v3143 = vpop.f32.mrb[0].mxu0
  %v3144 = vadd.f32 %v3073, %v3143
  %v3145 = vpop.f32.mrb[0].mxu0
  %v3146 = vadd.f32 %v3075, %v3145
  %3147 = vdwg.mxu0
  %3148 = vmatprep.subr.mxu0 %v1829
  %3149 = vmatpush1.msra.mxu0 %v1828
  %3150 = vmatprep.subr.mxu0 %v1833
  %3151 = vmatpush1.msra.mxu0 %v1832
  %3152 = vmatprep.subr.mxu0 %v1837
  %3153 = vmatpush1.msra.mxu0 %v1836
  %3154 = vmatprep.subr.mxu0 %v1841
  %3155 = vmatpush1.msra.mxu0 %v1840
  %3156 = vmatprep.subr.mxu0 %v1845
  %3157 = vmatpush1.msra.mxu0 %v1844
  %3158 = vmatprep.subr.mxu0 %v1849
  %3159 = vmatpush1.msra.mxu0 %v1848
  %3160 = vmatprep.subr.mxu0 %v1853
  %3161 = vmatpush1.msra.mxu0 %v1852
  %3162 = vmatprep.subr.mxu0 %v1857
  %3163 = vmatpush1.msra.mxu0 %v1856
  %3164 = vmatprep.subr.mxu0 %v1861
  %3165 = vmatpush1.msra.mxu0 %v1860
  %3166 = vmatprep.subr.mxu0 %v1865
  %3167 = vmatpush1.msra.mxu0 %v1864
  %3168 = vmatprep.subr.mxu0 %v1869
  %3169 = vmatpush1.msra.mxu0 %v1868
  %3170 = vmatprep.subr.mxu0 %v1873
  %3171 = vmatpush1.msra.mxu0 %v1872
  %3172 = vmatprep.subr.mxu0 %v1877
  %3173 = vmatpush1.msra.mxu0 %v1876
  %3174 = vmatprep.subr.mxu0 %v1881
  %3175 = vmatpush1.msra.mxu0 %v1880
  %3176 = vmatprep.subr.mxu0 %v1885
  %3177 = vmatpush1.msra.mxu0 %v1884
  %3178 = vmatprep.subr.mxu0 %v1889
  %3179 = vmatpush1.msra.mxu0 %v1888
  %3180 = vmatprep.subr.mxu0 %v1893
  %3181 = vmatpush1.msra.mxu0 %v1892
  %3182 = vmatprep.subr.mxu0 %v1897
  %3183 = vmatpush1.msra.mxu0 %v1896
  %3184 = vmatprep.subr.mxu0 %v1901
  %3185 = vmatpush1.msra.mxu0 %v1900
  %3186 = vmatprep.subr.mxu0 %v1905
  %3187 = vmatpush1.msra.mxu0 %v1904
  %3188 = vmatprep.subr.mxu0 %v1909
  %3189 = vmatpush1.msra.mxu0 %v1908
  %3190 = vmatprep.subr.mxu0 %v1913
  %3191 = vmatpush1.msra.mxu0 %v1912
  %3192 = vmatprep.subr.mxu0 %v1917
  %3193 = vmatpush1.msra.mxu0 %v1916
  %3194 = vmatprep.subr.mxu0 %v1921
  %3195 = vmatpush1.msra.mxu0 %v1920
  %3196 = vmatprep.subr.mxu0 %v1925
  %3197 = vmatpush1.msra.mxu0 %v1924
  %3198 = vmatprep.subr.mxu0 %v1929
  %3199 = vmatpush1.msra.mxu0 %v1928
  %3200 = vmatprep.subr.mxu0 %v1933
  %3201 = vmatpush1.msra.mxu0 %v1932
  %3202 = vmatprep.subr.mxu0 %v1937
  %3203 = vmatpush1.msra.mxu0 %v1936
  %3204 = vmatprep.subr.mxu0 %v1941
  %3205 = vmatpush1.msra.mxu0 %v1940
  %3206 = vmatprep.subr.mxu0 %v1945
  %3207 = vmatpush1.msra.mxu0 %v1944
  %3208 = vmatprep.subr.mxu0 %v1949
  %3209 = vmatpush1.msra.mxu0 %v1948
  %3210 = vmatprep.subr.mxu0 %v1953
  %3211 = vmatpush1.msra.mxu0 %v1952
  %3212 = vmatprep.mubr.f32.mxu0 %v2136
  %3213 = vmatmul.mubr.f32.gmra.mrb[0].mxu0 %v34
  %v3214 = vpop.f32.mrb[0].mxu0
  %v3215 = vadd.f32 %v3144, %v3214
  %v3216 = vpop.f32.mrb[0].mxu0
  %v3217 = vadd.f32 %v3146, %v3216
  %3218 = vdwg.mxu0
  %3219 = vmatprep.subr.mxu0 %v1957
  %3220 = vmatpush1.msra.mxu0 %v1956
  %3221 = vmatprep.subr.mxu0 %v1961
  %3222 = vmatpush1.msra.mxu0 %v1960
  %3223 = vmatprep.subr.mxu0 %v1965
  %3224 = vmatpush1.msra.mxu0 %v1964
  %3225 = vmatprep.subr.mxu0 %v1969
  %3226 = vmatpush1.msra.mxu0 %v1968
  %3227 = vmatprep.subr.mxu0 %v1973
  %3228 = vmatpush1.msra.mxu0 %v1972
  %3229 = vmatprep.subr.mxu0 %v1977
  %3230 = vmatpush1.msra.mxu0 %v1976
  %3231 = vmatprep.subr.mxu0 %v1981
  %3232 = vmatpush1.msra.mxu0 %v1980
  %3233 = vmatprep.subr.mxu0 %v1985
  %3234 = vmatpush1.msra.mxu0 %v1984
  %3235 = vmatprep.subr.mxu0 %v1989
  %3236 = vmatpush1.msra.mxu0 %v1988
  %3237 = vmatprep.subr.mxu0 %v1993
  %3238 = vmatpush1.msra.mxu0 %v1992
  %3239 = vmatprep.subr.mxu0 %v1997
  %3240 = vmatpush1.msra.mxu0 %v1996
  %3241 = vmatprep.subr.mxu0 %v2001
  %3242 = vmatpush1.msra.mxu0 %v2000
  %3243 = vmatprep.subr.mxu0 %v2005
  %3244 = vmatpush1.msra.mxu0 %v2004
  %3245 = vmatprep.subr.mxu0 %v2009
  %3246 = vmatpush1.msra.mxu0 %v2008
  %3247 = vmatprep.subr.mxu0 %v2013
  %3248 = vmatpush1.msra.mxu0 %v2012
  %3249 = vmatprep.subr.mxu0 %v2017
  %3250 = vmatpush1.msra.mxu0 %v2016
  %3251 = vmatprep.subr.mxu0 %v2021
  %3252 = vmatpush1.msra.mxu0 %v2020
  %3253 = vmatprep.subr.mxu0 %v2025
  %3254 = vmatpush1.msra.mxu0 %v2024
  %3255 = vmatprep.subr.mxu0 %v2029
  %3256 = vmatpush1.msra.mxu0 %v2028
  %3257 = vmatprep.subr.mxu0 %v2033
  %3258 = vmatpush1.msra.mxu0 %v2032
  %3259 = vmatprep.subr.mxu0 %v2037
  %3260 = vmatpush1.msra.mxu0 %v2036
  %3261 = vmatprep.subr.mxu0 %v2041
  %3262 = vmatpush1.msra.mxu0 %v2040
  %3263 = vmatprep.subr.mxu0 %v2045
  %3264 = vmatpush1.msra.mxu0 %v2044
  %3265 = vmatprep.subr.mxu0 %v2049
  %3266 = vmatpush1.msra.mxu0 %v2048
  %3267 = vmatprep.subr.mxu0 %v2053
  %3268 = vmatpush1.msra.mxu0 %v2052
  %3269 = vmatprep.subr.mxu0 %v2057
  %3270 = vmatpush1.msra.mxu0 %v2056
  %3271 = vmatprep.subr.mxu0 %v2061
  %3272 = vmatpush1.msra.mxu0 %v2060
  %3273 = vmatprep.subr.mxu0 %v2065
  %3274 = vmatpush1.msra.mxu0 %v2064
  %3275 = vmatprep.subr.mxu0 %v2069
  %3276 = vmatpush1.msra.mxu0 %v2068
  %3277 = vmatprep.subr.mxu0 %v2073
  %3278 = vmatpush1.msra.mxu0 %v2072
  %3279 = vmatprep.subr.mxu0 %v2077
  %3280 = vmatpush1.msra.mxu0 %v2076
  %3281 = vmatprep.subr.mxu0 %v2081
  %3282 = vmatpush1.msra.mxu0 %v2080
  %3283 = vmatprep.mubr.f32.mxu0 %v2137
  %3284 = vmatmul.mubr.f32.gmra.mrb[0].mxu0 %v35
  %v3285 = vpop.f32.mrb[0].mxu0
  %v3286 = vadd.f32 %v3215, %v3285
  %v3287 = vpop.f32.mrb[0].mxu0
  %v3288 = vadd.f32 %v3217, %v3287
  %3289 = vdwg.mxu0
  %3290 = vmatprep.subr.mxu0 %v39
  %3291 = vmatpush1.msra.mxu0 %v38
  %3292 = vmatprep.subr.mxu0 %v43
  %3293 = vmatpush1.msra.mxu0 %v42
  %3294 = vmatprep.subr.mxu0 %v47
  %3295 = vmatpush1.msra.mxu0 %v46
  %3296 = vmatprep.subr.mxu0 %v51
  %3297 = vmatpush1.msra.mxu0 %v50
  %3298 = vmatprep.subr.mxu0 %v55
  %3299 = vmatpush1.msra.mxu0 %v54
  %3300 = vmatprep.subr.mxu0 %v59
  %3301 = vmatpush1.msra.mxu0 %v58
  %3302 = vmatprep.subr.mxu0 %v63
  %3303 = vmatpush1.msra.mxu0 %v62
  %3304 = vmatprep.subr.mxu0 %v67
  %3305 = vmatpush1.msra.mxu0 %v66
  %3306 = vmatprep.subr.mxu0 %v71
  %3307 = vmatpush1.msra.mxu0 %v70
  %3308 = vmatprep.subr.mxu0 %v75
  %3309 = vmatpush1.msra.mxu0 %v74
  %3310 = vmatprep.subr.mxu0 %v79
  %3311 = vmatpush1.msra.mxu0 %v78
  %3312 = vmatprep.subr.mxu0 %v83
  %3313 = vmatpush1.msra.mxu0 %v82
  %3314 = vmatprep.subr.mxu0 %v87
  %3315 = vmatpush1.msra.mxu0 %v86
  %3316 = vmatprep.subr.mxu0 %v91
  %3317 = vmatpush1.msra.mxu0 %v90
  %3318 = vmatprep.subr.mxu0 %v95
  %3319 = vmatpush1.msra.mxu0 %v94
  %3320 = vmatprep.subr.mxu0 %v99
  %3321 = vmatpush1.msra.mxu0 %v98
  %3322 = vmatprep.subr.mxu0 %v103
  %3323 = vmatpush1.msra.mxu0 %v102
  %3324 = vmatprep.subr.mxu0 %v107
  %3325 = vmatpush1.msra.mxu0 %v106
  %3326 = vmatprep.subr.mxu0 %v111
  %3327 = vmatpush1.msra.mxu0 %v110
  %3328 = vmatprep.subr.mxu0 %v115
  %3329 = vmatpush1.msra.mxu0 %v114
  %3330 = vmatprep.subr.mxu0 %v119
  %3331 = vmatpush1.msra.mxu0 %v118
  %3332 = vmatprep.subr.mxu0 %v123
  %3333 = vmatpush1.msra.mxu0 %v122
  %3334 = vmatprep.subr.mxu0 %v127
  %3335 = vmatpush1.msra.mxu0 %v126
  %3336 = vmatprep.subr.mxu0 %v131
  %3337 = vmatpush1.msra.mxu0 %v130
  %3338 = vmatprep.subr.mxu0 %v135
  %3339 = vmatpush1.msra.mxu0 %v134
  %3340 = vmatprep.subr.mxu0 %v139
  %3341 = vmatpush1.msra.mxu0 %v138
  %3342 = vmatprep.subr.mxu0 %v143
  %3343 = vmatpush1.msra.mxu0 %v142
  %3344 = vmatprep.subr.mxu0 %v147
  %3345 = vmatpush1.msra.mxu0 %v146
  %3346 = vmatprep.subr.mxu0 %v151
  %3347 = vmatpush1.msra.mxu0 %v150
  %3348 = vmatprep.subr.mxu0 %v155
  %3349 = vmatpush1.msra.mxu0 %v154
  %3350 = vmatprep.subr.mxu0 %v159
  %3351 = vmatpush1.msra.mxu0 %v158
  %3352 = vmatprep.subr.mxu0 %v163
  %3353 = vmatpush1.msra.mxu0 %v162
  %3354 = vmatprep.mubr.f32.mxu0 %v2122
  %3355 = vmatmul.mubr.f32.gmra.mrb[0].mxu0 %v20
  %v3356 = vpop.f32.mrb[0].mxu0
  %v3357 = vadd.f32 %v2097, %v3356
  %v3358 = vpop.f32.mrb[0].mxu0
  %v3359 = vadd.f32 %v2101, %v3358
  %3360 = vdwg.mxu0
  %3361 = vmatprep.subr.mxu0 %v167
  %3362 = vmatpush1.msra.mxu0 %v166
  %3363 = vmatprep.subr.mxu0 %v171
  %3364 = vmatpush1.msra.mxu0 %v170
  %3365 = vmatprep.subr.mxu0 %v175
  %3366 = vmatpush1.msra.mxu0 %v174
  %3367 = vmatprep.subr.mxu0 %v179
  %3368 = vmatpush1.msra.mxu0 %v178
  %3369 = vmatprep.subr.mxu0 %v183
  %3370 = vmatpush1.msra.mxu0 %v182
  %3371 = vmatprep.subr.mxu0 %v187
  %3372 = vmatpush1.msra.mxu0 %v186
  %3373 = vmatprep.subr.mxu0 %v191
  %3374 = vmatpush1.msra.mxu0 %v190
  %3375 = vmatprep.subr.mxu0 %v195
  %3376 = vmatpush1.msra.mxu0 %v194
  %3377 = vmatprep.subr.mxu0 %v199
  %3378 = vmatpush1.msra.mxu0 %v198
  %3379 = vmatprep.subr.mxu0 %v203
  %3380 = vmatpush1.msra.mxu0 %v202
  %3381 = vmatprep.subr.mxu0 %v207
  %3382 = vmatpush1.msra.mxu0 %v206
  %3383 = vmatprep.subr.mxu0 %v211
  %3384 = vmatpush1.msra.mxu0 %v210
  %3385 = vmatprep.subr.mxu0 %v215
  %3386 = vmatpush1.msra.mxu0 %v214
  %3387 = vmatprep.subr.mxu0 %v219
  %3388 = vmatpush1.msra.mxu0 %v218
  %3389 = vmatprep.subr.mxu0 %v223
  %3390 = vmatpush1.msra.mxu0 %v222
  %3391 = vmatprep.subr.mxu0 %v227
  %3392 = vmatpush1.msra.mxu0 %v226
  %3393 = vmatprep.subr.mxu0 %v231
  %3394 = vmatpush1.msra.mxu0 %v230
  %3395 = vmatprep.subr.mxu0 %v235
  %3396 = vmatpush1.msra.mxu0 %v234
  %3397 = vmatprep.subr.mxu0 %v239
  %3398 = vmatpush1.msra.mxu0 %v238
  %3399 = vmatprep.subr.mxu0 %v243
  %3400 = vmatpush1.msra.mxu0 %v242
  %3401 = vmatprep.subr.mxu0 %v247
  %3402 = vmatpush1.msra.mxu0 %v246
  %3403 = vmatprep.subr.mxu0 %v251
  %3404 = vmatpush1.msra.mxu0 %v250
  %3405 = vmatprep.subr.mxu0 %v255
  %3406 = vmatpush1.msra.mxu0 %v254
  %3407 = vmatprep.subr.mxu0 %v259
  %3408 = vmatpush1.msra.mxu0 %v258
  %3409 = vmatprep.subr.mxu0 %v263
  %3410 = vmatpush1.msra.mxu0 %v262
  %3411 = vmatprep.subr.mxu0 %v267
  %3412 = vmatpush1.msra.mxu0 %v266
  %3413 = vmatprep.subr.mxu0 %v271
  %3414 = vmatpush1.msra.mxu0 %v270
  %3415 = vmatprep.subr.mxu0 %v275
  %3416 = vmatpush1.msra.mxu0 %v274
  %3417 = vmatprep.subr.mxu0 %v279
  %3418 = vmatpush1.msra.mxu0 %v278
  %3419 = vmatprep.subr.mxu0 %v283
  %3420 = vmatpush1.msra.mxu0 %v282
  %3421 = vmatprep.subr.mxu0 %v287
  %3422 = vmatpush1.msra.mxu0 %v286
  %3423 = vmatprep.subr.mxu0 %v291
  %3424 = vmatpush1.msra.mxu0 %v290
  %3425 = vmatprep.mubr.f32.mxu0 %v2123
  %3426 = vmatmul.mubr.f32.gmra.mrb[0].mxu0 %v21
  %v3427 = vpop.f32.mrb[0].mxu0
  %v3428 = vadd.f32 %v3357, %v3427
  %v3429 = vpop.f32.mrb[0].mxu0
  %v3430 = vadd.f32 %v3359, %v3429
  %3431 = vdwg.mxu0
  %3432 = vmatprep.subr.mxu0 %v295
  %3433 = vmatpush1.msra.mxu0 %v294
  %3434 = vmatprep.subr.mxu0 %v299
  %3435 = vmatpush1.msra.mxu0 %v298
  %3436 = vmatprep.subr.mxu0 %v303
  %3437 = vmatpush1.msra.mxu0 %v302
  %3438 = vmatprep.subr.mxu0 %v307
  %3439 = vmatpush1.msra.mxu0 %v306
  %3440 = vmatprep.subr.mxu0 %v311
  %3441 = vmatpush1.msra.mxu0 %v310
  %3442 = vmatprep.subr.mxu0 %v315
  %3443 = vmatpush1.msra.mxu0 %v314
  %3444 = vmatprep.subr.mxu0 %v319
  %3445 = vmatpush1.msra.mxu0 %v318
  %3446 = vmatprep.subr.mxu0 %v323
  %3447 = vmatpush1.msra.mxu0 %v322
  %3448 = vmatprep.subr.mxu0 %v327
  %3449 = vmatpush1.msra.mxu0 %v326
  %3450 = vmatprep.subr.mxu0 %v331
  %3451 = vmatpush1.msra.mxu0 %v330
  %3452 = vmatprep.subr.mxu0 %v335
  %3453 = vmatpush1.msra.mxu0 %v334
  %3454 = vmatprep.subr.mxu0 %v339
  %3455 = vmatpush1.msra.mxu0 %v338
  %3456 = vmatprep.subr.mxu0 %v343
  %3457 = vmatpush1.msra.mxu0 %v342
  %3458 = vmatprep.subr.mxu0 %v347
  %3459 = vmatpush1.msra.mxu0 %v346
  %3460 = vmatprep.subr.mxu0 %v351
  %3461 = vmatpush1.msra.mxu0 %v350
  %3462 = vmatprep.subr.mxu0 %v355
  %3463 = vmatpush1.msra.mxu0 %v354
  %3464 = vmatprep.subr.mxu0 %v359
  %3465 = vmatpush1.msra.mxu0 %v358
  %3466 = vmatprep.subr.mxu0 %v363
  %3467 = vmatpush1.msra.mxu0 %v362
  %3468 = vmatprep.subr.mxu0 %v367
  %3469 = vmatpush1.msra.mxu0 %v366
  %3470 = vmatprep.subr.mxu0 %v371
  %3471 = vmatpush1.msra.mxu0 %v370
  %3472 = vmatprep.subr.mxu0 %v375
  %3473 = vmatpush1.msra.mxu0 %v374
  %3474 = vmatprep.subr.mxu0 %v379
  %3475 = vmatpush1.msra.mxu0 %v378
  %3476 = vmatprep.subr.mxu0 %v383
  %3477 = vmatpush1.msra.mxu0 %v382
  %3478 = vmatprep.subr.mxu0 %v387
  %3479 = vmatpush1.msra.mxu0 %v386
  %3480 = vmatprep.subr.mxu0 %v391
  %3481 = vmatpush1.msra.mxu0 %v390
  %3482 = vmatprep.subr.mxu0 %v395
  %3483 = vmatpush1.msra.mxu0 %v394
  %3484 = vmatprep.subr.mxu0 %v399
  %3485 = vmatpush1.msra.mxu0 %v398
  %3486 = vmatprep.subr.mxu0 %v403
  %3487 = vmatpush1.msra.mxu0 %v402
  %3488 = vmatprep.subr.mxu0 %v407
  %3489 = vmatpush1.msra.mxu0 %v406
  %3490 = vmatprep.subr.mxu0 %v411
  %3491 = vmatpush1.msra.mxu0 %v410
  %3492 = vmatprep.subr.mxu0 %v415
  %3493 = vmatpush1.msra.mxu0 %v414
  %3494 = vmatprep.subr.mxu0 %v419
  %3495 = vmatpush1.msra.mxu0 %v418
  %3496 = vmatprep.mubr.f32.mxu0 %v2124
  %3497 = vmatmul.mubr.f32.gmra.mrb[0].mxu0 %v22
  %v3498 = vpop.f32.mrb[0].mxu0
  %v3499 = vadd.f32 %v3428, %v3498
  %v3500 = vpop.f32.mrb[0].mxu0
  %v3501 = vadd.f32 %v3430, %v3500
  %3502 = vdwg.mxu0
  %3503 = vmatprep.subr.mxu0 %v423
  %3504 = vmatpush1.msra.mxu0 %v422
  %3505 = vmatprep.subr.mxu0 %v427
  %3506 = vmatpush1.msra.mxu0 %v426
  %3507 = vmatprep.subr.mxu0 %v431
  %3508 = vmatpush1.msra.mxu0 %v430
  %3509 = vmatprep.subr.mxu0 %v435
  %3510 = vmatpush1.msra.mxu0 %v434
  %3511 = vmatprep.subr.mxu0 %v439
  %3512 = vmatpush1.msra.mxu0 %v438
  %3513 = vmatprep.subr.mxu0 %v443
  %3514 = vmatpush1.msra.mxu0 %v442
  %3515 = vmatprep.subr.mxu0 %v447
  %3516 = vmatpush1.msra.mxu0 %v446
  %3517 = vmatprep.subr.mxu0 %v451
  %3518 = vmatpush1.msra.mxu0 %v450
  %3519 = vmatprep.subr.mxu0 %v455
  %3520 = vmatpush1.msra.mxu0 %v454
  %3521 = vmatprep.subr.mxu0 %v459
  %3522 = vmatpush1.msra.mxu0 %v458
  %3523 = vmatprep.subr.mxu0 %v463
  %3524 = vmatpush1.msra.mxu0 %v462
  %3525 = vmatprep.subr.mxu0 %v467
  %3526 = vmatpush1.msra.mxu0 %v466
  %3527 = vmatprep.subr.mxu0 %v471
  %3528 = vmatpush1.msra.mxu0 %v470
  %3529 = vmatprep.subr.mxu0 %v475
  %3530 = vmatpush1.msra.mxu0 %v474
  %3531 = vmatprep.subr.mxu0 %v479
  %3532 = vmatpush1.msra.mxu0 %v478
  %3533 = vmatprep.subr.mxu0 %v483
  %3534 = vmatpush1.msra.mxu0 %v482
  %3535 = vmatprep.subr.mxu0 %v487
  %3536 = vmatpush1.msra.mxu0 %v486
  %3537 = vmatprep.subr.mxu0 %v491
  %3538 = vmatpush1.msra.mxu0 %v490
  %3539 = vmatprep.subr.mxu0 %v495
  %3540 = vmatpush1.msra.mxu0 %v494
  %3541 = vmatprep.subr.mxu0 %v499
  %3542 = vmatpush1.msra.mxu0 %v498
  %3543 = vmatprep.subr.mxu0 %v503
  %3544 = vmatpush1.msra.mxu0 %v502
  %3545 = vmatprep.subr.mxu0 %v507
  %3546 = vmatpush1.msra.mxu0 %v506
  %3547 = vmatprep.subr.mxu0 %v511
  %3548 = vmatpush1.msra.mxu0 %v510
  %3549 = vmatprep.subr.mxu0 %v515
  %3550 = vmatpush1.msra.mxu0 %v514
  %3551 = vmatprep.subr.mxu0 %v519
  %3552 = vmatpush1.msra.mxu0 %v518
  %3553 = vmatprep.subr.mxu0 %v523
  %3554 = vmatpush1.msra.mxu0 %v522
  %3555 = vmatprep.subr.mxu0 %v527
  %3556 = vmatpush1.msra.mxu0 %v526
  %3557 = vmatprep.subr.mxu0 %v531
  %3558 = vmatpush1.msra.mxu0 %v530
  %3559 = vmatprep.subr.mxu0 %v535
  %3560 = vmatpush1.msra.mxu0 %v534
  %3561 = vmatprep.subr.mxu0 %v539
  %3562 = vmatpush1.msra.mxu0 %v538
  %3563 = vmatprep.subr.mxu0 %v543
  %3564 = vmatpush1.msra.mxu0 %v542
  %3565 = vmatprep.subr.mxu0 %v547
  %3566 = vmatpush1.msra.mxu0 %v546
  %3567 = vmatprep.mubr.f32.mxu0 %v2125
  %3568 = vmatmul.mubr.f32.gmra.mrb[0].mxu0 %v23
  %v3569 = vpop.f32.mrb[0].mxu0
  %v3570 = vadd.f32 %v3499, %v3569
  %v3571 = vpop.f32.mrb[0].mxu0
  %v3572 = vadd.f32 %v3501, %v3571
  %3573 = vdwg.mxu0
  %3574 = vmatprep.subr.mxu0 %v551
  %3575 = vmatpush1.msra.mxu0 %v550
  %3576 = vmatprep.subr.mxu0 %v555
  %3577 = vmatpush1.msra.mxu0 %v554
  %3578 = vmatprep.subr.mxu0 %v559
  %3579 = vmatpush1.msra.mxu0 %v558
  %3580 = vmatprep.subr.mxu0 %v563
  %3581 = vmatpush1.msra.mxu0 %v562
  %3582 = vmatprep.subr.mxu0 %v567
  %3583 = vmatpush1.msra.mxu0 %v566
  %3584 = vmatprep.subr.mxu0 %v571
  %3585 = vmatpush1.msra.mxu0 %v570
  %3586 = vmatprep.subr.mxu0 %v575
  %3587 = vmatpush1.msra.mxu0 %v574
  %3588 = vmatprep.subr.mxu0 %v579
  %3589 = vmatpush1.msra.mxu0 %v578
  %3590 = vmatprep.subr.mxu0 %v583
  %3591 = vmatpush1.msra.mxu0 %v582
  %3592 = vmatprep.subr.mxu0 %v587
  %3593 = vmatpush1.msra.mxu0 %v586
  %3594 = vmatprep.subr.mxu0 %v591
  %3595 = vmatpush1.msra.mxu0 %v590
  %3596 = vmatprep.subr.mxu0 %v595
  %3597 = vmatpush1.msra.mxu0 %v594
  %3598 = vmatprep.subr.mxu0 %v599
  %3599 = vmatpush1.msra.mxu0 %v598
  %3600 = vmatprep.subr.mxu0 %v603
  %3601 = vmatpush1.msra.mxu0 %v602
  %3602 = vmatprep.subr.mxu0 %v607
  %3603 = vmatpush1.msra.mxu0 %v606
  %3604 = vmatprep.subr.mxu0 %v611
  %3605 = vmatpush1.msra.mxu0 %v610
  %3606 = vmatprep.subr.mxu0 %v615
  %3607 = vmatpush1.msra.mxu0 %v614
  %3608 = vmatprep.subr.mxu0 %v619
  %3609 = vmatpush1.msra.mxu0 %v618
  %3610 = vmatprep.subr.mxu0 %v623
  %3611 = vmatpush1.msra.mxu0 %v622
  %3612 = vmatprep.subr.mxu0 %v627
  %3613 = vmatpush1.msra.mxu0 %v626
  %3614 = vmatprep.subr.mxu0 %v631
  %3615 = vmatpush1.msra.mxu0 %v630
  %3616 = vmatprep.subr.mxu0 %v635
  %3617 = vmatpush1.msra.mxu0 %v634
  %3618 = vmatprep.subr.mxu0 %v639
  %3619 = vmatpush1.msra.mxu0 %v638
  %3620 = vmatprep.subr.mxu0 %v643
  %3621 = vmatpush1.msra.mxu0 %v642
  %3622 = vmatprep.subr.mxu0 %v647
  %3623 = vmatpush1.msra.mxu0 %v646
  %3624 = vmatprep.subr.mxu0 %v651
  %3625 = vmatpush1.msra.mxu0 %v650
  %3626 = vmatprep.subr.mxu0 %v655
  %3627 = vmatpush1.msra.mxu0 %v654
  %3628 = vmatprep.subr.mxu0 %v659
  %3629 = vmatpush1.msra.mxu0 %v658
  %3630 = vmatprep.subr.mxu0 %v663
  %3631 = vmatpush1.msra.mxu0 %v662
  %3632 = vmatprep.subr.mxu0 %v667
  %3633 = vmatpush1.msra.mxu0 %v666
  %3634 = vmatprep.subr.mxu0 %v671
  %3635 = vmatpush1.msra.mxu0 %v670
  %3636 = vmatprep.subr.mxu0 %v675
  %3637 = vmatpush1.msra.mxu0 %v674
  %3638 = vmatprep.mubr.f32.mxu0 %v2126
  %3639 = vmatmul.mubr.f32.gmra.mrb[0].mxu0 %v24
  %v3640 = vpop.f32.mrb[0].mxu0
  %v3641 = vadd.f32 %v3570, %v3640
  %v3642 = vpop.f32.mrb[0].mxu0
  %v3643 = vadd.f32 %v3572, %v3642
  %3644 = vdwg.mxu0
  %3645 = vmatprep.subr.mxu0 %v679
  %3646 = vmatpush1.msra.mxu0 %v678
  %3647 = vmatprep.subr.mxu0 %v683
  %3648 = vmatpush1.msra.mxu0 %v682
  %3649 = vmatprep.subr.mxu0 %v687
  %3650 = vmatpush1.msra.mxu0 %v686
  %3651 = vmatprep.subr.mxu0 %v691
  %3652 = vmatpush1.msra.mxu0 %v690
  %3653 = vmatprep.subr.mxu0 %v695
  %3654 = vmatpush1.msra.mxu0 %v694
  %3655 = vmatprep.subr.mxu0 %v699
  %3656 = vmatpush1.msra.mxu0 %v698
  %3657 = vmatprep.subr.mxu0 %v703
  %3658 = vmatpush1.msra.mxu0 %v702
  %3659 = vmatprep.subr.mxu0 %v707
  %3660 = vmatpush1.msra.mxu0 %v706
  %3661 = vmatprep.subr.mxu0 %v711
  %3662 = vmatpush1.msra.mxu0 %v710
  %3663 = vmatprep.subr.mxu0 %v715
  %3664 = vmatpush1.msra.mxu0 %v714
  %3665 = vmatprep.subr.mxu0 %v719
  %3666 = vmatpush1.msra.mxu0 %v718
  %3667 = vmatprep.subr.mxu0 %v723
  %3668 = vmatpush1.msra.mxu0 %v722
  %3669 = vmatprep.subr.mxu0 %v727
  %3670 = vmatpush1.msra.mxu0 %v726
  %3671 = vmatprep.subr.mxu0 %v731
  %3672 = vmatpush1.msra.mxu0 %v730
  %3673 = vmatprep.subr.mxu0 %v735
  %3674 = vmatpush1.msra.mxu0 %v734
  %3675 = vmatprep.subr.mxu0 %v739
  %3676 = vmatpush1.msra.mxu0 %v738
  %3677 = vmatprep.subr.mxu0 %v743
  %3678 = vmatpush1.msra.mxu0 %v742
  %3679 = vmatprep.subr.mxu0 %v747
  %3680 = vmatpush1.msra.mxu0 %v746
  %3681 = vmatprep.subr.mxu0 %v751
  %3682 = vmatpush1.msra.mxu0 %v750
  %3683 = vmatprep.subr.mxu0 %v755
  %3684 = vmatpush1.msra.mxu0 %v754
  %3685 = vmatprep.subr.mxu0 %v759
  %3686 = vmatpush1.msra.mxu0 %v758
  %3687 = vmatprep.subr.mxu0 %v763
  %3688 = vmatpush1.msra.mxu0 %v762
  %3689 = vmatprep.subr.mxu0 %v767
  %3690 = vmatpush1.msra.mxu0 %v766
  %3691 = vmatprep.subr.mxu0 %v771
  %3692 = vmatpush1.msra.mxu0 %v770
  %3693 = vmatprep.subr.mxu0 %v775
  %3694 = vmatpush1.msra.mxu0 %v774
  %3695 = vmatprep.subr.mxu0 %v779
  %3696 = vmatpush1.msra.mxu0 %v778
  %3697 = vmatprep.subr.mxu0 %v783
  %3698 = vmatpush1.msra.mxu0 %v782
  %3699 = vmatprep.subr.mxu0 %v787
  %3700 = vmatpush1.msra.mxu0 %v786
  %3701 = vmatprep.subr.mxu0 %v791
  %3702 = vmatpush1.msra.mxu0 %v790
  %3703 = vmatprep.subr.mxu0 %v795
  %3704 = vmatpush1.msra.mxu0 %v794
  %3705 = vmatprep.subr.mxu0 %v799
  %3706 = vmatpush1.msra.mxu0 %v798
  %3707 = vmatprep.subr.mxu0 %v803
  %3708 = vmatpush1.msra.mxu0 %v802
  %3709 = vmatprep.mubr.f32.mxu0 %v2127
  %3710 = vmatmul.mubr.f32.gmra.mrb[0].mxu0 %v25
  %v3711 = vpop.f32.mrb[0].mxu0
  %v3712 = vadd.f32 %v3641, %v3711
  %v3713 = vpop.f32.mrb[0].mxu0
  %v3714 = vadd.f32 %v3643, %v3713
  %3715 = vdwg.mxu0
  %3716 = vmatprep.subr.mxu0 %v807
  %3717 = vmatpush1.msra.mxu0 %v806
  %3718 = vmatprep.subr.mxu0 %v811
  %3719 = vmatpush1.msra.mxu0 %v810
  %3720 = vmatprep.subr.mxu0 %v815
  %3721 = vmatpush1.msra.mxu0 %v814
  %3722 = vmatprep.subr.mxu0 %v819
  %3723 = vmatpush1.msra.mxu0 %v818
  %3724 = vmatprep.subr.mxu0 %v823
  %3725 = vmatpush1.msra.mxu0 %v822
  %3726 = vmatprep.subr.mxu0 %v827
  %3727 = vmatpush1.msra.mxu0 %v826
  %3728 = vmatprep.subr.mxu0 %v831
  %3729 = vmatpush1.msra.mxu0 %v830
  %3730 = vmatprep.subr.mxu0 %v835
  %3731 = vmatpush1.msra.mxu0 %v834
  %3732 = vmatprep.subr.mxu0 %v839
  %3733 = vmatpush1.msra.mxu0 %v838
  %3734 = vmatprep.subr.mxu0 %v843
  %3735 = vmatpush1.msra.mxu0 %v842
  %3736 = vmatprep.subr.mxu0 %v847
  %3737 = vmatpush1.msra.mxu0 %v846
  %3738 = vmatprep.subr.mxu0 %v851
  %3739 = vmatpush1.msra.mxu0 %v850
  %3740 = vmatprep.subr.mxu0 %v855
  %3741 = vmatpush1.msra.mxu0 %v854
  %3742 = vmatprep.subr.mxu0 %v859
  %3743 = vmatpush1.msra.mxu0 %v858
  %3744 = vmatprep.subr.mxu0 %v863
  %3745 = vmatpush1.msra.mxu0 %v862
  %3746 = vmatprep.subr.mxu0 %v867
  %3747 = vmatpush1.msra.mxu0 %v866
  %3748 = vmatprep.subr.mxu0 %v871
  %3749 = vmatpush1.msra.mxu0 %v870
  %3750 = vmatprep.subr.mxu0 %v875
  %3751 = vmatpush1.msra.mxu0 %v874
  %3752 = vmatprep.subr.mxu0 %v879
  %3753 = vmatpush1.msra.mxu0 %v878
  %3754 = vmatprep.subr.mxu0 %v883
  %3755 = vmatpush1.msra.mxu0 %v882
  %3756 = vmatprep.subr.mxu0 %v887
  %3757 = vmatpush1.msra.mxu0 %v886
  %3758 = vmatprep.subr.mxu0 %v891
  %3759 = vmatpush1.msra.mxu0 %v890
  %3760 = vmatprep.subr.mxu0 %v895
  %3761 = vmatpush1.msra.mxu0 %v894
  %3762 = vmatprep.subr.mxu0 %v899
  %3763 = vmatpush1.msra.mxu0 %v898
  %3764 = vmatprep.subr.mxu0 %v903
  %3765 = vmatpush1.msra.mxu0 %v902
  %3766 = vmatprep.subr.mxu0 %v907
  %3767 = vmatpush1.msra.mxu0 %v906
  %3768 = vmatprep.subr.mxu0 %v911
  %3769 = vmatpush1.msra.mxu0 %v910
  %3770 = vmatprep.subr.mxu0 %v915
  %3771 = vmatpush1.msra.mxu0 %v914
  %3772 = vmatprep.subr.mxu0 %v919
  %3773 = vmatpush1.msra.mxu0 %v918
  %3774 = vmatprep.subr.mxu0 %v923
  %3775 = vmatpush1.msra.mxu0 %v922
  %3776 = vmatprep.subr.mxu0 %v927
  %3777 = vmatpush1.msra.mxu0 %v926
  %3778 = vmatprep.subr.mxu0 %v931
  %3779 = vmatpush1.msra.mxu0 %v930
  %3780 = vmatprep.mubr.f32.mxu0 %v2128
  %3781 = vmatmul.mubr.f32.gmra.mrb[0].mxu0 %v26
  %v3782 = vpop.f32.mrb[0].mxu0
  %v3783 = vadd.f32 %v3712, %v3782
  %v3784 = vpop.f32.mrb[0].mxu0
  %v3785 = vadd.f32 %v3714, %v3784
  %3786 = vdwg.mxu0
  %3787 = vmatprep.subr.mxu0 %v935
  %3788 = vmatpush1.msra.mxu0 %v934
  %3789 = vmatprep.subr.mxu0 %v939
  %3790 = vmatpush1.msra.mxu0 %v938
  %3791 = vmatprep.subr.mxu0 %v943
  %3792 = vmatpush1.msra.mxu0 %v942
  %3793 = vmatprep.subr.mxu0 %v947
  %3794 = vmatpush1.msra.mxu0 %v946
  %3795 = vmatprep.subr.mxu0 %v951
  %3796 = vmatpush1.msra.mxu0 %v950
  %3797 = vmatprep.subr.mxu0 %v955
  %3798 = vmatpush1.msra.mxu0 %v954
  %3799 = vmatprep.subr.mxu0 %v959
  %3800 = vmatpush1.msra.mxu0 %v958
  %3801 = vmatprep.subr.mxu0 %v963
  %3802 = vmatpush1.msra.mxu0 %v962
  %3803 = vmatprep.subr.mxu0 %v967
  %3804 = vmatpush1.msra.mxu0 %v966
  %3805 = vmatprep.subr.mxu0 %v971
  %3806 = vmatpush1.msra.mxu0 %v970
  %3807 = vmatprep.subr.mxu0 %v975
  %3808 = vmatpush1.msra.mxu0 %v974
  %3809 = vmatprep.subr.mxu0 %v979
  %3810 = vmatpush1.msra.mxu0 %v978
  %3811 = vmatprep.subr.mxu0 %v983
  %3812 = vmatpush1.msra.mxu0 %v982
  %3813 = vmatprep.subr.mxu0 %v987
  %3814 = vmatpush1.msra.mxu0 %v986
  %3815 = vmatprep.subr.mxu0 %v991
  %3816 = vmatpush1.msra.mxu0 %v990
  %3817 = vmatprep.subr.mxu0 %v995
  %3818 = vmatpush1.msra.mxu0 %v994
  %3819 = vmatprep.subr.mxu0 %v999
  %3820 = vmatpush1.msra.mxu0 %v998
  %3821 = vmatprep.subr.mxu0 %v1003
  %3822 = vmatpush1.msra.mxu0 %v1002
  %3823 = vmatprep.subr.mxu0 %v1007
  %3824 = vmatpush1.msra.mxu0 %v1006
  %3825 = vmatprep.subr.mxu0 %v1011
  %3826 = vmatpush1.msra.mxu0 %v1010
  %3827 = vmatprep.subr.mxu0 %v1015
  %3828 = vmatpush1.msra.mxu0 %v1014
  %3829 = vmatprep.subr.mxu0 %v1019
  %3830 = vmatpush1.msra.mxu0 %v1018
  %3831 = vmatprep.subr.mxu0 %v1023
  %3832 = vmatpush1.msra.mxu0 %v1022
  %3833 = vmatprep.subr.mxu0 %v1027
  %3834 = vmatpush1.msra.mxu0 %v1026
  %3835 = vmatprep.subr.mxu0 %v1031
  %3836 = vmatpush1.msra.mxu0 %v1030
  %3837 = vmatprep.subr.mxu0 %v1035
  %3838 = vmatpush1.msra.mxu0 %v1034
  %3839 = vmatprep.subr.mxu0 %v1039
  %3840 = vmatpush1.msra.mxu0 %v1038
  %3841 = vmatprep.subr.mxu0 %v1043
  %3842 = vmatpush1.msra.mxu0 %v1042
  %3843 = vmatprep.subr.mxu0 %v1047
  %3844 = vmatpush1.msra.mxu0 %v1046
  %3845 = vmatprep.subr.mxu0 %v1051
  %3846 = vmatpush1.msra.mxu0 %v1050
  %3847 = vmatprep.subr.mxu0 %v1055
  %3848 = vmatpush1.msra.mxu0 %v1054
  %3849 = vmatprep.subr.mxu0 %v1059
  %3850 = vmatpush1.msra.mxu0 %v1058
  %3851 = vmatprep.mubr.f32.mxu0 %v2129
  %3852 = vmatmul.mubr.f32.gmra.mrb[0].mxu0 %v27
  %v3853 = vpop.f32.mrb[0].mxu0
  %v3854 = vadd.f32 %v3783, %v3853
  %v3855 = vpop.f32.mrb[0].mxu0
  %v3856 = vadd.f32 %v3785, %v3855
  %3857 = vdwg.mxu0
  %3858 = vmatprep.subr.mxu0 %v1063
  %3859 = vmatpush1.msra.mxu0 %v1062
  %3860 = vmatprep.subr.mxu0 %v1067
  %3861 = vmatpush1.msra.mxu0 %v1066
  %3862 = vmatprep.subr.mxu0 %v1071
  %3863 = vmatpush1.msra.mxu0 %v1070
  %3864 = vmatprep.subr.mxu0 %v1075
  %3865 = vmatpush1.msra.mxu0 %v1074
  %3866 = vmatprep.subr.mxu0 %v1079
  %3867 = vmatpush1.msra.mxu0 %v1078
  %3868 = vmatprep.subr.mxu0 %v1083
  %3869 = vmatpush1.msra.mxu0 %v1082
  %3870 = vmatprep.subr.mxu0 %v1087
  %3871 = vmatpush1.msra.mxu0 %v1086
  %3872 = vmatprep.subr.mxu0 %v1091
  %3873 = vmatpush1.msra.mxu0 %v1090
  %3874 = vmatprep.subr.mxu0 %v1095
  %3875 = vmatpush1.msra.mxu0 %v1094
  %3876 = vmatprep.subr.mxu0 %v1099
  %3877 = vmatpush1.msra.mxu0 %v1098
  %3878 = vmatprep.subr.mxu0 %v1103
  %3879 = vmatpush1.msra.mxu0 %v1102
  %3880 = vmatprep.subr.mxu0 %v1107
  %3881 = vmatpush1.msra.mxu0 %v1106
  %3882 = vmatprep.subr.mxu0 %v1111
  %3883 = vmatpush1.msra.mxu0 %v1110
  %3884 = vmatprep.subr.mxu0 %v1115
  %3885 = vmatpush1.msra.mxu0 %v1114
  %3886 = vmatprep.subr.mxu0 %v1119
  %3887 = vmatpush1.msra.mxu0 %v1118
  %3888 = vmatprep.subr.mxu0 %v1123
  %3889 = vmatpush1.msra.mxu0 %v1122
  %3890 = vmatprep.subr.mxu0 %v1127
  %3891 = vmatpush1.msra.mxu0 %v1126
  %3892 = vmatprep.subr.mxu0 %v1131
  %3893 = vmatpush1.msra.mxu0 %v1130
  %3894 = vmatprep.subr.mxu0 %v1135
  %3895 = vmatpush1.msra.mxu0 %v1134
  %3896 = vmatprep.subr.mxu0 %v1139
  %3897 = vmatpush1.msra.mxu0 %v1138
  %3898 = vmatprep.subr.mxu0 %v1143
  %3899 = vmatpush1.msra.mxu0 %v1142
  %3900 = vmatprep.subr.mxu0 %v1147
  %3901 = vmatpush1.msra.mxu0 %v1146
  %3902 = vmatprep.subr.mxu0 %v1151
  %3903 = vmatpush1.msra.mxu0 %v1150
  %3904 = vmatprep.subr.mxu0 %v1155
  %3905 = vmatpush1.msra.mxu0 %v1154
  %3906 = vmatprep.subr.mxu0 %v1159
  %3907 = vmatpush1.msra.mxu0 %v1158
  %3908 = vmatprep.subr.mxu0 %v1163
  %3909 = vmatpush1.msra.mxu0 %v1162
  %3910 = vmatprep.subr.mxu0 %v1167
  %3911 = vmatpush1.msra.mxu0 %v1166
  %3912 = vmatprep.subr.mxu0 %v1171
  %3913 = vmatpush1.msra.mxu0 %v1170
  %3914 = vmatprep.subr.mxu0 %v1175
  %3915 = vmatpush1.msra.mxu0 %v1174
  %3916 = vmatprep.subr.mxu0 %v1179
  %3917 = vmatpush1.msra.mxu0 %v1178
  %3918 = vmatprep.subr.mxu0 %v1183
  %3919 = vmatpush1.msra.mxu0 %v1182
  %3920 = vmatprep.subr.mxu0 %v1187
  %3921 = vmatpush1.msra.mxu0 %v1186
  %3922 = vmatprep.mubr.f32.mxu0 %v2130
  %3923 = vmatmul.mubr.f32.gmra.mrb[0].mxu0 %v28
  %v3924 = vpop.f32.mrb[0].mxu0
  %v3925 = vadd.f32 %v3854, %v3924
  %v3926 = vpop.f32.mrb[0].mxu0
  %v3927 = vadd.f32 %v3856, %v3926
  %3928 = vdwg.mxu0
  %3929 = vmatprep.subr.mxu0 %v1191
  %3930 = vmatpush1.msra.mxu0 %v1190
  %3931 = vmatprep.subr.mxu0 %v1195
  %3932 = vmatpush1.msra.mxu0 %v1194
  %3933 = vmatprep.subr.mxu0 %v1199
  %3934 = vmatpush1.msra.mxu0 %v1198
  %3935 = vmatprep.subr.mxu0 %v1203
  %3936 = vmatpush1.msra.mxu0 %v1202
  %3937 = vmatprep.subr.mxu0 %v1207
  %3938 = vmatpush1.msra.mxu0 %v1206
  %3939 = vmatprep.subr.mxu0 %v1211
  %3940 = vmatpush1.msra.mxu0 %v1210
  %3941 = vmatprep.subr.mxu0 %v1215
  %3942 = vmatpush1.msra.mxu0 %v1214
  %3943 = vmatprep.subr.mxu0 %v1219
  %3944 = vmatpush1.msra.mxu0 %v1218
  %3945 = vmatprep.subr.mxu0 %v1223
  %3946 = vmatpush1.msra.mxu0 %v1222
  %3947 = vmatprep.subr.mxu0 %v1227
  %3948 = vmatpush1.msra.mxu0 %v1226
  %3949 = vmatprep.subr.mxu0 %v1231
  %3950 = vmatpush1.msra.mxu0 %v1230
  %3951 = vmatprep.subr.mxu0 %v1235
  %3952 = vmatpush1.msra.mxu0 %v1234
  %3953 = vmatprep.subr.mxu0 %v1239
  %3954 = vmatpush1.msra.mxu0 %v1238
  %3955 = vmatprep.subr.mxu0 %v1243
  %3956 = vmatpush1.msra.mxu0 %v1242
  %3957 = vmatprep.subr.mxu0 %v1247
  %3958 = vmatpush1.msra.mxu0 %v1246
  %3959 = vmatprep.subr.mxu0 %v1251
  %3960 = vmatpush1.msra.mxu0 %v1250
  %3961 = vmatprep.subr.mxu0 %v1255
  %3962 = vmatpush1.msra.mxu0 %v1254
  %3963 = vmatprep.subr.mxu0 %v1259
  %3964 = vmatpush1.msra.mxu0 %v1258
  %3965 = vmatprep.subr.mxu0 %v1263
  %3966 = vmatpush1.msra.mxu0 %v1262
  %3967 = vmatprep.subr.mxu0 %v1267
  %3968 = vmatpush1.msra.mxu0 %v1266
  %3969 = vmatprep.subr.mxu0 %v1271
  %3970 = vmatpush1.msra.mxu0 %v1270
  %3971 = vmatprep.subr.mxu0 %v1275
  %3972 = vmatpush1.msra.mxu0 %v1274
  %3973 = vmatprep.subr.mxu0 %v1279
  %3974 = vmatpush1.msra.mxu0 %v1278
  %3975 = vmatprep.subr.mxu0 %v1283
  %3976 = vmatpush1.msra.mxu0 %v1282
  %3977 = vmatprep.subr.mxu0 %v1287
  %3978 = vmatpush1.msra.mxu0 %v1286
  %3979 = vmatprep.subr.mxu0 %v1291
  %3980 = vmatpush1.msra.mxu0 %v1290
  %3981 = vmatprep.subr.mxu0 %v1295
  %3982 = vmatpush1.msra.mxu0 %v1294
  %3983 = vmatprep.subr.mxu0 %v1299
  %3984 = vmatpush1.msra.mxu0 %v1298
  %3985 = vmatprep.subr.mxu0 %v1303
  %3986 = vmatpush1.msra.mxu0 %v1302
  %3987 = vmatprep.subr.mxu0 %v1307
  %3988 = vmatpush1.msra.mxu0 %v1306
  %3989 = vmatprep.subr.mxu0 %v1311
  %3990 = vmatpush1.msra.mxu0 %v1310
  %3991 = vmatprep.subr.mxu0 %v1315
  %3992 = vmatpush1.msra.mxu0 %v1314
  %3993 = vmatprep.mubr.f32.mxu0 %v2131
  %3994 = vmatmul.mubr.f32.gmra.mrb[0].mxu0 %v29
  %v3995 = vpop.f32.mrb[0].mxu0
  %v3996 = vadd.f32 %v3925, %v3995
  %v3997 = vpop.f32.mrb[0].mxu0
  %v3998 = vadd.f32 %v3927, %v3997
  %3999 = vdwg.mxu0
  %4000 = vmatprep.subr.mxu0 %v1319
  %4001 = vmatpush1.msra.mxu0 %v1318
  %4002 = vmatprep.subr.mxu0 %v1323
  %4003 = vmatpush1.msra.mxu0 %v1322
  %4004 = vmatprep.subr.mxu0 %v1327
  %4005 = vmatpush1.msra.mxu0 %v1326
  %4006 = vmatprep.subr.mxu0 %v1331
  %4007 = vmatpush1.msra.mxu0 %v1330
  %4008 = vmatprep.subr.mxu0 %v1335
  %4009 = vmatpush1.msra.mxu0 %v1334
  %4010 = vmatprep.subr.mxu0 %v1339
  %4011 = vmatpush1.msra.mxu0 %v1338
  %4012 = vmatprep.subr.mxu0 %v1343
  %4013 = vmatpush1.msra.mxu0 %v1342
  %4014 = vmatprep.subr.mxu0 %v1347
  %4015 = vmatpush1.msra.mxu0 %v1346
  %4016 = vmatprep.subr.mxu0 %v1351
  %4017 = vmatpush1.msra.mxu0 %v1350
  %4018 = vmatprep.subr.mxu0 %v1355
  %4019 = vmatpush1.msra.mxu0 %v1354
  %4020 = vmatprep.subr.mxu0 %v1359
  %4021 = vmatpush1.msra.mxu0 %v1358
  %4022 = vmatprep.subr.mxu0 %v1363
  %4023 = vmatpush1.msra.mxu0 %v1362
  %4024 = vmatprep.subr.mxu0 %v1367
  %4025 = vmatpush1.msra.mxu0 %v1366
  %4026 = vmatprep.subr.mxu0 %v1371
  %4027 = vmatpush1.msra.mxu0 %v1370
  %4028 = vmatprep.subr.mxu0 %v1375
  %4029 = vmatpush1.msra.mxu0 %v1374
  %4030 = vmatprep.subr.mxu0 %v1379
  %4031 = vmatpush1.msra.mxu0 %v1378
  %4032 = vmatprep.subr.mxu0 %v1383
  %4033 = vmatpush1.msra.mxu0 %v1382
  %4034 = vmatprep.subr.mxu0 %v1387
  %4035 = vmatpush1.msra.mxu0 %v1386
  %4036 = vmatprep.subr.mxu0 %v1391
  %4037 = vmatpush1.msra.mxu0 %v1390
  %4038 = vmatprep.subr.mxu0 %v1395
  %4039 = vmatpush1.msra.mxu0 %v1394
  %4040 = vmatprep.subr.mxu0 %v1399
  %4041 = vmatpush1.msra.mxu0 %v1398
  %4042 = vmatprep.subr.mxu0 %v1403
  %4043 = vmatpush1.msra.mxu0 %v1402
  %4044 = vmatprep.subr.mxu0 %v1407
  %4045 = vmatpush1.msra.mxu0 %v1406
  %4046 = vmatprep.subr.mxu0 %v1411
  %4047 = vmatpush1.msra.mxu0 %v1410
  %4048 = vmatprep.subr.mxu0 %v1415
  %4049 = vmatpush1.msra.mxu0 %v1414
  %4050 = vmatprep.subr.mxu0 %v1419
  %4051 = vmatpush1.msra.mxu0 %v1418
  %4052 = vmatprep.subr.mxu0 %v1423
  %4053 = vmatpush1.msra.mxu0 %v1422
  %4054 = vmatprep.subr.mxu0 %v1427
  %4055 = vmatpush1.msra.mxu0 %v1426
  %4056 = vmatprep.subr.mxu0 %v1431
  %4057 = vmatpush1.msra.mxu0 %v1430
  %4058 = vmatprep.subr.mxu0 %v1435
  %4059 = vmatpush1.msra.mxu0 %v1434
  %4060 = vmatprep.subr.mxu0 %v1439
  %4061 = vmatpush1.msra.mxu0 %v1438
  %4062 = vmatprep.subr.mxu0 %v1443
  %4063 = vmatpush1.msra.mxu0 %v1442
  %4064 = vmatprep.mubr.f32.mxu0 %v2132
  %4065 = vmatmul.mubr.f32.gmra.mrb[0].mxu0 %v30
  %v4066 = vpop.f32.mrb[0].mxu0
  %v4067 = vadd.f32 %v3996, %v4066
  %v4068 = vpop.f32.mrb[0].mxu0
  %v4069 = vadd.f32 %v3998, %v4068
  %4070 = vdwg.mxu0
  %4071 = vmatprep.subr.mxu0 %v1447
  %4072 = vmatpush1.msra.mxu0 %v1446
  %4073 = vmatprep.subr.mxu0 %v1451
  %4074 = vmatpush1.msra.mxu0 %v1450
  %4075 = vmatprep.subr.mxu0 %v1455
  %4076 = vmatpush1.msra.mxu0 %v1454
  %4077 = vmatprep.subr.mxu0 %v1459
  %4078 = vmatpush1.msra.mxu0 %v1458
  %4079 = vmatprep.subr.mxu0 %v1463
  %4080 = vmatpush1.msra.mxu0 %v1462
  %4081 = vmatprep.subr.mxu0 %v1467
  %4082 = vmatpush1.msra.mxu0 %v1466
  %4083 = vmatprep.subr.mxu0 %v1471
  %4084 = vmatpush1.msra.mxu0 %v1470
  %4085 = vmatprep.subr.mxu0 %v1475
  %4086 = vmatpush1.msra.mxu0 %v1474
  %4087 = vmatprep.subr.mxu0 %v1479
  %4088 = vmatpush1.msra.mxu0 %v1478
  %4089 = vmatprep.subr.mxu0 %v1483
  %4090 = vmatpush1.msra.mxu0 %v1482
  %4091 = vmatprep.subr.mxu0 %v1487
  %4092 = vmatpush1.msra.mxu0 %v1486
  %4093 = vmatprep.subr.mxu0 %v1491
  %4094 = vmatpush1.msra.mxu0 %v1490
  %4095 = vmatprep.subr.mxu0 %v1495
  %4096 = vmatpush1.msra.mxu0 %v1494
  %4097 = vmatprep.subr.mxu0 %v1499
  %4098 = vmatpush1.msra.mxu0 %v1498
  %4099 = vmatprep.subr.mxu0 %v1503
  %4100 = vmatpush1.msra.mxu0 %v1502
  %4101 = vmatprep.subr.mxu0 %v1507
  %4102 = vmatpush1.msra.mxu0 %v1506
  %4103 = vmatprep.subr.mxu0 %v1511
  %4104 = vmatpush1.msra.mxu0 %v1510
  %4105 = vmatprep.subr.mxu0 %v1515
  %4106 = vmatpush1.msra.mxu0 %v1514
  %4107 = vmatprep.subr.mxu0 %v1519
  %4108 = vmatpush1.msra.mxu0 %v1518
  %4109 = vmatprep.subr.mxu0 %v1523
  %4110 = vmatpush1.msra.mxu0 %v1522
  %4111 = vmatprep.subr.mxu0 %v1527
  %4112 = vmatpush1.msra.mxu0 %v1526
  %4113 = vmatprep.subr.mxu0 %v1531
  %4114 = vmatpush1.msra.mxu0 %v1530
  %4115 = vmatprep.subr.mxu0 %v1535
  %4116 = vmatpush1.msra.mxu0 %v1534
  %4117 = vmatprep.subr.mxu0 %v1539
  %4118 = vmatpush1.msra.mxu0 %v1538
  %4119 = vmatprep.subr.mxu0 %v1543
  %4120 = vmatpush1.msra.mxu0 %v1542
  %4121 = vmatprep.subr.mxu0 %v1547
  %4122 = vmatpush1.msra.mxu0 %v1546
  %4123 = vmatprep.subr.mxu0 %v1551
  %4124 = vmatpush1.msra.mxu0 %v1550
  %4125 = vmatprep.subr.mxu0 %v1555
  %4126 = vmatpush1.msra.mxu0 %v1554
  %4127 = vmatprep.subr.mxu0 %v1559
  %4128 = vmatpush1.msra.mxu0 %v1558
  %4129 = vmatprep.subr.mxu0 %v1563
  %4130 = vmatpush1.msra.mxu0 %v1562
  %4131 = vmatprep.subr.mxu0 %v1567
  %4132 = vmatpush1.msra.mxu0 %v1566
  %4133 = vmatprep.subr.mxu0 %v1571
  %4134 = vmatpush1.msra.mxu0 %v1570
  %4135 = vmatprep.mubr.f32.mxu0 %v2133
  %4136 = vmatmul.mubr.f32.gmra.mrb[0].mxu0 %v31
  %v4137 = vpop.f32.mrb[0].mxu0
  %v4138 = vadd.f32 %v4067, %v4137
  %v4139 = vpop.f32.mrb[0].mxu0
  %v4140 = vadd.f32 %v4069, %v4139
  %4141 = vdwg.mxu0
  %4142 = vmatprep.subr.mxu0 %v1575
  %4143 = vmatpush1.msra.mxu0 %v1574
  %4144 = vmatprep.subr.mxu0 %v1579
  %4145 = vmatpush1.msra.mxu0 %v1578
  %4146 = vmatprep.subr.mxu0 %v1583
  %4147 = vmatpush1.msra.mxu0 %v1582
  %4148 = vmatprep.subr.mxu0 %v1587
  %4149 = vmatpush1.msra.mxu0 %v1586
  %4150 = vmatprep.subr.mxu0 %v1591
  %4151 = vmatpush1.msra.mxu0 %v1590
  %4152 = vmatprep.subr.mxu0 %v1595
  %4153 = vmatpush1.msra.mxu0 %v1594
  %4154 = vmatprep.subr.mxu0 %v1599
  %4155 = vmatpush1.msra.mxu0 %v1598
  %4156 = vmatprep.subr.mxu0 %v1603
  %4157 = vmatpush1.msra.mxu0 %v1602
  %4158 = vmatprep.subr.mxu0 %v1607
  %4159 = vmatpush1.msra.mxu0 %v1606
  %4160 = vmatprep.subr.mxu0 %v1611
  %4161 = vmatpush1.msra.mxu0 %v1610
  %4162 = vmatprep.subr.mxu0 %v1615
  %4163 = vmatpush1.msra.mxu0 %v1614
  %4164 = vmatprep.subr.mxu0 %v1619
  %4165 = vmatpush1.msra.mxu0 %v1618
  %4166 = vmatprep.subr.mxu0 %v1623
  %4167 = vmatpush1.msra.mxu0 %v1622
  %4168 = vmatprep.subr.mxu0 %v1627
  %4169 = vmatpush1.msra.mxu0 %v1626
  %4170 = vmatprep.subr.mxu0 %v1631
  %4171 = vmatpush1.msra.mxu0 %v1630
  %4172 = vmatprep.subr.mxu0 %v1635
  %4173 = vmatpush1.msra.mxu0 %v1634
  %4174 = vmatprep.subr.mxu0 %v1639
  %4175 = vmatpush1.msra.mxu0 %v1638
  %4176 = vmatprep.subr.mxu0 %v1643
  %4177 = vmatpush1.msra.mxu0 %v1642
  %4178 = vmatprep.subr.mxu0 %v1647
  %4179 = vmatpush1.msra.mxu0 %v1646
  %4180 = vmatprep.subr.mxu0 %v1651
  %4181 = vmatpush1.msra.mxu0 %v1650
  %4182 = vmatprep.subr.mxu0 %v1655
  %4183 = vmatpush1.msra.mxu0 %v1654
  %4184 = vmatprep.subr.mxu0 %v1659
  %4185 = vmatpush1.msra.mxu0 %v1658
  %4186 = vmatprep.subr.mxu0 %v1663
  %4187 = vmatpush1.msra.mxu0 %v1662
  %4188 = vmatprep.subr.mxu0 %v1667
  %4189 = vmatpush1.msra.mxu0 %v1666
  %4190 = vmatprep.subr.mxu0 %v1671
  %4191 = vmatpush1.msra.mxu0 %v1670
  %4192 = vmatprep.subr.mxu0 %v1675
  %4193 = vmatpush1.msra.mxu0 %v1674
  %4194 = vmatprep.subr.mxu0 %v1679
  %4195 = vmatpush1.msra.mxu0 %v1678
  %4196 = vmatprep.subr.mxu0 %v1683
  %4197 = vmatpush1.msra.mxu0 %v1682
  %4198 = vmatprep.subr.mxu0 %v1687
  %4199 = vmatpush1.msra.mxu0 %v1686
  %4200 = vmatprep.subr.mxu0 %v1691
  %4201 = vmatpush1.msra.mxu0 %v1690
  %4202 = vmatprep.subr.mxu0 %v1695
  %4203 = vmatpush1.msra.mxu0 %v1694
  %4204 = vmatprep.subr.mxu0 %v1699
  %4205 = vmatpush1.msra.mxu0 %v1698
  %4206 = vmatprep.mubr.f32.mxu0 %v2134
  %4207 = vmatmul.mubr.f32.gmra.mrb[0].mxu0 %v32
  %v4208 = vpop.f32.mrb[0].mxu0
  %v4209 = vadd.f32 %v4138, %v4208
  %v4210 = vpop.f32.mrb[0].mxu0
  %v4211 = vadd.f32 %v4140, %v4210
  %4212 = vdwg.mxu0
  %4213 = vmatprep.subr.mxu0 %v1703
  %4214 = vmatpush1.msra.mxu0 %v1702
  %4215 = vmatprep.subr.mxu0 %v1707
  %4216 = vmatpush1.msra.mxu0 %v1706
  %4217 = vmatprep.subr.mxu0 %v1711
  %4218 = vmatpush1.msra.mxu0 %v1710
  %4219 = vmatprep.subr.mxu0 %v1715
  %4220 = vmatpush1.msra.mxu0 %v1714
  %4221 = vmatprep.subr.mxu0 %v1719
  %4222 = vmatpush1.msra.mxu0 %v1718
  %4223 = vmatprep.subr.mxu0 %v1723
  %4224 = vmatpush1.msra.mxu0 %v1722
  %4225 = vmatprep.subr.mxu0 %v1727
  %4226 = vmatpush1.msra.mxu0 %v1726
  %4227 = vmatprep.subr.mxu0 %v1731
  %4228 = vmatpush1.msra.mxu0 %v1730
  %4229 = vmatprep.subr.mxu0 %v1735
  %4230 = vmatpush1.msra.mxu0 %v1734
  %4231 = vmatprep.subr.mxu0 %v1739
  %4232 = vmatpush1.msra.mxu0 %v1738
  %4233 = vmatprep.subr.mxu0 %v1743
  %4234 = vmatpush1.msra.mxu0 %v1742
  %4235 = vmatprep.subr.mxu0 %v1747
  %4236 = vmatpush1.msra.mxu0 %v1746
  %4237 = vmatprep.subr.mxu0 %v1751
  %4238 = vmatpush1.msra.mxu0 %v1750
  %4239 = vmatprep.subr.mxu0 %v1755
  %4240 = vmatpush1.msra.mxu0 %v1754
  %4241 = vmatprep.subr.mxu0 %v1759
  %4242 = vmatpush1.msra.mxu0 %v1758
  %4243 = vmatprep.subr.mxu0 %v1763
  %4244 = vmatpush1.msra.mxu0 %v1762
  %4245 = vmatprep.subr.mxu0 %v1767
  %4246 = vmatpush1.msra.mxu0 %v1766
  %4247 = vmatprep.subr.mxu0 %v1771
  %4248 = vmatpush1.msra.mxu0 %v1770
  %4249 = vmatprep.subr.mxu0 %v1775
  %4250 = vmatpush1.msra.mxu0 %v1774
  %4251 = vmatprep.subr.mxu0 %v1779
  %4252 = vmatpush1.msra.mxu0 %v1778
  %4253 = vmatprep.subr.mxu0 %v1783
  %4254 = vmatpush1.msra.mxu0 %v1782
  %4255 = vmatprep.subr.mxu0 %v1787
  %4256 = vmatpush1.msra.mxu0 %v1786
  %4257 = vmatprep.subr.mxu0 %v1791
  %4258 = vmatpush1.msra.mxu0 %v1790
  %4259 = vmatprep.subr.mxu0 %v1795
  %4260 = vmatpush1.msra.mxu0 %v1794
  %4261 = vmatprep.subr.mxu0 %v1799
  %4262 = vmatpush1.msra.mxu0 %v1798
  %4263 = vmatprep.subr.mxu0 %v1803
  %4264 = vmatpush1.msra.mxu0 %v1802
  %4265 = vmatprep.subr.mxu0 %v1807
  %4266 = vmatpush1.msra.mxu0 %v1806
  %4267 = vmatprep.subr.mxu0 %v1811
  %4268 = vmatpush1.msra.mxu0 %v1810
  %4269 = vmatprep.subr.mxu0 %v1815
  %4270 = vmatpush1.msra.mxu0 %v1814
  %4271 = vmatprep.subr.mxu0 %v1819
  %4272 = vmatpush1.msra.mxu0 %v1818
  %4273 = vmatprep.subr.mxu0 %v1823
  %4274 = vmatpush1.msra.mxu0 %v1822
  %4275 = vmatprep.subr.mxu0 %v1827
  %4276 = vmatpush1.msra.mxu0 %v1826
  %4277 = vmatprep.mubr.f32.mxu0 %v2135
  %4278 = vmatmul.mubr.f32.gmra.mrb[0].mxu0 %v33
  %v4279 = vpop.f32.mrb[0].mxu0
  %v4280 = vadd.f32 %v4209, %v4279
  %v4281 = vpop.f32.mrb[0].mxu0
  %v4282 = vadd.f32 %v4211, %v4281
  %4283 = vdwg.mxu0
  %4284 = vmatprep.subr.mxu0 %v1831
  %4285 = vmatpush1.msra.mxu0 %v1830
  %4286 = vmatprep.subr.mxu0 %v1835
  %4287 = vmatpush1.msra.mxu0 %v1834
  %4288 = vmatprep.subr.mxu0 %v1839
  %4289 = vmatpush1.msra.mxu0 %v1838
  %4290 = vmatprep.subr.mxu0 %v1843
  %4291 = vmatpush1.msra.mxu0 %v1842
  %4292 = vmatprep.subr.mxu0 %v1847
  %4293 = vmatpush1.msra.mxu0 %v1846
  %4294 = vmatprep.subr.mxu0 %v1851
  %4295 = vmatpush1.msra.mxu0 %v1850
  %4296 = vmatprep.subr.mxu0 %v1855
  %4297 = vmatpush1.msra.mxu0 %v1854
  %4298 = vmatprep.subr.mxu0 %v1859
  %4299 = vmatpush1.msra.mxu0 %v1858
  %4300 = vmatprep.subr.mxu0 %v1863
  %4301 = vmatpush1.msra.mxu0 %v1862
  %4302 = vmatprep.subr.mxu0 %v1867
  %4303 = vmatpush1.msra.mxu0 %v1866
  %4304 = vmatprep.subr.mxu0 %v1871
  %4305 = vmatpush1.msra.mxu0 %v1870
  %4306 = vmatprep.subr.mxu0 %v1875
  %4307 = vmatpush1.msra.mxu0 %v1874
  %4308 = vmatprep.subr.mxu0 %v1879
  %4309 = vmatpush1.msra.mxu0 %v1878
  %4310 = vmatprep.subr.mxu0 %v1883
  %4311 = vmatpush1.msra.mxu0 %v1882
  %4312 = vmatprep.subr.mxu0 %v1887
  %4313 = vmatpush1.msra.mxu0 %v1886
  %4314 = vmatprep.subr.mxu0 %v1891
  %4315 = vmatpush1.msra.mxu0 %v1890
  %4316 = vmatprep.subr.mxu0 %v1895
  %4317 = vmatpush1.msra.mxu0 %v1894
  %4318 = vmatprep.subr.mxu0 %v1899
  %4319 = vmatpush1.msra.mxu0 %v1898
  %4320 = vmatprep.subr.mxu0 %v1903
  %4321 = vmatpush1.msra.mxu0 %v1902
  %4322 = vmatprep.subr.mxu0 %v1907
  %4323 = vmatpush1.msra.mxu0 %v1906
  %4324 = vmatprep.subr.mxu0 %v1911
  %4325 = vmatpush1.msra.mxu0 %v1910
  %4326 = vmatprep.subr.mxu0 %v1915
  %4327 = vmatpush1.msra.mxu0 %v1914
  %4328 = vmatprep.subr.mxu0 %v1919
  %4329 = vmatpush1.msra.mxu0 %v1918
  %4330 = vmatprep.subr.mxu0 %v1923
  %4331 = vmatpush1.msra.mxu0 %v1922
  %4332 = vmatprep.subr.mxu0 %v1927
  %4333 = vmatpush1.msra.mxu0 %v1926
  %4334 = vmatprep.subr.mxu0 %v1931
  %4335 = vmatpush1.msra.mxu0 %v1930
  %4336 = vmatprep.subr.mxu0 %v1935
  %4337 = vmatpush1.msra.mxu0 %v1934
  %4338 = vmatprep.subr.mxu0 %v1939
  %4339 = vmatpush1.msra.mxu0 %v1938
  %4340 = vmatprep.subr.mxu0 %v1943
  %4341 = vmatpush1.msra.mxu0 %v1942
  %4342 = vmatprep.subr.mxu0 %v1947
  %4343 = vmatpush1.msra.mxu0 %v1946
  %4344 = vmatprep.subr.mxu0 %v1951
  %4345 = vmatpush1.msra.mxu0 %v1950
  %4346 = vmatprep.subr.mxu0 %v1955
  %4347 = vmatpush1.msra.mxu0 %v1954
  %4348 = vmatprep.mubr.f32.mxu0 %v2136
  %4349 = vmatmul.mubr.f32.gmra.mrb[0].mxu0 %v34
  %v4350 = vpop.f32.mrb[0].mxu0
  %v4351 = vadd.f32 %v4280, %v4350
  %v4352 = vpop.f32.mrb[0].mxu0
  %v4353 = vadd.f32 %v4282, %v4352
  %4354 = vdwg.mxu0
  %4355 = vmatprep.subr.mxu0 %v1959
  %4356 = vmatpush1.msra.mxu0 %v1958
  %4357 = vmatprep.subr.mxu0 %v1963
  %4358 = vmatpush1.msra.mxu0 %v1962
  %4359 = vmatprep.subr.mxu0 %v1967
  %4360 = vmatpush1.msra.mxu0 %v1966
  %4361 = vmatprep.subr.mxu0 %v1971
  %4362 = vmatpush1.msra.mxu0 %v1970
  %4363 = vmatprep.subr.mxu0 %v1975
  %4364 = vmatpush1.msra.mxu0 %v1974
  %4365 = vmatprep.subr.mxu0 %v1979
  %4366 = vmatpush1.msra.mxu0 %v1978
  %4367 = vmatprep.subr.mxu0 %v1983
  %4368 = vmatpush1.msra.mxu0 %v1982
  %4369 = vmatprep.subr.mxu0 %v1987
  %4370 = vmatpush1.msra.mxu0 %v1986
  %4371 = vmatprep.subr.mxu0 %v1991
  %4372 = vmatpush1.msra.mxu0 %v1990
  %4373 = vmatprep.subr.mxu0 %v1995
  %4374 = vmatpush1.msra.mxu0 %v1994
  %4375 = vmatprep.subr.mxu0 %v1999
  %4376 = vmatpush1.msra.mxu0 %v1998
  %4377 = vmatprep.subr.mxu0 %v2003
  %4378 = vmatpush1.msra.mxu0 %v2002
  %4379 = vmatprep.subr.mxu0 %v2007
  %4380 = vmatpush1.msra.mxu0 %v2006
  %4381 = vmatprep.subr.mxu0 %v2011
  %4382 = vmatpush1.msra.mxu0 %v2010
  %4383 = vmatprep.subr.mxu0 %v2015
  %4384 = vmatpush1.msra.mxu0 %v2014
  %4385 = vmatprep.subr.mxu0 %v2019
  %4386 = vmatpush1.msra.mxu0 %v2018
  %4387 = vmatprep.subr.mxu0 %v2023
  %4388 = vmatpush1.msra.mxu0 %v2022
  %4389 = vmatprep.subr.mxu0 %v2027
  %4390 = vmatpush1.msra.mxu0 %v2026
  %4391 = vmatprep.subr.mxu0 %v2031
  %4392 = vmatpush1.msra.mxu0 %v2030
  %4393 = vmatprep.subr.mxu0 %v2035
  %4394 = vmatpush1.msra.mxu0 %v2034
  %4395 = vmatprep.subr.mxu0 %v2039
  %4396 = vmatpush1.msra.mxu0 %v2038
  %4397 = vmatprep.subr.mxu0 %v2043
  %4398 = vmatpush1.msra.mxu0 %v2042
  %4399 = vmatprep.subr.mxu0 %v2047
  %4400 = vmatpush1.msra.mxu0 %v2046
  %4401 = vmatprep.subr.mxu0 %v2051
  %4402 = vmatpush1.msra.mxu0 %v2050
  %4403 = vmatprep.subr.mxu0 %v2055
  %4404 = vmatpush1.msra.mxu0 %v2054
  %4405 = vmatprep.subr.mxu0 %v2059
  %4406 = vmatpush1.msra.mxu0 %v2058
  %4407 = vmatprep.subr.mxu0 %v2063
  %4408 = vmatpush1.msra.mxu0 %v2062
  %4409 = vmatprep.subr.mxu0 %v2067
  %4410 = vmatpush1.msra.mxu0 %v2066
  %4411 = vmatprep.subr.mxu0 %v2071
  %4412 = vmatpush1.msra.mxu0 %v2070
  %4413 = vmatprep.subr.mxu0 %v2075
  %4414 = vmatpush1.msra.mxu0 %v2074
  %4415 = vmatprep.subr.mxu0 %v2079
  %4416 = vmatpush1.msra.mxu0 %v2078
  %4417 = vmatprep.subr.mxu0 %v2083
  %4418 = vmatpush1.msra.mxu0 %v2082
  %4419 = vmatprep.mubr.f32.mxu0 %v2137
  %4420 = vmatmul.mubr.f32.gmra.mrb[0].mxu0 %v35
  %v4421 = vpop.f32.mrb[0].mxu0
  %v4422 = vadd.f32 %v4351, %v4421
  %v4423 = vpop.f32.mrb[0].mxu0
  %v4424 = vadd.f32 %v4353, %v4423
  %4425 = vdwg.mxu0
  %v4426 = vmax.f32 %v3286, 0.0
  %v4427 = vmax.f32 %v3288, 0.0
  %v4428 = vmax.f32 %v4422, 0.0
  %v4429 = vmax.f32 %v4424, 0.0
  %v4430 = vld [vmem:[%s3] sm:$0xff]
  %v4431 = vld [vmem:[%s3 + $0x8] sm:$0xff]
  %v4432 = vld [vmem:[%s3 + $0x10] sm:$0xff]
  %v4433 = vld [vmem:[%s3 + $0x18] sm:$0xff]
  %v4434 = vld [vmem:[%s3 + $0x20] sm:$0xff]
  %v4435 = vld [vmem:[%s3 + $0x28] sm:$0xff]
  %v4436 = vld [vmem:[%s3 + $0x30] sm:$0xff]
  %v4437 = vld [vmem:[%s3 + $0x38] sm:$0xff]
  %v4438 = vld [vmem:[%s3 + $0x40] sm:$0xff]
  %v4439 = vld [vmem:[%s3 + $0x48] sm:$0xff]
  %v4440 = vld [vmem:[%s3 + $0x50] sm:$0xff]
  %v4441 = vld [vmem:[%s3 + $0x58] sm:$0xff]
  %v4442 = vld [vmem:[%s3 + $0x60] sm:$0xff]
  %v4443 = vld [vmem:[%s3 + $0x68] sm:$0xff]
  %v4444 = vld [vmem:[%s3 + $0x70] sm:$0xff]
  %v4445 = vld [vmem:[%s3 + $0x78] sm:$0xff]
  %v4446 = vld [vmem:[%s3 + $0x80] sm:$0xff]
  %v4447 = vld [vmem:[%s3 + $0x88] sm:$0xff]
  %v4448 = vld [vmem:[%s3 + $0x90] sm:$0xff]
  %v4449 = vld [vmem:[%s3 + $0x98] sm:$0xff]
  %v4450 = vld [vmem:[%s3 + $0xa0] sm:$0xff]
  %v4451 = vld [vmem:[%s3 + $0xa8] sm:$0xff]
  %v4452 = vld [vmem:[%s3 + $0xb0] sm:$0xff]
  %v4453 = vld [vmem:[%s3 + $0xb8] sm:$0xff]
  %v4454 = vld [vmem:[%s3 + $0xc0] sm:$0xff]
  %v4455 = vld [vmem:[%s3 + $0xc8] sm:$0xff]
  %v4456 = vld [vmem:[%s3 + $0xd0] sm:$0xff]
  %v4457 = vld [vmem:[%s3 + $0xd8] sm:$0xff]
  %v4458 = vld [vmem:[%s3 + $0xe0] sm:$0xff]
  %v4459 = vld [vmem:[%s3 + $0xe8] sm:$0xff]
  %v4460 = vld [vmem:[%s3 + $0xf0] sm:$0xff]
  %v4461 = vld [vmem:[%s3 + $0xf8] sm:$0xff]
  %v4462 = vld [vmem:[%s3 + $0x100] sm:$0xff]
  %v4463 = vld [vmem:[%s3 + $0x108] sm:$0xff]
  %v4464 = vld [vmem:[%s3 + $0x110] sm:$0xff]
  %v4465 = vld [vmem:[%s3 + $0x118] sm:$0xff]
  %v4466 = vld [vmem:[%s3 + $0x120] sm:$0xff]
  %v4467 = vld [vmem:[%s3 + $0x128] sm:$0xff]
  %v4468 = vld [vmem:[%s3 + $0x130] sm:$0xff]
  %v4469 = vld [vmem:[%s3 + $0x138] sm:$0xff]
  %v4470 = vld [vmem:[%s3 + $0x140] sm:$0xff]
  %v4471 = vld [vmem:[%s3 + $0x148] sm:$0xff]
  %v4472 = vld [vmem:[%s3 + $0x150] sm:$0xff]
  %v4473 = vld [vmem:[%s3 + $0x158] sm:$0xff]
  %v4474 = vld [vmem:[%s3 + $0x160] sm:$0xff]
  %v4475 = vld [vmem:[%s3 + $0x168] sm:$0xff]
  %v4476 = vld [vmem:[%s3 + $0x170] sm:$0xff]
  %v4477 = vld [vmem:[%s3 + $0x178] sm:$0xff]
  %v4478 = vld [vmem:[%s3 + $0x180] sm:$0xff]
  %v4479 = vld [vmem:[%s3 + $0x188] sm:$0xff]
  %v4480 = vld [vmem:[%s3 + $0x190] sm:$0xff]
  %v4481 = vld [vmem:[%s3 + $0x198] sm:$0xff]
  %v4482 = vld [vmem:[%s3 + $0x1a0] sm:$0xff]
  %v4483 = vld [vmem:[%s3 + $0x1a8] sm:$0xff]
  %v4484 = vld [vmem:[%s3 + $0x1b0] sm:$0xff]
  %v4485 = vld [vmem:[%s3 + $0x1b8] sm:$0xff]
  %v4486 = vld [vmem:[%s3 + $0x1c0] sm:$0xff]
  %v4487 = vld [vmem:[%s3 + $0x1c8] sm:$0xff]
  %v4488 = vld [vmem:[%s3 + $0x1d0] sm:$0xff]
  %v4489 = vld [vmem:[%s3 + $0x1d8] sm:$0xff]
  %v4490 = vld [vmem:[%s3 + $0x1e0] sm:$0xff]
  %v4491 = vld [vmem:[%s3 + $0x1e8] sm:$0xff]
  %v4492 = vld [vmem:[%s3 + $0x1f0] sm:$0xff]
  %v4493 = vld [vmem:[%s3 + $0x1f8] sm:$0xff]
  %v4494 = vld [vmem:[%s3 + $0x200] sm:$0xff]
  %v4495 = vld [vmem:[%s3 + $0x208] sm:$0xff]
  %v4496 = vld [vmem:[%s3 + $0x210] sm:$0xff]
  %v4497 = vld [vmem:[%s3 + $0x218] sm:$0xff]
  %v4498 = vld [vmem:[%s3 + $0x220] sm:$0xff]
  %v4499 = vld [vmem:[%s3 + $0x228] sm:$0xff]
  %v4500 = vld [vmem:[%s3 + $0x230] sm:$0xff]
  %v4501 = vld [vmem:[%s3 + $0x238] sm:$0xff]
  %v4502 = vld [vmem:[%s3 + $0x240] sm:$0xff]
  %v4503 = vld [vmem:[%s3 + $0x248] sm:$0xff]
  %v4504 = vld [vmem:[%s3 + $0x250] sm:$0xff]
  %v4505 = vld [vmem:[%s3 + $0x258] sm:$0xff]
  %v4506 = vld [vmem:[%s3 + $0x260] sm:$0xff]
  %v4507 = vld [vmem:[%s3 + $0x268] sm:$0xff]
  %v4508 = vld [vmem:[%s3 + $0x270] sm:$0xff]
  %v4509 = vld [vmem:[%s3 + $0x278] sm:$0xff]
  %v4510 = vld [vmem:[%s3 + $0x280] sm:$0xff]
  %v4511 = vld [vmem:[%s3 + $0x288] sm:$0xff]
  %v4512 = vld [vmem:[%s3 + $0x290] sm:$0xff]
  %v4513 = vld [vmem:[%s3 + $0x298] sm:$0xff]
  %v4514 = vld [vmem:[%s3 + $0x2a0] sm:$0xff]
  %v4515 = vld [vmem:[%s3 + $0x2a8] sm:$0xff]
  %v4516 = vld [vmem:[%s3 + $0x2b0] sm:$0xff]
  %v4517 = vld [vmem:[%s3 + $0x2b8] sm:$0xff]
  %v4518 = vld [vmem:[%s3 + $0x2c0] sm:$0xff]
  %v4519 = vld [vmem:[%s3 + $0x2c8] sm:$0xff]
  %v4520 = vld [vmem:[%s3 + $0x2d0] sm:$0xff]
  %v4521 = vld [vmem:[%s3 + $0x2d8] sm:$0xff]
  %v4522 = vld [vmem:[%s3 + $0x2e0] sm:$0xff]
  %v4523 = vld [vmem:[%s3 + $0x2e8] sm:$0xff]
  %v4524 = vld [vmem:[%s3 + $0x2f0] sm:$0xff]
  %v4525 = vld [vmem:[%s3 + $0x2f8] sm:$0xff]
  %v4526 = vld [vmem:[%s3 + $0x300] sm:$0xff]
  %v4527 = vld [vmem:[%s3 + $0x308] sm:$0xff]
  %v4528 = vld [vmem:[%s3 + $0x310] sm:$0xff]
  %v4529 = vld [vmem:[%s3 + $0x318] sm:$0xff]
  %v4530 = vld [vmem:[%s3 + $0x320] sm:$0xff]
  %v4531 = vld [vmem:[%s3 + $0x328] sm:$0xff]
  %v4532 = vld [vmem:[%s3 + $0x330] sm:$0xff]
  %v4533 = vld [vmem:[%s3 + $0x338] sm:$0xff]
  %v4534 = vld [vmem:[%s3 + $0x340] sm:$0xff]
  %v4535 = vld [vmem:[%s3 + $0x348] sm:$0xff]
  %v4536 = vld [vmem:[%s3 + $0x350] sm:$0xff]
  %v4537 = vld [vmem:[%s3 + $0x358] sm:$0xff]
  %v4538 = vld [vmem:[%s3 + $0x360] sm:$0xff]
  %v4539 = vld [vmem:[%s3 + $0x368] sm:$0xff]
  %v4540 = vld [vmem:[%s3 + $0x370] sm:$0xff]
  %v4541 = vld [vmem:[%s3 + $0x378] sm:$0xff]
  %v4542 = vld [vmem:[%s3 + $0x380] sm:$0xff]
  %v4543 = vld [vmem:[%s3 + $0x388] sm:$0xff]
  %v4544 = vld [vmem:[%s3 + $0x390] sm:$0xff]
  %v4545 = vld [vmem:[%s3 + $0x398] sm:$0xff]
  %v4546 = vld [vmem:[%s3 + $0x3a0] sm:$0xff]
  %v4547 = vld [vmem:[%s3 + $0x3a8] sm:$0xff]
  %v4548 = vld [vmem:[%s3 + $0x3b0] sm:$0xff]
  %v4549 = vld [vmem:[%s3 + $0x3b8] sm:$0xff]
  %v4550 = vld [vmem:[%s3 + $0x3c0] sm:$0xff]
  %v4551 = vld [vmem:[%s3 + $0x3c8] sm:$0xff]
  %v4552 = vld [vmem:[%s3 + $0x3d0] sm:$0xff]
  %v4553 = vld [vmem:[%s3 + $0x3d8] sm:$0xff]
  %v4554 = vld [vmem:[%s3 + $0x3e0] sm:$0xff]
  %v4555 = vld [vmem:[%s3 + $0x3e8] sm:$0xff]
  %v4556 = vld [vmem:[%s3 + $0x3f0] sm:$0xff]
  %v4557 = vld [vmem:[%s3 + $0x3f8] sm:$0xff]
  %v4558 = vld [vmem:[%s4] sm:$0x3]
  %v4560 = vlaneseq
  %v4561 = vshrl.u32 %v4560, 7
  %v4562 = vsub.s32 0, %v4561
  %v4563 = vrot.slane %v4558, %v4562
  %v4564 = vlaneseq
  %v4565 = vshrl.u32 %v4564, 7
  %v4566 = vsub.s32 1, %v4565
  %v4567 = vrot.slane %v4558, %v4566
  %4570 = vmatprep.subr.mxu0 %v4431
  %4571 = vmatpush1.msra.mxu0 %v4430
  %4572 = vmatprep.subr.mxu0 %v4433
  %4573 = vmatpush1.msra.mxu0 %v4432
  %4574 = vmatprep.subr.mxu0 %v4435
  %4575 = vmatpush1.msra.mxu0 %v4434
  %4576 = vmatprep.subr.mxu0 %v4437
  %4577 = vmatpush1.msra.mxu0 %v4436
  %4578 = vmatprep.subr.mxu0 %v4439
  %4579 = vmatpush1.msra.mxu0 %v4438
  %4580 = vmatprep.subr.mxu0 %v4441
  %4581 = vmatpush1.msra.mxu0 %v4440
  %4582 = vmatprep.subr.mxu0 %v4443
  %4583 = vmatpush1.msra.mxu0 %v4442
  %4584 = vmatprep.subr.mxu0 %v4445
  %4585 = vmatpush1.msra.mxu0 %v4444
  %4586 = vmatprep.subr.mxu0 %v4447
  %4587 = vmatpush1.msra.mxu0 %v4446
  %4588 = vmatprep.subr.mxu0 %v4449
  %4589 = vmatpush1.msra.mxu0 %v4448
  %4590 = vmatprep.subr.mxu0 %v4451
  %4591 = vmatpush1.msra.mxu0 %v4450
  %4592 = vmatprep.subr.mxu0 %v4453
  %4593 = vmatpush1.msra.mxu0 %v4452
  %4594 = vmatprep.subr.mxu0 %v4455
  %4595 = vmatpush1.msra.mxu0 %v4454
  %4596 = vmatprep.subr.mxu0 %v4457
  %4597 = vmatpush1.msra.mxu0 %v4456
  %4598 = vmatprep.subr.mxu0 %v4459
  %4599 = vmatpush1.msra.mxu0 %v4458
  %4600 = vmatprep.subr.mxu0 %v4461
  %4601 = vmatpush1.msra.mxu0 %v4460
  %4602 = vmatprep.subr.mxu0 %v4463
  %4603 = vmatpush1.msra.mxu0 %v4462
  %4604 = vmatprep.subr.mxu0 %v4465
  %4605 = vmatpush1.msra.mxu0 %v4464
  %4606 = vmatprep.subr.mxu0 %v4467
  %4607 = vmatpush1.msra.mxu0 %v4466
  %4608 = vmatprep.subr.mxu0 %v4469
  %4609 = vmatpush1.msra.mxu0 %v4468
  %4610 = vmatprep.subr.mxu0 %v4471
  %4611 = vmatpush1.msra.mxu0 %v4470
  %4612 = vmatprep.subr.mxu0 %v4473
  %4613 = vmatpush1.msra.mxu0 %v4472
  %4614 = vmatprep.subr.mxu0 %v4475
  %4615 = vmatpush1.msra.mxu0 %v4474
  %4616 = vmatprep.subr.mxu0 %v4477
  %4617 = vmatpush1.msra.mxu0 %v4476
  %4618 = vmatprep.subr.mxu0 %v4479
  %4619 = vmatpush1.msra.mxu0 %v4478
  %4620 = vmatprep.subr.mxu0 %v4481
  %4621 = vmatpush1.msra.mxu0 %v4480
  %4622 = vmatprep.subr.mxu0 %v4483
  %4623 = vmatpush1.msra.mxu0 %v4482
  %4624 = vmatprep.subr.mxu0 %v4485
  %4625 = vmatpush1.msra.mxu0 %v4484
  %4626 = vmatprep.subr.mxu0 %v4487
  %4627 = vmatpush1.msra.mxu0 %v4486
  %4628 = vmatprep.subr.mxu0 %v4489
  %4629 = vmatpush1.msra.mxu0 %v4488
  %4630 = vmatprep.subr.mxu0 %v4491
  %4631 = vmatpush1.msra.mxu0 %v4490
  %4632 = vmatprep.subr.mxu0 %v4493
  %4633 = vmatpush1.msra.mxu0 %v4492
  %4634 = vmatprep.mubr.f32.mxu0 %v4427
  %4635 = vmatmul.mubr.f32.gmra.mrb[0].mxu0 %v4426
  %v4636 = vpop.f32.mrb[0].mxu0
  %v4637 = vadd.f32 %v4563, %v4636
  %v4638 = vpop.f32.mrb[0].mxu0
  %v4639 = vadd.f32 %v4567, %v4638
  %4640 = vdwg.mxu0
  %4641 = vmatprep.subr.mxu0 %v4495
  %4642 = vmatpush1.msra.mxu0 %v4494
  %4643 = vmatprep.subr.mxu0 %v4497
  %4644 = vmatpush1.msra.mxu0 %v4496
  %4645 = vmatprep.subr.mxu0 %v4499
  %4646 = vmatpush1.msra.mxu0 %v4498
  %4647 = vmatprep.subr.mxu0 %v4501
  %4648 = vmatpush1.msra.mxu0 %v4500
  %4649 = vmatprep.subr.mxu0 %v4503
  %4650 = vmatpush1.msra.mxu0 %v4502
  %4651 = vmatprep.subr.mxu0 %v4505
  %4652 = vmatpush1.msra.mxu0 %v4504
  %4653 = vmatprep.subr.mxu0 %v4507
  %4654 = vmatpush1.msra.mxu0 %v4506
  %4655 = vmatprep.subr.mxu0 %v4509
  %4656 = vmatpush1.msra.mxu0 %v4508
  %4657 = vmatprep.subr.mxu0 %v4511
  %4658 = vmatpush1.msra.mxu0 %v4510
  %4659 = vmatprep.subr.mxu0 %v4513
  %4660 = vmatpush1.msra.mxu0 %v4512
  %4661 = vmatprep.subr.mxu0 %v4515
  %4662 = vmatpush1.msra.mxu0 %v4514
  %4663 = vmatprep.subr.mxu0 %v4517
  %4664 = vmatpush1.msra.mxu0 %v4516
  %4665 = vmatprep.subr.mxu0 %v4519
  %4666 = vmatpush1.msra.mxu0 %v4518
  %4667 = vmatprep.subr.mxu0 %v4521
  %4668 = vmatpush1.msra.mxu0 %v4520
  %4669 = vmatprep.subr.mxu0 %v4523
  %4670 = vmatpush1.msra.mxu0 %v4522
  %4671 = vmatprep.subr.mxu0 %v4525
  %4672 = vmatpush1.msra.mxu0 %v4524
  %4673 = vmatprep.subr.mxu0 %v4527
  %4674 = vmatpush1.msra.mxu0 %v4526
  %4675 = vmatprep.subr.mxu0 %v4529
  %4676 = vmatpush1.msra.mxu0 %v4528
  %4677 = vmatprep.subr.mxu0 %v4531
  %4678 = vmatpush1.msra.mxu0 %v4530
  %4679 = vmatprep.subr.mxu0 %v4533
  %4680 = vmatpush1.msra.mxu0 %v4532
  %4681 = vmatprep.subr.mxu0 %v4535
  %4682 = vmatpush1.msra.mxu0 %v4534
  %4683 = vmatprep.subr.mxu0 %v4537
  %4684 = vmatpush1.msra.mxu0 %v4536
  %4685 = vmatprep.subr.mxu0 %v4539
  %4686 = vmatpush1.msra.mxu0 %v4538
  %4687 = vmatprep.subr.mxu0 %v4541
  %4688 = vmatpush1.msra.mxu0 %v4540
  %4689 = vmatprep.subr.mxu0 %v4543
  %4690 = vmatpush1.msra.mxu0 %v4542
  %4691 = vmatprep.subr.mxu0 %v4545
  %4692 = vmatpush1.msra.mxu0 %v4544
  %4693 = vmatprep.subr.mxu0 %v4547
  %4694 = vmatpush1.msra.mxu0 %v4546
  %4695 = vmatprep.subr.mxu0 %v4549
  %4696 = vmatpush1.msra.mxu0 %v4548
  %4697 = vmatprep.subr.mxu0 %v4551
  %4698 = vmatpush1.msra.mxu0 %v4550
  %4699 = vmatprep.subr.mxu0 %v4553
  %4700 = vmatpush1.msra.mxu0 %v4552
  %4701 = vmatprep.subr.mxu0 %v4555
  %4702 = vmatpush1.msra.mxu0 %v4554
  %4703 = vmatprep.subr.mxu0 %v4557
  %4704 = vmatpush1.msra.mxu0 %v4556
  %4705 = vmatprep.mubr.f32.mxu0 %v4429
  %4706 = vmatmul.mubr.f32.gmra.mrb[0].mxu0 %v4428
  %v4707 = vpop.f32.mrb[0].mxu0
  %v4708 = vadd.f32 %v4637, %v4707
  %v4709 = vpop.f32.mrb[0].mxu0
  %v4710 = vadd.f32 %v4639, %v4709
  %4711 = vdwg.mxu0
  %v4714 = vrot.slane %v4708, 2
  %v4715 = vrot.slane %v4710, 2
  %v4718 = vsub.f32 %v4708, %v4714
  %v4719 = vsub.f32 %v4710, %v4715
  %v4720 = vmul.f32 %v4718, %v4718
  %v4721 = vmul.f32 %v4719, %v4719
  %vm4722 = vcmask 1041408
  %v4723 = vsel %vm4722, %v4720, 0.0
  %v4724 = vsel %vm4722, %v4721, 0.0
  %v4725 = vadd.f32 %v4723, %v4724
  %4726 = vadd.xlane.f32.xlu0 %v4725
  %v4727 = vpop.xlane.xlu0 %4726
  %v4728 = vrsqrt.pop %v4727
  %v4729 = vmul.f32 %v4727, %v4728
  %vm4730 = vcmp.eq.f32.partialorder %v4727, inf
  %v4731 = vsel %vm4730, %v4727, %v4729
  %vm4732 = vcmp.eq.f32.partialorder %v4727, 0.0
  %v4733 = vand.u32 %v4727, 2147483648
  %v4734 = vsel %vm4732, %v4733, %v4731
  %vm4735 = vcmask 1024
  %4736 = vst.msk [vmem:[%s5] sm:$0x3] %vm4735, %v4734
  // Predicated region
  $region22: #{siamese_forward.5} parent=0 // pred_check
    _
  $region23: #{siamese_forward.5} parent=0 // pred_check_branch
    %4738 = sbr.rel (0) target = $region25
  $region24: #{siamese_forward.5} parent=0 // pred_region
    _
  $region25: #{siamese_forward.5} parent=0 // pred_fallthru
    _
  // Predicated region
  $region26: #{siamese_forward.5} parent=0 // pred_check
    _
  $region27: #{siamese_forward.5} parent=0 // pred_check_branch
    %4740 = sbr.rel (0) target = $region29
  $region28: #{siamese_forward.5} parent=0 // pred_region
    _
  $region29: #{siamese_forward.5} parent=0 // pred_fallthru
    _

</llo_original>
